<compile_context>
chip_gen: v7x
topology: tpu7x:2x2x1
jax: 0.10.0
libtpu: 0.0.40
codegen_flags: <defaults>
</compile_context>

<pallas_src>
import jax
import jax.numpy as jnp
from jax import lax
from jax.experimental import pallas as pl
from jax.experimental.pallas import tpu as pltpu


_LANE = 128                      # pad channel (lane) dims to a multiple of this
_BN_EPS = 1e-5
_VMEM_FALLBACK = 64 * 1024 * 1024


# ------------------------- small helpers -------------------------

def _round_up(n, m):
    return ((n + m - 1) // m) * m


def _largest_divisor_leq(n, cap):
    for d in range(min(n, cap), 0, -1):
        if n % d == 0:
            return d
    return 1


def _pad_last(x, target):
    pad = target - x.shape[-1]
    if pad == 0:
        return x
    return jnp.pad(x, [(0, 0)] * (x.ndim - 1) + [(0, pad)])


def _pad_vec(v, target):
    return jnp.pad(v, (0, target - v.shape[0]))


def _prep_conv_w3(w_oihw, cin_p, cout_p):
    # torch Conv2d weight (O, I, 3, 3) -> (9*I_p, O_p) bf16, row order (ky,kx,ci).
    o, i = w_oihw.shape[0], w_oihw.shape[1]
    wt = jnp.transpose(w_oihw, (2, 3, 1, 0))                     # (ky, kx, ci, co)
    wt = jnp.pad(wt, ((0, 0), (0, 0), (0, cin_p - i), (0, cout_p - o)))
    return wt.reshape(9 * cin_p, cout_p).astype(jnp.bfloat16)


def _vmem_limit_bytes():
    try:
        cap = int(pltpu.get_tpu_info().vmem_capacity_bytes)      # 64 MiB v7x, 128 MiB v5e/v6e
    except Exception:
        cap = _VMEM_FALLBACK
    return max(32 * 1024 * 1024, int(cap * 0.75))


def _pick_conv_tile_rows(h2, w2, cins, cout_p, vmem_budget):
    per_row = 0
    for c in cins:
        per_row += 2 * w2 * c * 2          # double-buffered bf16 halo slab
        per_row += w2 * 9 * c * 2          # K-fused bf16 patch matrix
    per_row += w2 * cout_p * 4             # f32 accumulator
    per_row += 2 * w2 * cout_p * 2         # double-buffered bf16 output block
    fixed = sum(9 * c * cout_p * 2 for c in cins) + 6 * cout_p * 4
    cap = max(1, (vmem_budget - fixed) // per_row)
    cap = min(cap, h2, max(1, 8192 // max(w2, 1)))
    # TODO(synk): for H without a reasonable divisor, pad H and mask the padded
    # rows out of the stats instead of degrading to a tiny tile.
    return _largest_divisor_leq(h2, cap)


# ------------------------- upconv (ConvTranspose2d k=2 s=2) -------------------------

def _upconv_kernel(x_ref, w_ref, b_ref, o_ref):
    # x: (1, TR, W, Cin_p) bf16; w: (Cin_p, 4*Cout_p) bf16, columns ordered
    # (a, b, co); b: (1, 2*Cout_p) f32 (bias tiled over b);
    # o: (1, TR, 2, W, 2*Cout_p) bf16 (sub-pixel b merged into lanes).
    _, tr, wdim, cin_p = x_ref.shape
    cout2 = b_ref.shape[-1]
    x = x_ref[...].reshape(tr * wdim, cin_p)
    # One matmul per output sub-row a; each result is stored as a single
    # lane-dense 2*Cout_p slab before the next is produced.
    for a in range(2):
        y = jnp.dot(x, w_ref[:, a * cout2:(a + 1) * cout2],
                    preferred_element_type=jnp.float32)
        y = y + b_ref[...]
        o_ref[:, :, a:a + 1, :, :] = y.reshape(1, tr, 1, wdim, cout2).astype(o_ref.dtype)


def _upconv_pixelshuffle(x, w, b2):
    """x: (N, H, W, Cin_p) bf16; w: (Cin_p, 4*Cout_p) bf16; b2: (1, 2*Cout_p) f32.
    Returns (N, H, 2, W, 2*Cout_p) bf16 (== (N, 2H, 2W, Cout_p) after a free
    reshape)."""
    n, h, wdim, cin_p = x.shape
    cout2 = int(b2.shape[-1])
    vmem_limit = _vmem_limit_bytes()
    per_row = 2 * wdim * cin_p * 2 + 2 * 2 * wdim * cout2 * 2 + wdim * cout2 * 4
    fixed = cin_p * 2 * cout2 * 2
    cap = max(1, ((vmem_limit // 2) - fixed) // per_row)
    cap = min(cap, h, max(1, 8192 // max(wdim, 1)))
    tr = _largest_divisor_leq(h, cap)
    return pl.pallas_call(
        _upconv_kernel,
        out_shape=jax.ShapeDtypeStruct((n, h, 2, wdim, cout2), jnp.bfloat16),
        grid=(n, h // tr),
        in_specs=[
            pl.BlockSpec((1, tr, wdim, cin_p), lambda i, t: (i, t, 0, 0)),
            pl.BlockSpec((cin_p, 2 * cout2), lambda i, t: (0, 0)),
            pl.BlockSpec((1, cout2), lambda i, t: (0, 0)),
        ],
        out_specs=pl.BlockSpec((1, tr, 2, wdim, cout2),
                               lambda i, t: (i, t, 0, 0, 0)),
        compiler_params=pltpu.CompilerParams(
            dimension_semantics=("parallel", "parallel"),
            vmem_limit_bytes=vmem_limit),
    )(x, w, b2)


# ------------------------- 3x3 conv (+ fused previous BN) + stats -------------------------

def _make_conv3x3_kernel(tr, w2, cins, cout_p, fuse_affine):
    """3x3 'same' conv with bias (plus optional fused input affine+ReLU = the
    previous layer's BatchNorm) over one tr-row slab, emitting the pre-BN
    output in bf16 and per-tile (sum, sumsq) for this layer's two-pass BN."""
    n_src = len(cins)
    if fuse_affine:
        assert n_src == 1

    def kernel(*refs):
        pos = 0
        srcs = refs[pos:pos + n_src]; pos += n_src
        wts = refs[pos:pos + n_src]; pos += n_src
        b_ref = refs[pos]; pos += 1
        if fuse_affine:
            sc_ref, sh_ref = refs[pos], refs[pos + 1]; pos += 2
        y_ref, st_ref = refs[pos], refs[pos + 1]; pos += 2
        slabs = refs[pos:pos + n_src]; pos += n_src
        sems = refs[pos:pos + n_src]

        n = pl.program_id(0)
        t = pl.program_id(1)
        n_rt = pl.num_programs(1)

        def slab_copies(src_i, rt, slot):
            # The same helper builds the descriptors for .start() and .wait(),
            # so the semaphore byte counts always match.  Top/bottom halo rows
            # are clamped into the image and masked out below when invalid,
            # so no HBM spatial padding is needed.
            src, buf, sem = srcs[src_i], slabs[src_i], sems[src_i]
            h2 = src.shape[1]
            top = jnp.clip(rt * tr - 1, 0, h2 - 1)
            core = jnp.clip(rt * tr, 0, h2 - tr)
            bot = jnp.clip(rt * tr + tr, 0, h2 - 1)
            return (
                pltpu.make_async_copy(src.at[n, pl.ds(top, 1)],
                                      buf.at[slot, pl.ds(0, 1)], sem.at[slot, 0]),
                pltpu.make_async_copy(src.at[n, pl.ds(core, tr)],
                                      buf.at[slot, pl.ds(1, tr)], sem.at[slot, 1]),
                pltpu.make_async_copy(src.at[n, pl.ds(bot, 1)],
                                      buf.at[slot, pl.ds(tr + 1, 1)], sem.at[slot, 2]),
            )

        def start_slab(rt, slot):
            for s in range(n_src):
                for cp in slab_copies(s, rt, slot):
                    cp.start()

        def wait_slab(rt, slot):
            for s in range(n_src):
                for cp in slab_copies(s, rt, slot):
                    cp.wait()

        @pl.when(t == 0)          # prime this image's first halo slab
        def _():
            start_slab(0, 0)

        @pl.when(t + 1 < n_rt)    # prefetch the next slab of the same image
        def _():
            start_slab(t + 1, (t + 1) % 2)

        slot = t % 2
        wait_slab(t, slot)

        # Out-of-image halo rows (clamped duplicates) must act as zero padding.
        row = lax.broadcasted_iota(jnp.int32, (tr + 2, 1, 1), 0)
        row_lo = jnp.where(t == 0, 1, 0)
        row_hi = jnp.where(t == n_rt - 1, tr + 1, tr + 2)
        row_ok = (row >= row_lo) & (row < row_hi)

        acc = None
        for s in range(n_src):
            cin_p = cins[s]
            slab = slabs[s][slot]                         # (tr+2, w2, cin_p) bf16
            if fuse_affine:
                # Previous layer's BatchNorm + ReLU, fused right after the DMA.
                slab = jnp.maximum(
                    slab.astype(jnp.float32) * sc_ref[...] + sh_ref[...], 0.0)
            slab = jnp.where(row_ok, slab, 0).astype(jnp.bfloat16)

            # W-direction taps (explicit zero edge columns, no HBM padding).
            zero_col = jnp.zeros((tr + 2, 1, cin_p), jnp.bfloat16)
            tap_l = jnp.concatenate([zero_col, slab[:, :w2 - 1, :]], axis=1)
            tap_r = jnp.concatenate([slab[:, 1:, :], zero_col], axis=1)
            taps = (tap_l, slab, tap_r)

            # VMEM-local mini-im2col: K-fuse the nine taps into one MXU matmul.
            pieces = [taps[kx][ky:ky + tr] for ky in range(3) for kx in range(3)]
            patches = jnp.concatenate(pieces, axis=-1).reshape(tr * w2, 9 * cin_p)
            part = jnp.dot(patches, wts[s][...],
                           preferred_element_type=jnp.float32)
            acc = part if acc is None else acc + part

        acc = acc + b_ref[...]                            # conv bias (pre-BN)
        y_ref[...] = acc.reshape(1, tr, w2, cout_p).astype(y_ref.dtype)
        s1 = jnp.sum(acc, axis=0, keepdims=True)
        s2 = jnp.sum(acc * acc, axis=0, keepdims=True)
        st_ref[...] = jnp.concatenate([s1, s2], axis=0).reshape(1, 1, 2, cout_p)

    return kernel


def _conv3x3_pre_bn(sources, weights, bias, prev_affine):
    """sources: list of (N, H2, W2, Cs_p) bf16 NHWC arrays (lane-padded, unpadded
    spatially); weights: list of (9*Cs_p, Cout_p) bf16; bias: (Cout_p,) f32.
    prev_affine: None, or (scale, shift) each (Cs_p,) f32 applied (with ReLU) to
    the single source inside the kernel (the previous layer's BatchNorm).
    Returns (pre-BN conv output bf16, batch mean, batch var)."""
    n_src = len(sources)
    n, h2, w2 = (int(d) for d in sources[0].shape[:3])
    cins = tuple(int(s.shape[-1]) for s in sources)
    cout_p = int(weights[0].shape[-1])
    fuse = prev_affine is not None

    vmem_limit = _vmem_limit_bytes()
    tr = _pick_conv_tile_rows(h2, w2, cins, cout_p, vmem_limit // 2)
    n_rt = h2 // tr

    kernel = _make_conv3x3_kernel(tr, w2, cins, cout_p, fuse)

    in_specs = [pl.BlockSpec(memory_space=pl.ANY) for _ in range(n_src)]
    in_specs += [pl.BlockSpec((9 * c, cout_p), lambda i, t: (0, 0)) for c in cins]
    in_specs += [pl.BlockSpec((1, cout_p), lambda i, t: (0, 0))]
    args = list(sources) + list(weights) + [bias.reshape(1, cout_p)]
    if fuse:
        sc, sh = prev_affine
        in_specs += [pl.BlockSpec((1, cins[0]), lambda i, t: (0, 0)),
                     pl.BlockSpec((1, cins[0]), lambda i, t: (0, 0))]
        args += [sc.reshape(1, cins[0]), sh.reshape(1, cins[0])]

    scratch = [pltpu.VMEM((2, tr + 2, w2, c), jnp.bfloat16) for c in cins]
    scratch += [pltpu.SemaphoreType.DMA((2, 3)) for _ in cins]

    flops = 2 * n * h2 * w2 * 9 * sum(cins) * cout_p
    bytes_accessed = (sum(int(s.size) for s in sources) * 2
                      + sum(int(w.size) for w in weights) * 2
                      + n * h2 * w2 * cout_p * 2)

    y, stats = pl.pallas_call(
        kernel,
        out_shape=(
            jax.ShapeDtypeStruct((n, h2, w2, cout_p), jnp.bfloat16),   # pre-BN conv
            jax.ShapeDtypeStruct((n, n_rt, 2, cout_p), jnp.float32),   # per-tile stats
        ),
        grid=(n, n_rt),
        in_specs=in_specs,
        out_specs=(
            pl.BlockSpec((1, tr, w2, cout_p), lambda i, t: (i, t, 0, 0)),
            pl.BlockSpec((1, 1, 2, cout_p), lambda i, t: (i, t, 0, 0)),
        ),
        scratch_shapes=scratch,
        compiler_params=pltpu.CompilerParams(
            dimension_semantics=("parallel", "arbitrary"),
            vmem_limit_bytes=vmem_limit),
        cost_estimate=pl.CostEstimate(flops=flops, transcendentals=0,
                                      bytes_accessed=bytes_accessed),
    )(*args)

    # Two-pass BN: reduce per-tile (sum, sumsq) -> exact batch mean/var (tiny).
    tot = jnp.sum(stats, axis=(0, 1))                    # (2, Cout_p)
    cnt = float(n * h2 * w2)
    mean = tot[0] / cnt
    # TODO(synk): E[x^2]-E[x]^2 in f32 can lose precision at very large N*H*W.
    var = jnp.maximum(tot[1] / cnt - mean * mean, 0.0)
    return y, mean, var


def _bn_affine(mean, var, gamma, beta):
    inv = lax.rsqrt(var + _BN_EPS)
    return gamma * inv, beta - gamma * inv * mean


# ------------------------- final BN + ReLU apply -------------------------

def _bn_relu_kernel(y_ref, sc_ref, sh_ref, o_ref):
    o_ref[...] = jnp.maximum(
        y_ref[...].astype(jnp.float32) * sc_ref[...] + sh_ref[...],
        0.0).astype(o_ref.dtype)


def _bn_relu_apply(y, scale, shift, out_dtype):
    n, h2, w2, c = y.shape
    rows = n * h2 * w2
    vmem_limit = _vmem_limit_bytes()
    cap = max(8, min(8192, (vmem_limit // 2) // (12 * c)))
    chunk = rows
    for d in range(min(rows, cap), 0, -1):
        if rows % d == 0 and d % 8 == 0:
            chunk = d
            break
    out = pl.pallas_call(
        _bn_relu_kernel,
        out_shape=jax.ShapeDtypeStruct((rows, c), out_dtype),
        grid=(rows // chunk,),
        in_specs=[
            pl.BlockSpec((chunk, c), lambda i: (i, 0)),
            pl.BlockSpec((1, c), lambda i: (0, 0)),
            pl.BlockSpec((1, c), lambda i: (0, 0)),
        ],
        out_specs=pl.BlockSpec((chunk, c), lambda i: (i, 0)),
        compiler_params=pltpu.CompilerParams(
            dimension_semantics=("parallel",),
            vmem_limit_bytes=vmem_limit),
    )(y.reshape(rows, c), scale.reshape(1, c), shift.reshape(1, c))
    return out.reshape(n, h2, w2, c)


# ------------------------- ExpansiveBlock forward -------------------------

def expansive_block(x_e, x_c, params):
    """x_e: (N, Cin, H, W); x_c: (N, Cin - Cout, 2H, 2W) -> (N, Cout, 2H, 2W)."""
    n, cin, h, w = x_e.shape
    cout = int(params["up_b"].shape[0])
    cxc = int(x_c.shape[1])
    cin_p = _round_up(cin, _LANE)
    cout_p = _round_up(cout, _LANE)
    cxc_p = _round_up(cxc, _LANE)

    # ---- upconv: ConvTranspose2d(cin, cout, 2, 2), pixel shuffle folded in ----
    xe = _pad_last(jnp.transpose(x_e, (0, 2, 3, 1)), cin_p).astype(jnp.bfloat16)
    # torch weight (cin, cout, 2, 2) -> (cin_p, a, b, cout_p) -> (cin_p, 4*cout_p),
    # column order (a, b, co) matching the kernel's per-a slices.
    w_up = jnp.transpose(params["up_w"], (0, 2, 3, 1))
    w_up = jnp.pad(w_up, ((0, cin_p - cin), (0, 0), (0, 0), (0, cout_p - cout)))
    w_up = w_up.reshape(cin_p, 4 * cout_p).astype(jnp.bfloat16)
    b_up = _pad_vec(params["up_b"], cout_p)
    b_up2 = jnp.concatenate([b_up, b_up]).reshape(1, 2 * cout_p)   # tiled over b

    he5 = _upconv_pixelshuffle(xe, w_up, b_up2)          # (N, H, 2, W, 2*Cout_p)
    h_e = he5.reshape(n, 2 * h, 2 * w, cout_p)           # metadata-only reshape

    # ---- skip connection: fed to conv1 as a second source (no HBM concat) ----
    xc = _pad_last(jnp.transpose(x_c, (0, 2, 3, 1)), cxc_p).astype(jnp.bfloat16)

    # ---- ConvBlock layer 1: conv3x3 (two K-groups: [x_c | h_e]) + stats ----
    w1 = params["c1_w"]                                  # (cout, cxc + cout, 3, 3)
    w1_xc = _prep_conv_w3(w1[:, :cxc], cxc_p, cout_p)
    w1_he = _prep_conv_w3(w1[:, cxc:], cout_p, cout_p)
    y1, m1, v1 = _conv3x3_pre_bn([xc, h_e], [w1_xc, w1_he],
                                 _pad_vec(params["c1_b"], cout_p), None)
    sc1, sh1 = _bn_affine(m1, v1,
                          _pad_vec(params["bn1_g"], cout_p),
                          _pad_vec(params["bn1_b"], cout_p))

    # ---- ConvBlock layer 2: BN1+ReLU fused into the conv's input path ----
    w2_ = _prep_conv_w3(params["c2_w"], cout_p, cout_p)
    y2, m2, v2 = _conv3x3_pre_bn([y1], [w2_],
                                 _pad_vec(params["c2_b"], cout_p), (sc1, sh1))
    sc2, sh2 = _bn_affine(m2, v2,
                          _pad_vec(params["bn2_g"], cout_p),
                          _pad_vec(params["bn2_b"], cout_p))

    out = _bn_relu_apply(y2, sc2, sh2, jnp.float32)      # (N, 2H, 2W, Cout_p)
    out = out[..., :cout]                                # drop lane padding
    return jnp.transpose(out, (0, 3, 1, 2))              # back to NCHW


def init_params(key, in_channels, out_channels):
    ks = jax.random.split(key, 6)
    return {
        # ConvTranspose2d(in, out, 2, 2): weight (in, out, 2, 2), bias (out,)
        "up_w": 0.1 * jax.random.normal(ks[0], (in_channels, out_channels, 2, 2), jnp.float32),
        "up_b": 0.1 * jax.random.normal(ks[1], (out_channels,), jnp.float32),
        # Conv2d(in, out, 3): weight (out, in, 3, 3), bias (out,)
        "c1_w": 0.1 * jax.random.normal(ks[2], (out_channels, in_channels, 3, 3), jnp.float32),
        "c1_b": 0.1 * jax.random.normal(ks[3], (out_channels,), jnp.float32),
        "bn1_g": jnp.ones((out_channels,), jnp.float32),
        "bn1_b": jnp.zeros((out_channels,), jnp.float32),
        # Conv2d(out, out, 3)
        "c2_w": 0.1 * jax.random.normal(ks[4], (out_channels, out_channels, 3, 3), jnp.float32),
        "c2_b": 0.1 * jax.random.normal(ks[5], (out_channels,), jnp.float32),
        "bn2_g": jnp.ones((out_channels,), jnp.float32),
        "bn2_b": jnp.zeros((out_channels,), jnp.float32),
    }


# ------------------------- pure-JAX reference -------------------------

def _reference(x_e, x_c, params):
    """Reference forward (operands rounded through bf16 to match the kernels)."""
    def q(t):
        return t.astype(jnp.bfloat16).astype(jnp.float32)

    n, cin, h, w = x_e.shape
    cout = params["up_b"].shape[0]

    xe = jnp.transpose(x_e, (0, 2, 3, 1))
    he = jnp.einsum("nhwi,ioab->nhawbo", q(xe), q(params["up_w"]))
    he = he.reshape(n, 2 * h, 2 * w, cout) + params["up_b"]

    xc = jnp.transpose(x_c, (0, 2, 3, 1))
    x = jnp.concatenate([xc, he], axis=-1)

    def conv_bn_relu_ref(x, w_oihw, bias, g, bt):
        y = lax.conv_general_dilated(
            q(x), q(jnp.transpose(w_oihw, (2, 3, 1, 0))),
            window_strides=(1, 1), padding="SAME",
            dimension_numbers=("NHWC", "HWIO", "NHWC")) + bias
        y = q(y)                         # kernels keep the pre-BN output in bf16
        m = jnp.mean(y, axis=(0, 1, 2))
        v = jnp.mean((y - m) ** 2, axis=(0, 1, 2))
        return jnp.maximum((y - m) * lax.rsqrt(v + _BN_EPS) * g + bt, 0.0)

    h1 = conv_bn_relu_ref(x, params["c1_w"], params["c1_b"],
                          params["bn1_g"], params["bn1_b"])
    h2 = conv_bn_relu_ref(h1, params["c2_w"], params["c2_b"],
                          params["bn2_g"], params["bn2_b"])
    return jnp.transpose(h2, (0, 3, 1, 2))


if __name__ == "__main__":
    key = jax.random.PRNGKey(0)
    k_xe, k_xc, k_p = jax.random.split(key, 3)

    in_channels, out_channels = 8, 4       # standard U-Net decoder: in = 2 * out
    N, H, W = 2, 8, 8                      # x_e spatial; skip connection is 2H x 2W

    x_e = jax.random.normal(k_xe, (N, in_channels, H, W), jnp.float32)
    x_c = jax.random.normal(k_xc, (N, in_channels - out_channels, 2 * H, 2 * W),
                            jnp.float32)
    params = init_params(k_p, in_channels, out_channels)

    out = jax.jit(expansive_block)(x_e, x_c, params)
    out = jax.block_until_ready(out)
    assert out.shape == (N, out_channels, 2 * H, 2 * W), out.shape

    ref = _reference(x_e, x_c, params)
    err = float(jnp.max(jnp.abs(out - ref)))
    assert jnp.allclose(out, ref, atol=3e-2, rtol=3e-2), f"max abs err {err}"
    print("KERNEL_OK")
</pallas_src>

<mosaic_0001>
module attributes {stable_mosaic.version = 11 : i64} {
  func.func @_upconv_kernel(%arg0: i32, %arg1: i32, %arg2: memref<1x8x8x128xbf16, #tpu.memory_space<vmem>>, %arg3: memref<128x512xbf16, #tpu.memory_space<vmem>>, %arg4: memref<1x256xf32, #tpu.memory_space<vmem>>, %arg5: memref<1x8x2x8x256xbf16, #tpu.memory_space<vmem>>) attributes {dimension_semantics = [#tpu.dimension_semantics<parallel>, #tpu.dimension_semantics<parallel>], iteration_bounds = array<i64: 2, 1>, scalar_prefetch = 0 : i64, scratch_operands = 0 : i64, tpu.core_type = #tpu.core_type<tc>, window_params = [{transform_indices = @transform_0, window_bounds = array<i64: 1, 8, 8, 128>}, {pipeline_mode = #tpu.pipeline_mode<synchronous>, transform_indices = @transform_1, window_bounds = array<i64: 128, 512>}, {pipeline_mode = #tpu.pipeline_mode<synchronous>, transform_indices = @transform_2, window_bounds = array<i64: 1, 256>}, {transform_indices = @transform_3, window_bounds = array<i64: 1, 8, 2, 8, 256>}]} {
    %c0 = arith.constant 0 : index
    %c0_0 = arith.constant 0 : index
    %c0_1 = arith.constant 0 : index
    %c0_2 = arith.constant 0 : index
    %0 = vector.load %arg2[%c0, %c0_0, %c0_1, %c0_2] : memref<1x8x8x128xbf16, #tpu.memory_space<vmem>>, vector<1x8x8x128xbf16>
    %1 = vector.shape_cast %0 : vector<1x8x8x128xbf16> to vector<64x128xbf16>
    %c0_3 = arith.constant 0 : index
    %c0_4 = arith.constant 0 : index
    %2 = vector.load %arg3[%c0_3, %c0_4] : memref<128x512xbf16, #tpu.memory_space<vmem>>, vector<128x256xbf16>
    %cst = arith.constant dense<0.000000e+00> : vector<64x256xf32>
    %3 = tpu.matmul %1, %2, %cst {dimension_numbers = #tpu.dot_dimension_numbers<[1], [0], [0], [1], [0, 0, 1, 1], [], []>} : vector<64x128xbf16>, vector<128x256xbf16>, vector<64x256xf32> -> vector<64x256xf32>
    %c0_5 = arith.constant 0 : index
    %c0_6 = arith.constant 0 : index
    %4 = vector.load %arg4[%c0_5, %c0_6] : memref<1x256xf32, #tpu.memory_space<vmem>>, vector<1x256xf32>
    %5 = vector.broadcast %4 : vector<1x256xf32> to vector<64x256xf32>
    %6 = arith.addf %3, %5 : vector<64x256xf32>
    %7 = vector.shape_cast %6 : vector<64x256xf32> to vector<1x8x1x8x256xf32>
    %8 = arith.truncf %7 : vector<1x8x1x8x256xf32> to vector<1x8x1x8x256xbf16>
    %c0_7 = arith.constant 0 : index
    %c0_8 = arith.constant 0 : index
    %c0_9 = arith.constant 0 : index
    %c0_10 = arith.constant 0 : index
    %c0_11 = arith.constant 0 : index
    %9 = vector.load %arg5[%c0_7, %c0_8, %c0_9, %c0_10, %c0_11] : memref<1x8x2x8x256xbf16, #tpu.memory_space<vmem>>, vector<1x8x1x8x256xbf16>
    tpu.vector_store %arg5[%c0_7, %c0_8, %c0_9, %c0_10, %c0_11], %8 {strides = array<i32>} : memref<1x8x2x8x256xbf16, #tpu.memory_space<vmem>>, vector<1x8x1x8x256xbf16>,
    %c0_12 = arith.constant 0 : index
    %c256 = arith.constant 256 : index
    %10 = vector.load %arg3[%c0_12, %c256] : memref<128x512xbf16, #tpu.memory_space<vmem>>, vector<128x256xbf16>
    %cst_13 = arith.constant dense<0.000000e+00> : vector<64x256xf32>
    %11 = tpu.matmul %1, %10, %cst_13 {dimension_numbers = #tpu.dot_dimension_numbers<[1], [0], [0], [1], [0, 0, 1, 1], [], []>} : vector<64x128xbf16>, vector<128x256xbf16>, vector<64x256xf32> -> vector<64x256xf32>
    %c0_14 = arith.constant 0 : index
    %c0_15 = arith.constant 0 : index
    %12 = vector.load %arg4[%c0_14, %c0_15] : memref<1x256xf32, #tpu.memory_space<vmem>>, vector<1x256xf32>
    %13 = vector.broadcast %12 : vector<1x256xf32> to vector<64x256xf32>
    %14 = arith.addf %11, %13 : vector<64x256xf32>
    %15 = vector.shape_cast %14 : vector<64x256xf32> to vector<1x8x1x8x256xf32>
    %16 = arith.truncf %15 : vector<1x8x1x8x256xf32> to vector<1x8x1x8x256xbf16>
    %c0_16 = arith.constant 0 : index
    %c0_17 = arith.constant 0 : index
    %c1 = arith.constant 1 : index
    %c0_18 = arith.constant 0 : index
    %c0_19 = arith.constant 0 : index
    %17 = vector.load %arg5[%c0_16, %c0_17, %c1, %c0_18, %c0_19] : memref<1x8x2x8x256xbf16, #tpu.memory_space<vmem>>, vector<1x8x1x8x256xbf16>
    tpu.vector_store %arg5[%c0_16, %c0_17, %c1, %c0_18, %c0_19], %16 {strides = array<i32>} : memref<1x8x2x8x256xbf16, #tpu.memory_space<vmem>>, vector<1x8x1x8x256xbf16>,
    return
  }
  func.func @transform_0(%arg0: i32, %arg1: i32) -> (i32, i32, i32, i32) {
    %c0_i32 = arith.constant 0 : i32
    %c0_i32_0 = arith.constant 0 : i32
    %c0_i32_1 = arith.constant 0 : i32
    return %arg0, %arg1, %c0_i32, %c0_i32_0 : i32, i32, i32, i32
  }
  func.func @transform_1(%arg0: i32, %arg1: i32) -> (i32, i32) {
    %c0_i32 = arith.constant 0 : i32
    %c0_i32_0 = arith.constant 0 : i32
    %c0_i32_1 = arith.constant 0 : i32
    return %c0_i32, %c0_i32_0 : i32, i32
  }
  func.func @transform_2(%arg0: i32, %arg1: i32) -> (i32, i32) {
    %c0_i32 = arith.constant 0 : i32
    %c0_i32_0 = arith.constant 0 : i32
    %c0_i32_1 = arith.constant 0 : i32
    return %c0_i32, %c0_i32_0 : i32, i32
  }
  func.func @transform_3(%arg0: i32, %arg1: i32) -> (i32, i32, i32, i32, i32) {
    %c0_i32 = arith.constant 0 : i32
    %c0_i32_0 = arith.constant 0 : i32
    %c0_i32_1 = arith.constant 0 : i32
    %c0_i32_2 = arith.constant 0 : i32
    return %arg0, %arg1, %c0_i32, %c0_i32_0, %c0_i32_1 : i32, i32, i32, i32, i32
  }
}

module attributes {stable_mosaic.version = 11 : i64} {
  func.func @kernel(%arg0: i32, %arg1: i32, %arg2: memref<2x16x16x128xbf16, #tpu.memory_space<any>>, %arg3: memref<2x16x16x128xbf16, #tpu.memory_space<any>>, %arg4: memref<1152x128xbf16, #tpu.memory_space<vmem>>, %arg5: memref<1152x128xbf16, #tpu.memory_space<vmem>>, %arg6: memref<1x128xf32, #tpu.memory_space<vmem>>, %arg7: memref<1x16x16x128xbf16, #tpu.memory_space<vmem>>, %arg8: memref<1x1x2x128xf32, #tpu.memory_space<vmem>>, %arg9: memref<2x18x16x128xbf16, #tpu.memory_space<vmem>>, %arg10: memref<2x18x16x128xbf16, #tpu.memory_space<vmem>>, %arg11: memref<2x3x!tpu.dma_semaphore, #tpu.memory_space<semaphore_mem>>, %arg12: memref<2x3x!tpu.dma_semaphore, #tpu.memory_space<semaphore_mem>>) attributes {dimension_semantics = [#tpu.dimension_semantics<parallel>, #tpu.dimension_semantics<arbitrary>], iteration_bounds = array<i64: 2, 1>, scalar_prefetch = 0 : i64, scratch_operands = 4 : i64, tpu.core_type = #tpu.core_type<tc>, window_params = [{}, {}, {pipeline_mode = #tpu.pipeline_mode<synchronous>, transform_indices = @transform_2, window_bounds = array<i64: 1152, 128>}, {pipeline_mode = #tpu.pipeline_mode<synchronous>, transform_indices = @transform_3, window_bounds = array<i64: 1152, 128>}, {pipeline_mode = #tpu.pipeline_mode<synchronous>, transform_indices = @transform_4, window_bounds = array<i64: 1, 128>}, {transform_indices = @transform_5, window_bounds = array<i64: 1, 16, 16, 128>}, {transform_indices = @transform_6, window_bounds = array<i64: 1, 1, 2, 128>}]} {
    %c0_i32 = arith.constant 0 : i32
    %0 = arith.cmpi eq, %arg1, %c0_i32 : i32
    %1 = arith.extui %0 : i1 to i32
    %c0_i32_0 = arith.constant 0 : i32
    %2 = arith.cmpi ne, %1, %c0_i32_0 : i32
    scf.if %2 {
      %c-1_i32 = arith.constant -1 : i32
      %c0_i32_94 = arith.constant 0 : i32
      %c15_i32_95 = arith.constant 15 : i32
      %152 = arith.maxsi %c0_i32_94, %c-1_i32 : i32
      %153 = arith.minsi %c15_i32_95, %152 : i32
      %c0_i32_96 = arith.constant 0 : i32
      %c0_i32_97 = arith.constant 0 : i32
      %c0_i32_98 = arith.constant 0 : i32
      %154 = arith.maxsi %c0_i32_97, %c0_i32_96 : i32
      %155 = arith.minsi %c0_i32_98, %154 : i32
      %c16_i32_99 = arith.constant 16 : i32
      %c0_i32_100 = arith.constant 0 : i32
      %c15_i32_101 = arith.constant 15 : i32
      %156 = arith.maxsi %c0_i32_100, %c16_i32_99 : i32
      %157 = arith.minsi %c15_i32_101, %156 : i32
      %c0_i32_102 = arith.constant 0 : i32
      %c0_i32_103 = arith.constant 0 : i32
      %c0_i32_104 = arith.constant 0 : i32
      %c0_i32_105 = arith.constant 0 : i32
      %c0_i32_106 = arith.constant 0 : i32
      %158 = tpu.memref_slice %arg2[%arg0, %153, %c0_i32_105, %c0_i32_106] : memref<2x16x16x128xbf16, #tpu.memory_space<any>> -> memref<1x1x16x128xbf16, #tpu.memory_space<any>>
      %159 = tpu.memref_squeeze %158 : memref<1x1x16x128xbf16, #tpu.memory_space<any>> -> memref<1x16x128xbf16, #tpu.memory_space<any>>
      %c0_i32_107 = arith.constant 0 : i32
      %c0_i32_108 = arith.constant 0 : i32
      %c0_i32_109 = arith.constant 0 : i32
      %160 = tpu.memref_slice %arg9[%c0_i32_102, %c0_i32_107, %c0_i32_108, %c0_i32_109] : memref<2x18x16x128xbf16, #tpu.memory_space<vmem>> -> memref<1x1x16x128xbf16, #tpu.memory_space<vmem>>
      %161 = tpu.memref_squeeze %160 : memref<1x1x16x128xbf16, #tpu.memory_space<vmem>> -> memref<1x16x128xbf16, #tpu.memory_space<vmem>>
      %162 = tpu.memref_slice %arg11[%c0_i32_103, %c0_i32_104] : memref<2x3x!tpu.dma_semaphore, #tpu.memory_space<semaphore_mem>> -> memref<1x1x!tpu.dma_semaphore, #tpu.memory_space<semaphore_mem>>
      %163 = tpu.memref_squeeze %162 : memref<1x1x!tpu.dma_semaphore, #tpu.memory_space<semaphore_mem>> -> memref<!tpu.dma_semaphore, #tpu.memory_space<semaphore_mem>>
      tpu.enqueue_dma source(%159 : memref<1x16x128xbf16, #tpu.memory_space<any>>) target(%161 : memref<1x16x128xbf16, #tpu.memory_space<vmem>>) target_semaphore(%163 : memref<!tpu.dma_semaphore, #tpu.memory_space<semaphore_mem>>)
      %c0_i32_110 = arith.constant 0 : i32
      %c0_i32_111 = arith.constant 0 : i32
      %c1_i32_112 = arith.constant 1 : i32
      %c0_i32_113 = arith.constant 0 : i32
      %c0_i32_114 = arith.constant 0 : i32
      %164 = tpu.memref_slice %arg2[%arg0, %155, %c0_i32_113, %c0_i32_114] : memref<2x16x16x128xbf16, #tpu.memory_space<any>> -> memref<1x16x16x128xbf16, #tpu.memory_space<any>>
      %165 = tpu.memref_squeeze %164 : memref<1x16x16x128xbf16, #tpu.memory_space<any>> -> memref<16x16x128xbf16, #tpu.memory_space<any>>
      %c1_i32_115 = arith.constant 1 : i32
      %c0_i32_116 = arith.constant 0 : i32
      %c0_i32_117 = arith.constant 0 : i32
      %166 = tpu.memref_slice %arg9[%c0_i32_110, %c1_i32_115, %c0_i32_116, %c0_i32_117] : memref<2x18x16x128xbf16, #tpu.memory_space<vmem>> -> memref<1x16x16x128xbf16, #tpu.memory_space<vmem>>
      %167 = tpu.memref_squeeze %166 : memref<1x16x16x128xbf16, #tpu.memory_space<vmem>> -> memref<16x16x128xbf16, #tpu.memory_space<vmem>>
      %168 = tpu.memref_slice %arg11[%c0_i32_111, %c1_i32_112] : memref<2x3x!tpu.dma_semaphore, #tpu.memory_space<semaphore_mem>> -> memref<1x1x!tpu.dma_semaphore, #tpu.memory_space<semaphore_mem>>
      %169 = tpu.memref_squeeze %168 : memref<1x1x!tpu.dma_semaphore, #tpu.memory_space<semaphore_mem>> -> memref<!tpu.dma_semaphore, #tpu.memory_space<semaphore_mem>>
      tpu.enqueue_dma source(%165 : memref<16x16x128xbf16, #tpu.memory_space<any>>) target(%167 : memref<16x16x128xbf16, #tpu.memory_space<vmem>>) target_semaphore(%169 : memref<!tpu.dma_semaphore, #tpu.memory_space<semaphore_mem>>)
      %c0_i32_118 = arith.constant 0 : i32
      %c0_i32_119 = arith.constant 0 : i32
      %c2_i32_120 = arith.constant 2 : i32
      %c0_i32_121 = arith.constant 0 : i32
      %c0_i32_122 = arith.constant 0 : i32
      %170 = tpu.memref_slice %arg2[%arg0, %157, %c0_i32_121, %c0_i32_122] : memref<2x16x16x128xbf16, #tpu.memory_space<any>> -> memref<1x1x16x128xbf16, #tpu.memory_space<any>>
      %171 = tpu.memref_squeeze %170 : memref<1x1x16x128xbf16, #tpu.memory_space<any>> -> memref<1x16x128xbf16, #tpu.memory_space<any>>
      %c17_i32_123 = arith.constant 17 : i32
      %c0_i32_124 = arith.constant 0 : i32
      %c0_i32_125 = arith.constant 0 : i32
      %172 = tpu.memref_slice %arg9[%c0_i32_118, %c17_i32_123, %c0_i32_124, %c0_i32_125] : memref<2x18x16x128xbf16, #tpu.memory_space<vmem>> -> memref<1x1x16x128xbf16, #tpu.memory_space<vmem>>
      %173 = tpu.memref_squeeze %172 : memref<1x1x16x128xbf16, #tpu.memory_space<vmem>> -> memref<1x16x128xbf16, #tpu.memory_space<vmem>>
      %174 = tpu.memref_slice %arg11[%c0_i32_119, %c2_i32_120] : memref<2x3x!tpu.dma_semaphore, #tpu.memory_space<semaphore_mem>> -> memref<1x1x!tpu.dma_semaphore, #tpu.memory_space<semaphore_mem>>
      %175 = tpu.memref_squeeze %174 : memref<1x1x!tpu.dma_semaphore, #tpu.memory_space<semaphore_mem>> -> memref<!tpu.dma_semaphore, #tpu.memory_space<semaphore_mem>>
      tpu.enqueue_dma source(%171 : memref<1x16x128xbf16, #tpu.memory_space<any>>) target(%173 : memref<1x16x128xbf16, #tpu.memory_space<vmem>>) target_semaphore(%175 : memref<!tpu.dma_semaphore, #tpu.memory_space<semaphore_mem>>)
      %c-1_i32_126 = arith.constant -1 : i32
      %c0_i32_127 = arith.constant 0 : i32
      %c15_i32_128 = arith.constant 15 : i32
      %176 = arith.maxsi %c0_i32_127, %c-1_i32_126 : i32
      %177 = arith.minsi %c15_i32_128, %176 : i32
      %c0_i32_129 = arith.constant 0 : i32
      %c0_i32_130 = arith.constant 0 : i32
      %c0_i32_131 = arith.constant 0 : i32
      %178 = arith.maxsi %c0_i32_130, %c0_i32_129 : i32
      %179 = arith.minsi %c0_i32_131, %178 : i32
      %c16_i32_132 = arith.constant 16 : i32
      %c0_i32_133 = arith.constant 0 : i32
      %c15_i32_134 = arith.constant 15 : i32
      %180 = arith.maxsi %c0_i32_133, %c16_i32_132 : i32
      %181 = arith.minsi %c15_i32_134, %180 : i32
      %c0_i32_135 = arith.constant 0 : i32
      %c0_i32_136 = arith.constant 0 : i32
      %c0_i32_137 = arith.constant 0 : i32
      %c0_i32_138 = arith.constant 0 : i32
      %c0_i32_139 = arith.constant 0 : i32
      %182 = tpu.memref_slice %arg3[%arg0, %177, %c0_i32_138, %c0_i32_139] : memref<2x16x16x128xbf16, #tpu.memory_space<any>> -> memref<1x1x16x128xbf16, #tpu.memory_space<any>>
      %183 = tpu.memref_squeeze %182 : memref<1x1x16x128xbf16, #tpu.memory_space<any>> -> memref<1x16x128xbf16, #tpu.memory_space<any>>
      %c0_i32_140 = arith.constant 0 : i32
      %c0_i32_141 = arith.constant 0 : i32
      %c0_i32_142 = arith.constant 0 : i32
      %184 = tpu.memref_slice %arg10[%c0_i32_135, %c0_i32_140, %c0_i32_141, %c0_i32_142] : memref<2x18x16x128xbf16, #tpu.memory_space<vmem>> -> memref<1x1x16x128xbf16, #tpu.memory_space<vmem>>
      %185 = tpu.memref_squeeze %184 : memref<1x1x16x128xbf16, #tpu.memory_space<vmem>> -> memref<1x16x128xbf16, #tpu.memory_space<vmem>>
      %186 = tpu.memref_slice %arg12[%c0_i32_136, %c0_i32_137] : memref<2x3x!tpu.dma_semaphore, #tpu.memory_space<semaphore_mem>> -> memref<1x1x!tpu.dma_semaphore, #tpu.memory_space<semaphore_mem>>
      %187 = tpu.memref_squeeze %186 : memref<1x1x!tpu.dma_semaphore, #tpu.memory_space<semaphore_mem>> -> memref<!tpu.dma_semaphore, #tpu.memory_space<semaphore_mem>>
      tpu.enqueue_dma source(%183 : memref<1x16x128xbf16, #tpu.memory_space<any>>) target(%185 : memref<1x16x128xbf16, #tpu.memory_space<vmem>>) target_semaphore(%187 : memref<!tpu.dma_semaphore, #tpu.memory_space<semaphore_mem>>)
      %c0_i32_143 = arith.constant 0 : i32
      %c0_i32_144 = arith.constant 0 : i32
      %c1_i32_145 = arith.constant 1 : i32
      %c0_i32_146 = arith.constant 0 : i32
      %c0_i32_147 = arith.constant 0 : i32
      %188 = tpu.memref_slice %arg3[%arg0, %179, %c0_i32_146, %c0_i32_147] : memref<2x16x16x128xbf16, #tpu.memory_space<any>> -> memref<1x16x16x128xbf16, #tpu.memory_space<any>>
      %189 = tpu.memref_squeeze %188 : memref<1x16x16x128xbf16, #tpu.memory_space<any>> -> memref<16x16x128xbf16, #tpu.memory_space<any>>
      %c1_i32_148 = arith.constant 1 : i32
      %c0_i32_149 = arith.constant 0 : i32
      %c0_i32_150 = arith.constant 0 : i32
      %190 = tpu.memref_slice %arg10[%c0_i32_143, %c1_i32_148, %c0_i32_149, %c0_i32_150] : memref<2x18x16x128xbf16, #tpu.memory_space<vmem>> -> memref<1x16x16x128xbf16, #tpu.memory_space<vmem>>
      %191 = tpu.memref_squeeze %190 : memref<1x16x16x128xbf16, #tpu.memory_space<vmem>> -> memref<16x16x128xbf16, #tpu.memory_space<vmem>>
      %192 = tpu.memref_slice %arg12[%c0_i32_144, %c1_i32_145] : memref<2x3x!tpu.dma_semaphore, #tpu.memory_space<semaphore_mem>> -> memref<1x1x!tpu.dma_semaphore, #tpu.memory_space<semaphore_mem>>
      %193 = tpu.memref_squeeze %192 : memref<1x1x!tpu.dma_semaphore, #tpu.memory_space<semaphore_mem>> -> memref<!tpu.dma_semaphore, #tpu.memory_space<semaphore_mem>>
      tpu.enqueue_dma source(%189 : memref<16x16x128xbf16, #tpu.memory_space<any>>) target(%191 : memref<16x16x128xbf16, #tpu.memory_space<vmem>>) target_semaphore(%193 : memref<!tpu.dma_semaphore, #tpu.memory_space<semaphore_mem>>)
      %c0_i32_151 = arith.constant 0 : i32
      %c0_i32_152 = arith.constant 0 : i32
      %c2_i32_153 = arith.constant 2 : i32
      %c0_i32_154 = arith.constant 0 : i32
      %c0_i32_155 = arith.constant 0 : i32
      %194 = tpu.memref_slice %arg3[%arg0, %181, %c0_i32_154, %c0_i32_155] : memref<2x16x16x128xbf16, #tpu.memory_space<any>> -> memref<1x1x16x128xbf16, #tpu.memory_space<any>>
      %195 = tpu.memref_squeeze %194 : memref<1x1x16x128xbf16, #tpu.memory_space<any>> -> memref<1x16x128xbf16, #tpu.memory_space<any>>
      %c17_i32_156 = arith.constant 17 : i32
      %c0_i32_157 = arith.constant 0 : i32
      %c0_i32_158 = arith.constant 0 : i32
      %196 = tpu.memref_slice %arg10[%c0_i32_151, %c17_i32_156, %c0_i32_157, %c0_i32_158] : memref<2x18x16x128xbf16, #tpu.memory_space<vmem>> -> memref<1x1x16x128xbf16, #tpu.memory_space<vmem>>
      %197 = tpu.memref_squeeze %196 : memref<1x1x16x128xbf16, #tpu.memory_space<vmem>> -> memref<1x16x128xbf16, #tpu.memory_space<vmem>>
      %198 = tpu.memref_slice %arg12[%c0_i32_152, %c2_i32_153] : memref<2x3x!tpu.dma_semaphore, #tpu.memory_space<semaphore_mem>> -> memref<1x1x!tpu.dma_semaphore, #tpu.memory_space<semaphore_mem>>
      %199 = tpu.memref_squeeze %198 : memref<1x1x!tpu.dma_semaphore, #tpu.memory_space<semaphore_mem>> -> memref<!tpu.dma_semaphore, #tpu.memory_space<semaphore_mem>>
      tpu.enqueue_dma source(%195 : memref<1x16x128xbf16, #tpu.memory_space<any>>) target(%197 : memref<1x16x128xbf16, #tpu.memory_space<vmem>>) target_semaphore(%199 : memref<!tpu.dma_semaphore, #tpu.memory_space<semaphore_mem>>)
    } else {
    }
    %c1_i32 = arith.constant 1 : i32
    %3 = arith.addi %arg1, %c1_i32 : i32
    %c1_i32_1 = arith.constant 1 : i32
    %4 = arith.cmpi slt, %3, %c1_i32_1 : i32
    %5 = arith.extui %4 : i1 to i32
    %c0_i32_2 = arith.constant 0 : i32
    %6 = arith.cmpi ne, %5, %c0_i32_2 : i32
    scf.if %6 {
      %c1_i32_94 = arith.constant 1 : i32
      %152 = arith.addi %arg1, %c1_i32_94 : i32
      %c1_i32_95 = arith.constant 1 : i32
      %153 = arith.addi %arg1, %c1_i32_95 : i32
      %c2_i32_96 = arith.constant 2 : i32
      %c0_i32_97 = arith.constant 0 : i32
      %154 = arith.cmpi eq, %c2_i32_96, %c0_i32_97 : i32
      %c1_i32_98 = arith.constant 1 : i32
      %155 = arith.select %154, %c1_i32_98, %c2_i32_96 : i32
      %156 = arith.remsi %153, %155 : i32
      %c0_i32_99 = arith.constant 0 : i32
      %157 = arith.cmpi ne, %156, %c0_i32_99 : i32
      %c0_i32_100 = arith.constant 0 : i32
      %158 = arith.cmpi slt, %156, %c0_i32_100 : i32
      %c0_i32_101 = arith.constant 0 : i32
      %159 = arith.cmpi slt, %155, %c0_i32_101 : i32
      %160 = arith.xori %158, %159 : i1
      %161 = arith.andi %160, %157 : i1
      %162 = arith.addi %156, %155 : i32
      %163 = arith.select %161, %162, %156 : i32
      %c16_i32_102 = arith.constant 16 : i32
      %164 = arith.muli %152, %c16_i32_102 : i32
      %c1_i32_103 = arith.constant 1 : i32
      %165 = arith.subi %164, %c1_i32_103 : i32
      %c0_i32_104 = arith.constant 0 : i32
      %c15_i32_105 = arith.constant 15 : i32
      %166 = arith.maxsi %c0_i32_104, %165 : i32
      %167 = arith.minsi %c15_i32_105, %166 : i32
      %c16_i32_106 = arith.constant 16 : i32
      %168 = arith.muli %152, %c16_i32_106 : i32
      %c0_i32_107 = arith.constant 0 : i32
      %c0_i32_108 = arith.constant 0 : i32
      %169 = arith.maxsi %c0_i32_107, %168 : i32
      %170 = arith.minsi %c0_i32_108, %169 : i32
      %c16_i32_109 = arith.constant 16 : i32
      %171 = arith.muli %152, %c16_i32_109 : i32
      %c16_i32_110 = arith.constant 16 : i32
      %172 = arith.addi %171, %c16_i32_110 : i32
      %c0_i32_111 = arith.constant 0 : i32
      %c15_i32_112 = arith.constant 15 : i32
      %173 = arith.maxsi %c0_i32_111, %172 : i32
      %174 = arith.minsi %c15_i32_112, %173 : i32
      %c0_i32_113 = arith.constant 0 : i32
      %c0_i32_114 = arith.constant 0 : i32
      %c0_i32_115 = arith.constant 0 : i32
      %175 = tpu.memref_slice %arg2[%arg0, %167, %c0_i32_114, %c0_i32_115] : memref<2x16x16x128xbf16, #tpu.memory_space<any>> -> memref<1x1x16x128xbf16, #tpu.memory_space<any>>
      %176 = tpu.memref_squeeze %175 : memref<1x1x16x128xbf16, #tpu.memory_space<any>> -> memref<1x16x128xbf16, #tpu.memory_space<any>>
      %c0_i32_116 = arith.constant 0 : i32
      %c0_i32_117 = arith.constant 0 : i32
      %c0_i32_118 = arith.constant 0 : i32
      %177 = tpu.memref_slice %arg9[%163, %c0_i32_116, %c0_i32_117, %c0_i32_118] : memref<2x18x16x128xbf16, #tpu.memory_space<vmem>> -> memref<1x1x16x128xbf16, #tpu.memory_space<vmem>>
      %178 = tpu.memref_squeeze %177 : memref<1x1x16x128xbf16, #tpu.memory_space<vmem>> -> memref<1x16x128xbf16, #tpu.memory_space<vmem>>
      %179 = tpu.memref_slice %arg11[%163, %c0_i32_113] : memref<2x3x!tpu.dma_semaphore, #tpu.memory_space<semaphore_mem>> -> memref<1x1x!tpu.dma_semaphore, #tpu.memory_space<semaphore_mem>>
      %180 = tpu.memref_squeeze %179 : memref<1x1x!tpu.dma_semaphore, #tpu.memory_space<semaphore_mem>> -> memref<!tpu.dma_semaphore, #tpu.memory_space<semaphore_mem>>
      tpu.enqueue_dma source(%176 : memref<1x16x128xbf16, #tpu.memory_space<any>>) target(%178 : memref<1x16x128xbf16, #tpu.memory_space<vmem>>) target_semaphore(%180 : memref<!tpu.dma_semaphore, #tpu.memory_space<semaphore_mem>>)
      %c1_i32_119 = arith.constant 1 : i32
      %c0_i32_120 = arith.constant 0 : i32
      %c0_i32_121 = arith.constant 0 : i32
      %181 = tpu.memref_slice %arg2[%arg0, %170, %c0_i32_120, %c0_i32_121] : memref<2x16x16x128xbf16, #tpu.memory_space<any>> -> memref<1x16x16x128xbf16, #tpu.memory_space<any>>
      %182 = tpu.memref_squeeze %181 : memref<1x16x16x128xbf16, #tpu.memory_space<any>> -> memref<16x16x128xbf16, #tpu.memory_space<any>>
      %c1_i32_122 = arith.constant 1 : i32
      %c0_i32_123 = arith.constant 0 : i32
      %c0_i32_124 = arith.constant 0 : i32
      %183 = tpu.memref_slice %arg9[%163, %c1_i32_122, %c0_i32_123, %c0_i32_124] : memref<2x18x16x128xbf16, #tpu.memory_space<vmem>> -> memref<1x16x16x128xbf16, #tpu.memory_space<vmem>>
      %184 = tpu.memref_squeeze %183 : memref<1x16x16x128xbf16, #tpu.memory_space<vmem>> -> memref<16x16x128xbf16, #tpu.memory_space<vmem>>
      %185 = tpu.memref_slice %arg11[%163, %c1_i32_119] : memref<2x3x!tpu.dma_semaphore, #tpu.memory_space<semaphore_mem>> -> memref<1x1x!tpu.dma_semaphore, #tpu.memory_space<semaphore_mem>>
      %186 = tpu.memref_squeeze %185 : memref<1x1x!tpu.dma_semaphore, #tpu.memory_space<semaphore_mem>> -> memref<!tpu.dma_semaphore, #tpu.memory_space<semaphore_mem>>
      tpu.enqueue_dma source(%182 : memref<16x16x128xbf16, #tpu.memory_space<any>>) target(%184 : memref<16x16x128xbf16, #tpu.memory_space<vmem>>) target_semaphore(%186 : memref<!tpu.dma_semaphore, #tpu.memory_space<semaphore_mem>>)
      %c2_i32_125 = arith.constant 2 : i32
      %c0_i32_126 = arith.constant 0 : i32
      %c0_i32_127 = arith.constant 0 : i32
      %187 = tpu.memref_slice %arg2[%arg0, %174, %c0_i32_126, %c0_i32_127] : memref<2x16x16x128xbf16, #tpu.memory_space<any>> -> memref<1x1x16x128xbf16, #tpu.memory_space<any>>
      %188 = tpu.memref_squeeze %187 : memref<1x1x16x128xbf16, #tpu.memory_space<any>> -> memref<1x16x128xbf16, #tpu.memory_space<any>>
      %c17_i32_128 = arith.constant 17 : i32
      %c0_i32_129 = arith.constant 0 : i32
      %c0_i32_130 = arith.constant 0 : i32
      %189 = tpu.memref_slice %arg9[%163, %c17_i32_128, %c0_i32_129, %c0_i32_130] : memref<2x18x16x128xbf16, #tpu.memory_space<vmem>> -> memref<1x1x16x128xbf16, #tpu.memory_space<vmem>>
      %190 = tpu.memref_squeeze %189 : memref<1x1x16x128xbf16, #tpu.memory_space<vmem>> -> memref<1x16x128xbf16, #tpu.memory_space<vmem>>
      %191 = tpu.memref_slice %arg11[%163, %c2_i32_125] : memref<2x3x!tpu.dma_semaphore, #tpu.memory_space<semaphore_mem>> -> memref<1x1x!tpu.dma_semaphore, #tpu.memory_space<semaphore_mem>>
      %192 = tpu.memref_squeeze %191 : memref<1x1x!tpu.dma_semaphore, #tpu.memory_space<semaphore_mem>> -> memref<!tpu.dma_semaphore, #tpu.memory_space<semaphore_mem>>
      tpu.enqueue_dma source(%188 : memref<1x16x128xbf16, #tpu.memory_space<any>>) target(%190 : memref<1x16x128xbf16, #tpu.memory_space<vmem>>) target_semaphore(%192 : memref<!tpu.dma_semaphore, #tpu.memory_space<semaphore_mem>>)
      %c16_i32_131 = arith.constant 16 : i32
      %193 = arith.muli %152, %c16_i32_131 : i32
      %c1_i32_132 = arith.constant 1 : i32
      %194 = arith.subi %193, %c1_i32_132 : i32
      %c0_i32_133 = arith.constant 0 : i32
      %c15_i32_134 = arith.constant 15 : i32
      %195 = arith.maxsi %c0_i32_133, %194 : i32
      %196 = arith.minsi %c15_i32_134, %195 : i32
      %c16_i32_135 = arith.constant 16 : i32
      %197 = arith.muli %152, %c16_i32_135 : i32
      %c0_i32_136 = arith.constant 0 : i32
      %c0_i32_137 = arith.constant 0 : i32
      %198 = arith.maxsi %c0_i32_136, %197 : i32
      %199 = arith.minsi %c0_i32_137, %198 : i32
      %c16_i32_138 = arith.constant 16 : i32
      %200 = arith.muli %152, %c16_i32_138 : i32
      %c16_i32_139 = arith.constant 16 : i32
      %201 = arith.addi %200, %c16_i32_139 : i32
      %c0_i32_140 = arith.constant 0 : i32
      %c15_i32_141 = arith.constant 15 : i32
      %202 = arith.maxsi %c0_i32_140, %201 : i32
      %203 = arith.minsi %c15_i32_141, %202 : i32
      %c0_i32_142 = arith.constant 0 : i32
      %c0_i32_143 = arith.constant 0 : i32
      %c0_i32_144 = arith.constant 0 : i32
      %204 = tpu.memref_slice %arg3[%arg0, %196, %c0_i32_143, %c0_i32_144] : memref<2x16x16x128xbf16, #tpu.memory_space<any>> -> memref<1x1x16x128xbf16, #tpu.memory_space<any>>
      %205 = tpu.memref_squeeze %204 : memref<1x1x16x128xbf16, #tpu.memory_space<any>> -> memref<1x16x128xbf16, #tpu.memory_space<any>>
      %c0_i32_145 = arith.constant 0 : i32
      %c0_i32_146 = arith.constant 0 : i32
      %c0_i32_147 = arith.constant 0 : i32
      %206 = tpu.memref_slice %arg10[%163, %c0_i32_145, %c0_i32_146, %c0_i32_147] : memref<2x18x16x128xbf16, #tpu.memory_space<vmem>> -> memref<1x1x16x128xbf16, #tpu.memory_space<vmem>>
      %207 = tpu.memref_squeeze %206 : memref<1x1x16x128xbf16, #tpu.memory_space<vmem>> -> memref<1x16x128xbf16, #tpu.memory_space<vmem>>
      %208 = tpu.memref_slice %arg12[%163, %c0_i32_142] : memref<2x3x!tpu.dma_semaphore, #tpu.memory_space<semaphore_mem>> -> memref<1x1x!tpu.dma_semaphore, #tpu.memory_space<semaphore_mem>>
      %209 = tpu.memref_squeeze %208 : memref<1x1x!tpu.dma_semaphore, #tpu.memory_space<semaphore_mem>> -> memref<!tpu.dma_semaphore, #tpu.memory_space<semaphore_mem>>
      tpu.enqueue_dma source(%205 : memref<1x16x128xbf16, #tpu.memory_space<any>>) target(%207 : memref<1x16x128xbf16, #tpu.memory_space<vmem>>) target_semaphore(%209 : memref<!tpu.dma_semaphore, #tpu.memory_space<semaphore_mem>>)
      %c1_i32_148 = arith.constant 1 : i32
      %c0_i32_149 = arith.constant 0 : i32
      %c0_i32_150 = arith.constant 0 : i32
      %210 = tpu.memref_slice %arg3[%arg0, %199, %c0_i32_149, %c0_i32_150] : memref<2x16x16x128xbf16, #tpu.memory_space<any>> -> memref<1x16x16x128xbf16, #tpu.memory_space<any>>
      %211 = tpu.memref_squeeze %210 : memref<1x16x16x128xbf16, #tpu.memory_space<any>> -> memref<16x16x128xbf16, #tpu.memory_space<any>>
      %c1_i32_151 = arith.constant 1 : i32
      %c0_i32_152 = arith.constant 0 : i32
      %c0_i32_153 = arith.constant 0 : i32
      %212 = tpu.memref_slice %arg10[%163, %c1_i32_151, %c0_i32_152, %c0_i32_153] : memref<2x18x16x128xbf16, #tpu.memory_space<vmem>> -> memref<1x16x16x128xbf16, #tpu.memory_space<vmem>>
      %213 = tpu.memref_squeeze %212 : memref<1x16x16x128xbf16, #tpu.memory_space<vmem>> -> memref<16x16x128xbf16, #tpu.memory_space<vmem>>
      %214 = tpu.memref_slice %arg12[%163, %c1_i32_148] : memref<2x3x!tpu.dma_semaphore, #tpu.memory_space<semaphore_mem>> -> memref<1x1x!tpu.dma_semaphore, #tpu.memory_space<semaphore_mem>>
      %215 = tpu.memref_squeeze %214 : memref<1x1x!tpu.dma_semaphore, #tpu.memory_space<semaphore_mem>> -> memref<!tpu.dma_semaphore, #tpu.memory_space<semaphore_mem>>
      tpu.enqueue_dma source(%211 : memref<16x16x128xbf16, #tpu.memory_space<any>>) target(%213 : memref<16x16x128xbf16, #tpu.memory_space<vmem>>) target_semaphore(%215 : memref<!tpu.dma_semaphore, #tpu.memory_space<semaphore_mem>>)
      %c2_i32_154 = arith.constant 2 : i32
      %c0_i32_155 = arith.constant 0 : i32
      %c0_i32_156 = arith.constant 0 : i32
      %216 = tpu.memref_slice %arg3[%arg0, %203, %c0_i32_155, %c0_i32_156] : memref<2x16x16x128xbf16, #tpu.memory_space<any>> -> memref<1x1x16x128xbf16, #tpu.memory_space<any>>
      %217 = tpu.memref_squeeze %216 : memref<1x1x16x128xbf16, #tpu.memory_space<any>> -> memref<1x16x128xbf16, #tpu.memory_space<any>>
      %c17_i32_157 = arith.constant 17 : i32
      %c0_i32_158 = arith.constant 0 : i32
      %c0_i32_159 = arith.constant 0 : i32
      %218 = tpu.memref_slice %arg10[%163, %c17_i32_157, %c0_i32_158, %c0_i32_159] : memref<2x18x16x128xbf16, #tpu.memory_space<vmem>> -> memref<1x1x16x128xbf16, #tpu.memory_space<vmem>>
      %219 = tpu.memref_squeeze %218 : memref<1x1x16x128xbf16, #tpu.memory_space<vmem>> -> memref<1x16x128xbf16, #tpu.memory_space<vmem>>
      %220 = tpu.memref_slice %arg12[%163, %c2_i32_154] : memref<2x3x!tpu.dma_semaphore, #tpu.memory_space<semaphore_mem>> -> memref<1x1x!tpu.dma_semaphore, #tpu.memory_space<semaphore_mem>>
      %221 = tpu.memref_squeeze %220 : memref<1x1x!tpu.dma_semaphore, #tpu.memory_space<semaphore_mem>> -> memref<!tpu.dma_semaphore, #tpu.memory_space<semaphore_mem>>
      tpu.enqueue_dma source(%217 : memref<1x16x128xbf16, #tpu.memory_space<any>>) target(%219 : memref<1x16x128xbf16, #tpu.memory_space<vmem>>) target_semaphore(%221 : memref<!tpu.dma_semaphore, #tpu.memory_space<semaphore_mem>>)
    } else {
    }
    %c2_i32 = arith.constant 2 : i32
    %c0_i32_3 = arith.constant 0 : i32
    %7 = arith.cmpi eq, %c2_i32, %c0_i32_3 : i32
    %c1_i32_4 = arith.constant 1 : i32
    %8 = arith.select %7, %c1_i32_4, %c2_i32 : i32
    %9 = arith.remsi %arg1, %8 : i32
    %c0_i32_5 = arith.constant 0 : i32
    %10 = arith.cmpi ne, %9, %c0_i32_5 : i32
    %c0_i32_6 = arith.constant 0 : i32
    %11 = arith.cmpi slt, %9, %c0_i32_6 : i32
    %c0_i32_7 = arith.constant 0 : i32
    %12 = arith.cmpi slt, %8, %c0_i32_7 : i32
    %13 = arith.xori %11, %12 : i1
    %14 = arith.andi %13, %10 : i1
    %15 = arith.addi %9, %8 : i32
    %16 = arith.select %14, %15, %9 : i32
    %c16_i32 = arith.constant 16 : i32
    %17 = arith.muli %arg1, %c16_i32 : i32
    %c1_i32_8 = arith.constant 1 : i32
    %18 = arith.subi %17, %c1_i32_8 : i32
    %c0_i32_9 = arith.constant 0 : i32
    %c15_i32 = arith.constant 15 : i32
    %19 = arith.maxsi %c0_i32_9, %18 : i32
    %20 = arith.minsi %c15_i32, %19 : i32
    %c16_i32_10 = arith.constant 16 : i32
    %21 = arith.muli %arg1, %c16_i32_10 : i32
    %c0_i32_11 = arith.constant 0 : i32
    %c0_i32_12 = arith.constant 0 : i32
    %22 = arith.maxsi %c0_i32_11, %21 : i32
    %23 = arith.minsi %c0_i32_12, %22 : i32
    %c16_i32_13 = arith.constant 16 : i32
    %24 = arith.muli %arg1, %c16_i32_13 : i32
    %c16_i32_14 = arith.constant 16 : i32
    %25 = arith.addi %24, %c16_i32_14 : i32
    %c0_i32_15 = arith.constant 0 : i32
    %c15_i32_16 = arith.constant 15 : i32
    %26 = arith.maxsi %c0_i32_15, %25 : i32
    %27 = arith.minsi %c15_i32_16, %26 : i32
    %c0_i32_17 = arith.constant 0 : i32
    %c0_i32_18 = arith.constant 0 : i32
    %c0_i32_19 = arith.constant 0 : i32
    %28 = tpu.memref_slice %arg2[%arg0, %20, %c0_i32_18, %c0_i32_19] : memref<2x16x16x128xbf16, #tpu.memory_space<any>> -> memref<1x1x16x128xbf16, #tpu.memory_space<any>>
    %29 = tpu.memref_squeeze %28 : memref<1x1x16x128xbf16, #tpu.memory_space<any>> -> memref<1x16x128xbf16, #tpu.memory_space<any>>
    %c0_i32_20 = arith.constant 0 : i32
    %c0_i32_21 = arith.constant 0 : i32
    %c0_i32_22 = arith.constant 0 : i32
    %30 = tpu.memref_slice %arg9[%16, %c0_i32_20, %c0_i32_21, %c0_i32_22] : memref<2x18x16x128xbf16, #tpu.memory_space<vmem>> -> memref<1x1x16x128xbf16, #tpu.memory_space<vmem>>
    %31 = tpu.memref_squeeze %30 : memref<1x1x16x128xbf16, #tpu.memory_space<vmem>> -> memref<1x16x128xbf16, #tpu.memory_space<vmem>>
    %32 = tpu.memref_slice %arg11[%16, %c0_i32_17] : memref<2x3x!tpu.dma_semaphore, #tpu.memory_space<semaphore_mem>> -> memref<1x1x!tpu.dma_semaphore, #tpu.memory_space<semaphore_mem>>
    %33 = tpu.memref_squeeze %32 : memref<1x1x!tpu.dma_semaphore, #tpu.memory_space<semaphore_mem>> -> memref<!tpu.dma_semaphore, #tpu.memory_space<semaphore_mem>>
    tpu.wait_dma2 semaphore(%33 : memref<!tpu.dma_semaphore, #tpu.memory_space<semaphore_mem>>) src(%29 : memref<1x16x128xbf16, #tpu.memory_space<any>>) dst(%31 : memref<1x16x128xbf16, #tpu.memory_space<vmem>>)
    %c1_i32_23 = arith.constant 1 : i32
    %c0_i32_24 = arith.constant 0 : i32
    %c0_i32_25 = arith.constant 0 : i32
    %34 = tpu.memref_slice %arg2[%arg0, %23, %c0_i32_24, %c0_i32_25] : memref<2x16x16x128xbf16, #tpu.memory_space<any>> -> memref<1x16x16x128xbf16, #tpu.memory_space<any>>
    %35 = tpu.memref_squeeze %34 : memref<1x16x16x128xbf16, #tpu.memory_space<any>> -> memref<16x16x128xbf16, #tpu.memory_space<any>>
    %c1_i32_26 = arith.constant 1 : i32
    %c0_i32_27 = arith.constant 0 : i32
    %c0_i32_28 = arith.constant 0 : i32
    %36 = tpu.memref_slice %arg9[%16, %c1_i32_26, %c0_i32_27, %c0_i32_28] : memref<2x18x16x128xbf16, #tpu.memory_space<vmem>> -> memref<1x16x16x128xbf16, #tpu.memory_space<vmem>>
    %37 = tpu.memref_squeeze %36 : memref<1x16x16x128xbf16, #tpu.memory_space<vmem>> -> memref<16x16x128xbf16, #tpu.memory_space<vmem>>
    %38 = tpu.memref_slice %arg11[%16, %c1_i32_23] : memref<2x3x!tpu.dma_semaphore, #tpu.memory_space<semaphore_mem>> -> memref<1x1x!tpu.dma_semaphore, #tpu.memory_space<semaphore_mem>>
    %39 = tpu.memref_squeeze %38 : memref<1x1x!tpu.dma_semaphore, #tpu.memory_space<semaphore_mem>> -> memref<!tpu.dma_semaphore, #tpu.memory_space<semaphore_mem>>
    tpu.wait_dma2 semaphore(%39 : memref<!tpu.dma_semaphore, #tpu.memory_space<semaphore_mem>>) src(%35 : memref<16x16x128xbf16, #tpu.memory_space<any>>) dst(%37 : memref<16x16x128xbf16, #tpu.memory_space<vmem>>)
    %c2_i32_29 = arith.constant 2 : i32
    %c0_i32_30 = arith.constant 0 : i32
    %c0_i32_31 = arith.constant 0 : i32
    %40 = tpu.memref_slice %arg2[%arg0, %27, %c0_i32_30, %c0_i32_31] : memref<2x16x16x128xbf16, #tpu.memory_space<any>> -> memref<1x1x16x128xbf16, #tpu.memory_space<any>>
    %41 = tpu.memref_squeeze %40 : memref<1x1x16x128xbf16, #tpu.memory_space<any>> -> memref<1x16x128xbf16, #tpu.memory_space<any>>
    %c17_i32 = arith.constant 17 : i32
    %c0_i32_32 = arith.constant 0 : i32
    %c0_i32_33 = arith.constant 0 : i32
    %42 = tpu.memref_slice %arg9[%16, %c17_i32, %c0_i32_32, %c0_i32_33] : memref<2x18x16x128xbf16, #tpu.memory_space<vmem>> -> memref<1x1x16x128xbf16, #tpu.memory_space<vmem>>
    %43 = tpu.memref_squeeze %42 : memref<1x1x16x128xbf16, #tpu.memory_space<vmem>> -> memref<1x16x128xbf16, #tpu.memory_space<vmem>>
    %44 = tpu.memref_slice %arg11[%16, %c2_i32_29] : memref<2x3x!tpu.dma_semaphore, #tpu.memory_space<semaphore_mem>> -> memref<1x1x!tpu.dma_semaphore, #tpu.memory_space<semaphore_mem>>
    %45 = tpu.memref_squeeze %44 : memref<1x1x!tpu.dma_semaphore, #tpu.memory_space<semaphore_mem>> -> memref<!tpu.dma_semaphore, #tpu.memory_space<semaphore_mem>>
    tpu.wait_dma2 semaphore(%45 : memref<!tpu.dma_semaphore, #tpu.memory_space<semaphore_mem>>) src(%41 : memref<1x16x128xbf16, #tpu.memory_space<any>>) dst(%43 : memref<1x16x128xbf16, #tpu.memory_space<vmem>>)
    %c16_i32_34 = arith.constant 16 : i32
    %46 = arith.muli %arg1, %c16_i32_34 : i32
    %c1_i32_35 = arith.constant 1 : i32
    %47 = arith.subi %46, %c1_i32_35 : i32
    %c0_i32_36 = arith.constant 0 : i32
    %c15_i32_37 = arith.constant 15 : i32
    %48 = arith.maxsi %c0_i32_36, %47 : i32
    %49 = arith.minsi %c15_i32_37, %48 : i32
    %c16_i32_38 = arith.constant 16 : i32
    %50 = arith.muli %arg1, %c16_i32_38 : i32
    %c0_i32_39 = arith.constant 0 : i32
    %c0_i32_40 = arith.constant 0 : i32
    %51 = arith.maxsi %c0_i32_39, %50 : i32
    %52 = arith.minsi %c0_i32_40, %51 : i32
    %c16_i32_41 = arith.constant 16 : i32
    %53 = arith.muli %arg1, %c16_i32_41 : i32
    %c16_i32_42 = arith.constant 16 : i32
    %54 = arith.addi %53, %c16_i32_42 : i32
    %c0_i32_43 = arith.constant 0 : i32
    %c15_i32_44 = arith.constant 15 : i32
    %55 = arith.maxsi %c0_i32_43, %54 : i32
    %56 = arith.minsi %c15_i32_44, %55 : i32
    %c0_i32_45 = arith.constant 0 : i32
    %c0_i32_46 = arith.constant 0 : i32
    %c0_i32_47 = arith.constant 0 : i32
    %57 = tpu.memref_slice %arg3[%arg0, %49, %c0_i32_46, %c0_i32_47] : memref<2x16x16x128xbf16, #tpu.memory_space<any>> -> memref<1x1x16x128xbf16, #tpu.memory_space<any>>
    %58 = tpu.memref_squeeze %57 : memref<1x1x16x128xbf16, #tpu.memory_space<any>> -> memref<1x16x128xbf16, #tpu.memory_space<any>>
    %c0_i32_48 = arith.constant 0 : i32
    %c0_i32_49 = arith.constant 0 : i32
    %c0_i32_50 = arith.constant 0 : i32
    %59 = tpu.memref_slice %arg10[%16, %c0_i32_48, %c0_i32_49, %c0_i32_50] : memref<2x18x16x128xbf16, #tpu.memory_space<vmem>> -> memref<1x1x16x128xbf16, #tpu.memory_space<vmem>>
    %60 = tpu.memref_squeeze %59 : memref<1x1x16x128xbf16, #tpu.memory_space<vmem>> -> memref<1x16x128xbf16, #tpu.memory_space<vmem>>
    %61 = tpu.memref_slice %arg12[%16, %c0_i32_45] : memref<2x3x!tpu.dma_semaphore, #tpu.memory_space<semaphore_mem>> -> memref<1x1x!tpu.dma_semaphore, #tpu.memory_space<semaphore_mem>>
    %62 = tpu.memref_squeeze %61 : memref<1x1x!tpu.dma_semaphore, #tpu.memory_space<semaphore_mem>> -> memref<!tpu.dma_semaphore, #tpu.memory_space<semaphore_mem>>
    tpu.wait_dma2 semaphore(%62 : memref<!tpu.dma_semaphore, #tpu.memory_space<semaphore_mem>>) src(%58 : memref<1x16x128xbf16, #tpu.memory_space<any>>) dst(%60 : memref<1x16x128xbf16, #tpu.memory_space<vmem>>)
    %c1_i32_51 = arith.constant 1 : i32
    %c0_i32_52 = arith.constant 0 : i32
    %c0_i32_53 = arith.constant 0 : i32
    %63 = tpu.memref_slice %arg3[%arg0, %52, %c0_i32_52, %c0_i32_53] : memref<2x16x16x128xbf16, #tpu.memory_space<any>> -> memref<1x16x16x128xbf16, #tpu.memory_space<any>>
    %64 = tpu.memref_squeeze %63 : memref<1x16x16x128xbf16, #tpu.memory_space<any>> -> memref<16x16x128xbf16, #tpu.memory_space<any>>
    %c1_i32_54 = arith.constant 1 : i32
    %c0_i32_55 = arith.constant 0 : i32
    %c0_i32_56 = arith.constant 0 : i32
    %65 = tpu.memref_slice %arg10[%16, %c1_i32_54, %c0_i32_55, %c0_i32_56] : memref<2x18x16x128xbf16, #tpu.memory_space<vmem>> -> memref<1x16x16x128xbf16, #tpu.memory_space<vmem>>
    %66 = tpu.memref_squeeze %65 : memref<1x16x16x128xbf16, #tpu.memory_space<vmem>> -> memref<16x16x128xbf16, #tpu.memory_space<vmem>>
    %67 = tpu.memref_slice %arg12[%16, %c1_i32_51] : memref<2x3x!tpu.dma_semaphore, #tpu.memory_space<semaphore_mem>> -> memref<1x1x!tpu.dma_semaphore, #tpu.memory_space<semaphore_mem>>
    %68 = tpu.memref_squeeze %67 : memref<1x1x!tpu.dma_semaphore, #tpu.memory_space<semaphore_mem>> -> memref<!tpu.dma_semaphore, #tpu.memory_space<semaphore_mem>>
    tpu.wait_dma2 semaphore(%68 : memref<!tpu.dma_semaphore, #tpu.memory_space<semaphore_mem>>) src(%64 : memref<16x16x128xbf16, #tpu.memory_space<any>>) dst(%66 : memref<16x16x128xbf16, #tpu.memory_space<vmem>>)
    %c2_i32_57 = arith.constant 2 : i32
    %c0_i32_58 = arith.constant 0 : i32
    %c0_i32_59 = arith.constant 0 : i32
    %69 = tpu.memref_slice %arg3[%arg0, %56, %c0_i32_58, %c0_i32_59] : memref<2x16x16x128xbf16, #tpu.memory_space<any>> -> memref<1x1x16x128xbf16, #tpu.memory_space<any>>
    %70 = tpu.memref_squeeze %69 : memref<1x1x16x128xbf16, #tpu.memory_space<any>> -> memref<1x16x128xbf16, #tpu.memory_space<any>>
    %c17_i32_60 = arith.constant 17 : i32
    %c0_i32_61 = arith.constant 0 : i32
    %c0_i32_62 = arith.constant 0 : i32
    %71 = tpu.memref_slice %arg10[%16, %c17_i32_60, %c0_i32_61, %c0_i32_62] : memref<2x18x16x128xbf16, #tpu.memory_space<vmem>> -> memref<1x1x16x128xbf16, #tpu.memory_space<vmem>>
    %72 = tpu.memref_squeeze %71 : memref<1x1x16x128xbf16, #tpu.memory_space<vmem>> -> memref<1x16x128xbf16, #tpu.memory_space<vmem>>
    %73 = tpu.memref_slice %arg12[%16, %c2_i32_57] : memref<2x3x!tpu.dma_semaphore, #tpu.memory_space<semaphore_mem>> -> memref<1x1x!tpu.dma_semaphore, #tpu.memory_space<semaphore_mem>>
    %74 = tpu.memref_squeeze %73 : memref<1x1x!tpu.dma_semaphore, #tpu.memory_space<semaphore_mem>> -> memref<!tpu.dma_semaphore, #tpu.memory_space<semaphore_mem>>
    tpu.wait_dma2 semaphore(%74 : memref<!tpu.dma_semaphore, #tpu.memory_space<semaphore_mem>>) src(%70 : memref<1x16x128xbf16, #tpu.memory_space<any>>) dst(%72 : memref<1x16x128xbf16, #tpu.memory_space<vmem>>)
    %75 = tpu.iota {dimensions = array<i32: 0>} : vector<18x1x1xi32>
    %c0_i32_63 = arith.constant 0 : i32
    %76 = arith.cmpi eq, %arg1, %c0_i32_63 : i32
    %c1_i32_64 = arith.constant 1 : i32
    %c0_i32_65 = arith.constant 0 : i32
    %77 = arith.select %76, %c1_i32_64, %c0_i32_65 : i32
    %c0_i32_66 = arith.constant 0 : i32
    %78 = arith.cmpi eq, %arg1, %c0_i32_66 : i32
    %c17_i32_67 = arith.constant 17 : i32
    %c18_i32 = arith.constant 18 : i32
    %79 = arith.select %78, %c17_i32_67, %c18_i32 : i32
    %80 = vector.broadcast %77 : i32 to vector<18x1x1xi32>
    %81 = arith.cmpi sge, %75, %80 : vector<18x1x1xi32>
    %82 = vector.broadcast %79 : i32 to vector<18x1x1xi32>
    %83 = arith.cmpi slt, %75, %82 : vector<18x1x1xi32>
    %84 = arith.andi %81, %83 : vector<18x1x1xi1>
    %85 = arith.index_cast %16 : i32 to index
    %c0 = arith.constant 0 : index
    %c0_68 = arith.constant 0 : index
    %c0_69 = arith.constant 0 : index
    %86 = vector.load %arg9[%85, %c0, %c0_68, %c0_69] : memref<2x18x16x128xbf16, #tpu.memory_space<vmem>>, vector<1x18x16x128xbf16>
    %87 = vector.shape_cast %86 : vector<1x18x16x128xbf16> to vector<18x16x128xbf16>
    %c0_i32_70 = arith.constant 0 : i32
    %88 = arith.sitofp %c0_i32_70 : i32 to bf16
    %89 = vector.shape_cast %84 : vector<18x1x1xi1> to vector<18x1x1xi1>
    %90 = vector.broadcast %89 : vector<18x1x1xi1> to vector<18x16x128xi1>
    %91 = vector.broadcast %88 : bf16 to vector<18x16x128xbf16>
    %92 = arith.select %90, %87, %91 : vector<18x16x128xi1>, vector<18x16x128xbf16>
    %cst = arith.constant 0.000000e+00 : bf16
    %93 = vector.broadcast %cst : bf16 to vector<18x1x128xbf16>
    %94 = vector.extract_strided_slice %92 {offsets = [0, 0, 0], sizes = [18, 15, 128], strides = [1, 1, 1]} : vector<18x16x128xbf16> to vector<18x15x128xbf16>
    %95 = tpu.concatenate %93, %94 in 1 : vector<18x1x128xbf16>, vector<18x15x128xbf16> -> vector<18x16x128xbf16>
    %96 = vector.extract_strided_slice %92 {offsets = [0, 1, 0], sizes = [18, 15, 128], strides = [1, 1, 1]} : vector<18x16x128xbf16> to vector<18x15x128xbf16>
    %97 = tpu.concatenate %96, %93 in 1 : vector<18x15x128xbf16>, vector<18x1x128xbf16> -> vector<18x16x128xbf16>
    %98 = vector.extract_strided_slice %95 {offsets = [0, 0, 0], sizes = [16, 16, 128], strides = [1, 1, 1]} : vector<18x16x128xbf16> to vector<16x16x128xbf16>
    %99 = vector.extract_strided_slice %92 {offsets = [0, 0, 0], sizes = [16, 16, 128], strides = [1, 1, 1]} : vector<18x16x128xbf16> to vector<16x16x128xbf16>
    %100 = vector.extract_strided_slice %97 {offsets = [0, 0, 0], sizes = [16, 16, 128], strides = [1, 1, 1]} : vector<18x16x128xbf16> to vector<16x16x128xbf16>
    %101 = vector.extract_strided_slice %95 {offsets = [1, 0, 0], sizes = [16, 16, 128], strides = [1, 1, 1]} : vector<18x16x128xbf16> to vector<16x16x128xbf16>
    %102 = vector.extract_strided_slice %92 {offsets = [1, 0, 0], sizes = [16, 16, 128], strides = [1, 1, 1]} : vector<18x16x128xbf16> to vector<16x16x128xbf16>
    %103 = vector.extract_strided_slice %97 {offsets = [1, 0, 0], sizes = [16, 16, 128], strides = [1, 1, 1]} : vector<18x16x128xbf16> to vector<16x16x128xbf16>
    %104 = vector.extract_strided_slice %95 {offsets = [2, 0, 0], sizes = [16, 16, 128], strides = [1, 1, 1]} : vector<18x16x128xbf16> to vector<16x16x128xbf16>
    %105 = vector.extract_strided_slice %92 {offsets = [2, 0, 0], sizes = [16, 16, 128], strides = [1, 1, 1]} : vector<18x16x128xbf16> to vector<16x16x128xbf16>
    %106 = vector.extract_strided_slice %97 {offsets = [2, 0, 0], sizes = [16, 16, 128], strides = [1, 1, 1]} : vector<18x16x128xbf16> to vector<16x16x128xbf16>
    %107 = tpu.concatenate %98, %99, %100, %101, %102, %103, %104, %105, %106 in 2 : vector<16x16x128xbf16>, vector<16x16x128xbf16>, vector<16x16x128xbf16>, vector<16x16x128xbf16>, vector<16x16x128xbf16>, vector<16x16x128xbf16>, vector<16x16x128xbf16>, vector<16x16x128xbf16>, vector<16x16x128xbf16> -> vector<16x16x1152xbf16>
    %108 = vector.shape_cast %107 : vector<16x16x1152xbf16> to vector<256x1152xbf16>
    %c0_71 = arith.constant 0 : index
    %c0_72 = arith.constant 0 : index
    %109 = vector.load %arg4[%c0_71, %c0_72] : memref<1152x128xbf16, #tpu.memory_space<vmem>>, vector<1152x128xbf16>
    %cst_73 = arith.constant dense<0.000000e+00> : vector<256x128xf32>
    %110 = tpu.matmul %108, %109, %cst_73 {dimension_numbers = #tpu.dot_dimension_numbers<[1], [0], [0], [1], [0, 0, 1, 1], [], []>} : vector<256x1152xbf16>, vector<1152x128xbf16>, vector<256x128xf32> -> vector<256x128xf32>
    %111 = arith.index_cast %16 : i32 to index
    %c0_74 = arith.constant 0 : index
    %c0_75 = arith.constant 0 : index
    %c0_76 = arith.constant 0 : index
    %112 = vector.load %arg10[%111, %c0_74, %c0_75, %c0_76] : memref<2x18x16x128xbf16, #tpu.memory_space<vmem>>, vector<1x18x16x128xbf16>
    %113 = vector.shape_cast %112 : vector<1x18x16x128xbf16> to vector<18x16x128xbf16>
    %c0_i32_77 = arith.constant 0 : i32
    %114 = arith.sitofp %c0_i32_77 : i32 to bf16
    %115 = vector.shape_cast %84 : vector<18x1x1xi1> to vector<18x1x1xi1>
    %116 = vector.broadcast %115 : vector<18x1x1xi1> to vector<18x16x128xi1>
    %117 = vector.broadcast %114 : bf16 to vector<18x16x128xbf16>
    %118 = arith.select %116, %113, %117 : vector<18x16x128xi1>, vector<18x16x128xbf16>
    %cst_78 = arith.constant 0.000000e+00 : bf16
    %119 = vector.broadcast %cst_78 : bf16 to vector<18x1x128xbf16>
    %120 = vector.extract_strided_slice %118 {offsets = [0, 0, 0], sizes = [18, 15, 128], strides = [1, 1, 1]} : vector<18x16x128xbf16> to vector<18x15x128xbf16>
    %121 = tpu.concatenate %119, %120 in 1 : vector<18x1x128xbf16>, vector<18x15x128xbf16> -> vector<18x16x128xbf16>
    %122 = vector.extract_strided_slice %118 {offsets = [0, 1, 0], sizes = [18, 15, 128], strides = [1, 1, 1]} : vector<18x16x128xbf16> to vector<18x15x128xbf16>
    %123 = tpu.concatenate %122, %119 in 1 : vector<18x15x128xbf16>, vector<18x1x128xbf16> -> vector<18x16x128xbf16>
    %124 = vector.extract_strided_slice %121 {offsets = [0, 0, 0], sizes = [16, 16, 128], strides = [1, 1, 1]} : vector<18x16x128xbf16> to vector<16x16x128xbf16>
    %125 = vector.extract_strided_slice %118 {offsets = [0, 0, 0], sizes = [16, 16, 128], strides = [1, 1, 1]} : vector<18x16x128xbf16> to vector<16x16x128xbf16>
    %126 = vector.extract_strided_slice %123 {offsets = [0, 0, 0], sizes = [16, 16, 128], strides = [1, 1, 1]} : vector<18x16x128xbf16> to vector<16x16x128xbf16>
    %127 = vector.extract_strided_slice %121 {offsets = [1, 0, 0], sizes = [16, 16, 128], strides = [1, 1, 1]} : vector<18x16x128xbf16> to vector<16x16x128xbf16>
    %128 = vector.extract_strided_slice %118 {offsets = [1, 0, 0], sizes = [16, 16, 128], strides = [1, 1, 1]} : vector<18x16x128xbf16> to vector<16x16x128xbf16>
    %129 = vector.extract_strided_slice %123 {offsets = [1, 0, 0], sizes = [16, 16, 128], strides = [1, 1, 1]} : vector<18x16x128xbf16> to vector<16x16x128xbf16>
    %130 = vector.extract_strided_slice %121 {offsets = [2, 0, 0], sizes = [16, 16, 128], strides = [1, 1, 1]} : vector<18x16x128xbf16> to vector<16x16x128xbf16>
    %131 = vector.extract_strided_slice %118 {offsets = [2, 0, 0], sizes = [16, 16, 128], strides = [1, 1, 1]} : vector<18x16x128xbf16> to vector<16x16x128xbf16>
    %132 = vector.extract_strided_slice %123 {offsets = [2, 0, 0], sizes = [16, 16, 128], strides = [1, 1, 1]} : vector<18x16x128xbf16> to vector<16x16x128xbf16>
    %133 = tpu.concatenate %124, %125, %126, %127, %128, %129, %130, %131, %132 in 2 : vector<16x16x128xbf16>, vector<16x16x128xbf16>, vector<16x16x128xbf16>, vector<16x16x128xbf16>, vector<16x16x128xbf16>, vector<16x16x128xbf16>, vector<16x16x128xbf16>, vector<16x16x128xbf16>, vector<16x16x128xbf16> -> vector<16x16x1152xbf16>
    %134 = vector.shape_cast %133 : vector<16x16x1152xbf16> to vector<256x1152xbf16>
    %c0_79 = arith.constant 0 : index
    %c0_80 = arith.constant 0 : index
    %135 = vector.load %arg5[%c0_79, %c0_80] : memref<1152x128xbf16, #tpu.memory_space<vmem>>, vector<1152x128xbf16>
    %cst_81 = arith.constant dense<0.000000e+00> : vector<256x128xf32>
    %136 = tpu.matmul %134, %135, %cst_81 {dimension_numbers = #tpu.dot_dimension_numbers<[1], [0], [0], [1], [0, 0, 1, 1], [], []>} : vector<256x1152xbf16>, vector<1152x128xbf16>, vector<256x128xf32> -> vector<256x128xf32>
    %137 = arith.addf %110, %136 : vector<256x128xf32>
    %c0_82 = arith.constant 0 : index
    %c0_83 = arith.constant 0 : index
    %138 = vector.load %arg6[%c0_82, %c0_83] : memref<1x128xf32, #tpu.memory_space<vmem>>, vector<1x128xf32>
    %139 = vector.broadcast %138 : vector<1x128xf32> to vector<256x128xf32>
    %140 = arith.addf %137, %139 : vector<256x128xf32>
    %141 = vector.shape_cast %140 : vector<256x128xf32> to vector<1x16x16x128xf32>
    %142 = arith.truncf %141 : vector<1x16x16x128xf32> to vector<1x16x16x128xbf16>
    %c0_84 = arith.constant 0 : index
    %c0_85 = arith.constant 0 : index
    %c0_86 = arith.constant 0 : index
    %c0_87 = arith.constant 0 : index
    %143 = vector.load %arg7[%c0_84, %c0_85, %c0_86, %c0_87] : memref<1x16x16x128xbf16, #tpu.memory_space<vmem>>, vector<1x16x16x128xbf16>
    tpu.vector_store %arg7[%c0_84, %c0_85, %c0_86, %c0_87], %142 {strides = array<i32>} : memref<1x16x16x128xbf16, #tpu.memory_space<vmem>>, vector<1x16x16x128xbf16>,
    %cst_88 = arith.constant dense<0.000000e+00> : vector<128xf32>
    %144 = vector.multi_reduction <add>, %140, %cst_88 [0] : vector<256x128xf32> to vector<128xf32>
    %145 = vector.shape_cast %144 : vector<128xf32> to vector<1x128xf32>
    %146 = arith.mulf %140, %140 : vector<256x128xf32>
    %cst_89 = arith.constant dense<0.000000e+00> : vector<128xf32>
    %147 = vector.multi_reduction <add>, %146, %cst_89 [0] : vector<256x128xf32> to vector<128xf32>
    %148 = vector.shape_cast %147 : vector<128xf32> to vector<1x128xf32>
    %149 = tpu.concatenate %145, %148 in 0 : vector<1x128xf32>, vector<1x128xf32> -> vector<2x128xf32>
    %150 = vector.shape_cast %149 : vector<2x128xf32> to vector<1x1x2x128xf32>
    %c0_90 = arith.constant 0 : index
    %c0_91 = arith.constant 0 : index
    %c0_92 = arith.constant 0 : index
    %c0_93 = arith.constant 0 : index
    %151 = vector.load %arg8[%c0_90, %c0_91, %c0_92, %c0_93] : memref<1x1x2x128xf32, #tpu.memory_space<vmem>>, vector<1x1x2x128xf32>
    tpu.vector_store %arg8[%c0_90, %c0_91, %c0_92, %c0_93], %150 {strides = array<i32>} : memref<1x1x2x128xf32, #tpu.memory_space<vmem>>, vector<1x1x2x128xf32>,
    return
  }
  func.func @transform_2(%arg0: i32, %arg1: i32) -> (i32, i32) {
    %c0_i32 = arith.constant 0 : i32
    %c0_i32_0 = arith.constant 0 : i32
    %c0_i32_1 = arith.constant 0 : i32
    return %c0_i32, %c0_i32_0 : i32, i32
  }
  func.func @transform_3(%arg0: i32, %arg1: i32) -> (i32, i32) {
    %c0_i32 = arith.constant 0 : i32
    %c0_i32_0 = arith.constant 0 : i32
    %c0_i32_1 = arith.constant 0 : i32
    return %c0_i32, %c0_i32_0 : i32, i32
  }
  func.func @transform_4(%arg0: i32, %arg1: i32) -> (i32, i32) {
    %c0_i32 = arith.constant 0 : i32
    %c0_i32_0 = arith.constant 0 : i32
    %c0_i32_1 = arith.constant 0 : i32
    return %c0_i32, %c0_i32_0 : i32, i32
  }
  func.func @transform_5(%arg0: i32, %arg1: i32) -> (i32, i32, i32, i32) {
    %c0_i32 = arith.constant 0 : i32
    %c0_i32_0 = arith.constant 0 : i32
    %c0_i32_1 = arith.constant 0 : i32
    return %arg0, %arg1, %c0_i32, %c0_i32_0 : i32, i32, i32, i32
  }
  func.func @transform_6(%arg0: i32, %arg1: i32) -> (i32, i32, i32, i32) {
    %c0_i32 = arith.constant 0 : i32
    %c0_i32_0 = arith.constant 0 : i32
    %c0_i32_1 = arith.constant 0 : i32
    return %arg0, %arg1, %c0_i32, %c0_i32_0 : i32, i32, i32, i32
  }
}

module attributes {stable_mosaic.version = 11 : i64} {
  func.func @kernel(%arg0: i32, %arg1: i32, %arg2: memref<2x16x16x128xbf16, #tpu.memory_space<any>>, %arg3: memref<1152x128xbf16, #tpu.memory_space<vmem>>, %arg4: memref<1x128xf32, #tpu.memory_space<vmem>>, %arg5: memref<1x128xf32, #tpu.memory_space<vmem>>, %arg6: memref<1x128xf32, #tpu.memory_space<vmem>>, %arg7: memref<1x16x16x128xbf16, #tpu.memory_space<vmem>>, %arg8: memref<1x1x2x128xf32, #tpu.memory_space<vmem>>, %arg9: memref<2x18x16x128xbf16, #tpu.memory_space<vmem>>, %arg10: memref<2x3x!tpu.dma_semaphore, #tpu.memory_space<semaphore_mem>>) attributes {dimension_semantics = [#tpu.dimension_semantics<parallel>, #tpu.dimension_semantics<arbitrary>], iteration_bounds = array<i64: 2, 1>, scalar_prefetch = 0 : i64, scratch_operands = 2 : i64, tpu.core_type = #tpu.core_type<tc>, window_params = [{}, {pipeline_mode = #tpu.pipeline_mode<synchronous>, transform_indices = @transform_1, window_bounds = array<i64: 1152, 128>}, {pipeline_mode = #tpu.pipeline_mode<synchronous>, transform_indices = @transform_2, window_bounds = array<i64: 1, 128>}, {pipeline_mode = #tpu.pipeline_mode<synchronous>, transform_indices = @transform_3, window_bounds = array<i64: 1, 128>}, {pipeline_mode = #tpu.pipeline_mode<synchronous>, transform_indices = @transform_4, window_bounds = array<i64: 1, 128>}, {transform_indices = @transform_5, window_bounds = array<i64: 1, 16, 16, 128>}, {transform_indices = @transform_6, window_bounds = array<i64: 1, 1, 2, 128>}]} {
    %c0_i32 = arith.constant 0 : i32
    %0 = arith.cmpi eq, %arg1, %c0_i32 : i32
    %1 = arith.extui %0 : i1 to i32
    %c0_i32_0 = arith.constant 0 : i32
    %2 = arith.cmpi ne, %1, %c0_i32_0 : i32
    scf.if %2 {
      %c-1_i32 = arith.constant -1 : i32
      %c0_i32_62 = arith.constant 0 : i32
      %c15_i32_63 = arith.constant 15 : i32
      %108 = arith.maxsi %c0_i32_62, %c-1_i32 : i32
      %109 = arith.minsi %c15_i32_63, %108 : i32
      %c0_i32_64 = arith.constant 0 : i32
      %c0_i32_65 = arith.constant 0 : i32
      %c0_i32_66 = arith.constant 0 : i32
      %110 = arith.maxsi %c0_i32_65, %c0_i32_64 : i32
      %111 = arith.minsi %c0_i32_66, %110 : i32
      %c16_i32_67 = arith.constant 16 : i32
      %c0_i32_68 = arith.constant 0 : i32
      %c15_i32_69 = arith.constant 15 : i32
      %112 = arith.maxsi %c0_i32_68, %c16_i32_67 : i32
      %113 = arith.minsi %c15_i32_69, %112 : i32
      %c0_i32_70 = arith.constant 0 : i32
      %c0_i32_71 = arith.constant 0 : i32
      %c0_i32_72 = arith.constant 0 : i32
      %c0_i32_73 = arith.constant 0 : i32
      %c0_i32_74 = arith.constant 0 : i32
      %114 = tpu.memref_slice %arg2[%arg0, %109, %c0_i32_73, %c0_i32_74] : memref<2x16x16x128xbf16, #tpu.memory_space<any>> -> memref<1x1x16x128xbf16, #tpu.memory_space<any>>
      %115 = tpu.memref_squeeze %114 : memref<1x1x16x128xbf16, #tpu.memory_space<any>> -> memref<1x16x128xbf16, #tpu.memory_space<any>>
      %c0_i32_75 = arith.constant 0 : i32
      %c0_i32_76 = arith.constant 0 : i32
      %c0_i32_77 = arith.constant 0 : i32
      %116 = tpu.memref_slice %arg9[%c0_i32_70, %c0_i32_75, %c0_i32_76, %c0_i32_77] : memref<2x18x16x128xbf16, #tpu.memory_space<vmem>> -> memref<1x1x16x128xbf16, #tpu.memory_space<vmem>>
      %117 = tpu.memref_squeeze %116 : memref<1x1x16x128xbf16, #tpu.memory_space<vmem>> -> memref<1x16x128xbf16, #tpu.memory_space<vmem>>
      %118 = tpu.memref_slice %arg10[%c0_i32_71, %c0_i32_72] : memref<2x3x!tpu.dma_semaphore, #tpu.memory_space<semaphore_mem>> -> memref<1x1x!tpu.dma_semaphore, #tpu.memory_space<semaphore_mem>>
      %119 = tpu.memref_squeeze %118 : memref<1x1x!tpu.dma_semaphore, #tpu.memory_space<semaphore_mem>> -> memref<!tpu.dma_semaphore, #tpu.memory_space<semaphore_mem>>
      tpu.enqueue_dma source(%115 : memref<1x16x128xbf16, #tpu.memory_space<any>>) target(%117 : memref<1x16x128xbf16, #tpu.memory_space<vmem>>) target_semaphore(%119 : memref<!tpu.dma_semaphore, #tpu.memory_space<semaphore_mem>>)
      %c0_i32_78 = arith.constant 0 : i32
      %c0_i32_79 = arith.constant 0 : i32
      %c1_i32_80 = arith.constant 1 : i32
      %c0_i32_81 = arith.constant 0 : i32
      %c0_i32_82 = arith.constant 0 : i32
      %120 = tpu.memref_slice %arg2[%arg0, %111, %c0_i32_81, %c0_i32_82] : memref<2x16x16x128xbf16, #tpu.memory_space<any>> -> memref<1x16x16x128xbf16, #tpu.memory_space<any>>
      %121 = tpu.memref_squeeze %120 : memref<1x16x16x128xbf16, #tpu.memory_space<any>> -> memref<16x16x128xbf16, #tpu.memory_space<any>>
      %c1_i32_83 = arith.constant 1 : i32
      %c0_i32_84 = arith.constant 0 : i32
      %c0_i32_85 = arith.constant 0 : i32
      %122 = tpu.memref_slice %arg9[%c0_i32_78, %c1_i32_83, %c0_i32_84, %c0_i32_85] : memref<2x18x16x128xbf16, #tpu.memory_space<vmem>> -> memref<1x16x16x128xbf16, #tpu.memory_space<vmem>>
      %123 = tpu.memref_squeeze %122 : memref<1x16x16x128xbf16, #tpu.memory_space<vmem>> -> memref<16x16x128xbf16, #tpu.memory_space<vmem>>
      %124 = tpu.memref_slice %arg10[%c0_i32_79, %c1_i32_80] : memref<2x3x!tpu.dma_semaphore, #tpu.memory_space<semaphore_mem>> -> memref<1x1x!tpu.dma_semaphore, #tpu.memory_space<semaphore_mem>>
      %125 = tpu.memref_squeeze %124 : memref<1x1x!tpu.dma_semaphore, #tpu.memory_space<semaphore_mem>> -> memref<!tpu.dma_semaphore, #tpu.memory_space<semaphore_mem>>
      tpu.enqueue_dma source(%121 : memref<16x16x128xbf16, #tpu.memory_space<any>>) target(%123 : memref<16x16x128xbf16, #tpu.memory_space<vmem>>) target_semaphore(%125 : memref<!tpu.dma_semaphore, #tpu.memory_space<semaphore_mem>>)
      %c0_i32_86 = arith.constant 0 : i32
      %c0_i32_87 = arith.constant 0 : i32
      %c2_i32_88 = arith.constant 2 : i32
      %c0_i32_89 = arith.constant 0 : i32
      %c0_i32_90 = arith.constant 0 : i32
      %126 = tpu.memref_slice %arg2[%arg0, %113, %c0_i32_89, %c0_i32_90] : memref<2x16x16x128xbf16, #tpu.memory_space<any>> -> memref<1x1x16x128xbf16, #tpu.memory_space<any>>
      %127 = tpu.memref_squeeze %126 : memref<1x1x16x128xbf16, #tpu.memory_space<any>> -> memref<1x16x128xbf16, #tpu.memory_space<any>>
      %c17_i32_91 = arith.constant 17 : i32
      %c0_i32_92 = arith.constant 0 : i32
      %c0_i32_93 = arith.constant 0 : i32
      %128 = tpu.memref_slice %arg9[%c0_i32_86, %c17_i32_91, %c0_i32_92, %c0_i32_93] : memref<2x18x16x128xbf16, #tpu.memory_space<vmem>> -> memref<1x1x16x128xbf16, #tpu.memory_space<vmem>>
      %129 = tpu.memref_squeeze %128 : memref<1x1x16x128xbf16, #tpu.memory_space<vmem>> -> memref<1x16x128xbf16, #tpu.memory_space<vmem>>
      %130 = tpu.memref_slice %arg10[%c0_i32_87, %c2_i32_88] : memref<2x3x!tpu.dma_semaphore, #tpu.memory_space<semaphore_mem>> -> memref<1x1x!tpu.dma_semaphore, #tpu.memory_space<semaphore_mem>>
      %131 = tpu.memref_squeeze %130 : memref<1x1x!tpu.dma_semaphore, #tpu.memory_space<semaphore_mem>> -> memref<!tpu.dma_semaphore, #tpu.memory_space<semaphore_mem>>
      tpu.enqueue_dma source(%127 : memref<1x16x128xbf16, #tpu.memory_space<any>>) target(%129 : memref<1x16x128xbf16, #tpu.memory_space<vmem>>) target_semaphore(%131 : memref<!tpu.dma_semaphore, #tpu.memory_space<semaphore_mem>>)
    } else {
    }
    %c1_i32 = arith.constant 1 : i32
    %3 = arith.addi %arg1, %c1_i32 : i32
    %c1_i32_1 = arith.constant 1 : i32
    %4 = arith.cmpi slt, %3, %c1_i32_1 : i32
    %5 = arith.extui %4 : i1 to i32
    %c0_i32_2 = arith.constant 0 : i32
    %6 = arith.cmpi ne, %5, %c0_i32_2 : i32
    scf.if %6 {
      %c1_i32_62 = arith.constant 1 : i32
      %108 = arith.addi %arg1, %c1_i32_62 : i32
      %c1_i32_63 = arith.constant 1 : i32
      %109 = arith.addi %arg1, %c1_i32_63 : i32
      %c2_i32_64 = arith.constant 2 : i32
      %c0_i32_65 = arith.constant 0 : i32
      %110 = arith.cmpi eq, %c2_i32_64, %c0_i32_65 : i32
      %c1_i32_66 = arith.constant 1 : i32
      %111 = arith.select %110, %c1_i32_66, %c2_i32_64 : i32
      %112 = arith.remsi %109, %111 : i32
      %c0_i32_67 = arith.constant 0 : i32
      %113 = arith.cmpi ne, %112, %c0_i32_67 : i32
      %c0_i32_68 = arith.constant 0 : i32
      %114 = arith.cmpi slt, %112, %c0_i32_68 : i32
      %c0_i32_69 = arith.constant 0 : i32
      %115 = arith.cmpi slt, %111, %c0_i32_69 : i32
      %116 = arith.xori %114, %115 : i1
      %117 = arith.andi %116, %113 : i1
      %118 = arith.addi %112, %111 : i32
      %119 = arith.select %117, %118, %112 : i32
      %c16_i32_70 = arith.constant 16 : i32
      %120 = arith.muli %108, %c16_i32_70 : i32
      %c1_i32_71 = arith.constant 1 : i32
      %121 = arith.subi %120, %c1_i32_71 : i32
      %c0_i32_72 = arith.constant 0 : i32
      %c15_i32_73 = arith.constant 15 : i32
      %122 = arith.maxsi %c0_i32_72, %121 : i32
      %123 = arith.minsi %c15_i32_73, %122 : i32
      %c16_i32_74 = arith.constant 16 : i32
      %124 = arith.muli %108, %c16_i32_74 : i32
      %c0_i32_75 = arith.constant 0 : i32
      %c0_i32_76 = arith.constant 0 : i32
      %125 = arith.maxsi %c0_i32_75, %124 : i32
      %126 = arith.minsi %c0_i32_76, %125 : i32
      %c16_i32_77 = arith.constant 16 : i32
      %127 = arith.muli %108, %c16_i32_77 : i32
      %c16_i32_78 = arith.constant 16 : i32
      %128 = arith.addi %127, %c16_i32_78 : i32
      %c0_i32_79 = arith.constant 0 : i32
      %c15_i32_80 = arith.constant 15 : i32
      %129 = arith.maxsi %c0_i32_79, %128 : i32
      %130 = arith.minsi %c15_i32_80, %129 : i32
      %c0_i32_81 = arith.constant 0 : i32
      %c0_i32_82 = arith.constant 0 : i32
      %c0_i32_83 = arith.constant 0 : i32
      %131 = tpu.memref_slice %arg2[%arg0, %123, %c0_i32_82, %c0_i32_83] : memref<2x16x16x128xbf16, #tpu.memory_space<any>> -> memref<1x1x16x128xbf16, #tpu.memory_space<any>>
      %132 = tpu.memref_squeeze %131 : memref<1x1x16x128xbf16, #tpu.memory_space<any>> -> memref<1x16x128xbf16, #tpu.memory_space<any>>
      %c0_i32_84 = arith.constant 0 : i32
      %c0_i32_85 = arith.constant 0 : i32
      %c0_i32_86 = arith.constant 0 : i32
      %133 = tpu.memref_slice %arg9[%119, %c0_i32_84, %c0_i32_85, %c0_i32_86] : memref<2x18x16x128xbf16, #tpu.memory_space<vmem>> -> memref<1x1x16x128xbf16, #tpu.memory_space<vmem>>
      %134 = tpu.memref_squeeze %133 : memref<1x1x16x128xbf16, #tpu.memory_space<vmem>> -> memref<1x16x128xbf16, #tpu.memory_space<vmem>>
      %135 = tpu.memref_slice %arg10[%119, %c0_i32_81] : memref<2x3x!tpu.dma_semaphore, #tpu.memory_space<semaphore_mem>> -> memref<1x1x!tpu.dma_semaphore, #tpu.memory_space<semaphore_mem>>
      %136 = tpu.memref_squeeze %135 : memref<1x1x!tpu.dma_semaphore, #tpu.memory_space<semaphore_mem>> -> memref<!tpu.dma_semaphore, #tpu.memory_space<semaphore_mem>>
      tpu.enqueue_dma source(%132 : memref<1x16x128xbf16, #tpu.memory_space<any>>) target(%134 : memref<1x16x128xbf16, #tpu.memory_space<vmem>>) target_semaphore(%136 : memref<!tpu.dma_semaphore, #tpu.memory_space<semaphore_mem>>)
      %c1_i32_87 = arith.constant 1 : i32
      %c0_i32_88 = arith.constant 0 : i32
      %c0_i32_89 = arith.constant 0 : i32
      %137 = tpu.memref_slice %arg2[%arg0, %126, %c0_i32_88, %c0_i32_89] : memref<2x16x16x128xbf16, #tpu.memory_space<any>> -> memref<1x16x16x128xbf16, #tpu.memory_space<any>>
      %138 = tpu.memref_squeeze %137 : memref<1x16x16x128xbf16, #tpu.memory_space<any>> -> memref<16x16x128xbf16, #tpu.memory_space<any>>
      %c1_i32_90 = arith.constant 1 : i32
      %c0_i32_91 = arith.constant 0 : i32
      %c0_i32_92 = arith.constant 0 : i32
      %139 = tpu.memref_slice %arg9[%119, %c1_i32_90, %c0_i32_91, %c0_i32_92] : memref<2x18x16x128xbf16, #tpu.memory_space<vmem>> -> memref<1x16x16x128xbf16, #tpu.memory_space<vmem>>
      %140 = tpu.memref_squeeze %139 : memref<1x16x16x128xbf16, #tpu.memory_space<vmem>> -> memref<16x16x128xbf16, #tpu.memory_space<vmem>>
      %141 = tpu.memref_slice %arg10[%119, %c1_i32_87] : memref<2x3x!tpu.dma_semaphore, #tpu.memory_space<semaphore_mem>> -> memref<1x1x!tpu.dma_semaphore, #tpu.memory_space<semaphore_mem>>
      %142 = tpu.memref_squeeze %141 : memref<1x1x!tpu.dma_semaphore, #tpu.memory_space<semaphore_mem>> -> memref<!tpu.dma_semaphore, #tpu.memory_space<semaphore_mem>>
      tpu.enqueue_dma source(%138 : memref<16x16x128xbf16, #tpu.memory_space<any>>) target(%140 : memref<16x16x128xbf16, #tpu.memory_space<vmem>>) target_semaphore(%142 : memref<!tpu.dma_semaphore, #tpu.memory_space<semaphore_mem>>)
      %c2_i32_93 = arith.constant 2 : i32
      %c0_i32_94 = arith.constant 0 : i32
      %c0_i32_95 = arith.constant 0 : i32
      %143 = tpu.memref_slice %arg2[%arg0, %130, %c0_i32_94, %c0_i32_95] : memref<2x16x16x128xbf16, #tpu.memory_space<any>> -> memref<1x1x16x128xbf16, #tpu.memory_space<any>>
      %144 = tpu.memref_squeeze %143 : memref<1x1x16x128xbf16, #tpu.memory_space<any>> -> memref<1x16x128xbf16, #tpu.memory_space<any>>
      %c17_i32_96 = arith.constant 17 : i32
      %c0_i32_97 = arith.constant 0 : i32
      %c0_i32_98 = arith.constant 0 : i32
      %145 = tpu.memref_slice %arg9[%119, %c17_i32_96, %c0_i32_97, %c0_i32_98] : memref<2x18x16x128xbf16, #tpu.memory_space<vmem>> -> memref<1x1x16x128xbf16, #tpu.memory_space<vmem>>
      %146 = tpu.memref_squeeze %145 : memref<1x1x16x128xbf16, #tpu.memory_space<vmem>> -> memref<1x16x128xbf16, #tpu.memory_space<vmem>>
      %147 = tpu.memref_slice %arg10[%119, %c2_i32_93] : memref<2x3x!tpu.dma_semaphore, #tpu.memory_space<semaphore_mem>> -> memref<1x1x!tpu.dma_semaphore, #tpu.memory_space<semaphore_mem>>
      %148 = tpu.memref_squeeze %147 : memref<1x1x!tpu.dma_semaphore, #tpu.memory_space<semaphore_mem>> -> memref<!tpu.dma_semaphore, #tpu.memory_space<semaphore_mem>>
      tpu.enqueue_dma source(%144 : memref<1x16x128xbf16, #tpu.memory_space<any>>) target(%146 : memref<1x16x128xbf16, #tpu.memory_space<vmem>>) target_semaphore(%148 : memref<!tpu.dma_semaphore, #tpu.memory_space<semaphore_mem>>)
    } else {
    }
    %c2_i32 = arith.constant 2 : i32
    %c0_i32_3 = arith.constant 0 : i32
    %7 = arith.cmpi eq, %c2_i32, %c0_i32_3 : i32
    %c1_i32_4 = arith.constant 1 : i32
    %8 = arith.select %7, %c1_i32_4, %c2_i32 : i32
    %9 = arith.remsi %arg1, %8 : i32
    %c0_i32_5 = arith.constant 0 : i32
    %10 = arith.cmpi ne, %9, %c0_i32_5 : i32
    %c0_i32_6 = arith.constant 0 : i32
    %11 = arith.cmpi slt, %9, %c0_i32_6 : i32
    %c0_i32_7 = arith.constant 0 : i32
    %12 = arith.cmpi slt, %8, %c0_i32_7 : i32
    %13 = arith.xori %11, %12 : i1
    %14 = arith.andi %13, %10 : i1
    %15 = arith.addi %9, %8 : i32
    %16 = arith.select %14, %15, %9 : i32
    %c16_i32 = arith.constant 16 : i32
    %17 = arith.muli %arg1, %c16_i32 : i32
    %c1_i32_8 = arith.constant 1 : i32
    %18 = arith.subi %17, %c1_i32_8 : i32
    %c0_i32_9 = arith.constant 0 : i32
    %c15_i32 = arith.constant 15 : i32
    %19 = arith.maxsi %c0_i32_9, %18 : i32
    %20 = arith.minsi %c15_i32, %19 : i32
    %c16_i32_10 = arith.constant 16 : i32
    %21 = arith.muli %arg1, %c16_i32_10 : i32
    %c0_i32_11 = arith.constant 0 : i32
    %c0_i32_12 = arith.constant 0 : i32
    %22 = arith.maxsi %c0_i32_11, %21 : i32
    %23 = arith.minsi %c0_i32_12, %22 : i32
    %c16_i32_13 = arith.constant 16 : i32
    %24 = arith.muli %arg1, %c16_i32_13 : i32
    %c16_i32_14 = arith.constant 16 : i32
    %25 = arith.addi %24, %c16_i32_14 : i32
    %c0_i32_15 = arith.constant 0 : i32
    %c15_i32_16 = arith.constant 15 : i32
    %26 = arith.maxsi %c0_i32_15, %25 : i32
    %27 = arith.minsi %c15_i32_16, %26 : i32
    %c0_i32_17 = arith.constant 0 : i32
    %c0_i32_18 = arith.constant 0 : i32
    %c0_i32_19 = arith.constant 0 : i32
    %28 = tpu.memref_slice %arg2[%arg0, %20, %c0_i32_18, %c0_i32_19] : memref<2x16x16x128xbf16, #tpu.memory_space<any>> -> memref<1x1x16x128xbf16, #tpu.memory_space<any>>
    %29 = tpu.memref_squeeze %28 : memref<1x1x16x128xbf16, #tpu.memory_space<any>> -> memref<1x16x128xbf16, #tpu.memory_space<any>>
    %c0_i32_20 = arith.constant 0 : i32
    %c0_i32_21 = arith.constant 0 : i32
    %c0_i32_22 = arith.constant 0 : i32
    %30 = tpu.memref_slice %arg9[%16, %c0_i32_20, %c0_i32_21, %c0_i32_22] : memref<2x18x16x128xbf16, #tpu.memory_space<vmem>> -> memref<1x1x16x128xbf16, #tpu.memory_space<vmem>>
    %31 = tpu.memref_squeeze %30 : memref<1x1x16x128xbf16, #tpu.memory_space<vmem>> -> memref<1x16x128xbf16, #tpu.memory_space<vmem>>
    %32 = tpu.memref_slice %arg10[%16, %c0_i32_17] : memref<2x3x!tpu.dma_semaphore, #tpu.memory_space<semaphore_mem>> -> memref<1x1x!tpu.dma_semaphore, #tpu.memory_space<semaphore_mem>>
    %33 = tpu.memref_squeeze %32 : memref<1x1x!tpu.dma_semaphore, #tpu.memory_space<semaphore_mem>> -> memref<!tpu.dma_semaphore, #tpu.memory_space<semaphore_mem>>
    tpu.wait_dma2 semaphore(%33 : memref<!tpu.dma_semaphore, #tpu.memory_space<semaphore_mem>>) src(%29 : memref<1x16x128xbf16, #tpu.memory_space<any>>) dst(%31 : memref<1x16x128xbf16, #tpu.memory_space<vmem>>)
    %c1_i32_23 = arith.constant 1 : i32
    %c0_i32_24 = arith.constant 0 : i32
    %c0_i32_25 = arith.constant 0 : i32
    %34 = tpu.memref_slice %arg2[%arg0, %23, %c0_i32_24, %c0_i32_25] : memref<2x16x16x128xbf16, #tpu.memory_space<any>> -> memref<1x16x16x128xbf16, #tpu.memory_space<any>>
    %35 = tpu.memref_squeeze %34 : memref<1x16x16x128xbf16, #tpu.memory_space<any>> -> memref<16x16x128xbf16, #tpu.memory_space<any>>
    %c1_i32_26 = arith.constant 1 : i32
    %c0_i32_27 = arith.constant 0 : i32
    %c0_i32_28 = arith.constant 0 : i32
    %36 = tpu.memref_slice %arg9[%16, %c1_i32_26, %c0_i32_27, %c0_i32_28] : memref<2x18x16x128xbf16, #tpu.memory_space<vmem>> -> memref<1x16x16x128xbf16, #tpu.memory_space<vmem>>
    %37 = tpu.memref_squeeze %36 : memref<1x16x16x128xbf16, #tpu.memory_space<vmem>> -> memref<16x16x128xbf16, #tpu.memory_space<vmem>>
    %38 = tpu.memref_slice %arg10[%16, %c1_i32_23] : memref<2x3x!tpu.dma_semaphore, #tpu.memory_space<semaphore_mem>> -> memref<1x1x!tpu.dma_semaphore, #tpu.memory_space<semaphore_mem>>
    %39 = tpu.memref_squeeze %38 : memref<1x1x!tpu.dma_semaphore, #tpu.memory_space<semaphore_mem>> -> memref<!tpu.dma_semaphore, #tpu.memory_space<semaphore_mem>>
    tpu.wait_dma2 semaphore(%39 : memref<!tpu.dma_semaphore, #tpu.memory_space<semaphore_mem>>) src(%35 : memref<16x16x128xbf16, #tpu.memory_space<any>>) dst(%37 : memref<16x16x128xbf16, #tpu.memory_space<vmem>>)
    %c2_i32_29 = arith.constant 2 : i32
    %c0_i32_30 = arith.constant 0 : i32
    %c0_i32_31 = arith.constant 0 : i32
    %40 = tpu.memref_slice %arg2[%arg0, %27, %c0_i32_30, %c0_i32_31] : memref<2x16x16x128xbf16, #tpu.memory_space<any>> -> memref<1x1x16x128xbf16, #tpu.memory_space<any>>
    %41 = tpu.memref_squeeze %40 : memref<1x1x16x128xbf16, #tpu.memory_space<any>> -> memref<1x16x128xbf16, #tpu.memory_space<any>>
    %c17_i32 = arith.constant 17 : i32
    %c0_i32_32 = arith.constant 0 : i32
    %c0_i32_33 = arith.constant 0 : i32
    %42 = tpu.memref_slice %arg9[%16, %c17_i32, %c0_i32_32, %c0_i32_33] : memref<2x18x16x128xbf16, #tpu.memory_space<vmem>> -> memref<1x1x16x128xbf16, #tpu.memory_space<vmem>>
    %43 = tpu.memref_squeeze %42 : memref<1x1x16x128xbf16, #tpu.memory_space<vmem>> -> memref<1x16x128xbf16, #tpu.memory_space<vmem>>
    %44 = tpu.memref_slice %arg10[%16, %c2_i32_29] : memref<2x3x!tpu.dma_semaphore, #tpu.memory_space<semaphore_mem>> -> memref<1x1x!tpu.dma_semaphore, #tpu.memory_space<semaphore_mem>>
    %45 = tpu.memref_squeeze %44 : memref<1x1x!tpu.dma_semaphore, #tpu.memory_space<semaphore_mem>> -> memref<!tpu.dma_semaphore, #tpu.memory_space<semaphore_mem>>
    tpu.wait_dma2 semaphore(%45 : memref<!tpu.dma_semaphore, #tpu.memory_space<semaphore_mem>>) src(%41 : memref<1x16x128xbf16, #tpu.memory_space<any>>) dst(%43 : memref<1x16x128xbf16, #tpu.memory_space<vmem>>)
    %46 = tpu.iota {dimensions = array<i32: 0>} : vector<18x1x1xi32>
    %c0_i32_34 = arith.constant 0 : i32
    %47 = arith.cmpi eq, %arg1, %c0_i32_34 : i32
    %c1_i32_35 = arith.constant 1 : i32
    %c0_i32_36 = arith.constant 0 : i32
    %48 = arith.select %47, %c1_i32_35, %c0_i32_36 : i32
    %c0_i32_37 = arith.constant 0 : i32
    %49 = arith.cmpi eq, %arg1, %c0_i32_37 : i32
    %c17_i32_38 = arith.constant 17 : i32
    %c18_i32 = arith.constant 18 : i32
    %50 = arith.select %49, %c17_i32_38, %c18_i32 : i32
    %51 = vector.broadcast %48 : i32 to vector<18x1x1xi32>
    %52 = arith.cmpi sge, %46, %51 : vector<18x1x1xi32>
    %53 = vector.broadcast %50 : i32 to vector<18x1x1xi32>
    %54 = arith.cmpi slt, %46, %53 : vector<18x1x1xi32>
    %55 = arith.andi %52, %54 : vector<18x1x1xi1>
    %56 = arith.index_cast %16 : i32 to index
    %c0 = arith.constant 0 : index
    %c0_39 = arith.constant 0 : index
    %c0_40 = arith.constant 0 : index
    %57 = vector.load %arg9[%56, %c0, %c0_39, %c0_40] : memref<2x18x16x128xbf16, #tpu.memory_space<vmem>>, vector<1x18x16x128xbf16>
    %58 = vector.shape_cast %57 : vector<1x18x16x128xbf16> to vector<18x16x128xbf16>
    %59 = arith.extf %58 : vector<18x16x128xbf16> to vector<18x16x128xf32>
    %c0_41 = arith.constant 0 : index
    %c0_42 = arith.constant 0 : index
    %60 = vector.load %arg5[%c0_41, %c0_42] : memref<1x128xf32, #tpu.memory_space<vmem>>, vector<1x128xf32>
    %61 = vector.shape_cast %60 : vector<1x128xf32> to vector<1x1x128xf32>
    %62 = vector.broadcast %61 : vector<1x1x128xf32> to vector<18x16x128xf32>
    %63 = arith.mulf %59, %62 : vector<18x16x128xf32>
    %c0_43 = arith.constant 0 : index
    %c0_44 = arith.constant 0 : index
    %64 = vector.load %arg6[%c0_43, %c0_44] : memref<1x128xf32, #tpu.memory_space<vmem>>, vector<1x128xf32>
    %65 = vector.shape_cast %64 : vector<1x128xf32> to vector<1x1x128xf32>
    %66 = vector.broadcast %65 : vector<1x1x128xf32> to vector<18x16x128xf32>
    %67 = arith.addf %63, %66 : vector<18x16x128xf32>
    %cst = arith.constant 0.000000e+00 : f32
    %68 = vector.broadcast %cst : f32 to vector<18x16x128xf32>
    %69 = arith.maximumf %67, %68 : vector<18x16x128xf32>
    %c0_i32_45 = arith.constant 0 : i32
    %70 = arith.sitofp %c0_i32_45 : i32 to f32
    %71 = vector.shape_cast %55 : vector<18x1x1xi1> to vector<18x1x1xi1>
    %72 = vector.broadcast %71 : vector<18x1x1xi1> to vector<18x16x128xi1>
    %73 = vector.broadcast %70 : f32 to vector<18x16x128xf32>
    %74 = arith.select %72, %69, %73 : vector<18x16x128xi1>, vector<18x16x128xf32>
    %75 = arith.truncf %74 : vector<18x16x128xf32> to vector<18x16x128xbf16>
    %cst_46 = arith.constant 0.000000e+00 : bf16
    %76 = vector.broadcast %cst_46 : bf16 to vector<18x1x128xbf16>
    %77 = vector.extract_strided_slice %75 {offsets = [0, 0, 0], sizes = [18, 15, 128], strides = [1, 1, 1]} : vector<18x16x128xbf16> to vector<18x15x128xbf16>
    %78 = tpu.concatenate %76, %77 in 1 : vector<18x1x128xbf16>, vector<18x15x128xbf16> -> vector<18x16x128xbf16>
    %79 = vector.extract_strided_slice %75 {offsets = [0, 1, 0], sizes = [18, 15, 128], strides = [1, 1, 1]} : vector<18x16x128xbf16> to vector<18x15x128xbf16>
    %80 = tpu.concatenate %79, %76 in 1 : vector<18x15x128xbf16>, vector<18x1x128xbf16> -> vector<18x16x128xbf16>
    %81 = vector.extract_strided_slice %78 {offsets = [0, 0, 0], sizes = [16, 16, 128], strides = [1, 1, 1]} : vector<18x16x128xbf16> to vector<16x16x128xbf16>
    %82 = vector.extract_strided_slice %75 {offsets = [0, 0, 0], sizes = [16, 16, 128], strides = [1, 1, 1]} : vector<18x16x128xbf16> to vector<16x16x128xbf16>
    %83 = vector.extract_strided_slice %80 {offsets = [0, 0, 0], sizes = [16, 16, 128], strides = [1, 1, 1]} : vector<18x16x128xbf16> to vector<16x16x128xbf16>
    %84 = vector.extract_strided_slice %78 {offsets = [1, 0, 0], sizes = [16, 16, 128], strides = [1, 1, 1]} : vector<18x16x128xbf16> to vector<16x16x128xbf16>
    %85 = vector.extract_strided_slice %75 {offsets = [1, 0, 0], sizes = [16, 16, 128], strides = [1, 1, 1]} : vector<18x16x128xbf16> to vector<16x16x128xbf16>
    %86 = vector.extract_strided_slice %80 {offsets = [1, 0, 0], sizes = [16, 16, 128], strides = [1, 1, 1]} : vector<18x16x128xbf16> to vector<16x16x128xbf16>
    %87 = vector.extract_strided_slice %78 {offsets = [2, 0, 0], sizes = [16, 16, 128], strides = [1, 1, 1]} : vector<18x16x128xbf16> to vector<16x16x128xbf16>
    %88 = vector.extract_strided_slice %75 {offsets = [2, 0, 0], sizes = [16, 16, 128], strides = [1, 1, 1]} : vector<18x16x128xbf16> to vector<16x16x128xbf16>
    %89 = vector.extract_strided_slice %80 {offsets = [2, 0, 0], sizes = [16, 16, 128], strides = [1, 1, 1]} : vector<18x16x128xbf16> to vector<16x16x128xbf16>
    %90 = tpu.concatenate %81, %82, %83, %84, %85, %86, %87, %88, %89 in 2 : vector<16x16x128xbf16>, vector<16x16x128xbf16>, vector<16x16x128xbf16>, vector<16x16x128xbf16>, vector<16x16x128xbf16>, vector<16x16x128xbf16>, vector<16x16x128xbf16>, vector<16x16x128xbf16>, vector<16x16x128xbf16> -> vector<16x16x1152xbf16>
    %91 = vector.shape_cast %90 : vector<16x16x1152xbf16> to vector<256x1152xbf16>
    %c0_47 = arith.constant 0 : index
    %c0_48 = arith.constant 0 : index
    %92 = vector.load %arg3[%c0_47, %c0_48] : memref<1152x128xbf16, #tpu.memory_space<vmem>>, vector<1152x128xbf16>
    %cst_49 = arith.constant dense<0.000000e+00> : vector<256x128xf32>
    %93 = tpu.matmul %91, %92, %cst_49 {dimension_numbers = #tpu.dot_dimension_numbers<[1], [0], [0], [1], [0, 0, 1, 1], [], []>} : vector<256x1152xbf16>, vector<1152x128xbf16>, vector<256x128xf32> -> vector<256x128xf32>
    %c0_50 = arith.constant 0 : index
    %c0_51 = arith.constant 0 : index
    %94 = vector.load %arg4[%c0_50, %c0_51] : memref<1x128xf32, #tpu.memory_space<vmem>>, vector<1x128xf32>
    %95 = vector.broadcast %94 : vector<1x128xf32> to vector<256x128xf32>
    %96 = arith.addf %93, %95 : vector<256x128xf32>
    %97 = vector.shape_cast %96 : vector<256x128xf32> to vector<1x16x16x128xf32>
    %98 = arith.truncf %97 : vector<1x16x16x128xf32> to vector<1x16x16x128xbf16>
    %c0_52 = arith.constant 0 : index
    %c0_53 = arith.constant 0 : index
    %c0_54 = arith.constant 0 : index
    %c0_55 = arith.constant 0 : index
    %99 = vector.load %arg7[%c0_52, %c0_53, %c0_54, %c0_55] : memref<1x16x16x128xbf16, #tpu.memory_space<vmem>>, vector<1x16x16x128xbf16>
    tpu.vector_store %arg7[%c0_52, %c0_53, %c0_54, %c0_55], %98 {strides = array<i32>} : memref<1x16x16x128xbf16, #tpu.memory_space<vmem>>, vector<1x16x16x128xbf16>,
    %cst_56 = arith.constant dense<0.000000e+00> : vector<128xf32>
    %100 = vector.multi_reduction <add>, %96, %cst_56 [0] : vector<256x128xf32> to vector<128xf32>
    %101 = vector.shape_cast %100 : vector<128xf32> to vector<1x128xf32>
    %102 = arith.mulf %96, %96 : vector<256x128xf32>
    %cst_57 = arith.constant dense<0.000000e+00> : vector<128xf32>
    %103 = vector.multi_reduction <add>, %102, %cst_57 [0] : vector<256x128xf32> to vector<128xf32>
    %104 = vector.shape_cast %103 : vector<128xf32> to vector<1x128xf32>
    %105 = tpu.concatenate %101, %104 in 0 : vector<1x128xf32>, vector<1x128xf32> -> vector<2x128xf32>
    %106 = vector.shape_cast %105 : vector<2x128xf32> to vector<1x1x2x128xf32>
    %c0_58 = arith.constant 0 : index
    %c0_59 = arith.constant 0 : index
    %c0_60 = arith.constant 0 : index
    %c0_61 = arith.constant 0 : index
    %107 = vector.load %arg8[%c0_58, %c0_59, %c0_60, %c0_61] : memref<1x1x2x128xf32, #tpu.memory_space<vmem>>, vector<1x1x2x128xf32>
    tpu.vector_store %arg8[%c0_58, %c0_59, %c0_60, %c0_61], %106 {strides = array<i32>} : memref<1x1x2x128xf32, #tpu.memory_space<vmem>>, vector<1x1x2x128xf32>,
    return
  }
  func.func @transform_1(%arg0: i32, %arg1: i32) -> (i32, i32) {
    %c0_i32 = arith.constant 0 : i32
    %c0_i32_0 = arith.constant 0 : i32
    %c0_i32_1 = arith.constant 0 : i32
    return %c0_i32, %c0_i32_0 : i32, i32
  }
  func.func @transform_2(%arg0: i32, %arg1: i32) -> (i32, i32) {
    %c0_i32 = arith.constant 0 : i32
    %c0_i32_0 = arith.constant 0 : i32
    %c0_i32_1 = arith.constant 0 : i32
    return %c0_i32, %c0_i32_0 : i32, i32
  }
  func.func @transform_3(%arg0: i32, %arg1: i32) -> (i32, i32) {
    %c0_i32 = arith.constant 0 : i32
    %c0_i32_0 = arith.constant 0 : i32
    %c0_i32_1 = arith.constant 0 : i32
    return %c0_i32, %c0_i32_0 : i32, i32
  }
  func.func @transform_4(%arg0: i32, %arg1: i32) -> (i32, i32) {
    %c0_i32 = arith.constant 0 : i32
    %c0_i32_0 = arith.constant 0 : i32
    %c0_i32_1 = arith.constant 0 : i32
    return %c0_i32, %c0_i32_0 : i32, i32
  }
  func.func @transform_5(%arg0: i32, %arg1: i32) -> (i32, i32, i32, i32) {
    %c0_i32 = arith.constant 0 : i32
    %c0_i32_0 = arith.constant 0 : i32
    %c0_i32_1 = arith.constant 0 : i32
    return %arg0, %arg1, %c0_i32, %c0_i32_0 : i32, i32, i32, i32
  }
  func.func @transform_6(%arg0: i32, %arg1: i32) -> (i32, i32, i32, i32) {
    %c0_i32 = arith.constant 0 : i32
    %c0_i32_0 = arith.constant 0 : i32
    %c0_i32_1 = arith.constant 0 : i32
    return %arg0, %arg1, %c0_i32, %c0_i32_0 : i32, i32, i32, i32
  }
}

module attributes {stable_mosaic.version = 11 : i64} {
  func.func @_bn_relu_kernel(%arg0: i32, %arg1: memref<512x128xbf16, #tpu.memory_space<vmem>>, %arg2: memref<1x128xf32, #tpu.memory_space<vmem>>, %arg3: memref<1x128xf32, #tpu.memory_space<vmem>>, %arg4: memref<512x128xf32, #tpu.memory_space<vmem>>) attributes {dimension_semantics = [#tpu.dimension_semantics<parallel>], iteration_bounds = array<i64: 1>, scalar_prefetch = 0 : i64, scratch_operands = 0 : i64, tpu.core_type = #tpu.core_type<tc>, window_params = [{transform_indices = @transform_0, window_bounds = array<i64: 512, 128>}, {pipeline_mode = #tpu.pipeline_mode<synchronous>, transform_indices = @transform_1, window_bounds = array<i64: 1, 128>}, {pipeline_mode = #tpu.pipeline_mode<synchronous>, transform_indices = @transform_2, window_bounds = array<i64: 1, 128>}, {transform_indices = @transform_3, window_bounds = array<i64: 512, 128>}]} {
    %c0 = arith.constant 0 : index
    %c0_0 = arith.constant 0 : index
    %0 = vector.load %arg1[%c0, %c0_0] : memref<512x128xbf16, #tpu.memory_space<vmem>>, vector<512x128xbf16>
    %1 = arith.extf %0 : vector<512x128xbf16> to vector<512x128xf32>
    %c0_1 = arith.constant 0 : index
    %c0_2 = arith.constant 0 : index
    %2 = vector.load %arg2[%c0_1, %c0_2] : memref<1x128xf32, #tpu.memory_space<vmem>>, vector<1x128xf32>
    %3 = vector.broadcast %2 : vector<1x128xf32> to vector<512x128xf32>
    %4 = arith.mulf %1, %3 : vector<512x128xf32>
    %c0_3 = arith.constant 0 : index
    %c0_4 = arith.constant 0 : index
    %5 = vector.load %arg3[%c0_3, %c0_4] : memref<1x128xf32, #tpu.memory_space<vmem>>, vector<1x128xf32>
    %6 = vector.broadcast %5 : vector<1x128xf32> to vector<512x128xf32>
    %7 = arith.addf %4, %6 : vector<512x128xf32>
    %cst = arith.constant 0.000000e+00 : f32
    %8 = vector.broadcast %cst : f32 to vector<512x128xf32>
    %9 = arith.maximumf %7, %8 : vector<512x128xf32>
    %c0_5 = arith.constant 0 : index
    %c0_6 = arith.constant 0 : index
    %10 = vector.load %arg4[%c0_5, %c0_6] : memref<512x128xf32, #tpu.memory_space<vmem>>, vector<512x128xf32>
    tpu.vector_store %arg4[%c0_5, %c0_6], %9 {strides = array<i32>} : memref<512x128xf32, #tpu.memory_space<vmem>>, vector<512x128xf32>,
    return
  }
  func.func @transform_0(%arg0: i32) -> (i32, i32) {
    %c0_i32 = arith.constant 0 : i32
    %c0_i32_0 = arith.constant 0 : i32
    return %arg0, %c0_i32 : i32, i32
  }
  func.func @transform_1(%arg0: i32) -> (i32, i32) {
    %c0_i32 = arith.constant 0 : i32
    %c0_i32_0 = arith.constant 0 : i32
    %c0_i32_1 = arith.constant 0 : i32
    return %c0_i32, %c0_i32_0 : i32, i32
  }
  func.func @transform_2(%arg0: i32) -> (i32, i32) {
    %c0_i32 = arith.constant 0 : i32
    %c0_i32_0 = arith.constant 0 : i32
    %c0_i32_1 = arith.constant 0 : i32
    return %c0_i32, %c0_i32_0 : i32, i32
  }
  func.func @transform_3(%arg0: i32) -> (i32, i32) {
    %c0_i32 = arith.constant 0 : i32
    %c0_i32_0 = arith.constant 0 : i32
    return %arg0, %c0_i32 : i32, i32
  }
}

</mosaic_0001>

<llo_original>
// kernel: expansive_block.4
$region0: #{expansive_block.4}
  #allocation0 [shape = 'u32[]', space=smem, size = 0x4, offset = 0x4, fixed_abs, tag = 'smem constant byte address 0x4 - core index']
  #allocation1 [shape = 'u32[144,128]{1,0:T(1,128)}', space=vmem, size = 0x12000, scoped, tag = 'internal scratch']
  %s0 = inlined_call_operand.vmem [shape: bf16[2,8,8,128], index: 0, kind: input, shape index: {}]
  %s1 = inlined_call_operand.vmem [shape: bf16[128,512], index: 1, kind: input, shape index: {}]
  %s2 = inlined_call_operand.vmem [shape: f32[1,256], index: 2, kind: input, shape index: {}]
  %s3 = inlined_call_operand.vmem [shape: bf16[2,8,2,8,256], index: 3, kind: output, shape index: {}]
  %s4 = sld [smem:[#allocation0]]
  $region45: #{expansive_block.4} parent=0
    _
  %s6 = ssub.s32 1, %s4
  %s7 = scalar_select 0, %s6, %s4
  loop: start=0, step=1, limit=4
  $region2: #{expansive_block.4} parent=0 // loop_pre_header
    _
  $region3: #{expansive_block.4} parent=0 // loop_header
    %s9 = sphi 0, %s13
    %p10 = scmp.ge.s32.totalorder %s9, 4
    %s16 = sphi 0, %s28
    %s17 = sphi 0, %s24
    %s18 = sphi 0, %s16
    %s19 = sphi 0, %s17
    %s20 = sphi 0, %s18
    %s21 = sphi 0, %s19
    %s33 = sphi 0, %s35
    %s36 = sphi 0, %s33
    %s37 = sphi 0, %s36
    %s53 = sphi 0, %s37
    %s57 = sphi 0, %s57
    %s59 = sphi 0, %s57
    %s60 = sphi 0, %s59
    %s74 = sphi 0, %s60
    %s78 = sphi 0, %s78
    %s80 = sphi 0, %s78
    %s81 = sphi 0, %s80
    %s95 = sphi 0, %s81
    %s103 = sphi 0, %s105
    %s106 = sphi 0, %s103
    %s107 = sphi 0, %s106
    %s123 = sphi 0, %s107
  $region4: #{expansive_block.4} parent=0 // loop_header_branch
    %12 = sbr.rel (%p10) target = $region8
  $region5: #{expansive_block.4} parent=0 // loop_body
    %s14 = ssub.s32 %s9, 1
    %s15 = ssub.s32 %s9, 2
    %s22 = sadd.s32 1, %s17
    %p23 = scmp.ge.s32.totalorder %s22, 1
    %s24 = scalar_select %p23, 0, %s22
    %s25 = sadd.s32 1, %s16
    %s26 = scalar_select %p23, %s25, %s16
    %p27 = scmp.ge.s32.totalorder %s26, 2
    %s28 = scalar_select %p27, 0, %s26
    %s29 = ssub.s32 %s16, %s28
    %s30 = ssub.s32 %s17, %s24
    %s31 = sor.u32 %s29, %s30
    %p32 = scmp.eq.s32.totalorder %s31, 0
    %s34 = sadd.s32 %s33, 1
    %s35 = scalar_select %p32, %s33, %s34
    %p38 = pneg %p32
    %p39 = scmp.eq.s32.totalorder %s9, 1
    %p40 = por %p38, %p39
    %p41 = scmp.ne.s32.totalorder %s33, %s36
    %p42 = scmp.eq.s32.totalorder %s9, 0
    %p43 = por %p41, %p42
    %p44 = scmp.ne.s32.totalorder %s33, %s36
    %p45 = scmp.eq.s32.totalorder %s14, 1
    %p46 = por %p44, %p45
    %p47 = scmp.ne.s32.totalorder %s36, %s37
    %p48 = scmp.eq.s32.totalorder %s14, 0
    %p49 = por %p47, %p48
    %p50 = scmp.ne.s32.totalorder %s36, %s37
    %p51 = scmp.eq.s32.totalorder %s15, 1
    %p52 = por %p50, %p51
    %p54 = scmp.ne.s32.totalorder %s37, %s53
    %p55 = scmp.eq.s32.totalorder %s15, 0
    %p56 = por %p54, %p55
    %s58 = sadd.s32 %s57, 1
    %p61 = scmp.eq.s32.totalorder %s9, 1
    %p62 = scmp.ne.s32.totalorder %s57, %s59
    %p63 = scmp.eq.s32.totalorder %s9, 0
    %p64 = por %p62, %p63
    %p65 = scmp.ne.s32.totalorder %s57, %s59
    %p66 = scmp.eq.s32.totalorder %s14, 1
    %p67 = por %p65, %p66
    %p68 = scmp.ne.s32.totalorder %s59, %s60
    %p69 = scmp.eq.s32.totalorder %s14, 0
    %p70 = por %p68, %p69
    %p71 = scmp.ne.s32.totalorder %s59, %s60
    %p72 = scmp.eq.s32.totalorder %s15, 1
    %p73 = por %p71, %p72
    %p75 = scmp.ne.s32.totalorder %s60, %s74
    %p76 = scmp.eq.s32.totalorder %s15, 0
    %p77 = por %p75, %p76
    %s79 = sadd.s32 %s78, 1
    %p82 = scmp.eq.s32.totalorder %s9, 1
    %p83 = scmp.ne.s32.totalorder %s78, %s80
    %p84 = scmp.eq.s32.totalorder %s9, 0
    %p85 = por %p83, %p84
    %p86 = scmp.ne.s32.totalorder %s78, %s80
    %p87 = scmp.eq.s32.totalorder %s14, 1
    %p88 = por %p86, %p87
    %p89 = scmp.ne.s32.totalorder %s80, %s81
    %p90 = scmp.eq.s32.totalorder %s14, 0
    %p91 = por %p89, %p90
    %p92 = scmp.ne.s32.totalorder %s80, %s81
    %p93 = scmp.eq.s32.totalorder %s15, 1
    %p94 = por %p92, %p93
    %p96 = scmp.ne.s32.totalorder %s81, %s95
    %p97 = scmp.eq.s32.totalorder %s15, 0
    %p98 = por %p96, %p97
    %s99 = ssub.s32 %s16, %s28
    %s100 = ssub.s32 %s17, %s24
    %s101 = sor.u32 %s99, %s100
    %p102 = scmp.eq.s32.totalorder %s101, 0
    %s104 = sadd.s32 %s103, 1
    %s105 = scalar_select %p102, %s103, %s104
    %p108 = pneg %p102
    %p109 = scmp.eq.s32.totalorder %s9, 1
    %p110 = por %p108, %p109
    %p111 = scmp.ne.s32.totalorder %s103, %s106
    %p112 = scmp.eq.s32.totalorder %s9, 0
    %p113 = por %p111, %p112
    %p114 = scmp.ne.s32.totalorder %s103, %s106
    %p115 = scmp.eq.s32.totalorder %s14, 1
    %p116 = por %p114, %p115
    %p117 = scmp.ne.s32.totalorder %s106, %s107
    %p118 = scmp.eq.s32.totalorder %s14, 0
    %p119 = por %p117, %p118
    %p120 = scmp.ne.s32.totalorder %s106, %s107
    %p121 = scmp.eq.s32.totalorder %s15, 1
    %p122 = por %p120, %p121
    %p124 = scmp.ne.s32.totalorder %s107, %s123
    %p125 = scmp.eq.s32.totalorder %s15, 0
    %p126 = por %p124, %p125
    %p127 = scmp.le.s32.totalorder 1, %s9
    %p128 = scmp.lt.s32.totalorder %s9, 3
    %p129 = pnand %p127, %p128
    %p130 = pneg %p129
    // Predicated region
    $region9: #{expansive_block.4} parent=5 // pred_check
      _
    $region10: #{expansive_block.4} parent=5 // pred_check_branch
      %132 = sbr.rel (%p129) target = $region12
    $region11: #{expansive_block.4} parent=5 // pred_region
      %s133 = ssub.s32 %s9, 1
      // Predicated region
      $region13: #{expansive_block.4} parent=11 // pred_check
        %p134 = pneg %p70
      $region14: #{expansive_block.4} parent=11 // pred_check_branch
        %136 = sbr.rel (%p134) target = $region16
      $region15: #{expansive_block.4} parent=11 // pred_region
        _
      $region16: #{expansive_block.4} parent=11 // pred_fallthru
        _
      // Predicated region
      $region17: #{expansive_block.4} parent=11 // pred_check
        %p137 = pneg %p91
      $region18: #{expansive_block.4} parent=11 // pred_check_branch
        %139 = sbr.rel (%p137) target = $region20
      $region19: #{expansive_block.4} parent=11 // pred_region
        _
      $region20: #{expansive_block.4} parent=11 // pred_fallthru
        _
    $region12: #{expansive_block.4} parent=5 // pred_fallthru
      _
    %p140 = scmp.lt.s32.totalorder %s9, 2
    // Predicated region
    $region21: #{expansive_block.4} parent=5 // pred_check
      %p141 = pneg %p140
    $region22: #{expansive_block.4} parent=5 // pred_check_branch
      %143 = sbr.rel (%p141) target = $region24
    $region23: #{expansive_block.4} parent=5 // pred_region
      // Predicated region
      $region25: #{expansive_block.4} parent=23 // pred_check
        %p144 = pneg %p43
      $region26: #{expansive_block.4} parent=23 // pred_check_branch
        %146 = sbr.rel (%p144) target = $region28
      $region27: #{expansive_block.4} parent=23 // pred_region
        %s147 = smul.u32 8, %s17
        %p148 = scmp.lt.s32.totalorder %s16, 1
        %s149 = scalar_select %p148, %s16, 1
        %p150 = scmp.lt.s32.totalorder %s147, 7
        %s151 = scalar_select %p150, %s147, 7
        %s152 = smul.addr %s149, 8
        %s153 = sadd.s32 %s151, %s152
        %s154 = smul.addr %s153, 4
        %s155 = scalar_lea.vmem %s0, %s154
        %s156 = smul.u32 8, %s17
      $region28: #{expansive_block.4} parent=23 // pred_fallthru
        _
    $region24: #{expansive_block.4} parent=5 // pred_fallthru
      _
    %p157 = scmp.le.s32.totalorder 1, %s9
    %p158 = scmp.lt.s32.totalorder %s9, 3
    %p159 = pnand %p157, %p158
    %p160 = pneg %p159
    // Predicated region
    $region29: #{expansive_block.4} parent=5 // pred_check
      _
    $region30: #{expansive_block.4} parent=5 // pred_check_branch
      %162 = sbr.rel (%p159) target = $region32
    $region31: #{expansive_block.4} parent=5 // pred_region
      %s163 = ssub.s32 %s9, 1
      %s164 = smul.u32 8, %s19
      %p165 = scmp.lt.s32.totalorder %s18, 1
      %s166 = scalar_select %p165, %s18, 1
      %p167 = scmp.lt.s32.totalorder %s164, 7
      %s168 = scalar_select %p167, %s164, 7
      %s169 = smul.addr %s166, 8
      %s170 = sadd.s32 %s168, %s169
      %s171 = smul.addr %s170, 4
      %s172 = scalar_lea.vmem %s0, %s171
      %p173 = pneg %p49
      %p174 = pneg %p46
      %p175 = pneg %p70
      %p176 = pneg %p67
      %p177 = pneg %p91
      %p178 = pneg %p88
      %p179 = pneg %p119
      %p180 = pneg %p116
      %s181 = smul.u32 8, %s19
      %p182 = scmp.lt.s32.totalorder %s18, 1
      %s183 = scalar_select %p182, %s18, 1
      %p184 = scmp.lt.s32.totalorder %s181, 7
      %s185 = scalar_select %p184, %s181, 7
      %s186 = smul.addr %s185, 4
      %s187 = smul.addr %s183, 32
      %s188 = sadd.s32 %s186, %s187
      %s189 = smul.addr %s188, 4
      %s190 = scalar_lea.vmem %s3, %s189
      %s191 = smul.u32 8, %s19
      %p192 = scmp.lt.s32.totalorder %s18, 1
      %s193 = scalar_select %p192, %s18, 1
      %p194 = scmp.lt.s32.totalorder %s191, 7
      %s195 = scalar_select %p194, %s191, 7
      %s196 = smul.addr %s193, 8
      %s197 = sadd.s32 %s195, %s196
      %s198 = smul.addr %s197, 4
      %s199 = scalar_lea.vmem %s0, %s198
      %s200 = smul.u32 8, %s19
      %s201 = smul.u32 8, %s19
      %p202 = scmp.lt.s32.totalorder %s18, 1
      %s203 = scalar_select %p202, %s18, 1
      %p204 = scmp.lt.s32.totalorder %s201, 7
      %s205 = scalar_select %p204, %s201, 7
      %s206 = smul.addr %s205, 4
      %s207 = smul.addr %s203, 32
      %s208 = sadd.s32 %s206, %s207
      %s209 = smul.addr %s208, 4
      %s210 = scalar_lea.vmem %s3, %s209
      %s211 = smul.u32 8, %s19
      %v213 = vld [vmem:[%s199] sm:$0xf]
      %v214 = vld [vmem:[%s199 + $0x4] sm:$0xf]
      %v215 = vld [vmem:[%s199 + $0x8] sm:$0xf]
      %v216 = vld [vmem:[%s199 + $0xc] sm:$0xf]
      %v217 = vld [vmem:[%s199 + $0x10] sm:$0xf]
      %v218 = vld [vmem:[%s199 + $0x14] sm:$0xf]
      %v219 = vld [vmem:[%s199 + $0x18] sm:$0xf]
      %v220 = vld [vmem:[%s199 + $0x1c] sm:$0xf]
      %v221 = vld [vmem:[%s1] sm:$0xff]
      %v222 = vld [vmem:[%s1 + $0x10] sm:$0xff]
      %v223 = vld [vmem:[%s1 + $0x20] sm:$0xff]
      %v224 = vld [vmem:[%s1 + $0x30] sm:$0xff]
      %v225 = vld [vmem:[%s1 + $0x40] sm:$0xff]
      %v226 = vld [vmem:[%s1 + $0x50] sm:$0xff]
      %v227 = vld [vmem:[%s1 + $0x60] sm:$0xff]
      %v228 = vld [vmem:[%s1 + $0x70] sm:$0xff]
      %v229 = vld [vmem:[%s1 + $0x80] sm:$0xff]
      %v230 = vld [vmem:[%s1 + $0x90] sm:$0xff]
      %v231 = vld [vmem:[%s1 + $0xa0] sm:$0xff]
      %v232 = vld [vmem:[%s1 + $0xb0] sm:$0xff]
      %v233 = vld [vmem:[%s1 + $0xc0] sm:$0xff]
      %v234 = vld [vmem:[%s1 + $0xd0] sm:$0xff]
      %v235 = vld [vmem:[%s1 + $0xe0] sm:$0xff]
      %v236 = vld [vmem:[%s1 + $0xf0] sm:$0xff]
      %v237 = vld [vmem:[%s2] sm:$0x3]
      %v239 = vlaneseq
      %v240 = vshrl.u32 %v239, 7
      %v241 = vsub.s32 0, %v240
      %v242 = vrot.slane %v237, %v241
      %v243 = vlaneseq
      %v244 = vshrl.u32 %v243, 7
      %v245 = vsub.s32 1, %v244
      %v246 = vrot.slane %v237, %v245
      %v257 = vunpack.c.l.b16 %v213
      %v258 = vunpack.c.l.b16 %v214
      %v259 = vunpack.c.l.b16 %v215
      %v260 = vunpack.c.l.b16 %v216
      %v261 = vunpack.c.l.b16 %v217
      %v262 = vunpack.c.l.b16 %v218
      %v263 = vunpack.c.l.b16 %v219
      %v264 = vunpack.c.l.b16 %v220
      %v265 = vpack.c.b16 %v258, %v257
      %v266 = vpack.c.b16 %v260, %v259
      %v267 = vpack.c.b16 %v262, %v261
      %v268 = vpack.c.b16 %v264, %v263
      %v289 = vunpack.c.l.b16 %v221
      %v290 = vunpack.c.h.b16 %v221
      %v291 = vunpack.c.l.b16 %v222
      %v292 = vunpack.c.h.b16 %v222
      %v293 = vunpack.c.l.b16 %v223
      %v294 = vunpack.c.h.b16 %v223
      %v295 = vunpack.c.l.b16 %v224
      %v296 = vunpack.c.h.b16 %v224
      %v297 = vunpack.c.l.b16 %v225
      %v298 = vunpack.c.h.b16 %v225
      %v299 = vunpack.c.l.b16 %v226
      %v300 = vunpack.c.h.b16 %v226
      %v301 = vunpack.c.l.b16 %v227
      %v302 = vunpack.c.h.b16 %v227
      %v303 = vunpack.c.l.b16 %v228
      %v304 = vunpack.c.h.b16 %v228
      %v305 = vunpack.c.l.b16 %v229
      %v306 = vunpack.c.h.b16 %v229
      %v307 = vunpack.c.l.b16 %v230
      %v308 = vunpack.c.h.b16 %v230
      %v309 = vunpack.c.l.b16 %v231
      %v310 = vunpack.c.h.b16 %v231
      %v311 = vunpack.c.l.b16 %v232
      %v312 = vunpack.c.h.b16 %v232
      %v313 = vunpack.c.l.b16 %v233
      %v314 = vunpack.c.h.b16 %v233
      %v315 = vunpack.c.l.b16 %v234
      %v316 = vunpack.c.h.b16 %v234
      %v317 = vunpack.c.l.b16 %v235
      %v318 = vunpack.c.h.b16 %v235
      %v319 = vunpack.c.l.b16 %v236
      %v320 = vunpack.c.h.b16 %v236
      %v321 = vpack.c.b16 %v291, %v289
      %v322 = vpack.c.b16 %v292, %v290
      %v323 = vpack.c.b16 %v295, %v293
      %v324 = vpack.c.b16 %v296, %v294
      %v325 = vpack.c.b16 %v299, %v297
      %v326 = vpack.c.b16 %v300, %v298
      %v327 = vpack.c.b16 %v303, %v301
      %v328 = vpack.c.b16 %v304, %v302
      %v329 = vpack.c.b16 %v307, %v305
      %v330 = vpack.c.b16 %v308, %v306
      %v331 = vpack.c.b16 %v311, %v309
      %v332 = vpack.c.b16 %v312, %v310
      %v333 = vpack.c.b16 %v315, %v313
      %v334 = vpack.c.b16 %v316, %v314
      %v335 = vpack.c.b16 %v319, %v317
      %v336 = vpack.c.b16 %v320, %v318
      %353 = vmatprep.subr.bf16.mxu0 %v322
      %354 = vmatpush1.bf16.msra.mxu0 %v321
      %355 = vmatprep.subr.bf16.mxu0 %v324
      %356 = vmatpush1.bf16.msra.mxu0 %v323
      %357 = vmatprep.subr.bf16.mxu0 %v326
      %358 = vmatpush1.bf16.msra.mxu0 %v325
      %359 = vmatprep.subr.bf16.mxu0 %v328
      %360 = vmatpush1.bf16.msra.mxu0 %v327
      %361 = vmatprep.subr.bf16.mxu0 %v330
      %362 = vmatpush1.bf16.msra.mxu0 %v329
      %363 = vmatprep.subr.bf16.mxu0 %v332
      %364 = vmatpush1.bf16.msra.mxu0 %v331
      %365 = vmatprep.subr.bf16.mxu0 %v334
      %366 = vmatpush1.bf16.msra.mxu0 %v333
      %367 = vmatprep.subr.bf16.mxu0 %v336
      %368 = vmatpush1.bf16.msra.mxu0 %v335
      %369 = vmatprep.subr.bf16.mxu0 0
      %370 = vmatpush1.bf16.msra.mxu0 0
      %371 = vmatprep.subr.bf16.mxu0 0
      %372 = vmatpush1.bf16.msra.mxu0 0
      %373 = vmatprep.subr.bf16.mxu0 0
      %374 = vmatpush1.bf16.msra.mxu0 0
      %375 = vmatprep.subr.bf16.mxu0 0
      %376 = vmatpush1.bf16.msra.mxu0 0
      %377 = vmatprep.subr.bf16.mxu0 0
      %378 = vmatpush1.bf16.msra.mxu0 0
      %379 = vmatprep.subr.bf16.mxu0 0
      %380 = vmatpush1.bf16.msra.mxu0 0
      %381 = vmatprep.subr.bf16.mxu0 0
      %382 = vmatpush1.bf16.msra.mxu0 0
      %383 = vmatprep.subr.bf16.mxu0 0
      %384 = vmatpush1.bf16.msra.mxu0 0
      %385 = vmatprep.mubr.bf16.mxu0 0
      %386 = vmatmul.mubr.bf16.gmra.mrb[0].mxu0 %v265
      %v387 = vpop.f32.mrb[0].mxu0
      %v388 = vadd.f32 %v242, %v387
      %v389 = vpop.f32.mrb[0].mxu0
      %v390 = vadd.f32 %v246, %v389
      %v391 = vpop.f32.mrb[0].mxu0
      %v392 = vadd.f32 %v242, %v391
      %v393 = vpop.f32.mrb[0].mxu0
      %v394 = vadd.f32 %v246, %v393
      %395 = vmatprep.mubr.bf16.mxu0 0
      %396 = vmatmul.mubr.bf16.gmra.mrb[0].mxu0 %v266
      %v397 = vpop.f32.mrb[0].mxu0
      %v398 = vadd.f32 %v242, %v397
      %v399 = vpop.f32.mrb[0].mxu0
      %v400 = vadd.f32 %v246, %v399
      %v401 = vpop.f32.mrb[0].mxu0
      %v402 = vadd.f32 %v242, %v401
      %v403 = vpop.f32.mrb[0].mxu0
      %v404 = vadd.f32 %v246, %v403
      %405 = vmatprep.mubr.bf16.mxu0 0
      %406 = vmatmul.mubr.bf16.gmra.mrb[0].mxu0 %v267
      %v407 = vpop.f32.mrb[0].mxu0
      %v408 = vadd.f32 %v242, %v407
      %v409 = vpop.f32.mrb[0].mxu0
      %v410 = vadd.f32 %v246, %v409
      %v411 = vpop.f32.mrb[0].mxu0
      %v412 = vadd.f32 %v242, %v411
      %v413 = vpop.f32.mrb[0].mxu0
      %v414 = vadd.f32 %v246, %v413
      %415 = vmatprep.mubr.bf16.mxu0 0
      %416 = vmatmul.mubr.bf16.gmra.mrb[0].mxu0 %v268
      %v417 = vpop.f32.mrb[0].mxu0
      %v418 = vadd.f32 %v242, %v417
      %v419 = vpop.f32.mrb[0].mxu0
      %v420 = vadd.f32 %v246, %v419
      %v421 = vpop.f32.mrb[0].mxu0
      %v422 = vadd.f32 %v242, %v421
      %v423 = vpop.f32.mrb[0].mxu0
      %v424 = vadd.f32 %v246, %v423
      %425 = vdwg.mxu0
      %v426 = vpack.c.bf16 %v388, %v388
      %v427 = vpack.c.bf16 %v390, %v390
      %v428 = vpack.c.bf16 %v392, %v392
      %v429 = vpack.c.bf16 %v394, %v394
      %v430 = vpack.c.bf16 %v398, %v398
      %v431 = vpack.c.bf16 %v400, %v400
      %v432 = vpack.c.bf16 %v402, %v402
      %v433 = vpack.c.bf16 %v404, %v404
      %v434 = vpack.c.bf16 %v408, %v408
      %v435 = vpack.c.bf16 %v410, %v410
      %v436 = vpack.c.bf16 %v412, %v412
      %v437 = vpack.c.bf16 %v414, %v414
      %v438 = vpack.c.bf16 %v418, %v418
      %v439 = vpack.c.bf16 %v420, %v420
      %v440 = vpack.c.bf16 %v422, %v422
      %v441 = vpack.c.bf16 %v424, %v424
      %v458 = vunpack.c.l.b16 %v426
      %v459 = vunpack.c.l.b16 %v427
      %v460 = vunpack.c.l.b16 %v428
      %v461 = vunpack.c.l.b16 %v429
      %v462 = vunpack.c.l.b16 %v430
      %v463 = vunpack.c.l.b16 %v431
      %v464 = vunpack.c.l.b16 %v432
      %v465 = vunpack.c.l.b16 %v433
      %v466 = vunpack.c.l.b16 %v434
      %v467 = vunpack.c.l.b16 %v435
      %v468 = vunpack.c.l.b16 %v436
      %v469 = vunpack.c.l.b16 %v437
      %v470 = vunpack.c.l.b16 %v438
      %v471 = vunpack.c.l.b16 %v439
      %v472 = vunpack.c.l.b16 %v440
      %v473 = vunpack.c.l.b16 %v441
      %v474 = vpack.c.b16 %v459, %v458
      %v475 = vpack.c.b16 %v461, %v460
      %v476 = vpack.c.b16 %v463, %v462
      %v477 = vpack.c.b16 %v465, %v464
      %v478 = vpack.c.b16 %v467, %v466
      %v479 = vpack.c.b16 %v469, %v468
      %v480 = vpack.c.b16 %v471, %v470
      %v481 = vpack.c.b16 %v473, %v472
      %490 = vst [vmem:[%s210] sm:$0xff] %v474
      %491 = vst [vmem:[%s210 + $0x10] sm:$0xff] %v475
      %492 = vst [vmem:[%s210 + $0x20] sm:$0xff] %v476
      %493 = vst [vmem:[%s210 + $0x30] sm:$0xff] %v477
      %494 = vst [vmem:[%s210 + $0x40] sm:$0xff] %v478
      %495 = vst [vmem:[%s210 + $0x50] sm:$0xff] %v479
      %496 = vst [vmem:[%s210 + $0x60] sm:$0xff] %v480
      %497 = vst [vmem:[%s210 + $0x70] sm:$0xff] %v481
      %v498 = vld [vmem:[%s1 + $0x8] sm:$0xff]
      %v499 = vld [vmem:[%s1 + $0x18] sm:$0xff]
      %v500 = vld [vmem:[%s1 + $0x28] sm:$0xff]
      %v501 = vld [vmem:[%s1 + $0x38] sm:$0xff]
      %v502 = vld [vmem:[%s1 + $0x48] sm:$0xff]
      %v503 = vld [vmem:[%s1 + $0x58] sm:$0xff]
      %v504 = vld [vmem:[%s1 + $0x68] sm:$0xff]
      %v505 = vld [vmem:[%s1 + $0x78] sm:$0xff]
      %v506 = vld [vmem:[%s1 + $0x88] sm:$0xff]
      %v507 = vld [vmem:[%s1 + $0x98] sm:$0xff]
      %v508 = vld [vmem:[%s1 + $0xa8] sm:$0xff]
      %v509 = vld [vmem:[%s1 + $0xb8] sm:$0xff]
      %v510 = vld [vmem:[%s1 + $0xc8] sm:$0xff]
      %v511 = vld [vmem:[%s1 + $0xd8] sm:$0xff]
      %v512 = vld [vmem:[%s1 + $0xe8] sm:$0xff]
      %v513 = vld [vmem:[%s1 + $0xf8] sm:$0xff]
      %v514 = vld [vmem:[%s2] sm:$0x3]
      %v516 = vlaneseq
      %v517 = vshrl.u32 %v516, 7
      %v518 = vsub.s32 0, %v517
      %v519 = vrot.slane %v514, %v518
      %v520 = vlaneseq
      %v521 = vshrl.u32 %v520, 7
      %v522 = vsub.s32 1, %v521
      %v523 = vrot.slane %v514, %v522
      %v542 = vunpack.c.l.b16 %v498
      %v543 = vunpack.c.h.b16 %v498
      %v544 = vunpack.c.l.b16 %v499
      %v545 = vunpack.c.h.b16 %v499
      %v546 = vunpack.c.l.b16 %v500
      %v547 = vunpack.c.h.b16 %v500
      %v548 = vunpack.c.l.b16 %v501
      %v549 = vunpack.c.h.b16 %v501
      %v550 = vunpack.c.l.b16 %v502
      %v551 = vunpack.c.h.b16 %v502
      %v552 = vunpack.c.l.b16 %v503
      %v553 = vunpack.c.h.b16 %v503
      %v554 = vunpack.c.l.b16 %v504
      %v555 = vunpack.c.h.b16 %v504
      %v556 = vunpack.c.l.b16 %v505
      %v557 = vunpack.c.h.b16 %v505
      %v558 = vunpack.c.l.b16 %v506
      %v559 = vunpack.c.h.b16 %v506
      %v560 = vunpack.c.l.b16 %v507
      %v561 = vunpack.c.h.b16 %v507
      %v562 = vunpack.c.l.b16 %v508
      %v563 = vunpack.c.h.b16 %v508
      %v564 = vunpack.c.l.b16 %v509
      %v565 = vunpack.c.h.b16 %v509
      %v566 = vunpack.c.l.b16 %v510
      %v567 = vunpack.c.h.b16 %v510
      %v568 = vunpack.c.l.b16 %v511
      %v569 = vunpack.c.h.b16 %v511
      %v570 = vunpack.c.l.b16 %v512
      %v571 = vunpack.c.h.b16 %v512
      %v572 = vunpack.c.l.b16 %v513
      %v573 = vunpack.c.h.b16 %v513
      %v574 = vpack.c.b16 %v544, %v542
      %v575 = vpack.c.b16 %v545, %v543
      %v576 = vpack.c.b16 %v548, %v546
      %v577 = vpack.c.b16 %v549, %v547
      %v578 = vpack.c.b16 %v552, %v550
      %v579 = vpack.c.b16 %v553, %v551
      %v580 = vpack.c.b16 %v556, %v554
      %v581 = vpack.c.b16 %v557, %v555
      %v582 = vpack.c.b16 %v560, %v558
      %v583 = vpack.c.b16 %v561, %v559
      %v584 = vpack.c.b16 %v564, %v562
      %v585 = vpack.c.b16 %v565, %v563
      %v586 = vpack.c.b16 %v568, %v566
      %v587 = vpack.c.b16 %v569, %v567
      %v588 = vpack.c.b16 %v572, %v570
      %v589 = vpack.c.b16 %v573, %v571
      %606 = vmatprep.subr.bf16.mxu0 %v575
      %607 = vmatpush1.bf16.msra.mxu0 %v574
      %608 = vmatprep.subr.bf16.mxu0 %v577
      %609 = vmatpush1.bf16.msra.mxu0 %v576
      %610 = vmatprep.subr.bf16.mxu0 %v579
      %611 = vmatpush1.bf16.msra.mxu0 %v578
      %612 = vmatprep.subr.bf16.mxu0 %v581
      %613 = vmatpush1.bf16.msra.mxu0 %v580
      %614 = vmatprep.subr.bf16.mxu0 %v583
      %615 = vmatpush1.bf16.msra.mxu0 %v582
      %616 = vmatprep.subr.bf16.mxu0 %v585
      %617 = vmatpush1.bf16.msra.mxu0 %v584
      %618 = vmatprep.subr.bf16.mxu0 %v587
      %619 = vmatpush1.bf16.msra.mxu0 %v586
      %620 = vmatprep.subr.bf16.mxu0 %v589
      %621 = vmatpush1.bf16.msra.mxu0 %v588
      %622 = vmatprep.subr.bf16.mxu0 0
      %623 = vmatpush1.bf16.msra.mxu0 0
      %624 = vmatprep.subr.bf16.mxu0 0
      %625 = vmatpush1.bf16.msra.mxu0 0
      %626 = vmatprep.subr.bf16.mxu0 0
      %627 = vmatpush1.bf16.msra.mxu0 0
      %628 = vmatprep.subr.bf16.mxu0 0
      %629 = vmatpush1.bf16.msra.mxu0 0
      %630 = vmatprep.subr.bf16.mxu0 0
      %631 = vmatpush1.bf16.msra.mxu0 0
      %632 = vmatprep.subr.bf16.mxu0 0
      %633 = vmatpush1.bf16.msra.mxu0 0
      %634 = vmatprep.subr.bf16.mxu0 0
      %635 = vmatpush1.bf16.msra.mxu0 0
      %636 = vmatprep.subr.bf16.mxu0 0
      %637 = vmatpush1.bf16.msra.mxu0 0
      %638 = vmatprep.mubr.bf16.mxu0 0
      %639 = vmatmul.mubr.bf16.gmra.mrb[0].mxu0 %v265
      %v640 = vpop.f32.mrb[0].mxu0
      %v641 = vadd.f32 %v519, %v640
      %v642 = vpop.f32.mrb[0].mxu0
      %v643 = vadd.f32 %v523, %v642
      %v644 = vpop.f32.mrb[0].mxu0
      %v645 = vadd.f32 %v519, %v644
      %v646 = vpop.f32.mrb[0].mxu0
      %v647 = vadd.f32 %v523, %v646
      %648 = vmatprep.mubr.bf16.mxu0 0
      %649 = vmatmul.mubr.bf16.gmra.mrb[0].mxu0 %v266
      %v650 = vpop.f32.mrb[0].mxu0
      %v651 = vadd.f32 %v519, %v650
      %v652 = vpop.f32.mrb[0].mxu0
      %v653 = vadd.f32 %v523, %v652
      %v654 = vpop.f32.mrb[0].mxu0
      %v655 = vadd.f32 %v519, %v654
      %v656 = vpop.f32.mrb[0].mxu0
      %v657 = vadd.f32 %v523, %v656
      %658 = vmatprep.mubr.bf16.mxu0 0
      %659 = vmatmul.mubr.bf16.gmra.mrb[0].mxu0 %v267
      %v660 = vpop.f32.mrb[0].mxu0
      %v661 = vadd.f32 %v519, %v660
      %v662 = vpop.f32.mrb[0].mxu0
      %v663 = vadd.f32 %v523, %v662
      %v664 = vpop.f32.mrb[0].mxu0
      %v665 = vadd.f32 %v519, %v664
      %v666 = vpop.f32.mrb[0].mxu0
      %v667 = vadd.f32 %v523, %v666
      %668 = vmatprep.mubr.bf16.mxu0 0
      %669 = vmatmul.mubr.bf16.gmra.mrb[0].mxu0 %v268
      %v670 = vpop.f32.mrb[0].mxu0
      %v671 = vadd.f32 %v519, %v670
      %v672 = vpop.f32.mrb[0].mxu0
      %v673 = vadd.f32 %v523, %v672
      %v674 = vpop.f32.mrb[0].mxu0
      %v675 = vadd.f32 %v519, %v674
      %v676 = vpop.f32.mrb[0].mxu0
      %v677 = vadd.f32 %v523, %v676
      %678 = vdwg.mxu0
      %v679 = vpack.c.bf16 %v641, %v641
      %v680 = vpack.c.bf16 %v643, %v643
      %v681 = vpack.c.bf16 %v645, %v645
      %v682 = vpack.c.bf16 %v647, %v647
      %v683 = vpack.c.bf16 %v651, %v651
      %v684 = vpack.c.bf16 %v653, %v653
      %v685 = vpack.c.bf16 %v655, %v655
      %v686 = vpack.c.bf16 %v657, %v657
      %v687 = vpack.c.bf16 %v661, %v661
      %v688 = vpack.c.bf16 %v663, %v663
      %v689 = vpack.c.bf16 %v665, %v665
      %v690 = vpack.c.bf16 %v667, %v667
      %v691 = vpack.c.bf16 %v671, %v671
      %v692 = vpack.c.bf16 %v673, %v673
      %v693 = vpack.c.bf16 %v675, %v675
      %v694 = vpack.c.bf16 %v677, %v677
      %v711 = vunpack.c.l.b16 %v679
      %v712 = vunpack.c.l.b16 %v680
      %v713 = vunpack.c.l.b16 %v681
      %v714 = vunpack.c.l.b16 %v682
      %v715 = vunpack.c.l.b16 %v683
      %v716 = vunpack.c.l.b16 %v684
      %v717 = vunpack.c.l.b16 %v685
      %v718 = vunpack.c.l.b16 %v686
      %v719 = vunpack.c.l.b16 %v687
      %v720 = vunpack.c.l.b16 %v688
      %v721 = vunpack.c.l.b16 %v689
      %v722 = vunpack.c.l.b16 %v690
      %v723 = vunpack.c.l.b16 %v691
      %v724 = vunpack.c.l.b16 %v692
      %v725 = vunpack.c.l.b16 %v693
      %v726 = vunpack.c.l.b16 %v694
      %v727 = vpack.c.b16 %v712, %v711
      %v728 = vpack.c.b16 %v714, %v713
      %v729 = vpack.c.b16 %v716, %v715
      %v730 = vpack.c.b16 %v718, %v717
      %v731 = vpack.c.b16 %v720, %v719
      %v732 = vpack.c.b16 %v722, %v721
      %v733 = vpack.c.b16 %v724, %v723
      %v734 = vpack.c.b16 %v726, %v725
      %s743 = scalar_lea.vmem %s210, 8
      %744 = vst [vmem:[%s743] sm:$0xff] %v727
      %745 = vst [vmem:[%s743 + $0x10] sm:$0xff] %v728
      %746 = vst [vmem:[%s743 + $0x20] sm:$0xff] %v729
      %747 = vst [vmem:[%s743 + $0x30] sm:$0xff] %v730
      %748 = vst [vmem:[%s743 + $0x40] sm:$0xff] %v731
      %749 = vst [vmem:[%s743 + $0x50] sm:$0xff] %v732
      %750 = vst [vmem:[%s743 + $0x60] sm:$0xff] %v733
      %751 = vst [vmem:[%s743 + $0x70] sm:$0xff] %v734
      %s752 = smul.u32 8, %s19
      %p753 = scmp.lt.s32.totalorder %s18, 1
      %s754 = scalar_select %p753, %s18, 1
      %p755 = scmp.lt.s32.totalorder %s752, 7
      %s756 = scalar_select %p755, %s752, 7
      %s757 = smul.addr %s756, 4
      %s758 = smul.addr %s754, 32
      %s759 = sadd.s32 %s757, %s758
      %s760 = smul.addr %s759, 4
      %s761 = scalar_lea.vmem %s3, %s760
      // Predicated region
      $region33: #{expansive_block.4} parent=31 // pred_check
        %p762 = pneg %p116
      $region34: #{expansive_block.4} parent=31 // pred_check_branch
        %764 = sbr.rel (%p762) target = $region36
      $region35: #{expansive_block.4} parent=31 // pred_region
        %s765 = smul.u32 8, %s19
      $region36: #{expansive_block.4} parent=31 // pred_fallthru
        _
    $region32: #{expansive_block.4} parent=5 // pred_fallthru
      _
    %p766 = scmp.le.s32.totalorder 2, %s9
    // Predicated region
    $region37: #{expansive_block.4} parent=5 // pred_check
      %p767 = pneg %p766
    $region38: #{expansive_block.4} parent=5 // pred_check_branch
      %769 = sbr.rel (%p767) target = $region40
    $region39: #{expansive_block.4} parent=5 // pred_region
      %s770 = ssub.s32 %s9, 2
      // Predicated region
      $region41: #{expansive_block.4} parent=39 // pred_check
        %p771 = pneg %p122
      $region42: #{expansive_block.4} parent=39 // pred_check_branch
        %773 = sbr.rel (%p771) target = $region44
      $region43: #{expansive_block.4} parent=39 // pred_region
        %s774 = smul.u32 8, %s21
        %p775 = scmp.lt.s32.totalorder %s20, 1
        %s776 = scalar_select %p775, %s20, 1
        %p777 = scmp.lt.s32.totalorder %s774, 7
        %s778 = scalar_select %p777, %s774, 7
        %s779 = smul.addr %s778, 4
        %s780 = smul.addr %s776, 32
        %s781 = sadd.s32 %s779, %s780
        %s782 = smul.addr %s781, 4
        %s783 = scalar_lea.vmem %s3, %s782
      $region44: #{expansive_block.4} parent=39 // pred_fallthru
        _
    $region40: #{expansive_block.4} parent=5 // pred_fallthru
      _
  $region6: #{expansive_block.4} parent=0 // loop_footer
    %s13 = sadd.s32 1, %s9
  $region7: #{expansive_block.4} parent=0 // loop_footer_branch
    %8 = sbr.rel target = $region3
  $region8: #{expansive_block.4} parent=0 // loop_exit
    _

// kernel: expansive_block.7
$region0: #{expansive_block.7}
  #allocation0 [shape = 'u32[]', space=smem, size = 0x4, offset = 0x4, fixed_abs, tag = 'smem constant byte address 0x4 - core index']
  #allocation1 [shape = 'u32[144,128]{1,0:T(1,128)}', space=vmem, size = 0x12000, scoped, tag = 'internal scratch']
  %s0 = inlined_call_operand.vmem [shape: bf16[512,128], index: 0, kind: input, shape index: {}]
  %s1 = inlined_call_operand.vmem [shape: f32[1,128], index: 1, kind: input, shape index: {}]
  %s2 = inlined_call_operand.vmem [shape: f32[1,128], index: 2, kind: input, shape index: {}]
  %s3 = inlined_call_operand.vmem [shape: f32[512,128], index: 3, kind: output, shape index: {}]
  %s4 = sld [smem:[#allocation0]]
  $region22: #{expansive_block.7} parent=0
    _
  %s6 = ssub.s32 1, %s4
  %s7 = scalar_select 0, %s6, %s4
  // Predicated region
  $region2: #{expansive_block.7} parent=0 // pred_check
    _
  $region3: #{expansive_block.7} parent=0 // pred_check_branch
    %9 = sbr.rel (0) target = $region5
  $region4: #{expansive_block.7} parent=0 // pred_region
    _
  $region5: #{expansive_block.7} parent=0 // pred_fallthru
    _
  // Predicated region
  $region6: #{expansive_block.7} parent=0 // pred_check
    _
  $region7: #{expansive_block.7} parent=0 // pred_check_branch
    %11 = sbr.rel (0) target = $region9
  $region8: #{expansive_block.7} parent=0 // pred_region
    _
  $region9: #{expansive_block.7} parent=0 // pred_fallthru
    _
  // Predicated region
  $region10: #{expansive_block.7} parent=0 // pred_check
    _
  $region11: #{expansive_block.7} parent=0 // pred_check_branch
    %13 = sbr.rel (0) target = $region13
  $region12: #{expansive_block.7} parent=0 // pred_region
    _
  $region13: #{expansive_block.7} parent=0 // pred_fallthru
    _
  %v14 = vld [vmem:[%s0] sm:$0xf]
  %v15 = vld [vmem:[%s0 + $0x4] sm:$0xf]
  %v16 = vld [vmem:[%s0 + $0x8] sm:$0xf]
  %v17 = vld [vmem:[%s0 + $0xc] sm:$0xf]
  %v18 = vld [vmem:[%s0 + $0x10] sm:$0xf]
  %v19 = vld [vmem:[%s0 + $0x14] sm:$0xf]
  %v20 = vld [vmem:[%s0 + $0x18] sm:$0xf]
  %v21 = vld [vmem:[%s0 + $0x1c] sm:$0xf]
  %v22 = vld [vmem:[%s0 + $0x20] sm:$0xf]
  %v23 = vld [vmem:[%s0 + $0x24] sm:$0xf]
  %v24 = vld [vmem:[%s0 + $0x28] sm:$0xf]
  %v25 = vld [vmem:[%s0 + $0x2c] sm:$0xf]
  %v26 = vld [vmem:[%s0 + $0x30] sm:$0xf]
  %v27 = vld [vmem:[%s0 + $0x34] sm:$0xf]
  %v28 = vld [vmem:[%s0 + $0x38] sm:$0xf]
  %v29 = vld [vmem:[%s0 + $0x3c] sm:$0xf]
  %v30 = vld [vmem:[%s0 + $0x40] sm:$0xf]
  %v31 = vld [vmem:[%s0 + $0x44] sm:$0xf]
  %v32 = vld [vmem:[%s0 + $0x48] sm:$0xf]
  %v33 = vld [vmem:[%s0 + $0x4c] sm:$0xf]
  %v34 = vld [vmem:[%s0 + $0x50] sm:$0xf]
  %v35 = vld [vmem:[%s0 + $0x54] sm:$0xf]
  %v36 = vld [vmem:[%s0 + $0x58] sm:$0xf]
  %v37 = vld [vmem:[%s0 + $0x5c] sm:$0xf]
  %v38 = vld [vmem:[%s0 + $0x60] sm:$0xf]
  %v39 = vld [vmem:[%s0 + $0x64] sm:$0xf]
  %v40 = vld [vmem:[%s0 + $0x68] sm:$0xf]
  %v41 = vld [vmem:[%s0 + $0x6c] sm:$0xf]
  %v42 = vld [vmem:[%s0 + $0x70] sm:$0xf]
  %v43 = vld [vmem:[%s0 + $0x74] sm:$0xf]
  %v44 = vld [vmem:[%s0 + $0x78] sm:$0xf]
  %v45 = vld [vmem:[%s0 + $0x7c] sm:$0xf]
  %v46 = vld [vmem:[%s0 + $0x80] sm:$0xf]
  %v47 = vld [vmem:[%s0 + $0x84] sm:$0xf]
  %v48 = vld [vmem:[%s0 + $0x88] sm:$0xf]
  %v49 = vld [vmem:[%s0 + $0x8c] sm:$0xf]
  %v50 = vld [vmem:[%s0 + $0x90] sm:$0xf]
  %v51 = vld [vmem:[%s0 + $0x94] sm:$0xf]
  %v52 = vld [vmem:[%s0 + $0x98] sm:$0xf]
  %v53 = vld [vmem:[%s0 + $0x9c] sm:$0xf]
  %v54 = vld [vmem:[%s0 + $0xa0] sm:$0xf]
  %v55 = vld [vmem:[%s0 + $0xa4] sm:$0xf]
  %v56 = vld [vmem:[%s0 + $0xa8] sm:$0xf]
  %v57 = vld [vmem:[%s0 + $0xac] sm:$0xf]
  %v58 = vld [vmem:[%s0 + $0xb0] sm:$0xf]
  %v59 = vld [vmem:[%s0 + $0xb4] sm:$0xf]
  %v60 = vld [vmem:[%s0 + $0xb8] sm:$0xf]
  %v61 = vld [vmem:[%s0 + $0xbc] sm:$0xf]
  %v62 = vld [vmem:[%s0 + $0xc0] sm:$0xf]
  %v63 = vld [vmem:[%s0 + $0xc4] sm:$0xf]
  %v64 = vld [vmem:[%s0 + $0xc8] sm:$0xf]
  %v65 = vld [vmem:[%s0 + $0xcc] sm:$0xf]
  %v66 = vld [vmem:[%s0 + $0xd0] sm:$0xf]
  %v67 = vld [vmem:[%s0 + $0xd4] sm:$0xf]
  %v68 = vld [vmem:[%s0 + $0xd8] sm:$0xf]
  %v69 = vld [vmem:[%s0 + $0xdc] sm:$0xf]
  %v70 = vld [vmem:[%s0 + $0xe0] sm:$0xf]
  %v71 = vld [vmem:[%s0 + $0xe4] sm:$0xf]
  %v72 = vld [vmem:[%s0 + $0xe8] sm:$0xf]
  %v73 = vld [vmem:[%s0 + $0xec] sm:$0xf]
  %v74 = vld [vmem:[%s0 + $0xf0] sm:$0xf]
  %v75 = vld [vmem:[%s0 + $0xf4] sm:$0xf]
  %v76 = vld [vmem:[%s0 + $0xf8] sm:$0xf]
  %v77 = vld [vmem:[%s0 + $0xfc] sm:$0xf]
  %v78 = vunpack.c.l.bf16 %v14
  %v79 = vunpack.c.l.bf16 %v15
  %v80 = vunpack.c.l.bf16 %v16
  %v81 = vunpack.c.l.bf16 %v17
  %v82 = vunpack.c.l.bf16 %v18
  %v83 = vunpack.c.l.bf16 %v19
  %v84 = vunpack.c.l.bf16 %v20
  %v85 = vunpack.c.l.bf16 %v21
  %v86 = vunpack.c.l.bf16 %v22
  %v87 = vunpack.c.l.bf16 %v23
  %v88 = vunpack.c.l.bf16 %v24
  %v89 = vunpack.c.l.bf16 %v25
  %v90 = vunpack.c.l.bf16 %v26
  %v91 = vunpack.c.l.bf16 %v27
  %v92 = vunpack.c.l.bf16 %v28
  %v93 = vunpack.c.l.bf16 %v29
  %v94 = vunpack.c.l.bf16 %v30
  %v95 = vunpack.c.l.bf16 %v31
  %v96 = vunpack.c.l.bf16 %v32
  %v97 = vunpack.c.l.bf16 %v33
  %v98 = vunpack.c.l.bf16 %v34
  %v99 = vunpack.c.l.bf16 %v35
  %v100 = vunpack.c.l.bf16 %v36
  %v101 = vunpack.c.l.bf16 %v37
  %v102 = vunpack.c.l.bf16 %v38
  %v103 = vunpack.c.l.bf16 %v39
  %v104 = vunpack.c.l.bf16 %v40
  %v105 = vunpack.c.l.bf16 %v41
  %v106 = vunpack.c.l.bf16 %v42
  %v107 = vunpack.c.l.bf16 %v43
  %v108 = vunpack.c.l.bf16 %v44
  %v109 = vunpack.c.l.bf16 %v45
  %v110 = vunpack.c.l.bf16 %v46
  %v111 = vunpack.c.l.bf16 %v47
  %v112 = vunpack.c.l.bf16 %v48
  %v113 = vunpack.c.l.bf16 %v49
  %v114 = vunpack.c.l.bf16 %v50
  %v115 = vunpack.c.l.bf16 %v51
  %v116 = vunpack.c.l.bf16 %v52
  %v117 = vunpack.c.l.bf16 %v53
  %v118 = vunpack.c.l.bf16 %v54
  %v119 = vunpack.c.l.bf16 %v55
  %v120 = vunpack.c.l.bf16 %v56
  %v121 = vunpack.c.l.bf16 %v57
  %v122 = vunpack.c.l.bf16 %v58
  %v123 = vunpack.c.l.bf16 %v59
  %v124 = vunpack.c.l.bf16 %v60
  %v125 = vunpack.c.l.bf16 %v61
  %v126 = vunpack.c.l.bf16 %v62
  %v127 = vunpack.c.l.bf16 %v63
  %v128 = vunpack.c.l.bf16 %v64
  %v129 = vunpack.c.l.bf16 %v65
  %v130 = vunpack.c.l.bf16 %v66
  %v131 = vunpack.c.l.bf16 %v67
  %v132 = vunpack.c.l.bf16 %v68
  %v133 = vunpack.c.l.bf16 %v69
  %v134 = vunpack.c.l.bf16 %v70
  %v135 = vunpack.c.l.bf16 %v71
  %v136 = vunpack.c.l.bf16 %v72
  %v137 = vunpack.c.l.bf16 %v73
  %v138 = vunpack.c.l.bf16 %v74
  %v139 = vunpack.c.l.bf16 %v75
  %v140 = vunpack.c.l.bf16 %v76
  %v141 = vunpack.c.l.bf16 %v77
  %v142 = vld [vmem:[%s1] sm:$0x1]
  %v144 = vlaneseq
  %v145 = vshrl.u32 %v144, 7
  %v146 = vsub.s32 0, %v145
  %v147 = vrot.slane %v142, %v146
  %v149 = vmul.f32 %v78, %v147
  %v150 = vmul.f32 %v79, %v147
  %v151 = vmul.f32 %v80, %v147
  %v152 = vmul.f32 %v81, %v147
  %v153 = vmul.f32 %v82, %v147
  %v154 = vmul.f32 %v83, %v147
  %v155 = vmul.f32 %v84, %v147
  %v156 = vmul.f32 %v85, %v147
  %v157 = vmul.f32 %v86, %v147
  %v158 = vmul.f32 %v87, %v147
  %v159 = vmul.f32 %v88, %v147
  %v160 = vmul.f32 %v89, %v147
  %v161 = vmul.f32 %v90, %v147
  %v162 = vmul.f32 %v91, %v147
  %v163 = vmul.f32 %v92, %v147
  %v164 = vmul.f32 %v93, %v147
  %v165 = vmul.f32 %v94, %v147
  %v166 = vmul.f32 %v95, %v147
  %v167 = vmul.f32 %v96, %v147
  %v168 = vmul.f32 %v97, %v147
  %v169 = vmul.f32 %v98, %v147
  %v170 = vmul.f32 %v99, %v147
  %v171 = vmul.f32 %v100, %v147
  %v172 = vmul.f32 %v101, %v147
  %v173 = vmul.f32 %v102, %v147
  %v174 = vmul.f32 %v103, %v147
  %v175 = vmul.f32 %v104, %v147
  %v176 = vmul.f32 %v105, %v147
  %v177 = vmul.f32 %v106, %v147
  %v178 = vmul.f32 %v107, %v147
  %v179 = vmul.f32 %v108, %v147
  %v180 = vmul.f32 %v109, %v147
  %v181 = vmul.f32 %v110, %v147
  %v182 = vmul.f32 %v111, %v147
  %v183 = vmul.f32 %v112, %v147
  %v184 = vmul.f32 %v113, %v147
  %v185 = vmul.f32 %v114, %v147
  %v186 = vmul.f32 %v115, %v147
  %v187 = vmul.f32 %v116, %v147
  %v188 = vmul.f32 %v117, %v147
  %v189 = vmul.f32 %v118, %v147
  %v190 = vmul.f32 %v119, %v147
  %v191 = vmul.f32 %v120, %v147
  %v192 = vmul.f32 %v121, %v147
  %v193 = vmul.f32 %v122, %v147
  %v194 = vmul.f32 %v123, %v147
  %v195 = vmul.f32 %v124, %v147
  %v196 = vmul.f32 %v125, %v147
  %v197 = vmul.f32 %v126, %v147
  %v198 = vmul.f32 %v127, %v147
  %v199 = vmul.f32 %v128, %v147
  %v200 = vmul.f32 %v129, %v147
  %v201 = vmul.f32 %v130, %v147
  %v202 = vmul.f32 %v131, %v147
  %v203 = vmul.f32 %v132, %v147
  %v204 = vmul.f32 %v133, %v147
  %v205 = vmul.f32 %v134, %v147
  %v206 = vmul.f32 %v135, %v147
  %v207 = vmul.f32 %v136, %v147
  %v208 = vmul.f32 %v137, %v147
  %v209 = vmul.f32 %v138, %v147
  %v210 = vmul.f32 %v139, %v147
  %v211 = vmul.f32 %v140, %v147
  %v212 = vmul.f32 %v141, %v147
  %v213 = vld [vmem:[%s2] sm:$0x1]
  %v215 = vlaneseq
  %v216 = vshrl.u32 %v215, 7
  %v217 = vsub.s32 0, %v216
  %v218 = vrot.slane %v213, %v217
  %v220 = vadd.f32 %v149, %v218
  %v221 = vadd.f32 %v150, %v218
  %v222 = vadd.f32 %v151, %v218
  %v223 = vadd.f32 %v152, %v218
  %v224 = vadd.f32 %v153, %v218
  %v225 = vadd.f32 %v154, %v218
  %v226 = vadd.f32 %v155, %v218
  %v227 = vadd.f32 %v156, %v218
  %v228 = vadd.f32 %v157, %v218
  %v229 = vadd.f32 %v158, %v218
  %v230 = vadd.f32 %v159, %v218
  %v231 = vadd.f32 %v160, %v218
  %v232 = vadd.f32 %v161, %v218
  %v233 = vadd.f32 %v162, %v218
  %v234 = vadd.f32 %v163, %v218
  %v235 = vadd.f32 %v164, %v218
  %v236 = vadd.f32 %v165, %v218
  %v237 = vadd.f32 %v166, %v218
  %v238 = vadd.f32 %v167, %v218
  %v239 = vadd.f32 %v168, %v218
  %v240 = vadd.f32 %v169, %v218
  %v241 = vadd.f32 %v170, %v218
  %v242 = vadd.f32 %v171, %v218
  %v243 = vadd.f32 %v172, %v218
  %v244 = vadd.f32 %v173, %v218
  %v245 = vadd.f32 %v174, %v218
  %v246 = vadd.f32 %v175, %v218
  %v247 = vadd.f32 %v176, %v218
  %v248 = vadd.f32 %v177, %v218
  %v249 = vadd.f32 %v178, %v218
  %v250 = vadd.f32 %v179, %v218
  %v251 = vadd.f32 %v180, %v218
  %v252 = vadd.f32 %v181, %v218
  %v253 = vadd.f32 %v182, %v218
  %v254 = vadd.f32 %v183, %v218
  %v255 = vadd.f32 %v184, %v218
  %v256 = vadd.f32 %v185, %v218
  %v257 = vadd.f32 %v186, %v218
  %v258 = vadd.f32 %v187, %v218
  %v259 = vadd.f32 %v188, %v218
  %v260 = vadd.f32 %v189, %v218
  %v261 = vadd.f32 %v190, %v218
  %v262 = vadd.f32 %v191, %v218
  %v263 = vadd.f32 %v192, %v218
  %v264 = vadd.f32 %v193, %v218
  %v265 = vadd.f32 %v194, %v218
  %v266 = vadd.f32 %v195, %v218
  %v267 = vadd.f32 %v196, %v218
  %v268 = vadd.f32 %v197, %v218
  %v269 = vadd.f32 %v198, %v218
  %v270 = vadd.f32 %v199, %v218
  %v271 = vadd.f32 %v200, %v218
  %v272 = vadd.f32 %v201, %v218
  %v273 = vadd.f32 %v202, %v218
  %v274 = vadd.f32 %v203, %v218
  %v275 = vadd.f32 %v204, %v218
  %v276 = vadd.f32 %v205, %v218
  %v277 = vadd.f32 %v206, %v218
  %v278 = vadd.f32 %v207, %v218
  %v279 = vadd.f32 %v208, %v218
  %v280 = vadd.f32 %v209, %v218
  %v281 = vadd.f32 %v210, %v218
  %v282 = vadd.f32 %v211, %v218
  %v283 = vadd.f32 %v212, %v218
  %v284 = vmax.f32 %v220, 0.0
  %v285 = vmax.f32 %v221, 0.0
  %v286 = vmax.f32 %v222, 0.0
  %v287 = vmax.f32 %v223, 0.0
  %v288 = vmax.f32 %v224, 0.0
  %v289 = vmax.f32 %v225, 0.0
  %v290 = vmax.f32 %v226, 0.0
  %v291 = vmax.f32 %v227, 0.0
  %v292 = vmax.f32 %v228, 0.0
  %v293 = vmax.f32 %v229, 0.0
  %v294 = vmax.f32 %v230, 0.0
  %v295 = vmax.f32 %v231, 0.0
  %v296 = vmax.f32 %v232, 0.0
  %v297 = vmax.f32 %v233, 0.0
  %v298 = vmax.f32 %v234, 0.0
  %v299 = vmax.f32 %v235, 0.0
  %v300 = vmax.f32 %v236, 0.0
  %v301 = vmax.f32 %v237, 0.0
  %v302 = vmax.f32 %v238, 0.0
  %v303 = vmax.f32 %v239, 0.0
  %v304 = vmax.f32 %v240, 0.0
  %v305 = vmax.f32 %v241, 0.0
  %v306 = vmax.f32 %v242, 0.0
  %v307 = vmax.f32 %v243, 0.0
  %v308 = vmax.f32 %v244, 0.0
  %v309 = vmax.f32 %v245, 0.0
  %v310 = vmax.f32 %v246, 0.0
  %v311 = vmax.f32 %v247, 0.0
  %v312 = vmax.f32 %v248, 0.0
  %v313 = vmax.f32 %v249, 0.0
  %v314 = vmax.f32 %v250, 0.0
  %v315 = vmax.f32 %v251, 0.0
  %v316 = vmax.f32 %v252, 0.0
  %v317 = vmax.f32 %v253, 0.0
  %v318 = vmax.f32 %v254, 0.0
  %v319 = vmax.f32 %v255, 0.0
  %v320 = vmax.f32 %v256, 0.0
  %v321 = vmax.f32 %v257, 0.0
  %v322 = vmax.f32 %v258, 0.0
  %v323 = vmax.f32 %v259, 0.0
  %v324 = vmax.f32 %v260, 0.0
  %v325 = vmax.f32 %v261, 0.0
  %v326 = vmax.f32 %v262, 0.0
  %v327 = vmax.f32 %v263, 0.0
  %v328 = vmax.f32 %v264, 0.0
  %v329 = vmax.f32 %v265, 0.0
  %v330 = vmax.f32 %v266, 0.0
  %v331 = vmax.f32 %v267, 0.0
  %v332 = vmax.f32 %v268, 0.0
  %v333 = vmax.f32 %v269, 0.0
  %v334 = vmax.f32 %v270, 0.0
  %v335 = vmax.f32 %v271, 0.0
  %v336 = vmax.f32 %v272, 0.0
  %v337 = vmax.f32 %v273, 0.0
  %v338 = vmax.f32 %v274, 0.0
  %v339 = vmax.f32 %v275, 0.0
  %v340 = vmax.f32 %v276, 0.0
  %v341 = vmax.f32 %v277, 0.0
  %v342 = vmax.f32 %v278, 0.0
  %v343 = vmax.f32 %v279, 0.0
  %v344 = vmax.f32 %v280, 0.0
  %v345 = vmax.f32 %v281, 0.0
  %v346 = vmax.f32 %v282, 0.0
  %v347 = vmax.f32 %v283, 0.0
  %348 = vst [vmem:[%s3] sm:$0xff] %v284
  %349 = vst [vmem:[%s3 + $0x8] sm:$0xff] %v285
  %350 = vst [vmem:[%s3 + $0x10] sm:$0xff] %v286
  %351 = vst [vmem:[%s3 + $0x18] sm:$0xff] %v287
  %352 = vst [vmem:[%s3 + $0x20] sm:$0xff] %v288
  %353 = vst [vmem:[%s3 + $0x28] sm:$0xff] %v289
  %354 = vst [vmem:[%s3 + $0x30] sm:$0xff] %v290
  %355 = vst [vmem:[%s3 + $0x38] sm:$0xff] %v291
  %356 = vst [vmem:[%s3 + $0x40] sm:$0xff] %v292
  %357 = vst [vmem:[%s3 + $0x48] sm:$0xff] %v293
  %358 = vst [vmem:[%s3 + $0x50] sm:$0xff] %v294
  %359 = vst [vmem:[%s3 + $0x58] sm:$0xff] %v295
  %360 = vst [vmem:[%s3 + $0x60] sm:$0xff] %v296
  %361 = vst [vmem:[%s3 + $0x68] sm:$0xff] %v297
  %362 = vst [vmem:[%s3 + $0x70] sm:$0xff] %v298
  %363 = vst [vmem:[%s3 + $0x78] sm:$0xff] %v299
  %364 = vst [vmem:[%s3 + $0x80] sm:$0xff] %v300
  %365 = vst [vmem:[%s3 + $0x88] sm:$0xff] %v301
  %366 = vst [vmem:[%s3 + $0x90] sm:$0xff] %v302
  %367 = vst [vmem:[%s3 + $0x98] sm:$0xff] %v303
  %368 = vst [vmem:[%s3 + $0xa0] sm:$0xff] %v304
  %369 = vst [vmem:[%s3 + $0xa8] sm:$0xff] %v305
  %370 = vst [vmem:[%s3 + $0xb0] sm:$0xff] %v306
  %371 = vst [vmem:[%s3 + $0xb8] sm:$0xff] %v307
  %372 = vst [vmem:[%s3 + $0xc0] sm:$0xff] %v308
  %373 = vst [vmem:[%s3 + $0xc8] sm:$0xff] %v309
  %374 = vst [vmem:[%s3 + $0xd0] sm:$0xff] %v310
  %375 = vst [vmem:[%s3 + $0xd8] sm:$0xff] %v311
  %376 = vst [vmem:[%s3 + $0xe0] sm:$0xff] %v312
  %377 = vst [vmem:[%s3 + $0xe8] sm:$0xff] %v313
  %378 = vst [vmem:[%s3 + $0xf0] sm:$0xff] %v314
  %379 = vst [vmem:[%s3 + $0xf8] sm:$0xff] %v315
  %380 = vst [vmem:[%s3 + $0x100] sm:$0xff] %v316
  %381 = vst [vmem:[%s3 + $0x108] sm:$0xff] %v317
  %382 = vst [vmem:[%s3 + $0x110] sm:$0xff] %v318
  %383 = vst [vmem:[%s3 + $0x118] sm:$0xff] %v319
  %384 = vst [vmem:[%s3 + $0x120] sm:$0xff] %v320
  %385 = vst [vmem:[%s3 + $0x128] sm:$0xff] %v321
  %386 = vst [vmem:[%s3 + $0x130] sm:$0xff] %v322
  %387 = vst [vmem:[%s3 + $0x138] sm:$0xff] %v323
  %388 = vst [vmem:[%s3 + $0x140] sm:$0xff] %v324
  %389 = vst [vmem:[%s3 + $0x148] sm:$0xff] %v325
  %390 = vst [vmem:[%s3 + $0x150] sm:$0xff] %v326
  %391 = vst [vmem:[%s3 + $0x158] sm:$0xff] %v327
  %392 = vst [vmem:[%s3 + $0x160] sm:$0xff] %v328
  %393 = vst [vmem:[%s3 + $0x168] sm:$0xff] %v329
  %394 = vst [vmem:[%s3 + $0x170] sm:$0xff] %v330
  %395 = vst [vmem:[%s3 + $0x178] sm:$0xff] %v331
  %396 = vst [vmem:[%s3 + $0x180] sm:$0xff] %v332
  %397 = vst [vmem:[%s3 + $0x188] sm:$0xff] %v333
  %398 = vst [vmem:[%s3 + $0x190] sm:$0xff] %v334
  %399 = vst [vmem:[%s3 + $0x198] sm:$0xff] %v335
  %400 = vst [vmem:[%s3 + $0x1a0] sm:$0xff] %v336
  %401 = vst [vmem:[%s3 + $0x1a8] sm:$0xff] %v337
  %402 = vst [vmem:[%s3 + $0x1b0] sm:$0xff] %v338
  %403 = vst [vmem:[%s3 + $0x1b8] sm:$0xff] %v339
  %404 = vst [vmem:[%s3 + $0x1c0] sm:$0xff] %v340
  %405 = vst [vmem:[%s3 + $0x1c8] sm:$0xff] %v341
  %406 = vst [vmem:[%s3 + $0x1d0] sm:$0xff] %v342
  %407 = vst [vmem:[%s3 + $0x1d8] sm:$0xff] %v343
  %408 = vst [vmem:[%s3 + $0x1e0] sm:$0xff] %v344
  %409 = vst [vmem:[%s3 + $0x1e8] sm:$0xff] %v345
  %410 = vst [vmem:[%s3 + $0x1f0] sm:$0xff] %v346
  %411 = vst [vmem:[%s3 + $0x1f8] sm:$0xff] %v347
  // Predicated region
  $region14: #{expansive_block.7} parent=0 // pred_check
    _
  $region15: #{expansive_block.7} parent=0 // pred_check_branch
    %413 = sbr.rel (0) target = $region17
  $region16: #{expansive_block.7} parent=0 // pred_region
    _
  $region17: #{expansive_block.7} parent=0 // pred_fallthru
    _
  // Predicated region
  $region18: #{expansive_block.7} parent=0 // pred_check
    _
  $region19: #{expansive_block.7} parent=0 // pred_check_branch
    %415 = sbr.rel (0) target = $region21
  $region20: #{expansive_block.7} parent=0 // pred_region
    _
  $region21: #{expansive_block.7} parent=0 // pred_fallthru
    _

// kernel: expansive_block.6
$region0: #{expansive_block.6}
  #allocation0 [shape = 'u32[]', space=smem, size = 0x4, offset = 0x4, fixed_abs, tag = 'smem constant byte address 0x4 - core index']
  #allocation1 [shape = 'u32[144,128]{1,0:T(1,128)}', space=vmem, size = 0x12000, scoped, tag = 'internal scratch']
  #allocation2 [shape = 'bf16[2,18,16,128]{3,2,1,0:T(16,128)(2,1)}', space=vmem, size = 0x24000, scoped, tag = 'scratch operand']
  #allocation3 [shape = 's32[6]{0}', space=sflag, size = 0x18, scoped, tag = 'scratch operand']
  #allocation4 [shape = 's32[]', space=sflag, size = 0x4, offset = 0, fixed_abs, tag = 'sflag constant byte address 0x0 - dummy sync flag']
  #allocation5 [shape = 's32[]', space=sflag, size = 0x4, offset = 0, fixed_abs, tag = 'sflag constant byte address 0x0 - dummy sync flag']
  #allocation6 [shape = 's32[]', space=sflag, size = 0x4, offset = 0, fixed_abs, tag = 'sflag constant byte address 0x0 - dummy sync flag']
  #allocation7 [shape = 's32[]', space=sflag, size = 0x4, offset = 0, fixed_abs, tag = 'sflag constant byte address 0x0 - dummy sync flag']
  #allocation8 [shape = 's32[]', space=sflag, size = 0x4, offset = 0, fixed_abs, tag = 'sflag constant byte address 0x0 - dummy sync flag']
  #allocation9 [shape = 's32[]', space=sflag, size = 0x4, offset = 0, fixed_abs, tag = 'sflag constant byte address 0x0 - dummy sync flag']
  %s0 = inlined_call_operand.vmem [shape: bf16[2,16,16,128], index: 0, kind: input, shape index: {}]
  %s1 = inlined_call_operand.vmem [shape: bf16[1152,128], index: 1, kind: input, shape index: {}]
  %s2 = inlined_call_operand.vmem [shape: f32[1,128], index: 2, kind: input, shape index: {}]
  %s3 = inlined_call_operand.vmem [shape: f32[1,128], index: 3, kind: input, shape index: {}]
  %s4 = inlined_call_operand.vmem [shape: f32[1,128], index: 4, kind: input, shape index: {}]
  %s5 = inlined_call_operand.vmem [shape: bf16[2,16,16,128], index: 5, kind: output, shape index: {0}]
  %s6 = inlined_call_operand.vmem [shape: f32[2,1,2,128], index: 6, kind: output, shape index: {1}]
  %7 = xla_tuple %s5, %s6
  %s8 = sld [smem:[#allocation0]]
  $region269: #{expansive_block.6} parent=0
    _
  %s10 = ssub.s32 1, %s8
  %s11 = scalar_select 0, %s10, %s8
  loop: start=0, step=1, limit=4
  $region2: #{expansive_block.6} parent=0 // loop_pre_header
    _
  $region3: #{expansive_block.6} parent=0 // loop_header
    %s13 = sphi 0, %s17
    %p14 = scmp.ge.s32.totalorder %s13, 4
    %s20 = sphi 0, %s32
    %s21 = sphi 0, %s28
    %s22 = sphi 0, %s20
    %s23 = sphi 0, %s21
    %s24 = sphi 0, %s22
    %s25 = sphi 0, %s23
    %s33 = sphi 0, %s33
    %s35 = sphi 0, %s33
    %s36 = sphi 0, %s35
    %s50 = sphi 0, %s36
    %s54 = sphi 0, %s54
    %s56 = sphi 0, %s54
    %s57 = sphi 0, %s56
    %s71 = sphi 0, %s57
    %s75 = sphi 0, %s75
    %s77 = sphi 0, %s75
    %s78 = sphi 0, %s77
    %s92 = sphi 0, %s78
    %s96 = sphi 0, %s96
    %s98 = sphi 0, %s96
    %s99 = sphi 0, %s98
    %s113 = sphi 0, %s99
    %s121 = sphi 0, %s123
    %s124 = sphi 0, %s121
    %s125 = sphi 0, %s124
    %s141 = sphi 0, %s125
    %s149 = sphi 0, %s151
    %s152 = sphi 0, %s149
    %s153 = sphi 0, %s152
    %s169 = sphi 0, %s153
  $region4: #{expansive_block.6} parent=0 // loop_header_branch
    %16 = sbr.rel (%p14) target = $region8
  $region5: #{expansive_block.6} parent=0 // loop_body
    %s18 = ssub.s32 %s13, 1
    %s19 = ssub.s32 %s13, 2
    %s26 = sadd.s32 1, %s21
    %p27 = scmp.ge.s32.totalorder %s26, 1
    %s28 = scalar_select %p27, 0, %s26
    %s29 = sadd.s32 1, %s20
    %s30 = scalar_select %p27, %s29, %s20
    %p31 = scmp.ge.s32.totalorder %s30, 2
    %s32 = scalar_select %p31, 0, %s30
    %s34 = sadd.s32 %s33, 1
    %p37 = scmp.eq.s32.totalorder %s13, 1
    %p38 = scmp.ne.s32.totalorder %s33, %s35
    %p39 = scmp.eq.s32.totalorder %s13, 0
    %p40 = por %p38, %p39
    %p41 = scmp.ne.s32.totalorder %s33, %s35
    %p42 = scmp.eq.s32.totalorder %s18, 1
    %p43 = por %p41, %p42
    %p44 = scmp.ne.s32.totalorder %s35, %s36
    %p45 = scmp.eq.s32.totalorder %s18, 0
    %p46 = por %p44, %p45
    %p47 = scmp.ne.s32.totalorder %s35, %s36
    %p48 = scmp.eq.s32.totalorder %s19, 1
    %p49 = por %p47, %p48
    %p51 = scmp.ne.s32.totalorder %s36, %s50
    %p52 = scmp.eq.s32.totalorder %s19, 0
    %p53 = por %p51, %p52
    %s55 = sadd.s32 %s54, 1
    %p58 = scmp.eq.s32.totalorder %s13, 1
    %p59 = scmp.ne.s32.totalorder %s54, %s56
    %p60 = scmp.eq.s32.totalorder %s13, 0
    %p61 = por %p59, %p60
    %p62 = scmp.ne.s32.totalorder %s54, %s56
    %p63 = scmp.eq.s32.totalorder %s18, 1
    %p64 = por %p62, %p63
    %p65 = scmp.ne.s32.totalorder %s56, %s57
    %p66 = scmp.eq.s32.totalorder %s18, 0
    %p67 = por %p65, %p66
    %p68 = scmp.ne.s32.totalorder %s56, %s57
    %p69 = scmp.eq.s32.totalorder %s19, 1
    %p70 = por %p68, %p69
    %p72 = scmp.ne.s32.totalorder %s57, %s71
    %p73 = scmp.eq.s32.totalorder %s19, 0
    %p74 = por %p72, %p73
    %s76 = sadd.s32 %s75, 1
    %p79 = scmp.eq.s32.totalorder %s13, 1
    %p80 = scmp.ne.s32.totalorder %s75, %s77
    %p81 = scmp.eq.s32.totalorder %s13, 0
    %p82 = por %p80, %p81
    %p83 = scmp.ne.s32.totalorder %s75, %s77
    %p84 = scmp.eq.s32.totalorder %s18, 1
    %p85 = por %p83, %p84
    %p86 = scmp.ne.s32.totalorder %s77, %s78
    %p87 = scmp.eq.s32.totalorder %s18, 0
    %p88 = por %p86, %p87
    %p89 = scmp.ne.s32.totalorder %s77, %s78
    %p90 = scmp.eq.s32.totalorder %s19, 1
    %p91 = por %p89, %p90
    %p93 = scmp.ne.s32.totalorder %s78, %s92
    %p94 = scmp.eq.s32.totalorder %s19, 0
    %p95 = por %p93, %p94
    %s97 = sadd.s32 %s96, 1
    %p100 = scmp.eq.s32.totalorder %s13, 1
    %p101 = scmp.ne.s32.totalorder %s96, %s98
    %p102 = scmp.eq.s32.totalorder %s13, 0
    %p103 = por %p101, %p102
    %p104 = scmp.ne.s32.totalorder %s96, %s98
    %p105 = scmp.eq.s32.totalorder %s18, 1
    %p106 = por %p104, %p105
    %p107 = scmp.ne.s32.totalorder %s98, %s99
    %p108 = scmp.eq.s32.totalorder %s18, 0
    %p109 = por %p107, %p108
    %p110 = scmp.ne.s32.totalorder %s98, %s99
    %p111 = scmp.eq.s32.totalorder %s19, 1
    %p112 = por %p110, %p111
    %p114 = scmp.ne.s32.totalorder %s99, %s113
    %p115 = scmp.eq.s32.totalorder %s19, 0
    %p116 = por %p114, %p115
    %s117 = ssub.s32 %s20, %s32
    %s118 = ssub.s32 %s21, %s28
    %s119 = sor.u32 %s117, %s118
    %p120 = scmp.eq.s32.totalorder %s119, 0
    %s122 = sadd.s32 %s121, 1
    %s123 = scalar_select %p120, %s121, %s122
    %p126 = pneg %p120
    %p127 = scmp.eq.s32.totalorder %s13, 1
    %p128 = por %p126, %p127
    %p129 = scmp.ne.s32.totalorder %s121, %s124
    %p130 = scmp.eq.s32.totalorder %s13, 0
    %p131 = por %p129, %p130
    %p132 = scmp.ne.s32.totalorder %s121, %s124
    %p133 = scmp.eq.s32.totalorder %s18, 1
    %p134 = por %p132, %p133
    %p135 = scmp.ne.s32.totalorder %s124, %s125
    %p136 = scmp.eq.s32.totalorder %s18, 0
    %p137 = por %p135, %p136
    %p138 = scmp.ne.s32.totalorder %s124, %s125
    %p139 = scmp.eq.s32.totalorder %s19, 1
    %p140 = por %p138, %p139
    %p142 = scmp.ne.s32.totalorder %s125, %s141
    %p143 = scmp.eq.s32.totalorder %s19, 0
    %p144 = por %p142, %p143
    %s145 = ssub.s32 %s20, %s32
    %s146 = ssub.s32 %s21, %s28
    %s147 = sor.u32 %s145, %s146
    %p148 = scmp.eq.s32.totalorder %s147, 0
    %s150 = sadd.s32 %s149, 1
    %s151 = scalar_select %p148, %s149, %s150
    %p154 = pneg %p148
    %p155 = scmp.eq.s32.totalorder %s13, 1
    %p156 = por %p154, %p155
    %p157 = scmp.ne.s32.totalorder %s149, %s152
    %p158 = scmp.eq.s32.totalorder %s13, 0
    %p159 = por %p157, %p158
    %p160 = scmp.ne.s32.totalorder %s149, %s152
    %p161 = scmp.eq.s32.totalorder %s18, 1
    %p162 = por %p160, %p161
    %p163 = scmp.ne.s32.totalorder %s152, %s153
    %p164 = scmp.eq.s32.totalorder %s18, 0
    %p165 = por %p163, %p164
    %p166 = scmp.ne.s32.totalorder %s152, %s153
    %p167 = scmp.eq.s32.totalorder %s19, 1
    %p168 = por %p166, %p167
    %p170 = scmp.ne.s32.totalorder %s153, %s169
    %p171 = scmp.eq.s32.totalorder %s19, 0
    %p172 = por %p170, %p171
    %p173 = scmp.le.s32.totalorder 1, %s13
    %p174 = scmp.lt.s32.totalorder %s13, 3
    %p175 = pnand %p173, %p174
    %p176 = pneg %p175
    // Predicated region
    $region9: #{expansive_block.6} parent=5 // pred_check
      _
    $region10: #{expansive_block.6} parent=5 // pred_check_branch
      %178 = sbr.rel (%p175) target = $region12
    $region11: #{expansive_block.6} parent=5 // pred_region
      %s179 = ssub.s32 %s13, 1
      // Predicated region
      $region13: #{expansive_block.6} parent=11 // pred_check
        %p180 = pneg %p46
      $region14: #{expansive_block.6} parent=11 // pred_check_branch
        %182 = sbr.rel (%p180) target = $region16
      $region15: #{expansive_block.6} parent=11 // pred_region
        _
      $region16: #{expansive_block.6} parent=11 // pred_fallthru
        _
      // Predicated region
      $region17: #{expansive_block.6} parent=11 // pred_check
        %p183 = pneg %p67
      $region18: #{expansive_block.6} parent=11 // pred_check_branch
        %185 = sbr.rel (%p183) target = $region20
      $region19: #{expansive_block.6} parent=11 // pred_region
        _
      $region20: #{expansive_block.6} parent=11 // pred_fallthru
        _
      // Predicated region
      $region21: #{expansive_block.6} parent=11 // pred_check
        %p186 = pneg %p88
      $region22: #{expansive_block.6} parent=11 // pred_check_branch
        %188 = sbr.rel (%p186) target = $region24
      $region23: #{expansive_block.6} parent=11 // pred_region
        _
      $region24: #{expansive_block.6} parent=11 // pred_fallthru
        _
      // Predicated region
      $region25: #{expansive_block.6} parent=11 // pred_check
        %p189 = pneg %p109
      $region26: #{expansive_block.6} parent=11 // pred_check_branch
        %191 = sbr.rel (%p189) target = $region28
      $region27: #{expansive_block.6} parent=11 // pred_region
        _
      $region28: #{expansive_block.6} parent=11 // pred_fallthru
        _
    $region12: #{expansive_block.6} parent=5 // pred_fallthru
      _
    %p192 = scmp.lt.s32.totalorder %s13, 2
    // Predicated region
    $region29: #{expansive_block.6} parent=5 // pred_check
      %p193 = pneg %p192
    $region30: #{expansive_block.6} parent=5 // pred_check_branch
      %195 = sbr.rel (%p193) target = $region32
    $region31: #{expansive_block.6} parent=5 // pred_region
      _
    $region32: #{expansive_block.6} parent=5 // pred_fallthru
      _
    %p196 = scmp.le.s32.totalorder 1, %s13
    %p197 = scmp.lt.s32.totalorder %s13, 3
    %p198 = pnand %p196, %p197
    %p199 = pneg %p198
    // Predicated region
    $region33: #{expansive_block.6} parent=5 // pred_check
      _
    $region34: #{expansive_block.6} parent=5 // pred_check_branch
      %201 = sbr.rel (%p198) target = $region36
    $region35: #{expansive_block.6} parent=5 // pred_region
      %s202 = ssub.s32 %s13, 1
      %p203 = pneg %p46
      %p204 = pneg %p43
      %p205 = pneg %p67
      %p206 = pneg %p64
      %p207 = pneg %p88
      %p208 = pneg %p85
      %p209 = pneg %p109
      %p210 = pneg %p106
      %p211 = pneg %p137
      %p212 = pneg %p134
      %s213 = smul.u32 16, %s23
      %p214 = scmp.lt.s32.totalorder %s22, 1
      %s215 = scalar_select %p214, %s22, 1
      %p216 = scmp.lt.s32.totalorder %s213, 15
      %s217 = scalar_select %p216, %s213, 15
      %s218 = smul.addr %s217, 2
      %s219 = smul.addr %s215, 32
      %s220 = sadd.s32 %s218, %s219
      %s221 = smul.addr %s220, 4
      %s222 = scalar_lea.vmem %s5, %s221
      %p223 = pneg %p165
      %p224 = pneg %p162
      %p225 = scmp.lt.s32.totalorder %s22, 1
      %s226 = scalar_select %p225, %s22, 1
      %p227 = scmp.lt.s32.totalorder %s23, 0
      %s228 = scalar_select %p227, %s23, 0
      %s229 = sadd.s32 %s228, %s226
      %s230 = smul.addr %s229, 2
      %s231 = scalar_lea.vmem %s6, %s230
      %s232 = smul.u32 16, %s23
      %p233 = scmp.lt.s32.totalorder %s22, 1
      %s234 = scalar_select %p233, %s22, 1
      %p235 = scmp.lt.s32.totalorder %s232, 15
      %s236 = scalar_select %p235, %s232, 15
      %s237 = smul.addr %s236, 2
      %s238 = smul.addr %s234, 32
      %s239 = sadd.s32 %s237, %s238
      %s240 = smul.addr %s239, 4
      %s241 = scalar_lea.vmem %s5, %s240
      %s242 = smul.u32 16, %s23
      %p243 = scmp.lt.s32.totalorder %s22, 1
      %s244 = scalar_select %p243, %s22, 1
      %p245 = scmp.lt.s32.totalorder %s23, 0
      %s246 = scalar_select %p245, %s23, 0
      %s247 = sadd.s32 %s246, %s244
      %s248 = smul.addr %s247, 2
      %s249 = scalar_lea.vmem %s6, %s248
      %p251 = scmp.eq.s32.totalorder %s23, 0
      // Predicated region
      $region37: #{expansive_block.6} parent=35 // pred_check
        %p252 = pneg %p251
      $region38: #{expansive_block.6} parent=35 // pred_check_branch
        %254 = sbr.rel (%p252) target = $region40
      $region39: #{expansive_block.6} parent=35 // pred_region
        %s255 = smul.u32 %s22, 32
        %s256 = smul.addr %s255, 4
        %s257 = scalar_lea.vmem %s0, %s256
        %p259 = scmp.lt.u32.totalorder 8, 8
        %p260 = pneg %p259
        // Predicated region
        $region41: #{expansive_block.6} parent=39 // pred_check
          _
        $region42: #{expansive_block.6} parent=39 // pred_check_branch
          %262 = sbr.rel (%p259) target = $region44
        $region43: #{expansive_block.6} parent=39 // pred_region
          %s277 = sand.u32 8, 7
          %p278 = scmp.eq.s32.totalorder %s277, 0
          // Predicated region
          $region56: #{expansive_block.6} parent=43 // pred_check
            %p279 = pneg %p278
          $region57: #{expansive_block.6} parent=43 // pred_check_branch
            %281 = sbr.rel (%p279) target = $region59
          $region58: #{expansive_block.6} parent=43 // pred_region
            loop: start=0, step=1, limit=1
            $region60: #{expansive_block.6} parent=58 // loop_pre_header
              _
            $region61: #{expansive_block.6} parent=58 // loop_header
              %s283 = sphi 0, %s287
              %p284 = scmp.ge.s32.totalorder %s283, 1
              %s288 = sphi %s257, %s257
              %s289 = sphi [#allocation2], [#allocation2]
            $region62: #{expansive_block.6} parent=58 // loop_header_branch
              %286 = sbr.rel (%p284) target = $region66
            $region63: #{expansive_block.6} parent=58 // loop_body
              %v290 = vld [vmem:[%s288] sm:$0xff]
              %291 = vst [vmem:[%s289] sm:$0xff] %v290
            $region64: #{expansive_block.6} parent=58 // loop_footer
              %s287 = sadd.s32 1, %s283
            $region65: #{expansive_block.6} parent=58 // loop_footer_branch
              %282 = sbr.rel target = $region61
            $region66: #{expansive_block.6} parent=58 // loop_exit
              _
          $region59: #{expansive_block.6} parent=43 // pred_fallthru
            _
          %p292 = pneg %p278
          // Predicated region
          $region67: #{expansive_block.6} parent=43 // pred_check
            _
          $region68: #{expansive_block.6} parent=43 // pred_check_branch
            %294 = sbr.rel (%p278) target = $region70
          $region69: #{expansive_block.6} parent=43 // pred_region
            %s295 = sand.u32 8, 7
          $region70: #{expansive_block.6} parent=43 // pred_fallthru
            _
        $region44: #{expansive_block.6} parent=39 // pred_fallthru
          _
        // Predicated region
        $region45: #{expansive_block.6} parent=39 // pred_check
          %p263 = pneg %p259
        $region46: #{expansive_block.6} parent=39 // pred_check_branch
          %265 = sbr.rel (%p263) target = $region48
        $region47: #{expansive_block.6} parent=39 // pred_region
          %s266 = sshllo.u32 0, 8
          loop: start=0, step=1, limit=1
          $region49: #{expansive_block.6} parent=47 // loop_pre_header
            _
          $region50: #{expansive_block.6} parent=47 // loop_header
            %s268 = sphi 0, %s272
            %p269 = scmp.ge.s32.totalorder %s268, 1
            %s273 = sphi %s257, %s257
            %s274 = sphi [#allocation2], [#allocation2]
          $region51: #{expansive_block.6} parent=47 // loop_header_branch
            %271 = sbr.rel (%p269) target = $region55
          $region52: #{expansive_block.6} parent=47 // loop_body
            %v275 = vld [vmem:[%s273] sm:%s266]
            %276 = vst [vmem:[%s274] sm:%s266] %v275
          $region53: #{expansive_block.6} parent=47 // loop_footer
            %s272 = sadd.s32 1, %s268
          $region54: #{expansive_block.6} parent=47 // loop_footer_branch
            %267 = sbr.rel target = $region50
          $region55: #{expansive_block.6} parent=47 // loop_exit
            _
        $region48: #{expansive_block.6} parent=39 // pred_fallthru
          _
        // Predicated region
        $region71: #{expansive_block.6} parent=39 // pred_check
          _
        $region72: #{expansive_block.6} parent=39 // pred_check_branch
          %298 = sbr.rel (0) target = $region74
        $region73: #{expansive_block.6} parent=39 // pred_region
          %299 = vsyncadd [#allocation3], 128
        $region74: #{expansive_block.6} parent=39 // pred_fallthru
          _
        %s300 = scalar_lea.vmem [#allocation2], 8
        %s301 = scalar_lea.sflag [#allocation3], 1
        %p303 = scmp.lt.u32.totalorder 128, 8
        %p304 = pneg %p303
        // Predicated region
        $region75: #{expansive_block.6} parent=39 // pred_check
          _
        $region76: #{expansive_block.6} parent=39 // pred_check_branch
          %306 = sbr.rel (%p303) target = $region78
        $region77: #{expansive_block.6} parent=39 // pred_region
          %s321 = sand.u32 128, 7
          %p322 = scmp.eq.s32.totalorder %s321, 0
          // Predicated region
          $region90: #{expansive_block.6} parent=77 // pred_check
            %p323 = pneg %p322
          $region91: #{expansive_block.6} parent=77 // pred_check_branch
            %325 = sbr.rel (%p323) target = $region93
          $region92: #{expansive_block.6} parent=77 // pred_region
            loop: start=0, step=1, limit=1
            $region94: #{expansive_block.6} parent=92 // loop_pre_header
              _
            $region95: #{expansive_block.6} parent=92 // loop_header
              %s327 = sphi 0, %s331
              %p328 = scmp.ge.s32.totalorder %s327, 1
              %s332 = sphi %s257, %s257
              %s333 = sphi %s300, %s300
            $region96: #{expansive_block.6} parent=92 // loop_header_branch
              %330 = sbr.rel (%p328) target = $region100
            $region97: #{expansive_block.6} parent=92 // loop_body
              %v334 = vld [vmem:[%s332] sm:$0xff]
              %335 = vst [vmem:[%s333] sm:$0xff] %v334
              %v336 = vld [vmem:[%s332 + $0x8] sm:$0xff]
              %337 = vst [vmem:[%s333 + $0x8] sm:$0xff] %v336
              %v338 = vld [vmem:[%s332 + $0x10] sm:$0xff]
              %339 = vst [vmem:[%s333 + $0x10] sm:$0xff] %v338
              %v340 = vld [vmem:[%s332 + $0x18] sm:$0xff]
              %341 = vst [vmem:[%s333 + $0x18] sm:$0xff] %v340
              %v342 = vld [vmem:[%s332 + $0x20] sm:$0xff]
              %343 = vst [vmem:[%s333 + $0x20] sm:$0xff] %v342
              %v344 = vld [vmem:[%s332 + $0x28] sm:$0xff]
              %345 = vst [vmem:[%s333 + $0x28] sm:$0xff] %v344
              %v346 = vld [vmem:[%s332 + $0x30] sm:$0xff]
              %347 = vst [vmem:[%s333 + $0x30] sm:$0xff] %v346
              %v348 = vld [vmem:[%s332 + $0x38] sm:$0xff]
              %349 = vst [vmem:[%s333 + $0x38] sm:$0xff] %v348
              %v350 = vld [vmem:[%s332 + $0x40] sm:$0xff]
              %351 = vst [vmem:[%s333 + $0x40] sm:$0xff] %v350
              %v352 = vld [vmem:[%s332 + $0x48] sm:$0xff]
              %353 = vst [vmem:[%s333 + $0x48] sm:$0xff] %v352
              %v354 = vld [vmem:[%s332 + $0x50] sm:$0xff]
              %355 = vst [vmem:[%s333 + $0x50] sm:$0xff] %v354
              %v356 = vld [vmem:[%s332 + $0x58] sm:$0xff]
              %357 = vst [vmem:[%s333 + $0x58] sm:$0xff] %v356
              %v358 = vld [vmem:[%s332 + $0x60] sm:$0xff]
              %359 = vst [vmem:[%s333 + $0x60] sm:$0xff] %v358
              %v360 = vld [vmem:[%s332 + $0x68] sm:$0xff]
              %361 = vst [vmem:[%s333 + $0x68] sm:$0xff] %v360
              %v362 = vld [vmem:[%s332 + $0x70] sm:$0xff]
              %363 = vst [vmem:[%s333 + $0x70] sm:$0xff] %v362
              %v364 = vld [vmem:[%s332 + $0x78] sm:$0xff]
              %365 = vst [vmem:[%s333 + $0x78] sm:$0xff] %v364
            $region98: #{expansive_block.6} parent=92 // loop_footer
              %s331 = sadd.s32 1, %s327
            $region99: #{expansive_block.6} parent=92 // loop_footer_branch
              %326 = sbr.rel target = $region95
            $region100: #{expansive_block.6} parent=92 // loop_exit
              _
          $region93: #{expansive_block.6} parent=77 // pred_fallthru
            _
          %p366 = pneg %p322
          // Predicated region
          $region101: #{expansive_block.6} parent=77 // pred_check
            _
          $region102: #{expansive_block.6} parent=77 // pred_check_branch
            %368 = sbr.rel (%p322) target = $region104
          $region103: #{expansive_block.6} parent=77 // pred_region
            %s369 = sand.u32 128, 7
          $region104: #{expansive_block.6} parent=77 // pred_fallthru
            _
        $region78: #{expansive_block.6} parent=39 // pred_fallthru
          _
        // Predicated region
        $region79: #{expansive_block.6} parent=39 // pred_check
          %p307 = pneg %p303
        $region80: #{expansive_block.6} parent=39 // pred_check_branch
          %309 = sbr.rel (%p307) target = $region82
        $region81: #{expansive_block.6} parent=39 // pred_region
          %s310 = sshllo.u32 0, 128
          loop: start=0, step=1, limit=1
          $region83: #{expansive_block.6} parent=81 // loop_pre_header
            _
          $region84: #{expansive_block.6} parent=81 // loop_header
            %s312 = sphi 0, %s316
            %p313 = scmp.ge.s32.totalorder %s312, 1
            %s317 = sphi %s257, %s257
            %s318 = sphi %s300, %s300
          $region85: #{expansive_block.6} parent=81 // loop_header_branch
            %315 = sbr.rel (%p313) target = $region89
          $region86: #{expansive_block.6} parent=81 // loop_body
            %v319 = vld [vmem:[%s317] sm:%s310]
            %320 = vst [vmem:[%s318] sm:%s310] %v319
          $region87: #{expansive_block.6} parent=81 // loop_footer
            %s316 = sadd.s32 1, %s312
          $region88: #{expansive_block.6} parent=81 // loop_footer_branch
            %311 = sbr.rel target = $region84
          $region89: #{expansive_block.6} parent=81 // loop_exit
            _
        $region82: #{expansive_block.6} parent=39 // pred_fallthru
          _
        // Predicated region
        $region105: #{expansive_block.6} parent=39 // pred_check
          _
        $region106: #{expansive_block.6} parent=39 // pred_check_branch
          %372 = sbr.rel (0) target = $region108
        $region107: #{expansive_block.6} parent=39 // pred_region
          %373 = vsyncadd %s301, 2048
        $region108: #{expansive_block.6} parent=39 // pred_fallthru
          _
        %s374 = sadd.s32 30, %s255
        %s375 = smul.addr %s374, 4
        %s376 = scalar_lea.vmem %s0, %s375
        %s377 = scalar_lea.vmem [#allocation2], 136
        %s378 = scalar_lea.sflag [#allocation3], 2
        %p380 = scmp.lt.u32.totalorder 8, 8
        %p381 = pneg %p380
        // Predicated region
        $region109: #{expansive_block.6} parent=39 // pred_check
          _
        $region110: #{expansive_block.6} parent=39 // pred_check_branch
          %383 = sbr.rel (%p380) target = $region112
        $region111: #{expansive_block.6} parent=39 // pred_region
          %s398 = sand.u32 8, 7
          %p399 = scmp.eq.s32.totalorder %s398, 0
          // Predicated region
          $region124: #{expansive_block.6} parent=111 // pred_check
            %p400 = pneg %p399
          $region125: #{expansive_block.6} parent=111 // pred_check_branch
            %402 = sbr.rel (%p400) target = $region127
          $region126: #{expansive_block.6} parent=111 // pred_region
            loop: start=0, step=1, limit=1
            $region128: #{expansive_block.6} parent=126 // loop_pre_header
              _
            $region129: #{expansive_block.6} parent=126 // loop_header
              %s404 = sphi 0, %s408
              %p405 = scmp.ge.s32.totalorder %s404, 1
              %s409 = sphi %s376, %s376
              %s410 = sphi %s377, %s377
            $region130: #{expansive_block.6} parent=126 // loop_header_branch
              %407 = sbr.rel (%p405) target = $region134
            $region131: #{expansive_block.6} parent=126 // loop_body
              %v411 = vld [vmem:[%s409] sm:$0xff]
              %412 = vst [vmem:[%s410] sm:$0xff] %v411
            $region132: #{expansive_block.6} parent=126 // loop_footer
              %s408 = sadd.s32 1, %s404
            $region133: #{expansive_block.6} parent=126 // loop_footer_branch
              %403 = sbr.rel target = $region129
            $region134: #{expansive_block.6} parent=126 // loop_exit
              _
          $region127: #{expansive_block.6} parent=111 // pred_fallthru
            _
          %p413 = pneg %p399
          // Predicated region
          $region135: #{expansive_block.6} parent=111 // pred_check
            _
          $region136: #{expansive_block.6} parent=111 // pred_check_branch
            %415 = sbr.rel (%p399) target = $region138
          $region137: #{expansive_block.6} parent=111 // pred_region
            %s416 = sand.u32 8, 7
          $region138: #{expansive_block.6} parent=111 // pred_fallthru
            _
        $region112: #{expansive_block.6} parent=39 // pred_fallthru
          _
        // Predicated region
        $region113: #{expansive_block.6} parent=39 // pred_check
          %p384 = pneg %p380
        $region114: #{expansive_block.6} parent=39 // pred_check_branch
          %386 = sbr.rel (%p384) target = $region116
        $region115: #{expansive_block.6} parent=39 // pred_region
          %s387 = sshllo.u32 0, 8
          loop: start=0, step=1, limit=1
          $region117: #{expansive_block.6} parent=115 // loop_pre_header
            _
          $region118: #{expansive_block.6} parent=115 // loop_header
            %s389 = sphi 0, %s393
            %p390 = scmp.ge.s32.totalorder %s389, 1
            %s394 = sphi %s376, %s376
            %s395 = sphi %s377, %s377
          $region119: #{expansive_block.6} parent=115 // loop_header_branch
            %392 = sbr.rel (%p390) target = $region123
          $region120: #{expansive_block.6} parent=115 // loop_body
            %v396 = vld [vmem:[%s394] sm:%s387]
            %397 = vst [vmem:[%s395] sm:%s387] %v396
          $region121: #{expansive_block.6} parent=115 // loop_footer
            %s393 = sadd.s32 1, %s389
          $region122: #{expansive_block.6} parent=115 // loop_footer_branch
            %388 = sbr.rel target = $region118
          $region123: #{expansive_block.6} parent=115 // loop_exit
            _
        $region116: #{expansive_block.6} parent=39 // pred_fallthru
          _
        // Predicated region
        $region139: #{expansive_block.6} parent=39 // pred_check
          _
        $region140: #{expansive_block.6} parent=39 // pred_check_branch
          %419 = sbr.rel (0) target = $region142
        $region141: #{expansive_block.6} parent=39 // pred_region
          %420 = vsyncadd %s378, 128
        $region142: #{expansive_block.6} parent=39 // pred_fallthru
          _
      $region40: #{expansive_block.6} parent=35 // pred_fallthru
        _
      %s421 = sadd.s32 %s23, 1
      %p422 = scmp.lt.s32.totalorder %s421, 1
      // Predicated region
      $region143: #{expansive_block.6} parent=35 // pred_check
        %p423 = pneg %p422
      $region144: #{expansive_block.6} parent=35 // pred_check_branch
        %425 = sbr.rel (%p423) target = $region146
      $region145: #{expansive_block.6} parent=35 // pred_region
        %p426 = scmp.lt.s32.totalorder %s421, 0
        %s427 = ssub.s32 0, %s421
        %s428 = scalar_select %p426, %s427, %s421
        %s429 = sand.u32 %s428, 1
        %s430 = ssub.s32 0, %s429
        %s431 = scalar_select %p426, %s430, %s429
        %p432 = scmp.ne.s32.totalorder %s431, 0
        %p433 = scmp.lt.s32.totalorder %s431, 0
        %p434 = pnand %p433, %p432
        %p435 = pneg %p434
        %s436 = sadd.s32 %s431, 2
        %s437 = scalar_select %p435, %s436, %s431
        %s438 = smul.u32 %s421, 16
        %s439 = ssub.s32 %s438, 1
        %p440 = scmp.gt.s32.totalorder %s439, 0
        %s441 = scalar_select %p440, %s439, 0
        %p442 = scmp.lt.s32.totalorder %s441, 15
        %s443 = scalar_select %p442, %s441, 15
        %p444 = scmp.gt.s32.totalorder %s438, 0
        %s445 = scalar_select %p444, %s438, 0
        %p446 = scmp.lt.s32.totalorder %s445, 0
        %s447 = scalar_select %p446, %s445, 0
        %s448 = sadd.s32 %s438, 16
        %p449 = scmp.gt.s32.totalorder %s448, 0
        %s450 = scalar_select %p449, %s448, 0
        %p451 = scmp.lt.s32.totalorder %s450, 15
        %s452 = scalar_select %p451, %s450, 15
        %s453 = smul.u32 %s443, 2
        %s454 = smul.u32 %s22, 32
        %s455 = sadd.s32 %s453, %s454
        %s456 = smul.addr %s455, 4
        %s457 = scalar_lea.vmem %s0, %s456
        %s458 = smul.u32 %s437, 18
        %s459 = smul.addr %s458, 8
        %s460 = scalar_lea.vmem [#allocation2], %s459
        %s461 = smul.u32 %s437, 3
        %s462 = scalar_lea.sflag [#allocation3], %s461
        %p464 = scmp.lt.u32.totalorder 8, 8
        %p465 = pneg %p464
        // Predicated region
        $region147: #{expansive_block.6} parent=145 // pred_check
          _
        $region148: #{expansive_block.6} parent=145 // pred_check_branch
          %467 = sbr.rel (%p464) target = $region150
        $region149: #{expansive_block.6} parent=145 // pred_region
          %s482 = sand.u32 8, 7
          %p483 = scmp.eq.s32.totalorder %s482, 0
          // Predicated region
          $region162: #{expansive_block.6} parent=149 // pred_check
            %p484 = pneg %p483
          $region163: #{expansive_block.6} parent=149 // pred_check_branch
            %486 = sbr.rel (%p484) target = $region165
          $region164: #{expansive_block.6} parent=149 // pred_region
            loop: start=0, step=1, limit=1
            $region166: #{expansive_block.6} parent=164 // loop_pre_header
              _
            $region167: #{expansive_block.6} parent=164 // loop_header
              %s488 = sphi 0, %s492
              %p489 = scmp.ge.s32.totalorder %s488, 1
              %s493 = sphi %s457, %s457
              %s494 = sphi %s460, %s460
            $region168: #{expansive_block.6} parent=164 // loop_header_branch
              %491 = sbr.rel (%p489) target = $region172
            $region169: #{expansive_block.6} parent=164 // loop_body
              %v495 = vld [vmem:[%s493] sm:$0xff]
              %496 = vst [vmem:[%s494] sm:$0xff] %v495
            $region170: #{expansive_block.6} parent=164 // loop_footer
              %s492 = sadd.s32 1, %s488
            $region171: #{expansive_block.6} parent=164 // loop_footer_branch
              %487 = sbr.rel target = $region167
            $region172: #{expansive_block.6} parent=164 // loop_exit
              _
          $region165: #{expansive_block.6} parent=149 // pred_fallthru
            _
          %p497 = pneg %p483
          // Predicated region
          $region173: #{expansive_block.6} parent=149 // pred_check
            _
          $region174: #{expansive_block.6} parent=149 // pred_check_branch
            %499 = sbr.rel (%p483) target = $region176
          $region175: #{expansive_block.6} parent=149 // pred_region
            %s500 = sand.u32 8, 7
          $region176: #{expansive_block.6} parent=149 // pred_fallthru
            _
        $region150: #{expansive_block.6} parent=145 // pred_fallthru
          _
        // Predicated region
        $region151: #{expansive_block.6} parent=145 // pred_check
          %p468 = pneg %p464
        $region152: #{expansive_block.6} parent=145 // pred_check_branch
          %470 = sbr.rel (%p468) target = $region154
        $region153: #{expansive_block.6} parent=145 // pred_region
          %s471 = sshllo.u32 0, 8
          loop: start=0, step=1, limit=1
          $region155: #{expansive_block.6} parent=153 // loop_pre_header
            _
          $region156: #{expansive_block.6} parent=153 // loop_header
            %s473 = sphi 0, %s477
            %p474 = scmp.ge.s32.totalorder %s473, 1
            %s478 = sphi %s457, %s457
            %s479 = sphi %s460, %s460
          $region157: #{expansive_block.6} parent=153 // loop_header_branch
            %476 = sbr.rel (%p474) target = $region161
          $region158: #{expansive_block.6} parent=153 // loop_body
            %v480 = vld [vmem:[%s478] sm:%s471]
            %481 = vst [vmem:[%s479] sm:%s471] %v480
          $region159: #{expansive_block.6} parent=153 // loop_footer
            %s477 = sadd.s32 1, %s473
          $region160: #{expansive_block.6} parent=153 // loop_footer_branch
            %472 = sbr.rel target = $region156
          $region161: #{expansive_block.6} parent=153 // loop_exit
            _
        $region154: #{expansive_block.6} parent=145 // pred_fallthru
          _
        // Predicated region
        $region177: #{expansive_block.6} parent=145 // pred_check
          _
        $region178: #{expansive_block.6} parent=145 // pred_check_branch
          %503 = sbr.rel (0) target = $region180
        $region179: #{expansive_block.6} parent=145 // pred_region
          %504 = vsyncadd %s462, 128
        $region180: #{expansive_block.6} parent=145 // pred_fallthru
          _
        %s505 = smul.u32 %s447, 2
        %s506 = sadd.s32 %s505, %s454
        %s507 = smul.addr %s506, 4
        %s508 = scalar_lea.vmem %s0, %s507
        %s509 = sadd.s32 1, %s458
        %s510 = smul.addr %s509, 8
        %s511 = scalar_lea.vmem [#allocation2], %s510
        %s512 = sadd.s32 1, %s461
        %s513 = scalar_lea.sflag [#allocation3], %s512
        %p515 = scmp.lt.u32.totalorder 128, 8
        %p516 = pneg %p515
        // Predicated region
        $region181: #{expansive_block.6} parent=145 // pred_check
          _
        $region182: #{expansive_block.6} parent=145 // pred_check_branch
          %518 = sbr.rel (%p515) target = $region184
        $region183: #{expansive_block.6} parent=145 // pred_region
          %s533 = sand.u32 128, 7
          %p534 = scmp.eq.s32.totalorder %s533, 0
          // Predicated region
          $region196: #{expansive_block.6} parent=183 // pred_check
            %p535 = pneg %p534
          $region197: #{expansive_block.6} parent=183 // pred_check_branch
            %537 = sbr.rel (%p535) target = $region199
          $region198: #{expansive_block.6} parent=183 // pred_region
            loop: start=0, step=1, limit=1
            $region200: #{expansive_block.6} parent=198 // loop_pre_header
              _
            $region201: #{expansive_block.6} parent=198 // loop_header
              %s539 = sphi 0, %s543
              %p540 = scmp.ge.s32.totalorder %s539, 1
              %s544 = sphi %s508, %s508
              %s545 = sphi %s511, %s511
            $region202: #{expansive_block.6} parent=198 // loop_header_branch
              %542 = sbr.rel (%p540) target = $region206
            $region203: #{expansive_block.6} parent=198 // loop_body
              %v546 = vld [vmem:[%s544] sm:$0xff]
              %547 = vst [vmem:[%s545] sm:$0xff] %v546
              %v548 = vld [vmem:[%s544 + $0x8] sm:$0xff]
              %549 = vst [vmem:[%s545 + $0x8] sm:$0xff] %v548
              %v550 = vld [vmem:[%s544 + $0x10] sm:$0xff]
              %551 = vst [vmem:[%s545 + $0x10] sm:$0xff] %v550
              %v552 = vld [vmem:[%s544 + $0x18] sm:$0xff]
              %553 = vst [vmem:[%s545 + $0x18] sm:$0xff] %v552
              %v554 = vld [vmem:[%s544 + $0x20] sm:$0xff]
              %555 = vst [vmem:[%s545 + $0x20] sm:$0xff] %v554
              %v556 = vld [vmem:[%s544 + $0x28] sm:$0xff]
              %557 = vst [vmem:[%s545 + $0x28] sm:$0xff] %v556
              %v558 = vld [vmem:[%s544 + $0x30] sm:$0xff]
              %559 = vst [vmem:[%s545 + $0x30] sm:$0xff] %v558
              %v560 = vld [vmem:[%s544 + $0x38] sm:$0xff]
              %561 = vst [vmem:[%s545 + $0x38] sm:$0xff] %v560
              %v562 = vld [vmem:[%s544 + $0x40] sm:$0xff]
              %563 = vst [vmem:[%s545 + $0x40] sm:$0xff] %v562
              %v564 = vld [vmem:[%s544 + $0x48] sm:$0xff]
              %565 = vst [vmem:[%s545 + $0x48] sm:$0xff] %v564
              %v566 = vld [vmem:[%s544 + $0x50] sm:$0xff]
              %567 = vst [vmem:[%s545 + $0x50] sm:$0xff] %v566
              %v568 = vld [vmem:[%s544 + $0x58] sm:$0xff]
              %569 = vst [vmem:[%s545 + $0x58] sm:$0xff] %v568
              %v570 = vld [vmem:[%s544 + $0x60] sm:$0xff]
              %571 = vst [vmem:[%s545 + $0x60] sm:$0xff] %v570
              %v572 = vld [vmem:[%s544 + $0x68] sm:$0xff]
              %573 = vst [vmem:[%s545 + $0x68] sm:$0xff] %v572
              %v574 = vld [vmem:[%s544 + $0x70] sm:$0xff]
              %575 = vst [vmem:[%s545 + $0x70] sm:$0xff] %v574
              %v576 = vld [vmem:[%s544 + $0x78] sm:$0xff]
              %577 = vst [vmem:[%s545 + $0x78] sm:$0xff] %v576
            $region204: #{expansive_block.6} parent=198 // loop_footer
              %s543 = sadd.s32 1, %s539
            $region205: #{expansive_block.6} parent=198 // loop_footer_branch
              %538 = sbr.rel target = $region201
            $region206: #{expansive_block.6} parent=198 // loop_exit
              _
          $region199: #{expansive_block.6} parent=183 // pred_fallthru
            _
          %p578 = pneg %p534
          // Predicated region
          $region207: #{expansive_block.6} parent=183 // pred_check
            _
          $region208: #{expansive_block.6} parent=183 // pred_check_branch
            %580 = sbr.rel (%p534) target = $region210
          $region209: #{expansive_block.6} parent=183 // pred_region
            %s581 = sand.u32 128, 7
          $region210: #{expansive_block.6} parent=183 // pred_fallthru
            _
        $region184: #{expansive_block.6} parent=145 // pred_fallthru
          _
        // Predicated region
        $region185: #{expansive_block.6} parent=145 // pred_check
          %p519 = pneg %p515
        $region186: #{expansive_block.6} parent=145 // pred_check_branch
          %521 = sbr.rel (%p519) target = $region188
        $region187: #{expansive_block.6} parent=145 // pred_region
          %s522 = sshllo.u32 0, 128
          loop: start=0, step=1, limit=1
          $region189: #{expansive_block.6} parent=187 // loop_pre_header
            _
          $region190: #{expansive_block.6} parent=187 // loop_header
            %s524 = sphi 0, %s528
            %p525 = scmp.ge.s32.totalorder %s524, 1
            %s529 = sphi %s508, %s508
            %s530 = sphi %s511, %s511
          $region191: #{expansive_block.6} parent=187 // loop_header_branch
            %527 = sbr.rel (%p525) target = $region195
          $region192: #{expansive_block.6} parent=187 // loop_body
            %v531 = vld [vmem:[%s529] sm:%s522]
            %532 = vst [vmem:[%s530] sm:%s522] %v531
          $region193: #{expansive_block.6} parent=187 // loop_footer
            %s528 = sadd.s32 1, %s524
          $region194: #{expansive_block.6} parent=187 // loop_footer_branch
            %523 = sbr.rel target = $region190
          $region195: #{expansive_block.6} parent=187 // loop_exit
            _
        $region188: #{expansive_block.6} parent=145 // pred_fallthru
          _
        // Predicated region
        $region211: #{expansive_block.6} parent=145 // pred_check
          _
        $region212: #{expansive_block.6} parent=145 // pred_check_branch
          %584 = sbr.rel (0) target = $region214
        $region213: #{expansive_block.6} parent=145 // pred_region
          %585 = vsyncadd %s513, 2048
        $region214: #{expansive_block.6} parent=145 // pred_fallthru
          _
        %s586 = smul.u32 %s452, 2
        %s587 = sadd.s32 %s586, %s454
        %s588 = smul.addr %s587, 4
        %s589 = scalar_lea.vmem %s0, %s588
        %s590 = sadd.s32 17, %s458
        %s591 = smul.addr %s590, 8
        %s592 = scalar_lea.vmem [#allocation2], %s591
        %s593 = sadd.s32 2, %s461
        %s594 = scalar_lea.sflag [#allocation3], %s593
        %p596 = scmp.lt.u32.totalorder 8, 8
        %p597 = pneg %p596
        // Predicated region
        $region215: #{expansive_block.6} parent=145 // pred_check
          _
        $region216: #{expansive_block.6} parent=145 // pred_check_branch
          %599 = sbr.rel (%p596) target = $region218
        $region217: #{expansive_block.6} parent=145 // pred_region
          %s614 = sand.u32 8, 7
          %p615 = scmp.eq.s32.totalorder %s614, 0
          // Predicated region
          $region230: #{expansive_block.6} parent=217 // pred_check
            %p616 = pneg %p615
          $region231: #{expansive_block.6} parent=217 // pred_check_branch
            %618 = sbr.rel (%p616) target = $region233
          $region232: #{expansive_block.6} parent=217 // pred_region
            loop: start=0, step=1, limit=1
            $region234: #{expansive_block.6} parent=232 // loop_pre_header
              _
            $region235: #{expansive_block.6} parent=232 // loop_header
              %s620 = sphi 0, %s624
              %p621 = scmp.ge.s32.totalorder %s620, 1
              %s625 = sphi %s589, %s589
              %s626 = sphi %s592, %s592
            $region236: #{expansive_block.6} parent=232 // loop_header_branch
              %623 = sbr.rel (%p621) target = $region240
            $region237: #{expansive_block.6} parent=232 // loop_body
              %v627 = vld [vmem:[%s625] sm:$0xff]
              %628 = vst [vmem:[%s626] sm:$0xff] %v627
            $region238: #{expansive_block.6} parent=232 // loop_footer
              %s624 = sadd.s32 1, %s620
            $region239: #{expansive_block.6} parent=232 // loop_footer_branch
              %619 = sbr.rel target = $region235
            $region240: #{expansive_block.6} parent=232 // loop_exit
              _
          $region233: #{expansive_block.6} parent=217 // pred_fallthru
            _
          %p629 = pneg %p615
          // Predicated region
          $region241: #{expansive_block.6} parent=217 // pred_check
            _
          $region242: #{expansive_block.6} parent=217 // pred_check_branch
            %631 = sbr.rel (%p615) target = $region244
          $region243: #{expansive_block.6} parent=217 // pred_region
            %s632 = sand.u32 8, 7
          $region244: #{expansive_block.6} parent=217 // pred_fallthru
            _
        $region218: #{expansive_block.6} parent=145 // pred_fallthru
          _
        // Predicated region
        $region219: #{expansive_block.6} parent=145 // pred_check
          %p600 = pneg %p596
        $region220: #{expansive_block.6} parent=145 // pred_check_branch
          %602 = sbr.rel (%p600) target = $region222
        $region221: #{expansive_block.6} parent=145 // pred_region
          %s603 = sshllo.u32 0, 8
          loop: start=0, step=1, limit=1
          $region223: #{expansive_block.6} parent=221 // loop_pre_header
            _
          $region224: #{expansive_block.6} parent=221 // loop_header
            %s605 = sphi 0, %s609
            %p606 = scmp.ge.s32.totalorder %s605, 1
            %s610 = sphi %s589, %s589
            %s611 = sphi %s592, %s592
          $region225: #{expansive_block.6} parent=221 // loop_header_branch
            %608 = sbr.rel (%p606) target = $region229
          $region226: #{expansive_block.6} parent=221 // loop_body
            %v612 = vld [vmem:[%s610] sm:%s603]
            %613 = vst [vmem:[%s611] sm:%s603] %v612
          $region227: #{expansive_block.6} parent=221 // loop_footer
            %s609 = sadd.s32 1, %s605
          $region228: #{expansive_block.6} parent=221 // loop_footer_branch
            %604 = sbr.rel target = $region224
          $region229: #{expansive_block.6} parent=221 // loop_exit
            _
        $region222: #{expansive_block.6} parent=145 // pred_fallthru
          _
        // Predicated region
        $region245: #{expansive_block.6} parent=145 // pred_check
          _
        $region246: #{expansive_block.6} parent=145 // pred_check_branch
          %635 = sbr.rel (0) target = $region248
        $region247: #{expansive_block.6} parent=145 // pred_region
          %636 = vsyncadd %s594, 128
        $region248: #{expansive_block.6} parent=145 // pred_fallthru
          _
      $region146: #{expansive_block.6} parent=35 // pred_fallthru
        _
      %p637 = scmp.lt.s32.totalorder %s23, 0
      %s638 = ssub.s32 0, %s23
      %s639 = scalar_select %p637, %s638, %s23
      %s640 = sand.u32 %s639, 1
      %s641 = ssub.s32 0, %s640
      %s642 = scalar_select %p637, %s641, %s640
      %p643 = scmp.ne.s32.totalorder %s642, 0
      %p644 = scmp.lt.s32.totalorder %s642, 0
      %p645 = pnand %p644, %p643
      %p646 = pneg %p645
      %s647 = sadd.s32 %s642, 2
      %s648 = scalar_select %p646, %s647, %s642
      %s649 = smul.u32 %s648, 3
      %s650 = scalar_lea.sflag [#allocation3], %s649
      %s651 = smul.u32 4, 1
      %s652 = smul.u32 %s651, 2
      %s653 = smul.u32 %s652, 1
      %s654 = sshll.u32 %s653, 4
      %655 = dma.done %s650, %s654
      %s656 = sadd.s32 1, %s649
      %s657 = scalar_lea.sflag [#allocation3], %s656
      %s658 = smul.u32 4, 16
      %s659 = smul.u32 %s658, 2
      %s660 = smul.u32 %s659, 1
      %s661 = sshll.u32 %s660, 4
      %662 = dma.done %s657, %s661
      %s663 = sadd.s32 2, %s649
      %s664 = scalar_lea.sflag [#allocation3], %s663
      %s665 = sshll.u32 %s653, 4
      %666 = dma.done %s664, %s665
      %s667 = scalar_select %p251, 1, 0
      %s668 = scalar_select %p251, 17, 18
      %v669 = vstv %s667
      %vm670 = vcmp.le.s32.totalorder %v669, 0
      %vm671 = vcmp.le.s32.totalorder %v669, 1
      %vm672 = vcmp.le.s32.totalorder %v669, 2
      %vm673 = vcmp.le.s32.totalorder %v669, 3
      %vm674 = vcmp.le.s32.totalorder %v669, 4
      %vm675 = vcmp.le.s32.totalorder %v669, 5
      %vm676 = vcmp.le.s32.totalorder %v669, 6
      %vm677 = vcmp.le.s32.totalorder %v669, 7
      %vm678 = vcmp.le.s32.totalorder %v669, 8
      %vm679 = vcmp.le.s32.totalorder %v669, 9
      %vm680 = vcmp.le.s32.totalorder %v669, 10
      %vm681 = vcmp.le.s32.totalorder %v669, 11
      %vm682 = vcmp.le.s32.totalorder %v669, 12
      %vm683 = vcmp.le.s32.totalorder %v669, 13
      %vm684 = vcmp.le.s32.totalorder %v669, 14
      %vm685 = vcmp.le.s32.totalorder %v669, 15
      %vm686 = vcmp.le.s32.totalorder %v669, 16
      %vm687 = vcmp.le.s32.totalorder %v669, 17
      %v688 = vstv %s668
      %vm689 = vcmp.gt.s32.totalorder %v688, 0
      %vm690 = vcmp.gt.s32.totalorder %v688, 1
      %vm691 = vcmp.gt.s32.totalorder %v688, 2
      %vm692 = vcmp.gt.s32.totalorder %v688, 3
      %vm693 = vcmp.gt.s32.totalorder %v688, 4
      %vm694 = vcmp.gt.s32.totalorder %v688, 5
      %vm695 = vcmp.gt.s32.totalorder %v688, 6
      %vm696 = vcmp.gt.s32.totalorder %v688, 7
      %vm697 = vcmp.gt.s32.totalorder %v688, 8
      %vm698 = vcmp.gt.s32.totalorder %v688, 9
      %vm699 = vcmp.gt.s32.totalorder %v688, 10
      %vm700 = vcmp.gt.s32.totalorder %v688, 11
      %vm701 = vcmp.gt.s32.totalorder %v688, 12
      %vm702 = vcmp.gt.s32.totalorder %v688, 13
      %vm703 = vcmp.gt.s32.totalorder %v688, 14
      %vm704 = vcmp.gt.s32.totalorder %v688, 15
      %vm705 = vcmp.gt.s32.totalorder %v688, 16
      %vm706 = vcmp.gt.s32.totalorder %v688, 17
      %vm707 = vmand %vm670, %vm689
      %vm708 = vmand %vm671, %vm690
      %vm709 = vmand %vm672, %vm691
      %vm710 = vmand %vm673, %vm692
      %vm711 = vmand %vm674, %vm693
      %vm712 = vmand %vm675, %vm694
      %vm713 = vmand %vm676, %vm695
      %vm714 = vmand %vm677, %vm696
      %vm715 = vmand %vm678, %vm697
      %vm716 = vmand %vm679, %vm698
      %vm717 = vmand %vm680, %vm699
      %vm718 = vmand %vm681, %vm700
      %vm719 = vmand %vm682, %vm701
      %vm720 = vmand %vm683, %vm702
      %vm721 = vmand %vm684, %vm703
      %vm722 = vmand %vm685, %vm704
      %vm723 = vmand %vm686, %vm705
      %vm724 = vmand %vm687, %vm706
      %s725 = smul.u32 %s648, 18
      %s726 = smul.addr %s725, 8
      %s727 = scalar_lea.vmem [#allocation2], %s726
      %v728 = vld [vmem:[%s727] sm:$0xff]
      %v729 = vld [vmem:[%s727 + $0x8] sm:$0xff]
      %v730 = vld [vmem:[%s727 + $0x10] sm:$0xff]
      %v731 = vld [vmem:[%s727 + $0x18] sm:$0xff]
      %v732 = vld [vmem:[%s727 + $0x20] sm:$0xff]
      %v733 = vld [vmem:[%s727 + $0x28] sm:$0xff]
      %v734 = vld [vmem:[%s727 + $0x30] sm:$0xff]
      %v735 = vld [vmem:[%s727 + $0x38] sm:$0xff]
      %v736 = vld [vmem:[%s727 + $0x40] sm:$0xff]
      %v737 = vld [vmem:[%s727 + $0x48] sm:$0xff]
      %v738 = vld [vmem:[%s727 + $0x50] sm:$0xff]
      %v739 = vld [vmem:[%s727 + $0x58] sm:$0xff]
      %v740 = vld [vmem:[%s727 + $0x60] sm:$0xff]
      %v741 = vld [vmem:[%s727 + $0x68] sm:$0xff]
      %v742 = vld [vmem:[%s727 + $0x70] sm:$0xff]
      %v743 = vld [vmem:[%s727 + $0x78] sm:$0xff]
      %v744 = vld [vmem:[%s727 + $0x80] sm:$0xff]
      %v745 = vld [vmem:[%s727 + $0x88] sm:$0xff]
      %v746 = vunpack.c.l.bf16 %v728
      %v747 = vunpack.c.h.bf16 %v728
      %v748 = vunpack.c.l.bf16 %v729
      %v749 = vunpack.c.h.bf16 %v729
      %v750 = vunpack.c.l.bf16 %v730
      %v751 = vunpack.c.h.bf16 %v730
      %v752 = vunpack.c.l.bf16 %v731
      %v753 = vunpack.c.h.bf16 %v731
      %v754 = vunpack.c.l.bf16 %v732
      %v755 = vunpack.c.h.bf16 %v732
      %v756 = vunpack.c.l.bf16 %v733
      %v757 = vunpack.c.h.bf16 %v733
      %v758 = vunpack.c.l.bf16 %v734
      %v759 = vunpack.c.h.bf16 %v734
      %v760 = vunpack.c.l.bf16 %v735
      %v761 = vunpack.c.h.bf16 %v735
      %v762 = vunpack.c.l.bf16 %v736
      %v763 = vunpack.c.h.bf16 %v736
      %v764 = vunpack.c.l.bf16 %v737
      %v765 = vunpack.c.h.bf16 %v737
      %v766 = vunpack.c.l.bf16 %v738
      %v767 = vunpack.c.h.bf16 %v738
      %v768 = vunpack.c.l.bf16 %v739
      %v769 = vunpack.c.h.bf16 %v739
      %v770 = vunpack.c.l.bf16 %v740
      %v771 = vunpack.c.h.bf16 %v740
      %v772 = vunpack.c.l.bf16 %v741
      %v773 = vunpack.c.h.bf16 %v741
      %v774 = vunpack.c.l.bf16 %v742
      %v775 = vunpack.c.h.bf16 %v742
      %v776 = vunpack.c.l.bf16 %v743
      %v777 = vunpack.c.h.bf16 %v743
      %v778 = vunpack.c.l.bf16 %v744
      %v779 = vunpack.c.h.bf16 %v744
      %v780 = vunpack.c.l.bf16 %v745
      %v781 = vunpack.c.h.bf16 %v745
      %v782 = vld [vmem:[%s3] sm:$0x1]
      %v784 = vlaneseq
      %v785 = vshrl.u32 %v784, 7
      %v786 = vsub.s32 0, %v785
      %v787 = vrot.slane %v782, %v786
      %v789 = vmul.f32 %v746, %v787
      %v790 = vmul.f32 %v747, %v787
      %v791 = vmul.f32 %v748, %v787
      %v792 = vmul.f32 %v749, %v787
      %v793 = vmul.f32 %v750, %v787
      %v794 = vmul.f32 %v751, %v787
      %v795 = vmul.f32 %v752, %v787
      %v796 = vmul.f32 %v753, %v787
      %v797 = vmul.f32 %v754, %v787
      %v798 = vmul.f32 %v755, %v787
      %v799 = vmul.f32 %v756, %v787
      %v800 = vmul.f32 %v757, %v787
      %v801 = vmul.f32 %v758, %v787
      %v802 = vmul.f32 %v759, %v787
      %v803 = vmul.f32 %v760, %v787
      %v804 = vmul.f32 %v761, %v787
      %v805 = vmul.f32 %v762, %v787
      %v806 = vmul.f32 %v763, %v787
      %v807 = vmul.f32 %v764, %v787
      %v808 = vmul.f32 %v765, %v787
      %v809 = vmul.f32 %v766, %v787
      %v810 = vmul.f32 %v767, %v787
      %v811 = vmul.f32 %v768, %v787
      %v812 = vmul.f32 %v769, %v787
      %v813 = vmul.f32 %v770, %v787
      %v814 = vmul.f32 %v771, %v787
      %v815 = vmul.f32 %v772, %v787
      %v816 = vmul.f32 %v773, %v787
      %v817 = vmul.f32 %v774, %v787
      %v818 = vmul.f32 %v775, %v787
      %v819 = vmul.f32 %v776, %v787
      %v820 = vmul.f32 %v777, %v787
      %v821 = vmul.f32 %v778, %v787
      %v822 = vmul.f32 %v779, %v787
      %v823 = vmul.f32 %v780, %v787
      %v824 = vmul.f32 %v781, %v787
      %v825 = vld [vmem:[%s4] sm:$0x1]
      %v827 = vlaneseq
      %v828 = vshrl.u32 %v827, 7
      %v829 = vsub.s32 0, %v828
      %v830 = vrot.slane %v825, %v829
      %v832 = vadd.f32 %v789, %v830
      %v833 = vadd.f32 %v790, %v830
      %v834 = vadd.f32 %v791, %v830
      %v835 = vadd.f32 %v792, %v830
      %v836 = vadd.f32 %v793, %v830
      %v837 = vadd.f32 %v794, %v830
      %v838 = vadd.f32 %v795, %v830
      %v839 = vadd.f32 %v796, %v830
      %v840 = vadd.f32 %v797, %v830
      %v841 = vadd.f32 %v798, %v830
      %v842 = vadd.f32 %v799, %v830
      %v843 = vadd.f32 %v800, %v830
      %v844 = vadd.f32 %v801, %v830
      %v845 = vadd.f32 %v802, %v830
      %v846 = vadd.f32 %v803, %v830
      %v847 = vadd.f32 %v804, %v830
      %v848 = vadd.f32 %v805, %v830
      %v849 = vadd.f32 %v806, %v830
      %v850 = vadd.f32 %v807, %v830
      %v851 = vadd.f32 %v808, %v830
      %v852 = vadd.f32 %v809, %v830
      %v853 = vadd.f32 %v810, %v830
      %v854 = vadd.f32 %v811, %v830
      %v855 = vadd.f32 %v812, %v830
      %v856 = vadd.f32 %v813, %v830
      %v857 = vadd.f32 %v814, %v830
      %v858 = vadd.f32 %v815, %v830
      %v859 = vadd.f32 %v816, %v830
      %v860 = vadd.f32 %v817, %v830
      %v861 = vadd.f32 %v818, %v830
      %v862 = vadd.f32 %v819, %v830
      %v863 = vadd.f32 %v820, %v830
      %v864 = vadd.f32 %v821, %v830
      %v865 = vadd.f32 %v822, %v830
      %v866 = vadd.f32 %v823, %v830
      %v867 = vadd.f32 %v824, %v830
      %v868 = vmax.f32 %v832, 0.0
      %v869 = vmax.f32 %v833, 0.0
      %v870 = vmax.f32 %v834, 0.0
      %v871 = vmax.f32 %v835, 0.0
      %v872 = vmax.f32 %v836, 0.0
      %v873 = vmax.f32 %v837, 0.0
      %v874 = vmax.f32 %v838, 0.0
      %v875 = vmax.f32 %v839, 0.0
      %v876 = vmax.f32 %v840, 0.0
      %v877 = vmax.f32 %v841, 0.0
      %v878 = vmax.f32 %v842, 0.0
      %v879 = vmax.f32 %v843, 0.0
      %v880 = vmax.f32 %v844, 0.0
      %v881 = vmax.f32 %v845, 0.0
      %v882 = vmax.f32 %v846, 0.0
      %v883 = vmax.f32 %v847, 0.0
      %v884 = vmax.f32 %v848, 0.0
      %v885 = vmax.f32 %v849, 0.0
      %v886 = vmax.f32 %v850, 0.0
      %v887 = vmax.f32 %v851, 0.0
      %v888 = vmax.f32 %v852, 0.0
      %v889 = vmax.f32 %v853, 0.0
      %v890 = vmax.f32 %v854, 0.0
      %v891 = vmax.f32 %v855, 0.0
      %v892 = vmax.f32 %v856, 0.0
      %v893 = vmax.f32 %v857, 0.0
      %v894 = vmax.f32 %v858, 0.0
      %v895 = vmax.f32 %v859, 0.0
      %v896 = vmax.f32 %v860, 0.0
      %v897 = vmax.f32 %v861, 0.0
      %v898 = vmax.f32 %v862, 0.0
      %v899 = vmax.f32 %v863, 0.0
      %v900 = vmax.f32 %v864, 0.0
      %v901 = vmax.f32 %v865, 0.0
      %v902 = vmax.f32 %v866, 0.0
      %v903 = vmax.f32 %v867, 0.0
      %v904 = vsel %vm707, 1, 0
      %v905 = vsel %vm708, 1, 0
      %v906 = vsel %vm709, 1, 0
      %v907 = vsel %vm710, 1, 0
      %v908 = vsel %vm711, 1, 0
      %v909 = vsel %vm712, 1, 0
      %v910 = vsel %vm713, 1, 0
      %v911 = vsel %vm714, 1, 0
      %v912 = vsel %vm715, 1, 0
      %v913 = vsel %vm716, 1, 0
      %v914 = vsel %vm717, 1, 0
      %v915 = vsel %vm718, 1, 0
      %v916 = vsel %vm719, 1, 0
      %v917 = vsel %vm720, 1, 0
      %v918 = vsel %vm721, 1, 0
      %v919 = vsel %vm722, 1, 0
      %v920 = vsel %vm723, 1, 0
      %v921 = vsel %vm724, 1, 0
      %vm922 = vcmp.eq.s32.totalorder %v904, 1
      %vm923 = vcmp.eq.s32.totalorder %v905, 1
      %vm924 = vcmp.eq.s32.totalorder %v906, 1
      %vm925 = vcmp.eq.s32.totalorder %v907, 1
      %vm926 = vcmp.eq.s32.totalorder %v908, 1
      %vm927 = vcmp.eq.s32.totalorder %v909, 1
      %vm928 = vcmp.eq.s32.totalorder %v910, 1
      %vm929 = vcmp.eq.s32.totalorder %v911, 1
      %vm930 = vcmp.eq.s32.totalorder %v912, 1
      %vm931 = vcmp.eq.s32.totalorder %v913, 1
      %vm932 = vcmp.eq.s32.totalorder %v914, 1
      %vm933 = vcmp.eq.s32.totalorder %v915, 1
      %vm934 = vcmp.eq.s32.totalorder %v916, 1
      %vm935 = vcmp.eq.s32.totalorder %v917, 1
      %vm936 = vcmp.eq.s32.totalorder %v918, 1
      %vm937 = vcmp.eq.s32.totalorder %v919, 1
      %vm938 = vcmp.eq.s32.totalorder %v920, 1
      %vm939 = vcmp.eq.s32.totalorder %v921, 1
      %v940 = vsel %vm922, %v868, 0.0
      %v941 = vsel %vm922, %v869, 0.0
      %v942 = vsel %vm923, %v870, 0.0
      %v943 = vsel %vm923, %v871, 0.0
      %v944 = vsel %vm924, %v872, 0.0
      %v945 = vsel %vm924, %v873, 0.0
      %v946 = vsel %vm925, %v874, 0.0
      %v947 = vsel %vm925, %v875, 0.0
      %v948 = vsel %vm926, %v876, 0.0
      %v949 = vsel %vm926, %v877, 0.0
      %v950 = vsel %vm927, %v878, 0.0
      %v951 = vsel %vm927, %v879, 0.0
      %v952 = vsel %vm928, %v880, 0.0
      %v953 = vsel %vm928, %v881, 0.0
      %v954 = vsel %vm929, %v882, 0.0
      %v955 = vsel %vm929, %v883, 0.0
      %v956 = vsel %vm930, %v884, 0.0
      %v957 = vsel %vm930, %v885, 0.0
      %v958 = vsel %vm931, %v886, 0.0
      %v959 = vsel %vm931, %v887, 0.0
      %v960 = vsel %vm932, %v888, 0.0
      %v961 = vsel %vm932, %v889, 0.0
      %v962 = vsel %vm933, %v890, 0.0
      %v963 = vsel %vm933, %v891, 0.0
      %v964 = vsel %vm934, %v892, 0.0
      %v965 = vsel %vm934, %v893, 0.0
      %v966 = vsel %vm935, %v894, 0.0
      %v967 = vsel %vm935, %v895, 0.0
      %v968 = vsel %vm936, %v896, 0.0
      %v969 = vsel %vm936, %v897, 0.0
      %v970 = vsel %vm937, %v898, 0.0
      %v971 = vsel %vm937, %v899, 0.0
      %v972 = vsel %vm938, %v900, 0.0
      %v973 = vsel %vm938, %v901, 0.0
      %v974 = vsel %vm939, %v902, 0.0
      %v975 = vsel %vm939, %v903, 0.0
      %v976 = vpack.c.bf16 %v941, %v940
      %v977 = vpack.c.bf16 %v943, %v942
      %v978 = vpack.c.bf16 %v945, %v944
      %v979 = vpack.c.bf16 %v947, %v946
      %v980 = vpack.c.bf16 %v949, %v948
      %v981 = vpack.c.bf16 %v951, %v950
      %v982 = vpack.c.bf16 %v953, %v952
      %v983 = vpack.c.bf16 %v955, %v954
      %v984 = vpack.c.bf16 %v957, %v956
      %v985 = vpack.c.bf16 %v959, %v958
      %v986 = vpack.c.bf16 %v961, %v960
      %v987 = vpack.c.bf16 %v963, %v962
      %v988 = vpack.c.bf16 %v965, %v964
      %v989 = vpack.c.bf16 %v967, %v966
      %v990 = vpack.c.bf16 %v969, %v968
      %v991 = vpack.c.bf16 %v971, %v970
      %v992 = vpack.c.bf16 %v973, %v972
      %v993 = vpack.c.bf16 %v975, %v974
      %v995 = vshrl.u32 %v976, 16
      %v997 = vrot.slane %v995, 7
      %v998 = vshll.u32 %v976, 16
      %v1000 = vor.u32 %v997, %v998
      %v1002 = vshrl.u32 %v977, 16
      %v1004 = vrot.slane %v1002, 7
      %v1005 = vshll.u32 %v977, 16
      %v1007 = vor.u32 %v1004, %v1005
      %v1009 = vshrl.u32 %v978, 16
      %v1011 = vrot.slane %v1009, 7
      %v1012 = vshll.u32 %v978, 16
      %v1014 = vor.u32 %v1011, %v1012
      %v1016 = vshrl.u32 %v979, 16
      %v1018 = vrot.slane %v1016, 7
      %v1019 = vshll.u32 %v979, 16
      %v1021 = vor.u32 %v1018, %v1019
      %v1023 = vshrl.u32 %v980, 16
      %v1025 = vrot.slane %v1023, 7
      %v1026 = vshll.u32 %v980, 16
      %v1028 = vor.u32 %v1025, %v1026
      %v1030 = vshrl.u32 %v981, 16
      %v1032 = vrot.slane %v1030, 7
      %v1033 = vshll.u32 %v981, 16
      %v1035 = vor.u32 %v1032, %v1033
      %v1037 = vshrl.u32 %v982, 16
      %v1039 = vrot.slane %v1037, 7
      %v1040 = vshll.u32 %v982, 16
      %v1042 = vor.u32 %v1039, %v1040
      %v1044 = vshrl.u32 %v983, 16
      %v1046 = vrot.slane %v1044, 7
      %v1047 = vshll.u32 %v983, 16
      %v1049 = vor.u32 %v1046, %v1047
      %v1051 = vshrl.u32 %v984, 16
      %v1053 = vrot.slane %v1051, 7
      %v1054 = vshll.u32 %v984, 16
      %v1056 = vor.u32 %v1053, %v1054
      %v1058 = vshrl.u32 %v985, 16
      %v1060 = vrot.slane %v1058, 7
      %v1061 = vshll.u32 %v985, 16
      %v1063 = vor.u32 %v1060, %v1061
      %v1065 = vshrl.u32 %v986, 16
      %v1067 = vrot.slane %v1065, 7
      %v1068 = vshll.u32 %v986, 16
      %v1070 = vor.u32 %v1067, %v1068
      %v1072 = vshrl.u32 %v987, 16
      %v1074 = vrot.slane %v1072, 7
      %v1075 = vshll.u32 %v987, 16
      %v1077 = vor.u32 %v1074, %v1075
      %v1079 = vshrl.u32 %v988, 16
      %v1081 = vrot.slane %v1079, 7
      %v1082 = vshll.u32 %v988, 16
      %v1084 = vor.u32 %v1081, %v1082
      %v1086 = vshrl.u32 %v989, 16
      %v1088 = vrot.slane %v1086, 7
      %v1089 = vshll.u32 %v989, 16
      %v1091 = vor.u32 %v1088, %v1089
      %v1093 = vshrl.u32 %v990, 16
      %v1095 = vrot.slane %v1093, 7
      %v1096 = vshll.u32 %v990, 16
      %v1098 = vor.u32 %v1095, %v1096
      %v1100 = vshrl.u32 %v991, 16
      %v1102 = vrot.slane %v1100, 7
      %v1103 = vshll.u32 %v991, 16
      %v1105 = vor.u32 %v1102, %v1103
      %v1107 = vshrl.u32 %v992, 16
      %v1109 = vrot.slane %v1107, 7
      %v1110 = vshll.u32 %v992, 16
      %v1112 = vor.u32 %v1109, %v1110
      %v1114 = vshrl.u32 %v993, 16
      %v1116 = vrot.slane %v1114, 7
      %v1117 = vshll.u32 %v993, 16
      %v1119 = vor.u32 %v1116, %v1117
      %vm1138 = vcmask 1040384
      %vm1139 = vsmask.f32 256
      %vm1140 = vmand %vm1138, %vm1139
      %v1141 = vsel %vm1140, 0, %v1000
      %v1142 = vsel %vm1140, 0, %v1007
      %v1143 = vsel %vm1140, 0, %v1014
      %v1144 = vsel %vm1140, 0, %v1021
      %v1145 = vsel %vm1140, 0, %v1028
      %v1146 = vsel %vm1140, 0, %v1035
      %v1147 = vsel %vm1140, 0, %v1042
      %v1148 = vsel %vm1140, 0, %v1049
      %v1149 = vsel %vm1140, 0, %v1056
      %v1150 = vsel %vm1140, 0, %v1063
      %v1151 = vsel %vm1140, 0, %v1070
      %v1152 = vsel %vm1140, 0, %v1077
      %v1153 = vsel %vm1140, 0, %v1084
      %v1154 = vsel %vm1140, 0, %v1091
      %v1155 = vsel %vm1140, 0, %v1098
      %v1156 = vsel %vm1140, 0, %v1105
      %v1157 = vsel %vm1140, 0, %v1112
      %v1158 = vsel %vm1140, 0, %v1119
      %v1159 = vrot.slane %v998, 1
      %v1160 = vor.u32 %v995, %v1159
      %v1161 = vrot.slane %v1005, 1
      %v1162 = vor.u32 %v1002, %v1161
      %v1163 = vrot.slane %v1012, 1
      %v1164 = vor.u32 %v1009, %v1163
      %v1165 = vrot.slane %v1019, 1
      %v1166 = vor.u32 %v1016, %v1165
      %v1167 = vrot.slane %v1026, 1
      %v1168 = vor.u32 %v1023, %v1167
      %v1169 = vrot.slane %v1033, 1
      %v1170 = vor.u32 %v1030, %v1169
      %v1171 = vrot.slane %v1040, 1
      %v1172 = vor.u32 %v1037, %v1171
      %v1173 = vrot.slane %v1047, 1
      %v1174 = vor.u32 %v1044, %v1173
      %v1175 = vrot.slane %v1054, 1
      %v1176 = vor.u32 %v1051, %v1175
      %v1177 = vrot.slane %v1061, 1
      %v1178 = vor.u32 %v1058, %v1177
      %v1179 = vrot.slane %v1068, 1
      %v1180 = vor.u32 %v1065, %v1179
      %v1181 = vrot.slane %v1075, 1
      %v1182 = vor.u32 %v1072, %v1181
      %v1183 = vrot.slane %v1082, 1
      %v1184 = vor.u32 %v1079, %v1183
      %v1185 = vrot.slane %v1089, 1
      %v1186 = vor.u32 %v1086, %v1185
      %v1187 = vrot.slane %v1096, 1
      %v1188 = vor.u32 %v1093, %v1187
      %v1189 = vrot.slane %v1103, 1
      %v1190 = vor.u32 %v1100, %v1189
      %v1191 = vrot.slane %v1110, 1
      %v1192 = vor.u32 %v1107, %v1191
      %v1193 = vrot.slane %v1117, 1
      %v1194 = vor.u32 %v1114, %v1193
      %vm1213 = vcmask 1047552
      %vm1214 = vsmask.f32 7424
      %vm1215 = vmand %vm1213, %vm1214
      %v1216 = vsel %vm1215, %v1160, 0
      %v1217 = vsel %vm1215, %v1162, 0
      %v1218 = vsel %vm1215, %v1164, 0
      %v1219 = vsel %vm1215, %v1166, 0
      %v1220 = vsel %vm1215, %v1168, 0
      %v1221 = vsel %vm1215, %v1170, 0
      %v1222 = vsel %vm1215, %v1172, 0
      %v1223 = vsel %vm1215, %v1174, 0
      %v1224 = vsel %vm1215, %v1176, 0
      %v1225 = vsel %vm1215, %v1178, 0
      %v1226 = vsel %vm1215, %v1180, 0
      %v1227 = vsel %vm1215, %v1182, 0
      %v1228 = vsel %vm1215, %v1184, 0
      %v1229 = vsel %vm1215, %v1186, 0
      %v1230 = vsel %vm1215, %v1188, 0
      %v1231 = vsel %vm1215, %v1190, 0
      %v1232 = vsel %vm1215, %v1192, 0
      %v1233 = vsel %vm1215, %v1194, 0
      %v1234 = vld [vmem:[%s1] sm:$0xf]
      %v1235 = vld [vmem:[%s1 + $0x4] sm:$0xf]
      %v1236 = vld [vmem:[%s1 + $0x8] sm:$0xf]
      %v1237 = vld [vmem:[%s1 + $0xc] sm:$0xf]
      %v1238 = vld [vmem:[%s1 + $0x10] sm:$0xf]
      %v1239 = vld [vmem:[%s1 + $0x14] sm:$0xf]
      %v1240 = vld [vmem:[%s1 + $0x18] sm:$0xf]
      %v1241 = vld [vmem:[%s1 + $0x1c] sm:$0xf]
      %v1242 = vld [vmem:[%s1 + $0x20] sm:$0xf]
      %v1243 = vld [vmem:[%s1 + $0x24] sm:$0xf]
      %v1244 = vld [vmem:[%s1 + $0x28] sm:$0xf]
      %v1245 = vld [vmem:[%s1 + $0x2c] sm:$0xf]
      %v1246 = vld [vmem:[%s1 + $0x30] sm:$0xf]
      %v1247 = vld [vmem:[%s1 + $0x34] sm:$0xf]
      %v1248 = vld [vmem:[%s1 + $0x38] sm:$0xf]
      %v1249 = vld [vmem:[%s1 + $0x3c] sm:$0xf]
      %v1250 = vld [vmem:[%s1 + $0x40] sm:$0xf]
      %v1251 = vld [vmem:[%s1 + $0x44] sm:$0xf]
      %v1252 = vld [vmem:[%s1 + $0x48] sm:$0xf]
      %v1253 = vld [vmem:[%s1 + $0x4c] sm:$0xf]
      %v1254 = vld [vmem:[%s1 + $0x50] sm:$0xf]
      %v1255 = vld [vmem:[%s1 + $0x54] sm:$0xf]
      %v1256 = vld [vmem:[%s1 + $0x58] sm:$0xf]
      %v1257 = vld [vmem:[%s1 + $0x5c] sm:$0xf]
      %v1258 = vld [vmem:[%s1 + $0x60] sm:$0xf]
      %v1259 = vld [vmem:[%s1 + $0x64] sm:$0xf]
      %v1260 = vld [vmem:[%s1 + $0x68] sm:$0xf]
      %v1261 = vld [vmem:[%s1 + $0x6c] sm:$0xf]
      %v1262 = vld [vmem:[%s1 + $0x70] sm:$0xf]
      %v1263 = vld [vmem:[%s1 + $0x74] sm:$0xf]
      %v1264 = vld [vmem:[%s1 + $0x78] sm:$0xf]
      %v1265 = vld [vmem:[%s1 + $0x7c] sm:$0xf]
      %v1266 = vld [vmem:[%s1 + $0x80] sm:$0xf]
      %v1267 = vld [vmem:[%s1 + $0x84] sm:$0xf]
      %v1268 = vld [vmem:[%s1 + $0x88] sm:$0xf]
      %v1269 = vld [vmem:[%s1 + $0x8c] sm:$0xf]
      %v1270 = vld [vmem:[%s1 + $0x90] sm:$0xf]
      %v1271 = vld [vmem:[%s1 + $0x94] sm:$0xf]
      %v1272 = vld [vmem:[%s1 + $0x98] sm:$0xf]
      %v1273 = vld [vmem:[%s1 + $0x9c] sm:$0xf]
      %v1274 = vld [vmem:[%s1 + $0xa0] sm:$0xf]
      %v1275 = vld [vmem:[%s1 + $0xa4] sm:$0xf]
      %v1276 = vld [vmem:[%s1 + $0xa8] sm:$0xf]
      %v1277 = vld [vmem:[%s1 + $0xac] sm:$0xf]
      %v1278 = vld [vmem:[%s1 + $0xb0] sm:$0xf]
      %v1279 = vld [vmem:[%s1 + $0xb4] sm:$0xf]
      %v1280 = vld [vmem:[%s1 + $0xb8] sm:$0xf]
      %v1281 = vld [vmem:[%s1 + $0xbc] sm:$0xf]
      %v1282 = vld [vmem:[%s1 + $0xc0] sm:$0xf]
      %v1283 = vld [vmem:[%s1 + $0xc4] sm:$0xf]
      %v1284 = vld [vmem:[%s1 + $0xc8] sm:$0xf]
      %v1285 = vld [vmem:[%s1 + $0xcc] sm:$0xf]
      %v1286 = vld [vmem:[%s1 + $0xd0] sm:$0xf]
      %v1287 = vld [vmem:[%s1 + $0xd4] sm:$0xf]
      %v1288 = vld [vmem:[%s1 + $0xd8] sm:$0xf]
      %v1289 = vld [vmem:[%s1 + $0xdc] sm:$0xf]
      %v1290 = vld [vmem:[%s1 + $0xe0] sm:$0xf]
      %v1291 = vld [vmem:[%s1 + $0xe4] sm:$0xf]
      %v1292 = vld [vmem:[%s1 + $0xe8] sm:$0xf]
      %v1293 = vld [vmem:[%s1 + $0xec] sm:$0xf]
      %v1294 = vld [vmem:[%s1 + $0xf0] sm:$0xf]
      %v1295 = vld [vmem:[%s1 + $0xf4] sm:$0xf]
      %v1296 = vld [vmem:[%s1 + $0xf8] sm:$0xf]
      %v1297 = vld [vmem:[%s1 + $0xfc] sm:$0xf]
      %v1298 = vld [vmem:[%s1 + $0x100] sm:$0xf]
      %v1299 = vld [vmem:[%s1 + $0x104] sm:$0xf]
      %v1300 = vld [vmem:[%s1 + $0x108] sm:$0xf]
      %v1301 = vld [vmem:[%s1 + $0x10c] sm:$0xf]
      %v1302 = vld [vmem:[%s1 + $0x110] sm:$0xf]
      %v1303 = vld [vmem:[%s1 + $0x114] sm:$0xf]
      %v1304 = vld [vmem:[%s1 + $0x118] sm:$0xf]
      %v1305 = vld [vmem:[%s1 + $0x11c] sm:$0xf]
      %v1306 = vld [vmem:[%s1 + $0x120] sm:$0xf]
      %v1307 = vld [vmem:[%s1 + $0x124] sm:$0xf]
      %v1308 = vld [vmem:[%s1 + $0x128] sm:$0xf]
      %v1309 = vld [vmem:[%s1 + $0x12c] sm:$0xf]
      %v1310 = vld [vmem:[%s1 + $0x130] sm:$0xf]
      %v1311 = vld [vmem:[%s1 + $0x134] sm:$0xf]
      %v1312 = vld [vmem:[%s1 + $0x138] sm:$0xf]
      %v1313 = vld [vmem:[%s1 + $0x13c] sm:$0xf]
      %v1314 = vld [vmem:[%s1 + $0x140] sm:$0xf]
      %v1315 = vld [vmem:[%s1 + $0x144] sm:$0xf]
      %v1316 = vld [vmem:[%s1 + $0x148] sm:$0xf]
      %v1317 = vld [vmem:[%s1 + $0x14c] sm:$0xf]
      %v1318 = vld [vmem:[%s1 + $0x150] sm:$0xf]
      %v1319 = vld [vmem:[%s1 + $0x154] sm:$0xf]
      %v1320 = vld [vmem:[%s1 + $0x158] sm:$0xf]
      %v1321 = vld [vmem:[%s1 + $0x15c] sm:$0xf]
      %v1322 = vld [vmem:[%s1 + $0x160] sm:$0xf]
      %v1323 = vld [vmem:[%s1 + $0x164] sm:$0xf]
      %v1324 = vld [vmem:[%s1 + $0x168] sm:$0xf]
      %v1325 = vld [vmem:[%s1 + $0x16c] sm:$0xf]
      %v1326 = vld [vmem:[%s1 + $0x170] sm:$0xf]
      %v1327 = vld [vmem:[%s1 + $0x174] sm:$0xf]
      %v1328 = vld [vmem:[%s1 + $0x178] sm:$0xf]
      %v1329 = vld [vmem:[%s1 + $0x17c] sm:$0xf]
      %v1330 = vld [vmem:[%s1 + $0x180] sm:$0xf]
      %v1331 = vld [vmem:[%s1 + $0x184] sm:$0xf]
      %v1332 = vld [vmem:[%s1 + $0x188] sm:$0xf]
      %v1333 = vld [vmem:[%s1 + $0x18c] sm:$0xf]
      %v1334 = vld [vmem:[%s1 + $0x190] sm:$0xf]
      %v1335 = vld [vmem:[%s1 + $0x194] sm:$0xf]
      %v1336 = vld [vmem:[%s1 + $0x198] sm:$0xf]
      %v1337 = vld [vmem:[%s1 + $0x19c] sm:$0xf]
      %v1338 = vld [vmem:[%s1 + $0x1a0] sm:$0xf]
      %v1339 = vld [vmem:[%s1 + $0x1a4] sm:$0xf]
      %v1340 = vld [vmem:[%s1 + $0x1a8] sm:$0xf]
      %v1341 = vld [vmem:[%s1 + $0x1ac] sm:$0xf]
      %v1342 = vld [vmem:[%s1 + $0x1b0] sm:$0xf]
      %v1343 = vld [vmem:[%s1 + $0x1b4] sm:$0xf]
      %v1344 = vld [vmem:[%s1 + $0x1b8] sm:$0xf]
      %v1345 = vld [vmem:[%s1 + $0x1bc] sm:$0xf]
      %v1346 = vld [vmem:[%s1 + $0x1c0] sm:$0xf]
      %v1347 = vld [vmem:[%s1 + $0x1c4] sm:$0xf]
      %v1348 = vld [vmem:[%s1 + $0x1c8] sm:$0xf]
      %v1349 = vld [vmem:[%s1 + $0x1cc] sm:$0xf]
      %v1350 = vld [vmem:[%s1 + $0x1d0] sm:$0xf]
      %v1351 = vld [vmem:[%s1 + $0x1d4] sm:$0xf]
      %v1352 = vld [vmem:[%s1 + $0x1d8] sm:$0xf]
      %v1353 = vld [vmem:[%s1 + $0x1dc] sm:$0xf]
      %v1354 = vld [vmem:[%s1 + $0x1e0] sm:$0xf]
      %v1355 = vld [vmem:[%s1 + $0x1e4] sm:$0xf]
      %v1356 = vld [vmem:[%s1 + $0x1e8] sm:$0xf]
      %v1357 = vld [vmem:[%s1 + $0x1ec] sm:$0xf]
      %v1358 = vld [vmem:[%s1 + $0x1f0] sm:$0xf]
      %v1359 = vld [vmem:[%s1 + $0x1f4] sm:$0xf]
      %v1360 = vld [vmem:[%s1 + $0x1f8] sm:$0xf]
      %v1361 = vld [vmem:[%s1 + $0x1fc] sm:$0xf]
      %v1362 = vld [vmem:[%s1 + $0x200] sm:$0xf]
      %v1363 = vld [vmem:[%s1 + $0x204] sm:$0xf]
      %v1364 = vld [vmem:[%s1 + $0x208] sm:$0xf]
      %v1365 = vld [vmem:[%s1 + $0x20c] sm:$0xf]
      %v1366 = vld [vmem:[%s1 + $0x210] sm:$0xf]
      %v1367 = vld [vmem:[%s1 + $0x214] sm:$0xf]
      %v1368 = vld [vmem:[%s1 + $0x218] sm:$0xf]
      %v1369 = vld [vmem:[%s1 + $0x21c] sm:$0xf]
      %v1370 = vld [vmem:[%s1 + $0x220] sm:$0xf]
      %v1371 = vld [vmem:[%s1 + $0x224] sm:$0xf]
      %v1372 = vld [vmem:[%s1 + $0x228] sm:$0xf]
      %v1373 = vld [vmem:[%s1 + $0x22c] sm:$0xf]
      %v1374 = vld [vmem:[%s1 + $0x230] sm:$0xf]
      %v1375 = vld [vmem:[%s1 + $0x234] sm:$0xf]
      %v1376 = vld [vmem:[%s1 + $0x238] sm:$0xf]
      %v1377 = vld [vmem:[%s1 + $0x23c] sm:$0xf]
      %v1378 = vld [vmem:[%s2] sm:$0x1]
      %v1380 = vlaneseq
      %v1381 = vshrl.u32 %v1380, 7
      %v1382 = vsub.s32 0, %v1381
      %v1383 = vrot.slane %v1378, %v1382
      %v1529 = vunpack.c.l.b16 %v1234
      %v1530 = vunpack.c.l.b16 %v1235
      %v1531 = vunpack.c.l.b16 %v1236
      %v1532 = vunpack.c.l.b16 %v1237
      %v1533 = vunpack.c.l.b16 %v1238
      %v1534 = vunpack.c.l.b16 %v1239
      %v1535 = vunpack.c.l.b16 %v1240
      %v1536 = vunpack.c.l.b16 %v1241
      %v1537 = vunpack.c.l.b16 %v1242
      %v1538 = vunpack.c.l.b16 %v1243
      %v1539 = vunpack.c.l.b16 %v1244
      %v1540 = vunpack.c.l.b16 %v1245
      %v1541 = vunpack.c.l.b16 %v1246
      %v1542 = vunpack.c.l.b16 %v1247
      %v1543 = vunpack.c.l.b16 %v1248
      %v1544 = vunpack.c.l.b16 %v1249
      %v1545 = vunpack.c.l.b16 %v1250
      %v1546 = vunpack.c.l.b16 %v1251
      %v1547 = vunpack.c.l.b16 %v1252
      %v1548 = vunpack.c.l.b16 %v1253
      %v1549 = vunpack.c.l.b16 %v1254
      %v1550 = vunpack.c.l.b16 %v1255
      %v1551 = vunpack.c.l.b16 %v1256
      %v1552 = vunpack.c.l.b16 %v1257
      %v1553 = vunpack.c.l.b16 %v1258
      %v1554 = vunpack.c.l.b16 %v1259
      %v1555 = vunpack.c.l.b16 %v1260
      %v1556 = vunpack.c.l.b16 %v1261
      %v1557 = vunpack.c.l.b16 %v1262
      %v1558 = vunpack.c.l.b16 %v1263
      %v1559 = vunpack.c.l.b16 %v1264
      %v1560 = vunpack.c.l.b16 %v1265
      %v1561 = vunpack.c.l.b16 %v1266
      %v1562 = vunpack.c.l.b16 %v1267
      %v1563 = vunpack.c.l.b16 %v1268
      %v1564 = vunpack.c.l.b16 %v1269
      %v1565 = vunpack.c.l.b16 %v1270
      %v1566 = vunpack.c.l.b16 %v1271
      %v1567 = vunpack.c.l.b16 %v1272
      %v1568 = vunpack.c.l.b16 %v1273
      %v1569 = vunpack.c.l.b16 %v1274
      %v1570 = vunpack.c.l.b16 %v1275
      %v1571 = vunpack.c.l.b16 %v1276
      %v1572 = vunpack.c.l.b16 %v1277
      %v1573 = vunpack.c.l.b16 %v1278
      %v1574 = vunpack.c.l.b16 %v1279
      %v1575 = vunpack.c.l.b16 %v1280
      %v1576 = vunpack.c.l.b16 %v1281
      %v1577 = vunpack.c.l.b16 %v1282
      %v1578 = vunpack.c.l.b16 %v1283
      %v1579 = vunpack.c.l.b16 %v1284
      %v1580 = vunpack.c.l.b16 %v1285
      %v1581 = vunpack.c.l.b16 %v1286
      %v1582 = vunpack.c.l.b16 %v1287
      %v1583 = vunpack.c.l.b16 %v1288
      %v1584 = vunpack.c.l.b16 %v1289
      %v1585 = vunpack.c.l.b16 %v1290
      %v1586 = vunpack.c.l.b16 %v1291
      %v1587 = vunpack.c.l.b16 %v1292
      %v1588 = vunpack.c.l.b16 %v1293
      %v1589 = vunpack.c.l.b16 %v1294
      %v1590 = vunpack.c.l.b16 %v1295
      %v1591 = vunpack.c.l.b16 %v1296
      %v1592 = vunpack.c.l.b16 %v1297
      %v1593 = vunpack.c.l.b16 %v1298
      %v1594 = vunpack.c.l.b16 %v1299
      %v1595 = vunpack.c.l.b16 %v1300
      %v1596 = vunpack.c.l.b16 %v1301
      %v1597 = vunpack.c.l.b16 %v1302
      %v1598 = vunpack.c.l.b16 %v1303
      %v1599 = vunpack.c.l.b16 %v1304
      %v1600 = vunpack.c.l.b16 %v1305
      %v1601 = vunpack.c.l.b16 %v1306
      %v1602 = vunpack.c.l.b16 %v1307
      %v1603 = vunpack.c.l.b16 %v1308
      %v1604 = vunpack.c.l.b16 %v1309
      %v1605 = vunpack.c.l.b16 %v1310
      %v1606 = vunpack.c.l.b16 %v1311
      %v1607 = vunpack.c.l.b16 %v1312
      %v1608 = vunpack.c.l.b16 %v1313
      %v1609 = vunpack.c.l.b16 %v1314
      %v1610 = vunpack.c.l.b16 %v1315
      %v1611 = vunpack.c.l.b16 %v1316
      %v1612 = vunpack.c.l.b16 %v1317
      %v1613 = vunpack.c.l.b16 %v1318
      %v1614 = vunpack.c.l.b16 %v1319
      %v1615 = vunpack.c.l.b16 %v1320
      %v1616 = vunpack.c.l.b16 %v1321
      %v1617 = vunpack.c.l.b16 %v1322
      %v1618 = vunpack.c.l.b16 %v1323
      %v1619 = vunpack.c.l.b16 %v1324
      %v1620 = vunpack.c.l.b16 %v1325
      %v1621 = vunpack.c.l.b16 %v1326
      %v1622 = vunpack.c.l.b16 %v1327
      %v1623 = vunpack.c.l.b16 %v1328
      %v1624 = vunpack.c.l.b16 %v1329
      %v1625 = vunpack.c.l.b16 %v1330
      %v1626 = vunpack.c.l.b16 %v1331
      %v1627 = vunpack.c.l.b16 %v1332
      %v1628 = vunpack.c.l.b16 %v1333
      %v1629 = vunpack.c.l.b16 %v1334
      %v1630 = vunpack.c.l.b16 %v1335
      %v1631 = vunpack.c.l.b16 %v1336
      %v1632 = vunpack.c.l.b16 %v1337
      %v1633 = vunpack.c.l.b16 %v1338
      %v1634 = vunpack.c.l.b16 %v1339
      %v1635 = vunpack.c.l.b16 %v1340
      %v1636 = vunpack.c.l.b16 %v1341
      %v1637 = vunpack.c.l.b16 %v1342
      %v1638 = vunpack.c.l.b16 %v1343
      %v1639 = vunpack.c.l.b16 %v1344
      %v1640 = vunpack.c.l.b16 %v1345
      %v1641 = vunpack.c.l.b16 %v1346
      %v1642 = vunpack.c.l.b16 %v1347
      %v1643 = vunpack.c.l.b16 %v1348
      %v1644 = vunpack.c.l.b16 %v1349
      %v1645 = vunpack.c.l.b16 %v1350
      %v1646 = vunpack.c.l.b16 %v1351
      %v1647 = vunpack.c.l.b16 %v1352
      %v1648 = vunpack.c.l.b16 %v1353
      %v1649 = vunpack.c.l.b16 %v1354
      %v1650 = vunpack.c.l.b16 %v1355
      %v1651 = vunpack.c.l.b16 %v1356
      %v1652 = vunpack.c.l.b16 %v1357
      %v1653 = vunpack.c.l.b16 %v1358
      %v1654 = vunpack.c.l.b16 %v1359
      %v1655 = vunpack.c.l.b16 %v1360
      %v1656 = vunpack.c.l.b16 %v1361
      %v1657 = vunpack.c.l.b16 %v1362
      %v1658 = vunpack.c.l.b16 %v1363
      %v1659 = vunpack.c.l.b16 %v1364
      %v1660 = vunpack.c.l.b16 %v1365
      %v1661 = vunpack.c.l.b16 %v1366
      %v1662 = vunpack.c.l.b16 %v1367
      %v1663 = vunpack.c.l.b16 %v1368
      %v1664 = vunpack.c.l.b16 %v1369
      %v1665 = vunpack.c.l.b16 %v1370
      %v1666 = vunpack.c.l.b16 %v1371
      %v1667 = vunpack.c.l.b16 %v1372
      %v1668 = vunpack.c.l.b16 %v1373
      %v1669 = vunpack.c.l.b16 %v1374
      %v1670 = vunpack.c.l.b16 %v1375
      %v1671 = vunpack.c.l.b16 %v1376
      %v1672 = vunpack.c.l.b16 %v1377
      %v1673 = vpack.c.b16 %v1530, %v1529
      %v1674 = vpack.c.b16 %v1532, %v1531
      %v1675 = vpack.c.b16 %v1534, %v1533
      %v1676 = vpack.c.b16 %v1536, %v1535
      %v1677 = vpack.c.b16 %v1538, %v1537
      %v1678 = vpack.c.b16 %v1540, %v1539
      %v1679 = vpack.c.b16 %v1542, %v1541
      %v1680 = vpack.c.b16 %v1544, %v1543
      %v1681 = vpack.c.b16 %v1546, %v1545
      %v1682 = vpack.c.b16 %v1548, %v1547
      %v1683 = vpack.c.b16 %v1550, %v1549
      %v1684 = vpack.c.b16 %v1552, %v1551
      %v1685 = vpack.c.b16 %v1554, %v1553
      %v1686 = vpack.c.b16 %v1556, %v1555
      %v1687 = vpack.c.b16 %v1558, %v1557
      %v1688 = vpack.c.b16 %v1560, %v1559
      %v1689 = vpack.c.b16 %v1562, %v1561
      %v1690 = vpack.c.b16 %v1564, %v1563
      %v1691 = vpack.c.b16 %v1566, %v1565
      %v1692 = vpack.c.b16 %v1568, %v1567
      %v1693 = vpack.c.b16 %v1570, %v1569
      %v1694 = vpack.c.b16 %v1572, %v1571
      %v1695 = vpack.c.b16 %v1574, %v1573
      %v1696 = vpack.c.b16 %v1576, %v1575
      %v1697 = vpack.c.b16 %v1578, %v1577
      %v1698 = vpack.c.b16 %v1580, %v1579
      %v1699 = vpack.c.b16 %v1582, %v1581
      %v1700 = vpack.c.b16 %v1584, %v1583
      %v1701 = vpack.c.b16 %v1586, %v1585
      %v1702 = vpack.c.b16 %v1588, %v1587
      %v1703 = vpack.c.b16 %v1590, %v1589
      %v1704 = vpack.c.b16 %v1592, %v1591
      %v1705 = vpack.c.b16 %v1594, %v1593
      %v1706 = vpack.c.b16 %v1596, %v1595
      %v1707 = vpack.c.b16 %v1598, %v1597
      %v1708 = vpack.c.b16 %v1600, %v1599
      %v1709 = vpack.c.b16 %v1602, %v1601
      %v1710 = vpack.c.b16 %v1604, %v1603
      %v1711 = vpack.c.b16 %v1606, %v1605
      %v1712 = vpack.c.b16 %v1608, %v1607
      %v1713 = vpack.c.b16 %v1610, %v1609
      %v1714 = vpack.c.b16 %v1612, %v1611
      %v1715 = vpack.c.b16 %v1614, %v1613
      %v1716 = vpack.c.b16 %v1616, %v1615
      %v1717 = vpack.c.b16 %v1618, %v1617
      %v1718 = vpack.c.b16 %v1620, %v1619
      %v1719 = vpack.c.b16 %v1622, %v1621
      %v1720 = vpack.c.b16 %v1624, %v1623
      %v1721 = vpack.c.b16 %v1626, %v1625
      %v1722 = vpack.c.b16 %v1628, %v1627
      %v1723 = vpack.c.b16 %v1630, %v1629
      %v1724 = vpack.c.b16 %v1632, %v1631
      %v1725 = vpack.c.b16 %v1634, %v1633
      %v1726 = vpack.c.b16 %v1636, %v1635
      %v1727 = vpack.c.b16 %v1638, %v1637
      %v1728 = vpack.c.b16 %v1640, %v1639
      %v1729 = vpack.c.b16 %v1642, %v1641
      %v1730 = vpack.c.b16 %v1644, %v1643
      %v1731 = vpack.c.b16 %v1646, %v1645
      %v1732 = vpack.c.b16 %v1648, %v1647
      %v1733 = vpack.c.b16 %v1650, %v1649
      %v1734 = vpack.c.b16 %v1652, %v1651
      %v1735 = vpack.c.b16 %v1654, %v1653
      %v1736 = vpack.c.b16 %v1656, %v1655
      %v1737 = vpack.c.b16 %v1658, %v1657
      %v1738 = vpack.c.b16 %v1660, %v1659
      %v1739 = vpack.c.b16 %v1662, %v1661
      %v1740 = vpack.c.b16 %v1664, %v1663
      %v1741 = vpack.c.b16 %v1666, %v1665
      %v1742 = vpack.c.b16 %v1668, %v1667
      %v1743 = vpack.c.b16 %v1670, %v1669
      %v1744 = vpack.c.b16 %v1672, %v1671
      %1817 = vmatprep.subr.bf16.mxu0 0
      %1818 = vmatpush1.bf16.msra.mxu0 %v1673
      %1819 = vmatprep.subr.bf16.mxu0 0
      %1820 = vmatpush1.bf16.msra.mxu0 %v1674
      %1821 = vmatprep.subr.bf16.mxu0 0
      %1822 = vmatpush1.bf16.msra.mxu0 %v1675
      %1823 = vmatprep.subr.bf16.mxu0 0
      %1824 = vmatpush1.bf16.msra.mxu0 %v1676
      %1825 = vmatprep.subr.bf16.mxu0 0
      %1826 = vmatpush1.bf16.msra.mxu0 %v1677
      %1827 = vmatprep.subr.bf16.mxu0 0
      %1828 = vmatpush1.bf16.msra.mxu0 %v1678
      %1829 = vmatprep.subr.bf16.mxu0 0
      %1830 = vmatpush1.bf16.msra.mxu0 %v1679
      %1831 = vmatprep.subr.bf16.mxu0 0
      %1832 = vmatpush1.bf16.msra.mxu0 %v1680
      %1833 = vmatprep.subr.bf16.mxu0 0
      %1834 = vmatpush1.bf16.msra.mxu0 %v1681
      %1835 = vmatprep.subr.bf16.mxu0 0
      %1836 = vmatpush1.bf16.msra.mxu0 %v1682
      %1837 = vmatprep.subr.bf16.mxu0 0
      %1838 = vmatpush1.bf16.msra.mxu0 %v1683
      %1839 = vmatprep.subr.bf16.mxu0 0
      %1840 = vmatpush1.bf16.msra.mxu0 %v1684
      %1841 = vmatprep.subr.bf16.mxu0 0
      %1842 = vmatpush1.bf16.msra.mxu0 %v1685
      %1843 = vmatprep.subr.bf16.mxu0 0
      %1844 = vmatpush1.bf16.msra.mxu0 %v1686
      %1845 = vmatprep.subr.bf16.mxu0 0
      %1846 = vmatpush1.bf16.msra.mxu0 %v1687
      %1847 = vmatprep.subr.bf16.mxu0 0
      %1848 = vmatpush1.bf16.msra.mxu0 %v1688
      %1849 = vmatprep.mubr.bf16.mxu0 %v976
      %1850 = vmatmul.mubr.bf16.gmra.mrb[0].mxu0 %v1141
      %v1851 = vpop.f32.mrb[0].mxu0
      %v1852 = vadd.f32 %v1383, %v1851
      %v1853 = vpop.f32.mrb[0].mxu0
      %v1854 = vpop.f32.mrb[0].mxu0
      %v1855 = vadd.f32 %v1383, %v1854
      %v1856 = vpop.f32.mrb[0].mxu0
      %1857 = vmatprep.mubr.bf16.mxu0 %v977
      %1858 = vmatmul.mubr.bf16.gmra.mrb[0].mxu0 %v1142
      %v1859 = vpop.f32.mrb[0].mxu0
      %v1860 = vadd.f32 %v1383, %v1859
      %v1861 = vpop.f32.mrb[0].mxu0
      %v1862 = vpop.f32.mrb[0].mxu0
      %v1863 = vadd.f32 %v1383, %v1862
      %v1864 = vpop.f32.mrb[0].mxu0
      %1865 = vmatprep.mubr.bf16.mxu0 %v978
      %1866 = vmatmul.mubr.bf16.gmra.mrb[0].mxu0 %v1143
      %v1867 = vpop.f32.mrb[0].mxu0
      %v1868 = vadd.f32 %v1383, %v1867
      %v1869 = vpop.f32.mrb[0].mxu0
      %v1870 = vpop.f32.mrb[0].mxu0
      %v1871 = vadd.f32 %v1383, %v1870
      %v1872 = vpop.f32.mrb[0].mxu0
      %1873 = vmatprep.mubr.bf16.mxu0 %v979
      %1874 = vmatmul.mubr.bf16.gmra.mrb[0].mxu0 %v1144
      %v1875 = vpop.f32.mrb[0].mxu0
      %v1876 = vadd.f32 %v1383, %v1875
      %v1877 = vpop.f32.mrb[0].mxu0
      %v1878 = vpop.f32.mrb[0].mxu0
      %v1879 = vadd.f32 %v1383, %v1878
      %v1880 = vpop.f32.mrb[0].mxu0
      %1881 = vmatprep.mubr.bf16.mxu0 %v980
      %1882 = vmatmul.mubr.bf16.gmra.mrb[0].mxu0 %v1145
      %v1883 = vpop.f32.mrb[0].mxu0
      %v1884 = vadd.f32 %v1383, %v1883
      %v1885 = vpop.f32.mrb[0].mxu0
      %v1886 = vpop.f32.mrb[0].mxu0
      %v1887 = vadd.f32 %v1383, %v1886
      %v1888 = vpop.f32.mrb[0].mxu0
      %1889 = vmatprep.mubr.bf16.mxu0 %v981
      %1890 = vmatmul.mubr.bf16.gmra.mrb[0].mxu0 %v1146
      %v1891 = vpop.f32.mrb[0].mxu0
      %v1892 = vadd.f32 %v1383, %v1891
      %v1893 = vpop.f32.mrb[0].mxu0
      %v1894 = vpop.f32.mrb[0].mxu0
      %v1895 = vadd.f32 %v1383, %v1894
      %v1896 = vpop.f32.mrb[0].mxu0
      %1897 = vmatprep.mubr.bf16.mxu0 %v982
      %1898 = vmatmul.mubr.bf16.gmra.mrb[0].mxu0 %v1147
      %v1899 = vpop.f32.mrb[0].mxu0
      %v1900 = vadd.f32 %v1383, %v1899
      %v1901 = vpop.f32.mrb[0].mxu0
      %v1902 = vpop.f32.mrb[0].mxu0
      %v1903 = vadd.f32 %v1383, %v1902
      %v1904 = vpop.f32.mrb[0].mxu0
      %1905 = vmatprep.mubr.bf16.mxu0 %v983
      %1906 = vmatmul.mubr.bf16.gmra.mrb[0].mxu0 %v1148
      %v1907 = vpop.f32.mrb[0].mxu0
      %v1908 = vadd.f32 %v1383, %v1907
      %v1909 = vpop.f32.mrb[0].mxu0
      %v1910 = vpop.f32.mrb[0].mxu0
      %v1911 = vadd.f32 %v1383, %v1910
      %v1912 = vpop.f32.mrb[0].mxu0
      %1913 = vmatprep.mubr.bf16.mxu0 %v984
      %1914 = vmatmul.mubr.bf16.gmra.mrb[0].mxu0 %v1149
      %v1915 = vpop.f32.mrb[0].mxu0
      %v1916 = vadd.f32 %v1383, %v1915
      %v1917 = vpop.f32.mrb[0].mxu0
      %v1918 = vpop.f32.mrb[0].mxu0
      %v1919 = vadd.f32 %v1383, %v1918
      %v1920 = vpop.f32.mrb[0].mxu0
      %1921 = vmatprep.mubr.bf16.mxu0 %v985
      %1922 = vmatmul.mubr.bf16.gmra.mrb[0].mxu0 %v1150
      %v1923 = vpop.f32.mrb[0].mxu0
      %v1924 = vadd.f32 %v1383, %v1923
      %v1925 = vpop.f32.mrb[0].mxu0
      %v1926 = vpop.f32.mrb[0].mxu0
      %v1927 = vadd.f32 %v1383, %v1926
      %v1928 = vpop.f32.mrb[0].mxu0
      %1929 = vmatprep.mubr.bf16.mxu0 %v986
      %1930 = vmatmul.mubr.bf16.gmra.mrb[0].mxu0 %v1151
      %v1931 = vpop.f32.mrb[0].mxu0
      %v1932 = vadd.f32 %v1383, %v1931
      %v1933 = vpop.f32.mrb[0].mxu0
      %v1934 = vpop.f32.mrb[0].mxu0
      %v1935 = vadd.f32 %v1383, %v1934
      %v1936 = vpop.f32.mrb[0].mxu0
      %1937 = vmatprep.mubr.bf16.mxu0 %v987
      %1938 = vmatmul.mubr.bf16.gmra.mrb[0].mxu0 %v1152
      %v1939 = vpop.f32.mrb[0].mxu0
      %v1940 = vadd.f32 %v1383, %v1939
      %v1941 = vpop.f32.mrb[0].mxu0
      %v1942 = vpop.f32.mrb[0].mxu0
      %v1943 = vadd.f32 %v1383, %v1942
      %v1944 = vpop.f32.mrb[0].mxu0
      %1945 = vmatprep.mubr.bf16.mxu0 %v988
      %1946 = vmatmul.mubr.bf16.gmra.mrb[0].mxu0 %v1153
      %v1947 = vpop.f32.mrb[0].mxu0
      %v1948 = vadd.f32 %v1383, %v1947
      %v1949 = vpop.f32.mrb[0].mxu0
      %v1950 = vpop.f32.mrb[0].mxu0
      %v1951 = vadd.f32 %v1383, %v1950
      %v1952 = vpop.f32.mrb[0].mxu0
      %1953 = vmatprep.mubr.bf16.mxu0 %v989
      %1954 = vmatmul.mubr.bf16.gmra.mrb[0].mxu0 %v1154
      %v1955 = vpop.f32.mrb[0].mxu0
      %v1956 = vadd.f32 %v1383, %v1955
      %v1957 = vpop.f32.mrb[0].mxu0
      %v1958 = vpop.f32.mrb[0].mxu0
      %v1959 = vadd.f32 %v1383, %v1958
      %v1960 = vpop.f32.mrb[0].mxu0
      %1961 = vmatprep.mubr.bf16.mxu0 %v990
      %1962 = vmatmul.mubr.bf16.gmra.mrb[0].mxu0 %v1155
      %v1963 = vpop.f32.mrb[0].mxu0
      %v1964 = vadd.f32 %v1383, %v1963
      %v1965 = vpop.f32.mrb[0].mxu0
      %v1966 = vpop.f32.mrb[0].mxu0
      %v1967 = vadd.f32 %v1383, %v1966
      %v1968 = vpop.f32.mrb[0].mxu0
      %1969 = vmatprep.mubr.bf16.mxu0 %v991
      %1970 = vmatmul.mubr.bf16.gmra.mrb[0].mxu0 %v1156
      %v1971 = vpop.f32.mrb[0].mxu0
      %v1972 = vadd.f32 %v1383, %v1971
      %v1973 = vpop.f32.mrb[0].mxu0
      %v1974 = vpop.f32.mrb[0].mxu0
      %v1975 = vadd.f32 %v1383, %v1974
      %v1976 = vpop.f32.mrb[0].mxu0
      %1977 = vdwg.mxu0
      %1978 = vmatprep.subr.bf16.mxu0 0
      %1979 = vmatpush1.bf16.msra.mxu0 %v1689
      %1980 = vmatprep.subr.bf16.mxu0 0
      %1981 = vmatpush1.bf16.msra.mxu0 %v1690
      %1982 = vmatprep.subr.bf16.mxu0 0
      %1983 = vmatpush1.bf16.msra.mxu0 %v1691
      %1984 = vmatprep.subr.bf16.mxu0 0
      %1985 = vmatpush1.bf16.msra.mxu0 %v1692
      %1986 = vmatprep.subr.bf16.mxu0 0
      %1987 = vmatpush1.bf16.msra.mxu0 %v1693
      %1988 = vmatprep.subr.bf16.mxu0 0
      %1989 = vmatpush1.bf16.msra.mxu0 %v1694
      %1990 = vmatprep.subr.bf16.mxu0 0
      %1991 = vmatpush1.bf16.msra.mxu0 %v1695
      %1992 = vmatprep.subr.bf16.mxu0 0
      %1993 = vmatpush1.bf16.msra.mxu0 %v1696
      %1994 = vmatprep.subr.bf16.mxu0 0
      %1995 = vmatpush1.bf16.msra.mxu0 %v1697
      %1996 = vmatprep.subr.bf16.mxu0 0
      %1997 = vmatpush1.bf16.msra.mxu0 %v1698
      %1998 = vmatprep.subr.bf16.mxu0 0
      %1999 = vmatpush1.bf16.msra.mxu0 %v1699
      %2000 = vmatprep.subr.bf16.mxu0 0
      %2001 = vmatpush1.bf16.msra.mxu0 %v1700
      %2002 = vmatprep.subr.bf16.mxu0 0
      %2003 = vmatpush1.bf16.msra.mxu0 %v1701
      %2004 = vmatprep.subr.bf16.mxu0 0
      %2005 = vmatpush1.bf16.msra.mxu0 %v1702
      %2006 = vmatprep.subr.bf16.mxu0 0
      %2007 = vmatpush1.bf16.msra.mxu0 %v1703
      %2008 = vmatprep.subr.bf16.mxu0 0
      %2009 = vmatpush1.bf16.msra.mxu0 %v1704
      %2010 = vmatprep.mubr.bf16.mxu0 %v1142
      %2011 = vmatmul.mubr.bf16.gmra.mrb[0].mxu0 %v1216
      %v2012 = vpop.f32.mrb[0].mxu0
      %v2013 = vadd.f32 %v1852, %v2012
      %v2014 = vpop.f32.mrb[0].mxu0
      %v2015 = vpop.f32.mrb[0].mxu0
      %v2016 = vadd.f32 %v1855, %v2015
      %v2017 = vpop.f32.mrb[0].mxu0
      %2018 = vmatprep.mubr.bf16.mxu0 %v1143
      %2019 = vmatmul.mubr.bf16.gmra.mrb[0].mxu0 %v1217
      %v2020 = vpop.f32.mrb[0].mxu0
      %v2021 = vadd.f32 %v1860, %v2020
      %v2022 = vpop.f32.mrb[0].mxu0
      %v2023 = vpop.f32.mrb[0].mxu0
      %v2024 = vadd.f32 %v1863, %v2023
      %v2025 = vpop.f32.mrb[0].mxu0
      %2026 = vmatprep.mubr.bf16.mxu0 %v1144
      %2027 = vmatmul.mubr.bf16.gmra.mrb[0].mxu0 %v1218
      %v2028 = vpop.f32.mrb[0].mxu0
      %v2029 = vadd.f32 %v1868, %v2028
      %v2030 = vpop.f32.mrb[0].mxu0
      %v2031 = vpop.f32.mrb[0].mxu0
      %v2032 = vadd.f32 %v1871, %v2031
      %v2033 = vpop.f32.mrb[0].mxu0
      %2034 = vmatprep.mubr.bf16.mxu0 %v1145
      %2035 = vmatmul.mubr.bf16.gmra.mrb[0].mxu0 %v1219
      %v2036 = vpop.f32.mrb[0].mxu0
      %v2037 = vadd.f32 %v1876, %v2036
      %v2038 = vpop.f32.mrb[0].mxu0
      %v2039 = vpop.f32.mrb[0].mxu0
      %v2040 = vadd.f32 %v1879, %v2039
      %v2041 = vpop.f32.mrb[0].mxu0
      %2042 = vmatprep.mubr.bf16.mxu0 %v1146
      %2043 = vmatmul.mubr.bf16.gmra.mrb[0].mxu0 %v1220
      %v2044 = vpop.f32.mrb[0].mxu0
      %v2045 = vadd.f32 %v1884, %v2044
      %v2046 = vpop.f32.mrb[0].mxu0
      %v2047 = vpop.f32.mrb[0].mxu0
      %v2048 = vadd.f32 %v1887, %v2047
      %v2049 = vpop.f32.mrb[0].mxu0
      %2050 = vmatprep.mubr.bf16.mxu0 %v1147
      %2051 = vmatmul.mubr.bf16.gmra.mrb[0].mxu0 %v1221
      %v2052 = vpop.f32.mrb[0].mxu0
      %v2053 = vadd.f32 %v1892, %v2052
      %v2054 = vpop.f32.mrb[0].mxu0
      %v2055 = vpop.f32.mrb[0].mxu0
      %v2056 = vadd.f32 %v1895, %v2055
      %v2057 = vpop.f32.mrb[0].mxu0
      %2058 = vmatprep.mubr.bf16.mxu0 %v1148
      %2059 = vmatmul.mubr.bf16.gmra.mrb[0].mxu0 %v1222
      %v2060 = vpop.f32.mrb[0].mxu0
      %v2061 = vadd.f32 %v1900, %v2060
      %v2062 = vpop.f32.mrb[0].mxu0
      %v2063 = vpop.f32.mrb[0].mxu0
      %v2064 = vadd.f32 %v1903, %v2063
      %v2065 = vpop.f32.mrb[0].mxu0
      %2066 = vmatprep.mubr.bf16.mxu0 %v1149
      %2067 = vmatmul.mubr.bf16.gmra.mrb[0].mxu0 %v1223
      %v2068 = vpop.f32.mrb[0].mxu0
      %v2069 = vadd.f32 %v1908, %v2068
      %v2070 = vpop.f32.mrb[0].mxu0
      %v2071 = vpop.f32.mrb[0].mxu0
      %v2072 = vadd.f32 %v1911, %v2071
      %v2073 = vpop.f32.mrb[0].mxu0
      %2074 = vmatprep.mubr.bf16.mxu0 %v1150
      %2075 = vmatmul.mubr.bf16.gmra.mrb[0].mxu0 %v1224
      %v2076 = vpop.f32.mrb[0].mxu0
      %v2077 = vadd.f32 %v1916, %v2076
      %v2078 = vpop.f32.mrb[0].mxu0
      %v2079 = vpop.f32.mrb[0].mxu0
      %v2080 = vadd.f32 %v1919, %v2079
      %v2081 = vpop.f32.mrb[0].mxu0
      %2082 = vmatprep.mubr.bf16.mxu0 %v1151
      %2083 = vmatmul.mubr.bf16.gmra.mrb[0].mxu0 %v1225
      %v2084 = vpop.f32.mrb[0].mxu0
      %v2085 = vadd.f32 %v1924, %v2084
      %v2086 = vpop.f32.mrb[0].mxu0
      %v2087 = vpop.f32.mrb[0].mxu0
      %v2088 = vadd.f32 %v1927, %v2087
      %v2089 = vpop.f32.mrb[0].mxu0
      %2090 = vmatprep.mubr.bf16.mxu0 %v1152
      %2091 = vmatmul.mubr.bf16.gmra.mrb[0].mxu0 %v1226
      %v2092 = vpop.f32.mrb[0].mxu0
      %v2093 = vadd.f32 %v1932, %v2092
      %v2094 = vpop.f32.mrb[0].mxu0
      %v2095 = vpop.f32.mrb[0].mxu0
      %v2096 = vadd.f32 %v1935, %v2095
      %v2097 = vpop.f32.mrb[0].mxu0
      %2098 = vmatprep.mubr.bf16.mxu0 %v1153
      %2099 = vmatmul.mubr.bf16.gmra.mrb[0].mxu0 %v1227
      %v2100 = vpop.f32.mrb[0].mxu0
      %v2101 = vadd.f32 %v1940, %v2100
      %v2102 = vpop.f32.mrb[0].mxu0
      %v2103 = vpop.f32.mrb[0].mxu0
      %v2104 = vadd.f32 %v1943, %v2103
      %v2105 = vpop.f32.mrb[0].mxu0
      %2106 = vmatprep.mubr.bf16.mxu0 %v1154
      %2107 = vmatmul.mubr.bf16.gmra.mrb[0].mxu0 %v1228
      %v2108 = vpop.f32.mrb[0].mxu0
      %v2109 = vadd.f32 %v1948, %v2108
      %v2110 = vpop.f32.mrb[0].mxu0
      %v2111 = vpop.f32.mrb[0].mxu0
      %v2112 = vadd.f32 %v1951, %v2111
      %v2113 = vpop.f32.mrb[0].mxu0
      %2114 = vmatprep.mubr.bf16.mxu0 %v1155
      %2115 = vmatmul.mubr.bf16.gmra.mrb[0].mxu0 %v1229
      %v2116 = vpop.f32.mrb[0].mxu0
      %v2117 = vadd.f32 %v1956, %v2116
      %v2118 = vpop.f32.mrb[0].mxu0
      %v2119 = vpop.f32.mrb[0].mxu0
      %v2120 = vadd.f32 %v1959, %v2119
      %v2121 = vpop.f32.mrb[0].mxu0
      %2122 = vmatprep.mubr.bf16.mxu0 %v1156
      %2123 = vmatmul.mubr.bf16.gmra.mrb[0].mxu0 %v1230
      %v2124 = vpop.f32.mrb[0].mxu0
      %v2125 = vadd.f32 %v1964, %v2124
      %v2126 = vpop.f32.mrb[0].mxu0
      %v2127 = vpop.f32.mrb[0].mxu0
      %v2128 = vadd.f32 %v1967, %v2127
      %v2129 = vpop.f32.mrb[0].mxu0
      %2130 = vmatprep.mubr.bf16.mxu0 %v1157
      %2131 = vmatmul.mubr.bf16.gmra.mrb[0].mxu0 %v1231
      %v2132 = vpop.f32.mrb[0].mxu0
      %v2133 = vadd.f32 %v1972, %v2132
      %v2134 = vpop.f32.mrb[0].mxu0
      %v2135 = vpop.f32.mrb[0].mxu0
      %v2136 = vadd.f32 %v1975, %v2135
      %v2137 = vpop.f32.mrb[0].mxu0
      %2138 = vdwg.mxu0
      %2139 = vmatprep.subr.bf16.mxu0 0
      %2140 = vmatpush1.bf16.msra.mxu0 %v1705
      %2141 = vmatprep.subr.bf16.mxu0 0
      %2142 = vmatpush1.bf16.msra.mxu0 %v1706
      %2143 = vmatprep.subr.bf16.mxu0 0
      %2144 = vmatpush1.bf16.msra.mxu0 %v1707
      %2145 = vmatprep.subr.bf16.mxu0 0
      %2146 = vmatpush1.bf16.msra.mxu0 %v1708
      %2147 = vmatprep.subr.bf16.mxu0 0
      %2148 = vmatpush1.bf16.msra.mxu0 %v1709
      %2149 = vmatprep.subr.bf16.mxu0 0
      %2150 = vmatpush1.bf16.msra.mxu0 %v1710
      %2151 = vmatprep.subr.bf16.mxu0 0
      %2152 = vmatpush1.bf16.msra.mxu0 %v1711
      %2153 = vmatprep.subr.bf16.mxu0 0
      %2154 = vmatpush1.bf16.msra.mxu0 %v1712
      %2155 = vmatprep.subr.bf16.mxu0 0
      %2156 = vmatpush1.bf16.msra.mxu0 %v1713
      %2157 = vmatprep.subr.bf16.mxu0 0
      %2158 = vmatpush1.bf16.msra.mxu0 %v1714
      %2159 = vmatprep.subr.bf16.mxu0 0
      %2160 = vmatpush1.bf16.msra.mxu0 %v1715
      %2161 = vmatprep.subr.bf16.mxu0 0
      %2162 = vmatpush1.bf16.msra.mxu0 %v1716
      %2163 = vmatprep.subr.bf16.mxu0 0
      %2164 = vmatpush1.bf16.msra.mxu0 %v1717
      %2165 = vmatprep.subr.bf16.mxu0 0
      %2166 = vmatpush1.bf16.msra.mxu0 %v1718
      %2167 = vmatprep.subr.bf16.mxu0 0
      %2168 = vmatpush1.bf16.msra.mxu0 %v1719
      %2169 = vmatprep.subr.bf16.mxu0 0
      %2170 = vmatpush1.bf16.msra.mxu0 %v1720
      %2171 = vmatprep.mubr.bf16.mxu0 %v1217
      %2172 = vmatmul.mubr.bf16.gmra.mrb[0].mxu0 %v977
      %v2173 = vpop.f32.mrb[0].mxu0
      %v2174 = vadd.f32 %v2013, %v2173
      %v2175 = vpop.f32.mrb[0].mxu0
      %v2176 = vpop.f32.mrb[0].mxu0
      %v2177 = vadd.f32 %v2016, %v2176
      %v2178 = vpop.f32.mrb[0].mxu0
      %2179 = vmatprep.mubr.bf16.mxu0 %v1218
      %2180 = vmatmul.mubr.bf16.gmra.mrb[0].mxu0 %v978
      %v2181 = vpop.f32.mrb[0].mxu0
      %v2182 = vadd.f32 %v2021, %v2181
      %v2183 = vpop.f32.mrb[0].mxu0
      %v2184 = vpop.f32.mrb[0].mxu0
      %v2185 = vadd.f32 %v2024, %v2184
      %v2186 = vpop.f32.mrb[0].mxu0
      %2187 = vmatprep.mubr.bf16.mxu0 %v1219
      %2188 = vmatmul.mubr.bf16.gmra.mrb[0].mxu0 %v979
      %v2189 = vpop.f32.mrb[0].mxu0
      %v2190 = vadd.f32 %v2029, %v2189
      %v2191 = vpop.f32.mrb[0].mxu0
      %v2192 = vpop.f32.mrb[0].mxu0
      %v2193 = vadd.f32 %v2032, %v2192
      %v2194 = vpop.f32.mrb[0].mxu0
      %2195 = vmatprep.mubr.bf16.mxu0 %v1220
      %2196 = vmatmul.mubr.bf16.gmra.mrb[0].mxu0 %v980
      %v2197 = vpop.f32.mrb[0].mxu0
      %v2198 = vadd.f32 %v2037, %v2197
      %v2199 = vpop.f32.mrb[0].mxu0
      %v2200 = vpop.f32.mrb[0].mxu0
      %v2201 = vadd.f32 %v2040, %v2200
      %v2202 = vpop.f32.mrb[0].mxu0
      %2203 = vmatprep.mubr.bf16.mxu0 %v1221
      %2204 = vmatmul.mubr.bf16.gmra.mrb[0].mxu0 %v981
      %v2205 = vpop.f32.mrb[0].mxu0
      %v2206 = vadd.f32 %v2045, %v2205
      %v2207 = vpop.f32.mrb[0].mxu0
      %v2208 = vpop.f32.mrb[0].mxu0
      %v2209 = vadd.f32 %v2048, %v2208
      %v2210 = vpop.f32.mrb[0].mxu0
      %2211 = vmatprep.mubr.bf16.mxu0 %v1222
      %2212 = vmatmul.mubr.bf16.gmra.mrb[0].mxu0 %v982
      %v2213 = vpop.f32.mrb[0].mxu0
      %v2214 = vadd.f32 %v2053, %v2213
      %v2215 = vpop.f32.mrb[0].mxu0
      %v2216 = vpop.f32.mrb[0].mxu0
      %v2217 = vadd.f32 %v2056, %v2216
      %v2218 = vpop.f32.mrb[0].mxu0
      %2219 = vmatprep.mubr.bf16.mxu0 %v1223
      %2220 = vmatmul.mubr.bf16.gmra.mrb[0].mxu0 %v983
      %v2221 = vpop.f32.mrb[0].mxu0
      %v2222 = vadd.f32 %v2061, %v2221
      %v2223 = vpop.f32.mrb[0].mxu0
      %v2224 = vpop.f32.mrb[0].mxu0
      %v2225 = vadd.f32 %v2064, %v2224
      %v2226 = vpop.f32.mrb[0].mxu0
      %2227 = vmatprep.mubr.bf16.mxu0 %v1224
      %2228 = vmatmul.mubr.bf16.gmra.mrb[0].mxu0 %v984
      %v2229 = vpop.f32.mrb[0].mxu0
      %v2230 = vadd.f32 %v2069, %v2229
      %v2231 = vpop.f32.mrb[0].mxu0
      %v2232 = vpop.f32.mrb[0].mxu0
      %v2233 = vadd.f32 %v2072, %v2232
      %v2234 = vpop.f32.mrb[0].mxu0
      %2235 = vmatprep.mubr.bf16.mxu0 %v1225
      %2236 = vmatmul.mubr.bf16.gmra.mrb[0].mxu0 %v985
      %v2237 = vpop.f32.mrb[0].mxu0
      %v2238 = vadd.f32 %v2077, %v2237
      %v2239 = vpop.f32.mrb[0].mxu0
      %v2240 = vpop.f32.mrb[0].mxu0
      %v2241 = vadd.f32 %v2080, %v2240
      %v2242 = vpop.f32.mrb[0].mxu0
      %2243 = vmatprep.mubr.bf16.mxu0 %v1226
      %2244 = vmatmul.mubr.bf16.gmra.mrb[0].mxu0 %v986
      %v2245 = vpop.f32.mrb[0].mxu0
      %v2246 = vadd.f32 %v2085, %v2245
      %v2247 = vpop.f32.mrb[0].mxu0
      %v2248 = vpop.f32.mrb[0].mxu0
      %v2249 = vadd.f32 %v2088, %v2248
      %v2250 = vpop.f32.mrb[0].mxu0
      %2251 = vmatprep.mubr.bf16.mxu0 %v1227
      %2252 = vmatmul.mubr.bf16.gmra.mrb[0].mxu0 %v987
      %v2253 = vpop.f32.mrb[0].mxu0
      %v2254 = vadd.f32 %v2093, %v2253
      %v2255 = vpop.f32.mrb[0].mxu0
      %v2256 = vpop.f32.mrb[0].mxu0
      %v2257 = vadd.f32 %v2096, %v2256
      %v2258 = vpop.f32.mrb[0].mxu0
      %2259 = vmatprep.mubr.bf16.mxu0 %v1228
      %2260 = vmatmul.mubr.bf16.gmra.mrb[0].mxu0 %v988
      %v2261 = vpop.f32.mrb[0].mxu0
      %v2262 = vadd.f32 %v2101, %v2261
      %v2263 = vpop.f32.mrb[0].mxu0
      %v2264 = vpop.f32.mrb[0].mxu0
      %v2265 = vadd.f32 %v2104, %v2264
      %v2266 = vpop.f32.mrb[0].mxu0
      %2267 = vmatprep.mubr.bf16.mxu0 %v1229
      %2268 = vmatmul.mubr.bf16.gmra.mrb[0].mxu0 %v989
      %v2269 = vpop.f32.mrb[0].mxu0
      %v2270 = vadd.f32 %v2109, %v2269
      %v2271 = vpop.f32.mrb[0].mxu0
      %v2272 = vpop.f32.mrb[0].mxu0
      %v2273 = vadd.f32 %v2112, %v2272
      %v2274 = vpop.f32.mrb[0].mxu0
      %2275 = vmatprep.mubr.bf16.mxu0 %v1230
      %2276 = vmatmul.mubr.bf16.gmra.mrb[0].mxu0 %v990
      %v2277 = vpop.f32.mrb[0].mxu0
      %v2278 = vadd.f32 %v2117, %v2277
      %v2279 = vpop.f32.mrb[0].mxu0
      %v2280 = vpop.f32.mrb[0].mxu0
      %v2281 = vadd.f32 %v2120, %v2280
      %v2282 = vpop.f32.mrb[0].mxu0
      %2283 = vmatprep.mubr.bf16.mxu0 %v1231
      %2284 = vmatmul.mubr.bf16.gmra.mrb[0].mxu0 %v991
      %v2285 = vpop.f32.mrb[0].mxu0
      %v2286 = vadd.f32 %v2125, %v2285
      %v2287 = vpop.f32.mrb[0].mxu0
      %v2288 = vpop.f32.mrb[0].mxu0
      %v2289 = vadd.f32 %v2128, %v2288
      %v2290 = vpop.f32.mrb[0].mxu0
      %2291 = vmatprep.mubr.bf16.mxu0 %v1232
      %2292 = vmatmul.mubr.bf16.gmra.mrb[0].mxu0 %v992
      %v2293 = vpop.f32.mrb[0].mxu0
      %v2294 = vadd.f32 %v2133, %v2293
      %v2295 = vpop.f32.mrb[0].mxu0
      %v2296 = vpop.f32.mrb[0].mxu0
      %v2297 = vadd.f32 %v2136, %v2296
      %v2298 = vpop.f32.mrb[0].mxu0
      %2299 = vdwg.mxu0
      %2300 = vmatprep.subr.bf16.mxu0 0
      %2301 = vmatpush1.bf16.msra.mxu0 %v1721
      %2302 = vmatprep.subr.bf16.mxu0 0
      %2303 = vmatpush1.bf16.msra.mxu0 %v1722
      %2304 = vmatprep.subr.bf16.mxu0 0
      %2305 = vmatpush1.bf16.msra.mxu0 %v1723
      %2306 = vmatprep.subr.bf16.mxu0 0
      %2307 = vmatpush1.bf16.msra.mxu0 %v1724
      %2308 = vmatprep.subr.bf16.mxu0 0
      %2309 = vmatpush1.bf16.msra.mxu0 %v1725
      %2310 = vmatprep.subr.bf16.mxu0 0
      %2311 = vmatpush1.bf16.msra.mxu0 %v1726
      %2312 = vmatprep.subr.bf16.mxu0 0
      %2313 = vmatpush1.bf16.msra.mxu0 %v1727
      %2314 = vmatprep.subr.bf16.mxu0 0
      %2315 = vmatpush1.bf16.msra.mxu0 %v1728
      %2316 = vmatprep.subr.bf16.mxu0 0
      %2317 = vmatpush1.bf16.msra.mxu0 %v1729
      %2318 = vmatprep.subr.bf16.mxu0 0
      %2319 = vmatpush1.bf16.msra.mxu0 %v1730
      %2320 = vmatprep.subr.bf16.mxu0 0
      %2321 = vmatpush1.bf16.msra.mxu0 %v1731
      %2322 = vmatprep.subr.bf16.mxu0 0
      %2323 = vmatpush1.bf16.msra.mxu0 %v1732
      %2324 = vmatprep.subr.bf16.mxu0 0
      %2325 = vmatpush1.bf16.msra.mxu0 %v1733
      %2326 = vmatprep.subr.bf16.mxu0 0
      %2327 = vmatpush1.bf16.msra.mxu0 %v1734
      %2328 = vmatprep.subr.bf16.mxu0 0
      %2329 = vmatpush1.bf16.msra.mxu0 %v1735
      %2330 = vmatprep.subr.bf16.mxu0 0
      %2331 = vmatpush1.bf16.msra.mxu0 %v1736
      %2332 = vmatprep.mubr.bf16.mxu0 %v978
      %2333 = vmatmul.mubr.bf16.gmra.mrb[0].mxu0 %v1143
      %v2334 = vpop.f32.mrb[0].mxu0
      %v2335 = vadd.f32 %v2174, %v2334
      %v2336 = vpop.f32.mrb[0].mxu0
      %v2337 = vpop.f32.mrb[0].mxu0
      %v2338 = vadd.f32 %v2177, %v2337
      %v2339 = vpop.f32.mrb[0].mxu0
      %2340 = vmatprep.mubr.bf16.mxu0 %v979
      %2341 = vmatmul.mubr.bf16.gmra.mrb[0].mxu0 %v1144
      %v2342 = vpop.f32.mrb[0].mxu0
      %v2343 = vadd.f32 %v2182, %v2342
      %v2344 = vpop.f32.mrb[0].mxu0
      %v2345 = vpop.f32.mrb[0].mxu0
      %v2346 = vadd.f32 %v2185, %v2345
      %v2347 = vpop.f32.mrb[0].mxu0
      %2348 = vmatprep.mubr.bf16.mxu0 %v980
      %2349 = vmatmul.mubr.bf16.gmra.mrb[0].mxu0 %v1145
      %v2350 = vpop.f32.mrb[0].mxu0
      %v2351 = vadd.f32 %v2190, %v2350
      %v2352 = vpop.f32.mrb[0].mxu0
      %v2353 = vpop.f32.mrb[0].mxu0
      %v2354 = vadd.f32 %v2193, %v2353
      %v2355 = vpop.f32.mrb[0].mxu0
      %2356 = vmatprep.mubr.bf16.mxu0 %v981
      %2357 = vmatmul.mubr.bf16.gmra.mrb[0].mxu0 %v1146
      %v2358 = vpop.f32.mrb[0].mxu0
      %v2359 = vadd.f32 %v2198, %v2358
      %v2360 = vpop.f32.mrb[0].mxu0
      %v2361 = vpop.f32.mrb[0].mxu0
      %v2362 = vadd.f32 %v2201, %v2361
      %v2363 = vpop.f32.mrb[0].mxu0
      %2364 = vmatprep.mubr.bf16.mxu0 %v982
      %2365 = vmatmul.mubr.bf16.gmra.mrb[0].mxu0 %v1147
      %v2366 = vpop.f32.mrb[0].mxu0
      %v2367 = vadd.f32 %v2206, %v2366
      %v2368 = vpop.f32.mrb[0].mxu0
      %v2369 = vpop.f32.mrb[0].mxu0
      %v2370 = vadd.f32 %v2209, %v2369
      %v2371 = vpop.f32.mrb[0].mxu0
      %2372 = vmatprep.mubr.bf16.mxu0 %v983
      %2373 = vmatmul.mubr.bf16.gmra.mrb[0].mxu0 %v1148
      %v2374 = vpop.f32.mrb[0].mxu0
      %v2375 = vadd.f32 %v2214, %v2374
      %v2376 = vpop.f32.mrb[0].mxu0
      %v2377 = vpop.f32.mrb[0].mxu0
      %v2378 = vadd.f32 %v2217, %v2377
      %v2379 = vpop.f32.mrb[0].mxu0
      %2380 = vmatprep.mubr.bf16.mxu0 %v984
      %2381 = vmatmul.mubr.bf16.gmra.mrb[0].mxu0 %v1149
      %v2382 = vpop.f32.mrb[0].mxu0
      %v2383 = vadd.f32 %v2222, %v2382
      %v2384 = vpop.f32.mrb[0].mxu0
      %v2385 = vpop.f32.mrb[0].mxu0
      %v2386 = vadd.f32 %v2225, %v2385
      %v2387 = vpop.f32.mrb[0].mxu0
      %2388 = vmatprep.mubr.bf16.mxu0 %v985
      %2389 = vmatmul.mubr.bf16.gmra.mrb[0].mxu0 %v1150
      %v2390 = vpop.f32.mrb[0].mxu0
      %v2391 = vadd.f32 %v2230, %v2390
      %v2392 = vpop.f32.mrb[0].mxu0
      %v2393 = vpop.f32.mrb[0].mxu0
      %v2394 = vadd.f32 %v2233, %v2393
      %v2395 = vpop.f32.mrb[0].mxu0
      %2396 = vmatprep.mubr.bf16.mxu0 %v986
      %2397 = vmatmul.mubr.bf16.gmra.mrb[0].mxu0 %v1151
      %v2398 = vpop.f32.mrb[0].mxu0
      %v2399 = vadd.f32 %v2238, %v2398
      %v2400 = vpop.f32.mrb[0].mxu0
      %v2401 = vpop.f32.mrb[0].mxu0
      %v2402 = vadd.f32 %v2241, %v2401
      %v2403 = vpop.f32.mrb[0].mxu0
      %2404 = vmatprep.mubr.bf16.mxu0 %v987
      %2405 = vmatmul.mubr.bf16.gmra.mrb[0].mxu0 %v1152
      %v2406 = vpop.f32.mrb[0].mxu0
      %v2407 = vadd.f32 %v2246, %v2406
      %v2408 = vpop.f32.mrb[0].mxu0
      %v2409 = vpop.f32.mrb[0].mxu0
      %v2410 = vadd.f32 %v2249, %v2409
      %v2411 = vpop.f32.mrb[0].mxu0
      %2412 = vmatprep.mubr.bf16.mxu0 %v988
      %2413 = vmatmul.mubr.bf16.gmra.mrb[0].mxu0 %v1153
      %v2414 = vpop.f32.mrb[0].mxu0
      %v2415 = vadd.f32 %v2254, %v2414
      %v2416 = vpop.f32.mrb[0].mxu0
      %v2417 = vpop.f32.mrb[0].mxu0
      %v2418 = vadd.f32 %v2257, %v2417
      %v2419 = vpop.f32.mrb[0].mxu0
      %2420 = vmatprep.mubr.bf16.mxu0 %v989
      %2421 = vmatmul.mubr.bf16.gmra.mrb[0].mxu0 %v1154
      %v2422 = vpop.f32.mrb[0].mxu0
      %v2423 = vadd.f32 %v2262, %v2422
      %v2424 = vpop.f32.mrb[0].mxu0
      %v2425 = vpop.f32.mrb[0].mxu0
      %v2426 = vadd.f32 %v2265, %v2425
      %v2427 = vpop.f32.mrb[0].mxu0
      %2428 = vmatprep.mubr.bf16.mxu0 %v990
      %2429 = vmatmul.mubr.bf16.gmra.mrb[0].mxu0 %v1155
      %v2430 = vpop.f32.mrb[0].mxu0
      %v2431 = vadd.f32 %v2270, %v2430
      %v2432 = vpop.f32.mrb[0].mxu0
      %v2433 = vpop.f32.mrb[0].mxu0
      %v2434 = vadd.f32 %v2273, %v2433
      %v2435 = vpop.f32.mrb[0].mxu0
      %2436 = vmatprep.mubr.bf16.mxu0 %v991
      %2437 = vmatmul.mubr.bf16.gmra.mrb[0].mxu0 %v1156
      %v2438 = vpop.f32.mrb[0].mxu0
      %v2439 = vadd.f32 %v2278, %v2438
      %v2440 = vpop.f32.mrb[0].mxu0
      %v2441 = vpop.f32.mrb[0].mxu0
      %v2442 = vadd.f32 %v2281, %v2441
      %v2443 = vpop.f32.mrb[0].mxu0
      %2444 = vmatprep.mubr.bf16.mxu0 %v992
      %2445 = vmatmul.mubr.bf16.gmra.mrb[0].mxu0 %v1157
      %v2446 = vpop.f32.mrb[0].mxu0
      %v2447 = vadd.f32 %v2286, %v2446
      %v2448 = vpop.f32.mrb[0].mxu0
      %v2449 = vpop.f32.mrb[0].mxu0
      %v2450 = vadd.f32 %v2289, %v2449
      %v2451 = vpop.f32.mrb[0].mxu0
      %2452 = vmatprep.mubr.bf16.mxu0 %v993
      %2453 = vmatmul.mubr.bf16.gmra.mrb[0].mxu0 %v1158
      %v2454 = vpop.f32.mrb[0].mxu0
      %v2455 = vadd.f32 %v2294, %v2454
      %v2456 = vpop.f32.mrb[0].mxu0
      %v2457 = vpop.f32.mrb[0].mxu0
      %v2458 = vadd.f32 %v2297, %v2457
      %v2459 = vpop.f32.mrb[0].mxu0
      %2460 = vdwg.mxu0
      %2461 = vmatprep.subr.bf16.mxu0 0
      %2462 = vmatpush1.bf16.msra.mxu0 %v1737
      %2463 = vmatprep.subr.bf16.mxu0 0
      %2464 = vmatpush1.bf16.msra.mxu0 %v1738
      %2465 = vmatprep.subr.bf16.mxu0 0
      %2466 = vmatpush1.bf16.msra.mxu0 %v1739
      %2467 = vmatprep.subr.bf16.mxu0 0
      %2468 = vmatpush1.bf16.msra.mxu0 %v1740
      %2469 = vmatprep.subr.bf16.mxu0 0
      %2470 = vmatpush1.bf16.msra.mxu0 %v1741
      %2471 = vmatprep.subr.bf16.mxu0 0
      %2472 = vmatpush1.bf16.msra.mxu0 %v1742
      %2473 = vmatprep.subr.bf16.mxu0 0
      %2474 = vmatpush1.bf16.msra.mxu0 %v1743
      %2475 = vmatprep.subr.bf16.mxu0 0
      %2476 = vmatpush1.bf16.msra.mxu0 %v1744
      %2477 = vmatprep.subr.bf16.mxu0 0
      %2478 = vmatpush1.bf16.msra.mxu0 0
      %2479 = vmatprep.subr.bf16.mxu0 0
      %2480 = vmatpush1.bf16.msra.mxu0 0
      %2481 = vmatprep.subr.bf16.mxu0 0
      %2482 = vmatpush1.bf16.msra.mxu0 0
      %2483 = vmatprep.subr.bf16.mxu0 0
      %2484 = vmatpush1.bf16.msra.mxu0 0
      %2485 = vmatprep.subr.bf16.mxu0 0
      %2486 = vmatpush1.bf16.msra.mxu0 0
      %2487 = vmatprep.subr.bf16.mxu0 0
      %2488 = vmatpush1.bf16.msra.mxu0 0
      %2489 = vmatprep.subr.bf16.mxu0 0
      %2490 = vmatpush1.bf16.msra.mxu0 0
      %2491 = vmatprep.subr.bf16.mxu0 0
      %2492 = vmatpush1.bf16.msra.mxu0 0
      %2493 = vmatprep.mubr.bf16.mxu0 0
      %2494 = vmatmul.mubr.bf16.gmra.mrb[0].mxu0 %v1218
      %v2495 = vpop.f32.mrb[0].mxu0
      %v2496 = vadd.f32 %v2335, %v2495
      %v2497 = vpop.f32.mrb[0].mxu0
      %v2498 = vpop.f32.mrb[0].mxu0
      %v2499 = vadd.f32 %v2338, %v2498
      %v2500 = vpop.f32.mrb[0].mxu0
      %2501 = vmatprep.mubr.bf16.mxu0 0
      %2502 = vmatmul.mubr.bf16.gmra.mrb[0].mxu0 %v1219
      %v2503 = vpop.f32.mrb[0].mxu0
      %v2504 = vadd.f32 %v2343, %v2503
      %v2505 = vpop.f32.mrb[0].mxu0
      %v2506 = vpop.f32.mrb[0].mxu0
      %v2507 = vadd.f32 %v2346, %v2506
      %v2508 = vpop.f32.mrb[0].mxu0
      %2509 = vmatprep.mubr.bf16.mxu0 0
      %2510 = vmatmul.mubr.bf16.gmra.mrb[0].mxu0 %v1220
      %v2511 = vpop.f32.mrb[0].mxu0
      %v2512 = vadd.f32 %v2351, %v2511
      %v2513 = vpop.f32.mrb[0].mxu0
      %v2514 = vpop.f32.mrb[0].mxu0
      %v2515 = vadd.f32 %v2354, %v2514
      %v2516 = vpop.f32.mrb[0].mxu0
      %2517 = vmatprep.mubr.bf16.mxu0 0
      %2518 = vmatmul.mubr.bf16.gmra.mrb[0].mxu0 %v1221
      %v2519 = vpop.f32.mrb[0].mxu0
      %v2520 = vadd.f32 %v2359, %v2519
      %v2521 = vpop.f32.mrb[0].mxu0
      %v2522 = vpop.f32.mrb[0].mxu0
      %v2523 = vadd.f32 %v2362, %v2522
      %v2524 = vpop.f32.mrb[0].mxu0
      %2525 = vmatprep.mubr.bf16.mxu0 0
      %2526 = vmatmul.mubr.bf16.gmra.mrb[0].mxu0 %v1222
      %v2527 = vpop.f32.mrb[0].mxu0
      %v2528 = vadd.f32 %v2367, %v2527
      %v2529 = vpop.f32.mrb[0].mxu0
      %v2530 = vpop.f32.mrb[0].mxu0
      %v2531 = vadd.f32 %v2370, %v2530
      %v2532 = vpop.f32.mrb[0].mxu0
      %2533 = vmatprep.mubr.bf16.mxu0 0
      %2534 = vmatmul.mubr.bf16.gmra.mrb[0].mxu0 %v1223
      %v2535 = vpop.f32.mrb[0].mxu0
      %v2536 = vadd.f32 %v2375, %v2535
      %v2537 = vpop.f32.mrb[0].mxu0
      %v2538 = vpop.f32.mrb[0].mxu0
      %v2539 = vadd.f32 %v2378, %v2538
      %v2540 = vpop.f32.mrb[0].mxu0
      %2541 = vmatprep.mubr.bf16.mxu0 0
      %2542 = vmatmul.mubr.bf16.gmra.mrb[0].mxu0 %v1224
      %v2543 = vpop.f32.mrb[0].mxu0
      %v2544 = vadd.f32 %v2383, %v2543
      %v2545 = vpop.f32.mrb[0].mxu0
      %v2546 = vpop.f32.mrb[0].mxu0
      %v2547 = vadd.f32 %v2386, %v2546
      %v2548 = vpop.f32.mrb[0].mxu0
      %2549 = vmatprep.mubr.bf16.mxu0 0
      %2550 = vmatmul.mubr.bf16.gmra.mrb[0].mxu0 %v1225
      %v2551 = vpop.f32.mrb[0].mxu0
      %v2552 = vadd.f32 %v2391, %v2551
      %v2553 = vpop.f32.mrb[0].mxu0
      %v2554 = vpop.f32.mrb[0].mxu0
      %v2555 = vadd.f32 %v2394, %v2554
      %v2556 = vpop.f32.mrb[0].mxu0
      %2557 = vmatprep.mubr.bf16.mxu0 0
      %2558 = vmatmul.mubr.bf16.gmra.mrb[0].mxu0 %v1226
      %v2559 = vpop.f32.mrb[0].mxu0
      %v2560 = vadd.f32 %v2399, %v2559
      %v2561 = vpop.f32.mrb[0].mxu0
      %v2562 = vpop.f32.mrb[0].mxu0
      %v2563 = vadd.f32 %v2402, %v2562
      %v2564 = vpop.f32.mrb[0].mxu0
      %2565 = vmatprep.mubr.bf16.mxu0 0
      %2566 = vmatmul.mubr.bf16.gmra.mrb[0].mxu0 %v1227
      %v2567 = vpop.f32.mrb[0].mxu0
      %v2568 = vadd.f32 %v2407, %v2567
      %v2569 = vpop.f32.mrb[0].mxu0
      %v2570 = vpop.f32.mrb[0].mxu0
      %v2571 = vadd.f32 %v2410, %v2570
      %v2572 = vpop.f32.mrb[0].mxu0
      %2573 = vmatprep.mubr.bf16.mxu0 0
      %2574 = vmatmul.mubr.bf16.gmra.mrb[0].mxu0 %v1228
      %v2575 = vpop.f32.mrb[0].mxu0
      %v2576 = vadd.f32 %v2415, %v2575
      %v2577 = vpop.f32.mrb[0].mxu0
      %v2578 = vpop.f32.mrb[0].mxu0
      %v2579 = vadd.f32 %v2418, %v2578
      %v2580 = vpop.f32.mrb[0].mxu0
      %2581 = vmatprep.mubr.bf16.mxu0 0
      %2582 = vmatmul.mubr.bf16.gmra.mrb[0].mxu0 %v1229
      %v2583 = vpop.f32.mrb[0].mxu0
      %v2584 = vadd.f32 %v2423, %v2583
      %v2585 = vpop.f32.mrb[0].mxu0
      %v2586 = vpop.f32.mrb[0].mxu0
      %v2587 = vadd.f32 %v2426, %v2586
      %v2588 = vpop.f32.mrb[0].mxu0
      %2589 = vmatprep.mubr.bf16.mxu0 0
      %2590 = vmatmul.mubr.bf16.gmra.mrb[0].mxu0 %v1230
      %v2591 = vpop.f32.mrb[0].mxu0
      %v2592 = vadd.f32 %v2431, %v2591
      %v2593 = vpop.f32.mrb[0].mxu0
      %v2594 = vpop.f32.mrb[0].mxu0
      %v2595 = vadd.f32 %v2434, %v2594
      %v2596 = vpop.f32.mrb[0].mxu0
      %2597 = vmatprep.mubr.bf16.mxu0 0
      %2598 = vmatmul.mubr.bf16.gmra.mrb[0].mxu0 %v1231
      %v2599 = vpop.f32.mrb[0].mxu0
      %v2600 = vadd.f32 %v2439, %v2599
      %v2601 = vpop.f32.mrb[0].mxu0
      %v2602 = vpop.f32.mrb[0].mxu0
      %v2603 = vadd.f32 %v2442, %v2602
      %v2604 = vpop.f32.mrb[0].mxu0
      %2605 = vmatprep.mubr.bf16.mxu0 0
      %2606 = vmatmul.mubr.bf16.gmra.mrb[0].mxu0 %v1232
      %v2607 = vpop.f32.mrb[0].mxu0
      %v2608 = vadd.f32 %v2447, %v2607
      %v2609 = vpop.f32.mrb[0].mxu0
      %v2610 = vpop.f32.mrb[0].mxu0
      %v2611 = vadd.f32 %v2450, %v2610
      %v2612 = vpop.f32.mrb[0].mxu0
      %2613 = vmatprep.mubr.bf16.mxu0 0
      %2614 = vmatmul.mubr.bf16.gmra.mrb[0].mxu0 %v1233
      %v2615 = vpop.f32.mrb[0].mxu0
      %v2616 = vadd.f32 %v2455, %v2615
      %v2617 = vpop.f32.mrb[0].mxu0
      %v2618 = vpop.f32.mrb[0].mxu0
      %v2619 = vadd.f32 %v2458, %v2618
      %v2620 = vpop.f32.mrb[0].mxu0
      %2621 = vdwg.mxu0
      %v2622 = vpack.c.bf16 %v2499, %v2496
      %v2623 = vpack.c.bf16 %v2507, %v2504
      %v2624 = vpack.c.bf16 %v2515, %v2512
      %v2625 = vpack.c.bf16 %v2523, %v2520
      %v2626 = vpack.c.bf16 %v2531, %v2528
      %v2627 = vpack.c.bf16 %v2539, %v2536
      %v2628 = vpack.c.bf16 %v2547, %v2544
      %v2629 = vpack.c.bf16 %v2555, %v2552
      %v2630 = vpack.c.bf16 %v2563, %v2560
      %v2631 = vpack.c.bf16 %v2571, %v2568
      %v2632 = vpack.c.bf16 %v2579, %v2576
      %v2633 = vpack.c.bf16 %v2587, %v2584
      %v2634 = vpack.c.bf16 %v2595, %v2592
      %v2635 = vpack.c.bf16 %v2603, %v2600
      %v2636 = vpack.c.bf16 %v2611, %v2608
      %v2637 = vpack.c.bf16 %v2619, %v2616
      %v2654 = vunpack.c.l.b16 %v2622
      %v2655 = vunpack.c.h.b16 %v2622
      %v2656 = vunpack.c.l.b16 %v2623
      %v2657 = vunpack.c.h.b16 %v2623
      %v2658 = vunpack.c.l.b16 %v2624
      %v2659 = vunpack.c.h.b16 %v2624
      %v2660 = vunpack.c.l.b16 %v2625
      %v2661 = vunpack.c.h.b16 %v2625
      %v2662 = vunpack.c.l.b16 %v2626
      %v2663 = vunpack.c.h.b16 %v2626
      %v2664 = vunpack.c.l.b16 %v2627
      %v2665 = vunpack.c.h.b16 %v2627
      %v2666 = vunpack.c.l.b16 %v2628
      %v2667 = vunpack.c.h.b16 %v2628
      %v2668 = vunpack.c.l.b16 %v2629
      %v2669 = vunpack.c.h.b16 %v2629
      %v2670 = vunpack.c.l.b16 %v2630
      %v2671 = vunpack.c.h.b16 %v2630
      %v2672 = vunpack.c.l.b16 %v2631
      %v2673 = vunpack.c.h.b16 %v2631
      %v2674 = vunpack.c.l.b16 %v2632
      %v2675 = vunpack.c.h.b16 %v2632
      %v2676 = vunpack.c.l.b16 %v2633
      %v2677 = vunpack.c.h.b16 %v2633
      %v2678 = vunpack.c.l.b16 %v2634
      %v2679 = vunpack.c.h.b16 %v2634
      %v2680 = vunpack.c.l.b16 %v2635
      %v2681 = vunpack.c.h.b16 %v2635
      %v2682 = vunpack.c.l.b16 %v2636
      %v2683 = vunpack.c.h.b16 %v2636
      %v2684 = vunpack.c.l.b16 %v2637
      %v2685 = vunpack.c.h.b16 %v2637
      %v2686 = vpack.c.b16 %v2654, %v2654
      %v2687 = vpack.c.b16 %v2655, %v2655
      %v2688 = vpack.c.b16 %v2656, %v2656
      %v2689 = vpack.c.b16 %v2657, %v2657
      %v2690 = vpack.c.b16 %v2658, %v2658
      %v2691 = vpack.c.b16 %v2659, %v2659
      %v2692 = vpack.c.b16 %v2660, %v2660
      %v2693 = vpack.c.b16 %v2661, %v2661
      %v2694 = vpack.c.b16 %v2662, %v2662
      %v2695 = vpack.c.b16 %v2663, %v2663
      %v2696 = vpack.c.b16 %v2664, %v2664
      %v2697 = vpack.c.b16 %v2665, %v2665
      %v2698 = vpack.c.b16 %v2666, %v2666
      %v2699 = vpack.c.b16 %v2667, %v2667
      %v2700 = vpack.c.b16 %v2668, %v2668
      %v2701 = vpack.c.b16 %v2669, %v2669
      %v2702 = vpack.c.b16 %v2670, %v2670
      %v2703 = vpack.c.b16 %v2671, %v2671
      %v2704 = vpack.c.b16 %v2672, %v2672
      %v2705 = vpack.c.b16 %v2673, %v2673
      %v2706 = vpack.c.b16 %v2674, %v2674
      %v2707 = vpack.c.b16 %v2675, %v2675
      %v2708 = vpack.c.b16 %v2676, %v2676
      %v2709 = vpack.c.b16 %v2677, %v2677
      %v2710 = vpack.c.b16 %v2678, %v2678
      %v2711 = vpack.c.b16 %v2679, %v2679
      %v2712 = vpack.c.b16 %v2680, %v2680
      %v2713 = vpack.c.b16 %v2681, %v2681
      %v2714 = vpack.c.b16 %v2682, %v2682
      %v2715 = vpack.c.b16 %v2683, %v2683
      %v2716 = vpack.c.b16 %v2684, %v2684
      %v2717 = vpack.c.b16 %v2685, %v2685
      %2750 = vst [vmem:[%s241] sm:$0xf] %v2686
      %2751 = vst [vmem:[%s241 + $0x4] sm:$0xf] %v2687
      %2752 = vst [vmem:[%s241 + $0x8] sm:$0xf] %v2688
      %2753 = vst [vmem:[%s241 + $0xc] sm:$0xf] %v2689
      %2754 = vst [vmem:[%s241 + $0x10] sm:$0xf] %v2690
      %2755 = vst [vmem:[%s241 + $0x14] sm:$0xf] %v2691
      %2756 = vst [vmem:[%s241 + $0x18] sm:$0xf] %v2692
      %2757 = vst [vmem:[%s241 + $0x1c] sm:$0xf] %v2693
      %2758 = vst [vmem:[%s241 + $0x20] sm:$0xf] %v2694
      %2759 = vst [vmem:[%s241 + $0x24] sm:$0xf] %v2695
      %2760 = vst [vmem:[%s241 + $0x28] sm:$0xf] %v2696
      %2761 = vst [vmem:[%s241 + $0x2c] sm:$0xf] %v2697
      %2762 = vst [vmem:[%s241 + $0x30] sm:$0xf] %v2698
      %2763 = vst [vmem:[%s241 + $0x34] sm:$0xf] %v2699
      %2764 = vst [vmem:[%s241 + $0x38] sm:$0xf] %v2700
      %2765 = vst [vmem:[%s241 + $0x3c] sm:$0xf] %v2701
      %2766 = vst [vmem:[%s241 + $0x40] sm:$0xf] %v2702
      %2767 = vst [vmem:[%s241 + $0x44] sm:$0xf] %v2703
      %2768 = vst [vmem:[%s241 + $0x48] sm:$0xf] %v2704
      %2769 = vst [vmem:[%s241 + $0x4c] sm:$0xf] %v2705
      %2770 = vst [vmem:[%s241 + $0x50] sm:$0xf] %v2706
      %2771 = vst [vmem:[%s241 + $0x54] sm:$0xf] %v2707
      %2772 = vst [vmem:[%s241 + $0x58] sm:$0xf] %v2708
      %2773 = vst [vmem:[%s241 + $0x5c] sm:$0xf] %v2709
      %2774 = vst [vmem:[%s241 + $0x60] sm:$0xf] %v2710
      %2775 = vst [vmem:[%s241 + $0x64] sm:$0xf] %v2711
      %2776 = vst [vmem:[%s241 + $0x68] sm:$0xf] %v2712
      %2777 = vst [vmem:[%s241 + $0x6c] sm:$0xf] %v2713
      %2778 = vst [vmem:[%s241 + $0x70] sm:$0xf] %v2714
      %2779 = vst [vmem:[%s241 + $0x74] sm:$0xf] %v2715
      %2780 = vst [vmem:[%s241 + $0x78] sm:$0xf] %v2716
      %2781 = vst [vmem:[%s241 + $0x7c] sm:$0xf] %v2717
      %v2782 = vadd.f32 %v2496, %v2499
      %v2783 = vadd.f32 %v2782, %v2504
      %v2784 = vadd.f32 %v2783, %v2507
      %v2785 = vadd.f32 %v2784, %v2512
      %v2786 = vadd.f32 %v2785, %v2515
      %v2787 = vadd.f32 %v2786, %v2520
      %v2788 = vadd.f32 %v2787, %v2523
      %v2789 = vadd.f32 %v2788, %v2528
      %v2790 = vadd.f32 %v2789, %v2531
      %v2791 = vadd.f32 %v2790, %v2536
      %v2792 = vadd.f32 %v2791, %v2539
      %v2793 = vadd.f32 %v2792, %v2544
      %v2794 = vadd.f32 %v2793, %v2547
      %v2795 = vadd.f32 %v2794, %v2552
      %v2796 = vadd.f32 %v2795, %v2555
      %v2797 = vadd.f32 %v2796, %v2560
      %v2798 = vadd.f32 %v2797, %v2563
      %v2799 = vadd.f32 %v2798, %v2568
      %v2800 = vadd.f32 %v2799, %v2571
      %v2801 = vadd.f32 %v2800, %v2576
      %v2802 = vadd.f32 %v2801, %v2579
      %v2803 = vadd.f32 %v2802, %v2584
      %v2804 = vadd.f32 %v2803, %v2587
      %v2805 = vadd.f32 %v2804, %v2592
      %v2806 = vadd.f32 %v2805, %v2595
      %v2807 = vadd.f32 %v2806, %v2600
      %v2808 = vadd.f32 %v2807, %v2603
      %v2809 = vadd.f32 %v2808, %v2608
      %v2810 = vadd.f32 %v2809, %v2611
      %v2811 = vadd.f32 %v2810, %v2616
      %v2812 = vadd.f32 %v2811, %v2619
      %v2813 = vrot.slane %v2812, 4
      %v2814 = vadd.f32 %v2812, %v2813
      %v2815 = vrot.slane %v2814, 2
      %v2816 = vadd.f32 %v2814, %v2815
      %v2817 = vrot.slane %v2816, 1
      %v2818 = vadd.f32 %v2816, %v2817
      %v2819 = vmul.f32 %v2496, %v2496
      %v2820 = vmul.f32 %v2499, %v2499
      %v2821 = vmul.f32 %v2504, %v2504
      %v2822 = vmul.f32 %v2507, %v2507
      %v2823 = vmul.f32 %v2512, %v2512
      %v2824 = vmul.f32 %v2515, %v2515
      %v2825 = vmul.f32 %v2520, %v2520
      %v2826 = vmul.f32 %v2523, %v2523
      %v2827 = vmul.f32 %v2528, %v2528
      %v2828 = vmul.f32 %v2531, %v2531
      %v2829 = vmul.f32 %v2536, %v2536
      %v2830 = vmul.f32 %v2539, %v2539
      %v2831 = vmul.f32 %v2544, %v2544
      %v2832 = vmul.f32 %v2547, %v2547
      %v2833 = vmul.f32 %v2552, %v2552
      %v2834 = vmul.f32 %v2555, %v2555
      %v2835 = vmul.f32 %v2560, %v2560
      %v2836 = vmul.f32 %v2563, %v2563
      %v2837 = vmul.f32 %v2568, %v2568
      %v2838 = vmul.f32 %v2571, %v2571
      %v2839 = vmul.f32 %v2576, %v2576
      %v2840 = vmul.f32 %v2579, %v2579
      %v2841 = vmul.f32 %v2584, %v2584
      %v2842 = vmul.f32 %v2587, %v2587
      %v2843 = vmul.f32 %v2592, %v2592
      %v2844 = vmul.f32 %v2595, %v2595
      %v2845 = vmul.f32 %v2600, %v2600
      %v2846 = vmul.f32 %v2603, %v2603
      %v2847 = vmul.f32 %v2608, %v2608
      %v2848 = vmul.f32 %v2611, %v2611
      %v2849 = vmul.f32 %v2616, %v2616
      %v2850 = vmul.f32 %v2619, %v2619
      %v2851 = vadd.f32 %v2819, %v2820
      %v2852 = vadd.f32 %v2851, %v2821
      %v2853 = vadd.f32 %v2852, %v2822
      %v2854 = vadd.f32 %v2853, %v2823
      %v2855 = vadd.f32 %v2854, %v2824
      %v2856 = vadd.f32 %v2855, %v2825
      %v2857 = vadd.f32 %v2856, %v2826
      %v2858 = vadd.f32 %v2857, %v2827
      %v2859 = vadd.f32 %v2858, %v2828
      %v2860 = vadd.f32 %v2859, %v2829
      %v2861 = vadd.f32 %v2860, %v2830
      %v2862 = vadd.f32 %v2861, %v2831
      %v2863 = vadd.f32 %v2862, %v2832
      %v2864 = vadd.f32 %v2863, %v2833
      %v2865 = vadd.f32 %v2864, %v2834
      %v2866 = vadd.f32 %v2865, %v2835
      %v2867 = vadd.f32 %v2866, %v2836
      %v2868 = vadd.f32 %v2867, %v2837
      %v2869 = vadd.f32 %v2868, %v2838
      %v2870 = vadd.f32 %v2869, %v2839
      %v2871 = vadd.f32 %v2870, %v2840
      %v2872 = vadd.f32 %v2871, %v2841
      %v2873 = vadd.f32 %v2872, %v2842
      %v2874 = vadd.f32 %v2873, %v2843
      %v2875 = vadd.f32 %v2874, %v2844
      %v2876 = vadd.f32 %v2875, %v2845
      %v2877 = vadd.f32 %v2876, %v2846
      %v2878 = vadd.f32 %v2877, %v2847
      %v2879 = vadd.f32 %v2878, %v2848
      %v2880 = vadd.f32 %v2879, %v2849
      %v2881 = vadd.f32 %v2880, %v2850
      %v2882 = vrot.slane %v2881, 4
      %v2883 = vadd.f32 %v2881, %v2882
      %v2884 = vrot.slane %v2883, 2
      %v2885 = vadd.f32 %v2883, %v2884
      %v2886 = vrot.slane %v2885, 1
      %v2887 = vadd.f32 %v2885, %v2886
      %vm2888 = vcmask 1040384
      %v2889 = vsel %vm2888, %v2818, %v2887
      %2890 = vst [vmem:[%s249] sm:$0x3] %v2889
      %s2891 = smul.u32 16, %s23
      %p2892 = scmp.lt.s32.totalorder %s22, 1
      %s2893 = scalar_select %p2892, %s22, 1
      %p2894 = scmp.lt.s32.totalorder %s2891, 15
      %s2895 = scalar_select %p2894, %s2891, 15
      %s2896 = smul.addr %s2895, 2
      %s2897 = smul.addr %s2893, 32
      %s2898 = sadd.s32 %s2896, %s2897
      %s2899 = smul.addr %s2898, 4
      %s2900 = scalar_lea.vmem %s5, %s2899
      %p2901 = scmp.lt.s32.totalorder %s22, 1
      %s2902 = scalar_select %p2901, %s22, 1
      %p2903 = scmp.lt.s32.totalorder %s23, 0
      %s2904 = scalar_select %p2903, %s23, 0
      %s2905 = sadd.s32 %s2904, %s2902
      %s2906 = smul.addr %s2905, 2
      %s2907 = scalar_lea.vmem %s6, %s2906
      // Predicated region
      $region249: #{expansive_block.6} parent=35 // pred_check
        %p2908 = pneg %p134
      $region250: #{expansive_block.6} parent=35 // pred_check_branch
        %2910 = sbr.rel (%p2908) target = $region252
      $region251: #{expansive_block.6} parent=35 // pred_region
        %s2911 = smul.u32 16, %s23
      $region252: #{expansive_block.6} parent=35 // pred_fallthru
        _
      // Predicated region
      $region253: #{expansive_block.6} parent=35 // pred_check
        %p2912 = pneg %p162
      $region254: #{expansive_block.6} parent=35 // pred_check_branch
        %2914 = sbr.rel (%p2912) target = $region256
      $region255: #{expansive_block.6} parent=35 // pred_region
        _
      $region256: #{expansive_block.6} parent=35 // pred_fallthru
        _
    $region36: #{expansive_block.6} parent=5 // pred_fallthru
      _
    %p2915 = scmp.le.s32.totalorder 2, %s13
    // Predicated region
    $region257: #{expansive_block.6} parent=5 // pred_check
      %p2916 = pneg %p2915
    $region258: #{expansive_block.6} parent=5 // pred_check_branch
      %2918 = sbr.rel (%p2916) target = $region260
    $region259: #{expansive_block.6} parent=5 // pred_region
      %s2919 = ssub.s32 %s13, 2
      // Predicated region
      $region261: #{expansive_block.6} parent=259 // pred_check
        %p2920 = pneg %p140
      $region262: #{expansive_block.6} parent=259 // pred_check_branch
        %2922 = sbr.rel (%p2920) target = $region264
      $region263: #{expansive_block.6} parent=259 // pred_region
        %s2923 = smul.u32 16, %s25
        %p2924 = scmp.lt.s32.totalorder %s24, 1
        %s2925 = scalar_select %p2924, %s24, 1
        %p2926 = scmp.lt.s32.totalorder %s2923, 15
        %s2927 = scalar_select %p2926, %s2923, 15
        %s2928 = smul.addr %s2927, 2
        %s2929 = smul.addr %s2925, 32
        %s2930 = sadd.s32 %s2928, %s2929
        %s2931 = smul.addr %s2930, 4
        %s2932 = scalar_lea.vmem %s5, %s2931
      $region264: #{expansive_block.6} parent=259 // pred_fallthru
        _
      // Predicated region
      $region265: #{expansive_block.6} parent=259 // pred_check
        %p2933 = pneg %p168
      $region266: #{expansive_block.6} parent=259 // pred_check_branch
        %2935 = sbr.rel (%p2933) target = $region268
      $region267: #{expansive_block.6} parent=259 // pred_region
        %p2936 = scmp.lt.s32.totalorder %s24, 1
        %s2937 = scalar_select %p2936, %s24, 1
        %p2938 = scmp.lt.s32.totalorder %s25, 0
        %s2939 = scalar_select %p2938, %s25, 0
        %s2940 = sadd.s32 %s2939, %s2937
        %s2941 = smul.addr %s2940, 2
        %s2942 = scalar_lea.vmem %s6, %s2941
      $region268: #{expansive_block.6} parent=259 // pred_fallthru
        _
    $region260: #{expansive_block.6} parent=5 // pred_fallthru
      _
  $region6: #{expansive_block.6} parent=0 // loop_footer
    %s17 = sadd.s32 1, %s13
  $region7: #{expansive_block.6} parent=0 // loop_footer_branch
    %12 = sbr.rel target = $region3
  $region8: #{expansive_block.6} parent=0 // loop_exit
    _
  %2943 = vsyncmov [#allocation3]
  %s2944 = vpop.sfrf %2943
  %p2945 = scmp.eq.s32.totalorder %s2944, 0
  %p2946 = pneg %p2945
  %2948 = shalt.err (%p2946)
  %s2949 = scalar_lea.sflag [#allocation3], 1
  %2950 = vsyncmov %s2949
  %s2951 = vpop.sfrf %2950
  %p2952 = scmp.eq.s32.totalorder %s2951, 0
  %p2953 = pneg %p2952
  %2955 = shalt.err (%p2953)
  %s2956 = scalar_lea.sflag [#allocation3], 2
  %2957 = vsyncmov %s2956
  %s2958 = vpop.sfrf %2957
  %p2959 = scmp.eq.s32.totalorder %s2958, 0
  %p2960 = pneg %p2959
  %2962 = shalt.err (%p2960)
  %s2963 = scalar_lea.sflag [#allocation3], 3
  %2964 = vsyncmov %s2963
  %s2965 = vpop.sfrf %2964
  %p2966 = scmp.eq.s32.totalorder %s2965, 0
  %p2967 = pneg %p2966
  %2969 = shalt.err (%p2967)
  %s2970 = scalar_lea.sflag [#allocation3], 4
  %2971 = vsyncmov %s2970
  %s2972 = vpop.sfrf %2971
  %p2973 = scmp.eq.s32.totalorder %s2972, 0
  %p2974 = pneg %p2973
  %2976 = shalt.err (%p2974)
  %s2977 = scalar_lea.sflag [#allocation3], 5
  %2978 = vsyncmov %s2977
  %s2979 = vpop.sfrf %2978
  %p2980 = scmp.eq.s32.totalorder %s2979, 0
  %p2981 = pneg %p2980
  %2983 = shalt.err (%p2981)

// kernel: expansive_block.5
$region0: #{expansive_block.5}
  #allocation0 [shape = 'u32[]', space=smem, size = 0x4, offset = 0x4, fixed_abs, tag = 'smem constant byte address 0x4 - core index']
  #allocation1 [shape = 'u32[144,128]{1,0:T(1,128)}', space=vmem, size = 0x12000, scoped, tag = 'internal scratch']
  #allocation2 [shape = 'bf16[2,18,16,128]{3,2,1,0:T(16,128)(2,1)}', space=vmem, size = 0x24000, scoped, tag = 'scratch operand']
  #allocation3 [shape = 'bf16[2,18,16,128]{3,2,1,0:T(16,128)(2,1)}', space=vmem, size = 0x24000, scoped, tag = 'scratch operand']
  #allocation4 [shape = 's32[6]{0}', space=sflag, size = 0x18, scoped, tag = 'scratch operand']
  #allocation5 [shape = 's32[6]{0}', space=sflag, size = 0x18, scoped, tag = 'scratch operand']
  #allocation6 [shape = 's32[]', space=sflag, size = 0x4, offset = 0, fixed_abs, tag = 'sflag constant byte address 0x0 - dummy sync flag']
  #allocation7 [shape = 's32[]', space=sflag, size = 0x4, offset = 0, fixed_abs, tag = 'sflag constant byte address 0x0 - dummy sync flag']
  #allocation8 [shape = 's32[]', space=sflag, size = 0x4, offset = 0, fixed_abs, tag = 'sflag constant byte address 0x0 - dummy sync flag']
  #allocation9 [shape = 's32[]', space=sflag, size = 0x4, offset = 0, fixed_abs, tag = 'sflag constant byte address 0x0 - dummy sync flag']
  #allocation10 [shape = 's32[]', space=sflag, size = 0x4, offset = 0, fixed_abs, tag = 'sflag constant byte address 0x0 - dummy sync flag']
  #allocation11 [shape = 's32[]', space=sflag, size = 0x4, offset = 0, fixed_abs, tag = 'sflag constant byte address 0x0 - dummy sync flag']
  #allocation12 [shape = 's32[]', space=sflag, size = 0x4, offset = 0, fixed_abs, tag = 'sflag constant byte address 0x0 - dummy sync flag']
  #allocation13 [shape = 's32[]', space=sflag, size = 0x4, offset = 0, fixed_abs, tag = 'sflag constant byte address 0x0 - dummy sync flag']
  #allocation14 [shape = 's32[]', space=sflag, size = 0x4, offset = 0, fixed_abs, tag = 'sflag constant byte address 0x0 - dummy sync flag']
  #allocation15 [shape = 's32[]', space=sflag, size = 0x4, offset = 0, fixed_abs, tag = 'sflag constant byte address 0x0 - dummy sync flag']
  #allocation16 [shape = 's32[]', space=sflag, size = 0x4, offset = 0, fixed_abs, tag = 'sflag constant byte address 0x0 - dummy sync flag']
  #allocation17 [shape = 's32[]', space=sflag, size = 0x4, offset = 0, fixed_abs, tag = 'sflag constant byte address 0x0 - dummy sync flag']
  %s0 = inlined_call_operand.vmem [shape: bf16[2,16,16,128], index: 0, kind: input, shape index: {}]
  %s1 = inlined_call_operand.vmem [shape: bf16[2,16,16,128], index: 1, kind: input, shape index: {}]
  %s2 = inlined_call_operand.vmem [shape: bf16[1152,128], index: 2, kind: input, shape index: {}]
  %s3 = inlined_call_operand.vmem [shape: bf16[1152,128], index: 3, kind: input, shape index: {}]
  %s4 = inlined_call_operand.vmem [shape: f32[1,128], index: 4, kind: input, shape index: {}]
  %s5 = inlined_call_operand.vmem [shape: bf16[2,16,16,128], index: 5, kind: output, shape index: {0}]
  %s6 = inlined_call_operand.vmem [shape: f32[2,1,2,128], index: 6, kind: output, shape index: {1}]
  %7 = xla_tuple %s5, %s6
  %s8 = sld [smem:[#allocation0]]
  $region469: #{expansive_block.5} parent=0
    _
  %s10 = ssub.s32 1, %s8
  %s11 = scalar_select 0, %s10, %s8
  loop: start=0, step=1, limit=4
  $region2: #{expansive_block.5} parent=0 // loop_pre_header
    _
  $region3: #{expansive_block.5} parent=0 // loop_header
    %s13 = sphi 0, %s17
    %p14 = scmp.ge.s32.totalorder %s13, 4
    %s20 = sphi 0, %s32
    %s21 = sphi 0, %s28
    %s22 = sphi 0, %s20
    %s23 = sphi 0, %s21
    %s24 = sphi 0, %s22
    %s25 = sphi 0, %s23
    %s33 = sphi 0, %s33
    %s35 = sphi 0, %s33
    %s36 = sphi 0, %s35
    %s50 = sphi 0, %s36
    %s54 = sphi 0, %s54
    %s56 = sphi 0, %s54
    %s57 = sphi 0, %s56
    %s71 = sphi 0, %s57
    %s75 = sphi 0, %s75
    %s77 = sphi 0, %s75
    %s78 = sphi 0, %s77
    %s92 = sphi 0, %s78
    %s100 = sphi 0, %s102
    %s103 = sphi 0, %s100
    %s104 = sphi 0, %s103
    %s120 = sphi 0, %s104
    %s128 = sphi 0, %s130
    %s131 = sphi 0, %s128
    %s132 = sphi 0, %s131
    %s148 = sphi 0, %s132
  $region4: #{expansive_block.5} parent=0 // loop_header_branch
    %16 = sbr.rel (%p14) target = $region8
  $region5: #{expansive_block.5} parent=0 // loop_body
    %s18 = ssub.s32 %s13, 1
    %s19 = ssub.s32 %s13, 2
    %s26 = sadd.s32 1, %s21
    %p27 = scmp.ge.s32.totalorder %s26, 1
    %s28 = scalar_select %p27, 0, %s26
    %s29 = sadd.s32 1, %s20
    %s30 = scalar_select %p27, %s29, %s20
    %p31 = scmp.ge.s32.totalorder %s30, 2
    %s32 = scalar_select %p31, 0, %s30
    %s34 = sadd.s32 %s33, 1
    %p37 = scmp.eq.s32.totalorder %s13, 1
    %p38 = scmp.ne.s32.totalorder %s33, %s35
    %p39 = scmp.eq.s32.totalorder %s13, 0
    %p40 = por %p38, %p39
    %p41 = scmp.ne.s32.totalorder %s33, %s35
    %p42 = scmp.eq.s32.totalorder %s18, 1
    %p43 = por %p41, %p42
    %p44 = scmp.ne.s32.totalorder %s35, %s36
    %p45 = scmp.eq.s32.totalorder %s18, 0
    %p46 = por %p44, %p45
    %p47 = scmp.ne.s32.totalorder %s35, %s36
    %p48 = scmp.eq.s32.totalorder %s19, 1
    %p49 = por %p47, %p48
    %p51 = scmp.ne.s32.totalorder %s36, %s50
    %p52 = scmp.eq.s32.totalorder %s19, 0
    %p53 = por %p51, %p52
    %s55 = sadd.s32 %s54, 1
    %p58 = scmp.eq.s32.totalorder %s13, 1
    %p59 = scmp.ne.s32.totalorder %s54, %s56
    %p60 = scmp.eq.s32.totalorder %s13, 0
    %p61 = por %p59, %p60
    %p62 = scmp.ne.s32.totalorder %s54, %s56
    %p63 = scmp.eq.s32.totalorder %s18, 1
    %p64 = por %p62, %p63
    %p65 = scmp.ne.s32.totalorder %s56, %s57
    %p66 = scmp.eq.s32.totalorder %s18, 0
    %p67 = por %p65, %p66
    %p68 = scmp.ne.s32.totalorder %s56, %s57
    %p69 = scmp.eq.s32.totalorder %s19, 1
    %p70 = por %p68, %p69
    %p72 = scmp.ne.s32.totalorder %s57, %s71
    %p73 = scmp.eq.s32.totalorder %s19, 0
    %p74 = por %p72, %p73
    %s76 = sadd.s32 %s75, 1
    %p79 = scmp.eq.s32.totalorder %s13, 1
    %p80 = scmp.ne.s32.totalorder %s75, %s77
    %p81 = scmp.eq.s32.totalorder %s13, 0
    %p82 = por %p80, %p81
    %p83 = scmp.ne.s32.totalorder %s75, %s77
    %p84 = scmp.eq.s32.totalorder %s18, 1
    %p85 = por %p83, %p84
    %p86 = scmp.ne.s32.totalorder %s77, %s78
    %p87 = scmp.eq.s32.totalorder %s18, 0
    %p88 = por %p86, %p87
    %p89 = scmp.ne.s32.totalorder %s77, %s78
    %p90 = scmp.eq.s32.totalorder %s19, 1
    %p91 = por %p89, %p90
    %p93 = scmp.ne.s32.totalorder %s78, %s92
    %p94 = scmp.eq.s32.totalorder %s19, 0
    %p95 = por %p93, %p94
    %s96 = ssub.s32 %s20, %s32
    %s97 = ssub.s32 %s21, %s28
    %s98 = sor.u32 %s96, %s97
    %p99 = scmp.eq.s32.totalorder %s98, 0
    %s101 = sadd.s32 %s100, 1
    %s102 = scalar_select %p99, %s100, %s101
    %p105 = pneg %p99
    %p106 = scmp.eq.s32.totalorder %s13, 1
    %p107 = por %p105, %p106
    %p108 = scmp.ne.s32.totalorder %s100, %s103
    %p109 = scmp.eq.s32.totalorder %s13, 0
    %p110 = por %p108, %p109
    %p111 = scmp.ne.s32.totalorder %s100, %s103
    %p112 = scmp.eq.s32.totalorder %s18, 1
    %p113 = por %p111, %p112
    %p114 = scmp.ne.s32.totalorder %s103, %s104
    %p115 = scmp.eq.s32.totalorder %s18, 0
    %p116 = por %p114, %p115
    %p117 = scmp.ne.s32.totalorder %s103, %s104
    %p118 = scmp.eq.s32.totalorder %s19, 1
    %p119 = por %p117, %p118
    %p121 = scmp.ne.s32.totalorder %s104, %s120
    %p122 = scmp.eq.s32.totalorder %s19, 0
    %p123 = por %p121, %p122
    %s124 = ssub.s32 %s20, %s32
    %s125 = ssub.s32 %s21, %s28
    %s126 = sor.u32 %s124, %s125
    %p127 = scmp.eq.s32.totalorder %s126, 0
    %s129 = sadd.s32 %s128, 1
    %s130 = scalar_select %p127, %s128, %s129
    %p133 = pneg %p127
    %p134 = scmp.eq.s32.totalorder %s13, 1
    %p135 = por %p133, %p134
    %p136 = scmp.ne.s32.totalorder %s128, %s131
    %p137 = scmp.eq.s32.totalorder %s13, 0
    %p138 = por %p136, %p137
    %p139 = scmp.ne.s32.totalorder %s128, %s131
    %p140 = scmp.eq.s32.totalorder %s18, 1
    %p141 = por %p139, %p140
    %p142 = scmp.ne.s32.totalorder %s131, %s132
    %p143 = scmp.eq.s32.totalorder %s18, 0
    %p144 = por %p142, %p143
    %p145 = scmp.ne.s32.totalorder %s131, %s132
    %p146 = scmp.eq.s32.totalorder %s19, 1
    %p147 = por %p145, %p146
    %p149 = scmp.ne.s32.totalorder %s132, %s148
    %p150 = scmp.eq.s32.totalorder %s19, 0
    %p151 = por %p149, %p150
    %p152 = scmp.le.s32.totalorder 1, %s13
    %p153 = scmp.lt.s32.totalorder %s13, 3
    %p154 = pnand %p152, %p153
    %p155 = pneg %p154
    // Predicated region
    $region9: #{expansive_block.5} parent=5 // pred_check
      _
    $region10: #{expansive_block.5} parent=5 // pred_check_branch
      %157 = sbr.rel (%p154) target = $region12
    $region11: #{expansive_block.5} parent=5 // pred_region
      %s158 = ssub.s32 %s13, 1
      // Predicated region
      $region13: #{expansive_block.5} parent=11 // pred_check
        %p159 = pneg %p46
      $region14: #{expansive_block.5} parent=11 // pred_check_branch
        %161 = sbr.rel (%p159) target = $region16
      $region15: #{expansive_block.5} parent=11 // pred_region
        _
      $region16: #{expansive_block.5} parent=11 // pred_fallthru
        _
      // Predicated region
      $region17: #{expansive_block.5} parent=11 // pred_check
        %p162 = pneg %p67
      $region18: #{expansive_block.5} parent=11 // pred_check_branch
        %164 = sbr.rel (%p162) target = $region20
      $region19: #{expansive_block.5} parent=11 // pred_region
        _
      $region20: #{expansive_block.5} parent=11 // pred_fallthru
        _
      // Predicated region
      $region21: #{expansive_block.5} parent=11 // pred_check
        %p165 = pneg %p88
      $region22: #{expansive_block.5} parent=11 // pred_check_branch
        %167 = sbr.rel (%p165) target = $region24
      $region23: #{expansive_block.5} parent=11 // pred_region
        _
      $region24: #{expansive_block.5} parent=11 // pred_fallthru
        _
    $region12: #{expansive_block.5} parent=5 // pred_fallthru
      _
    %p168 = scmp.lt.s32.totalorder %s13, 2
    // Predicated region
    $region25: #{expansive_block.5} parent=5 // pred_check
      %p169 = pneg %p168
    $region26: #{expansive_block.5} parent=5 // pred_check_branch
      %171 = sbr.rel (%p169) target = $region28
    $region27: #{expansive_block.5} parent=5 // pred_region
      _
    $region28: #{expansive_block.5} parent=5 // pred_fallthru
      _
    %p172 = scmp.le.s32.totalorder 1, %s13
    %p173 = scmp.lt.s32.totalorder %s13, 3
    %p174 = pnand %p172, %p173
    %p175 = pneg %p174
    // Predicated region
    $region29: #{expansive_block.5} parent=5 // pred_check
      _
    $region30: #{expansive_block.5} parent=5 // pred_check_branch
      %177 = sbr.rel (%p174) target = $region32
    $region31: #{expansive_block.5} parent=5 // pred_region
      %s178 = ssub.s32 %s13, 1
      %p179 = pneg %p46
      %p180 = pneg %p43
      %p181 = pneg %p67
      %p182 = pneg %p64
      %p183 = pneg %p88
      %p184 = pneg %p85
      %p185 = pneg %p116
      %p186 = pneg %p113
      %s187 = smul.u32 16, %s23
      %p188 = scmp.lt.s32.totalorder %s22, 1
      %s189 = scalar_select %p188, %s22, 1
      %p190 = scmp.lt.s32.totalorder %s187, 15
      %s191 = scalar_select %p190, %s187, 15
      %s192 = smul.addr %s191, 2
      %s193 = smul.addr %s189, 32
      %s194 = sadd.s32 %s192, %s193
      %s195 = smul.addr %s194, 4
      %s196 = scalar_lea.vmem %s5, %s195
      %p197 = pneg %p144
      %p198 = pneg %p141
      %p199 = scmp.lt.s32.totalorder %s22, 1
      %s200 = scalar_select %p199, %s22, 1
      %p201 = scmp.lt.s32.totalorder %s23, 0
      %s202 = scalar_select %p201, %s23, 0
      %s203 = sadd.s32 %s202, %s200
      %s204 = smul.addr %s203, 2
      %s205 = scalar_lea.vmem %s6, %s204
      %s206 = smul.u32 16, %s23
      %p207 = scmp.lt.s32.totalorder %s22, 1
      %s208 = scalar_select %p207, %s22, 1
      %p209 = scmp.lt.s32.totalorder %s206, 15
      %s210 = scalar_select %p209, %s206, 15
      %s211 = smul.addr %s210, 2
      %s212 = smul.addr %s208, 32
      %s213 = sadd.s32 %s211, %s212
      %s214 = smul.addr %s213, 4
      %s215 = scalar_lea.vmem %s5, %s214
      %s216 = smul.u32 16, %s23
      %p217 = scmp.lt.s32.totalorder %s22, 1
      %s218 = scalar_select %p217, %s22, 1
      %p219 = scmp.lt.s32.totalorder %s23, 0
      %s220 = scalar_select %p219, %s23, 0
      %s221 = sadd.s32 %s220, %s218
      %s222 = smul.addr %s221, 2
      %s223 = scalar_lea.vmem %s6, %s222
      %p225 = scmp.eq.s32.totalorder %s23, 0
      // Predicated region
      $region33: #{expansive_block.5} parent=31 // pred_check
        %p226 = pneg %p225
      $region34: #{expansive_block.5} parent=31 // pred_check_branch
        %228 = sbr.rel (%p226) target = $region36
      $region35: #{expansive_block.5} parent=31 // pred_region
        %s229 = smul.u32 %s22, 32
        %s230 = smul.addr %s229, 4
        %s231 = scalar_lea.vmem %s0, %s230
        %p233 = scmp.lt.u32.totalorder 8, 8
        %p234 = pneg %p233
        // Predicated region
        $region37: #{expansive_block.5} parent=35 // pred_check
          _
        $region38: #{expansive_block.5} parent=35 // pred_check_branch
          %236 = sbr.rel (%p233) target = $region40
        $region39: #{expansive_block.5} parent=35 // pred_region
          %s251 = sand.u32 8, 7
          %p252 = scmp.eq.s32.totalorder %s251, 0
          // Predicated region
          $region52: #{expansive_block.5} parent=39 // pred_check
            %p253 = pneg %p252
          $region53: #{expansive_block.5} parent=39 // pred_check_branch
            %255 = sbr.rel (%p253) target = $region55
          $region54: #{expansive_block.5} parent=39 // pred_region
            loop: start=0, step=1, limit=1
            $region56: #{expansive_block.5} parent=54 // loop_pre_header
              _
            $region57: #{expansive_block.5} parent=54 // loop_header
              %s257 = sphi 0, %s261
              %p258 = scmp.ge.s32.totalorder %s257, 1
              %s262 = sphi %s231, %s231
              %s263 = sphi [#allocation2], [#allocation2]
            $region58: #{expansive_block.5} parent=54 // loop_header_branch
              %260 = sbr.rel (%p258) target = $region62
            $region59: #{expansive_block.5} parent=54 // loop_body
              %v264 = vld [vmem:[%s262] sm:$0xff]
              %265 = vst [vmem:[%s263] sm:$0xff] %v264
            $region60: #{expansive_block.5} parent=54 // loop_footer
              %s261 = sadd.s32 1, %s257
            $region61: #{expansive_block.5} parent=54 // loop_footer_branch
              %256 = sbr.rel target = $region57
            $region62: #{expansive_block.5} parent=54 // loop_exit
              _
          $region55: #{expansive_block.5} parent=39 // pred_fallthru
            _
          %p266 = pneg %p252
          // Predicated region
          $region63: #{expansive_block.5} parent=39 // pred_check
            _
          $region64: #{expansive_block.5} parent=39 // pred_check_branch
            %268 = sbr.rel (%p252) target = $region66
          $region65: #{expansive_block.5} parent=39 // pred_region
            %s269 = sand.u32 8, 7
          $region66: #{expansive_block.5} parent=39 // pred_fallthru
            _
        $region40: #{expansive_block.5} parent=35 // pred_fallthru
          _
        // Predicated region
        $region41: #{expansive_block.5} parent=35 // pred_check
          %p237 = pneg %p233
        $region42: #{expansive_block.5} parent=35 // pred_check_branch
          %239 = sbr.rel (%p237) target = $region44
        $region43: #{expansive_block.5} parent=35 // pred_region
          %s240 = sshllo.u32 0, 8
          loop: start=0, step=1, limit=1
          $region45: #{expansive_block.5} parent=43 // loop_pre_header
            _
          $region46: #{expansive_block.5} parent=43 // loop_header
            %s242 = sphi 0, %s246
            %p243 = scmp.ge.s32.totalorder %s242, 1
            %s247 = sphi %s231, %s231
            %s248 = sphi [#allocation2], [#allocation2]
          $region47: #{expansive_block.5} parent=43 // loop_header_branch
            %245 = sbr.rel (%p243) target = $region51
          $region48: #{expansive_block.5} parent=43 // loop_body
            %v249 = vld [vmem:[%s247] sm:%s240]
            %250 = vst [vmem:[%s248] sm:%s240] %v249
          $region49: #{expansive_block.5} parent=43 // loop_footer
            %s246 = sadd.s32 1, %s242
          $region50: #{expansive_block.5} parent=43 // loop_footer_branch
            %241 = sbr.rel target = $region46
          $region51: #{expansive_block.5} parent=43 // loop_exit
            _
        $region44: #{expansive_block.5} parent=35 // pred_fallthru
          _
        // Predicated region
        $region67: #{expansive_block.5} parent=35 // pred_check
          _
        $region68: #{expansive_block.5} parent=35 // pred_check_branch
          %272 = sbr.rel (0) target = $region70
        $region69: #{expansive_block.5} parent=35 // pred_region
          %273 = vsyncadd [#allocation4], 128
        $region70: #{expansive_block.5} parent=35 // pred_fallthru
          _
        %s274 = scalar_lea.vmem [#allocation2], 8
        %s275 = scalar_lea.sflag [#allocation4], 1
        %p277 = scmp.lt.u32.totalorder 128, 8
        %p278 = pneg %p277
        // Predicated region
        $region71: #{expansive_block.5} parent=35 // pred_check
          _
        $region72: #{expansive_block.5} parent=35 // pred_check_branch
          %280 = sbr.rel (%p277) target = $region74
        $region73: #{expansive_block.5} parent=35 // pred_region
          %s295 = sand.u32 128, 7
          %p296 = scmp.eq.s32.totalorder %s295, 0
          // Predicated region
          $region86: #{expansive_block.5} parent=73 // pred_check
            %p297 = pneg %p296
          $region87: #{expansive_block.5} parent=73 // pred_check_branch
            %299 = sbr.rel (%p297) target = $region89
          $region88: #{expansive_block.5} parent=73 // pred_region
            loop: start=0, step=1, limit=1
            $region90: #{expansive_block.5} parent=88 // loop_pre_header
              _
            $region91: #{expansive_block.5} parent=88 // loop_header
              %s301 = sphi 0, %s305
              %p302 = scmp.ge.s32.totalorder %s301, 1
              %s306 = sphi %s231, %s231
              %s307 = sphi %s274, %s274
            $region92: #{expansive_block.5} parent=88 // loop_header_branch
              %304 = sbr.rel (%p302) target = $region96
            $region93: #{expansive_block.5} parent=88 // loop_body
              %v308 = vld [vmem:[%s306] sm:$0xff]
              %309 = vst [vmem:[%s307] sm:$0xff] %v308
              %v310 = vld [vmem:[%s306 + $0x8] sm:$0xff]
              %311 = vst [vmem:[%s307 + $0x8] sm:$0xff] %v310
              %v312 = vld [vmem:[%s306 + $0x10] sm:$0xff]
              %313 = vst [vmem:[%s307 + $0x10] sm:$0xff] %v312
              %v314 = vld [vmem:[%s306 + $0x18] sm:$0xff]
              %315 = vst [vmem:[%s307 + $0x18] sm:$0xff] %v314
              %v316 = vld [vmem:[%s306 + $0x20] sm:$0xff]
              %317 = vst [vmem:[%s307 + $0x20] sm:$0xff] %v316
              %v318 = vld [vmem:[%s306 + $0x28] sm:$0xff]
              %319 = vst [vmem:[%s307 + $0x28] sm:$0xff] %v318
              %v320 = vld [vmem:[%s306 + $0x30] sm:$0xff]
              %321 = vst [vmem:[%s307 + $0x30] sm:$0xff] %v320
              %v322 = vld [vmem:[%s306 + $0x38] sm:$0xff]
              %323 = vst [vmem:[%s307 + $0x38] sm:$0xff] %v322
              %v324 = vld [vmem:[%s306 + $0x40] sm:$0xff]
              %325 = vst [vmem:[%s307 + $0x40] sm:$0xff] %v324
              %v326 = vld [vmem:[%s306 + $0x48] sm:$0xff]
              %327 = vst [vmem:[%s307 + $0x48] sm:$0xff] %v326
              %v328 = vld [vmem:[%s306 + $0x50] sm:$0xff]
              %329 = vst [vmem:[%s307 + $0x50] sm:$0xff] %v328
              %v330 = vld [vmem:[%s306 + $0x58] sm:$0xff]
              %331 = vst [vmem:[%s307 + $0x58] sm:$0xff] %v330
              %v332 = vld [vmem:[%s306 + $0x60] sm:$0xff]
              %333 = vst [vmem:[%s307 + $0x60] sm:$0xff] %v332
              %v334 = vld [vmem:[%s306 + $0x68] sm:$0xff]
              %335 = vst [vmem:[%s307 + $0x68] sm:$0xff] %v334
              %v336 = vld [vmem:[%s306 + $0x70] sm:$0xff]
              %337 = vst [vmem:[%s307 + $0x70] sm:$0xff] %v336
              %v338 = vld [vmem:[%s306 + $0x78] sm:$0xff]
              %339 = vst [vmem:[%s307 + $0x78] sm:$0xff] %v338
            $region94: #{expansive_block.5} parent=88 // loop_footer
              %s305 = sadd.s32 1, %s301
            $region95: #{expansive_block.5} parent=88 // loop_footer_branch
              %300 = sbr.rel target = $region91
            $region96: #{expansive_block.5} parent=88 // loop_exit
              _
          $region89: #{expansive_block.5} parent=73 // pred_fallthru
            _
          %p340 = pneg %p296
          // Predicated region
          $region97: #{expansive_block.5} parent=73 // pred_check
            _
          $region98: #{expansive_block.5} parent=73 // pred_check_branch
            %342 = sbr.rel (%p296) target = $region100
          $region99: #{expansive_block.5} parent=73 // pred_region
            %s343 = sand.u32 128, 7
          $region100: #{expansive_block.5} parent=73 // pred_fallthru
            _
        $region74: #{expansive_block.5} parent=35 // pred_fallthru
          _
        // Predicated region
        $region75: #{expansive_block.5} parent=35 // pred_check
          %p281 = pneg %p277
        $region76: #{expansive_block.5} parent=35 // pred_check_branch
          %283 = sbr.rel (%p281) target = $region78
        $region77: #{expansive_block.5} parent=35 // pred_region
          %s284 = sshllo.u32 0, 128
          loop: start=0, step=1, limit=1
          $region79: #{expansive_block.5} parent=77 // loop_pre_header
            _
          $region80: #{expansive_block.5} parent=77 // loop_header
            %s286 = sphi 0, %s290
            %p287 = scmp.ge.s32.totalorder %s286, 1
            %s291 = sphi %s231, %s231
            %s292 = sphi %s274, %s274
          $region81: #{expansive_block.5} parent=77 // loop_header_branch
            %289 = sbr.rel (%p287) target = $region85
          $region82: #{expansive_block.5} parent=77 // loop_body
            %v293 = vld [vmem:[%s291] sm:%s284]
            %294 = vst [vmem:[%s292] sm:%s284] %v293
          $region83: #{expansive_block.5} parent=77 // loop_footer
            %s290 = sadd.s32 1, %s286
          $region84: #{expansive_block.5} parent=77 // loop_footer_branch
            %285 = sbr.rel target = $region80
          $region85: #{expansive_block.5} parent=77 // loop_exit
            _
        $region78: #{expansive_block.5} parent=35 // pred_fallthru
          _
        // Predicated region
        $region101: #{expansive_block.5} parent=35 // pred_check
          _
        $region102: #{expansive_block.5} parent=35 // pred_check_branch
          %346 = sbr.rel (0) target = $region104
        $region103: #{expansive_block.5} parent=35 // pred_region
          %347 = vsyncadd %s275, 2048
        $region104: #{expansive_block.5} parent=35 // pred_fallthru
          _
        %s348 = sadd.s32 30, %s229
        %s349 = smul.addr %s348, 4
        %s350 = scalar_lea.vmem %s0, %s349
        %s351 = scalar_lea.vmem [#allocation2], 136
        %s352 = scalar_lea.sflag [#allocation4], 2
        %p354 = scmp.lt.u32.totalorder 8, 8
        %p355 = pneg %p354
        // Predicated region
        $region105: #{expansive_block.5} parent=35 // pred_check
          _
        $region106: #{expansive_block.5} parent=35 // pred_check_branch
          %357 = sbr.rel (%p354) target = $region108
        $region107: #{expansive_block.5} parent=35 // pred_region
          %s372 = sand.u32 8, 7
          %p373 = scmp.eq.s32.totalorder %s372, 0
          // Predicated region
          $region120: #{expansive_block.5} parent=107 // pred_check
            %p374 = pneg %p373
          $region121: #{expansive_block.5} parent=107 // pred_check_branch
            %376 = sbr.rel (%p374) target = $region123
          $region122: #{expansive_block.5} parent=107 // pred_region
            loop: start=0, step=1, limit=1
            $region124: #{expansive_block.5} parent=122 // loop_pre_header
              _
            $region125: #{expansive_block.5} parent=122 // loop_header
              %s378 = sphi 0, %s382
              %p379 = scmp.ge.s32.totalorder %s378, 1
              %s383 = sphi %s350, %s350
              %s384 = sphi %s351, %s351
            $region126: #{expansive_block.5} parent=122 // loop_header_branch
              %381 = sbr.rel (%p379) target = $region130
            $region127: #{expansive_block.5} parent=122 // loop_body
              %v385 = vld [vmem:[%s383] sm:$0xff]
              %386 = vst [vmem:[%s384] sm:$0xff] %v385
            $region128: #{expansive_block.5} parent=122 // loop_footer
              %s382 = sadd.s32 1, %s378
            $region129: #{expansive_block.5} parent=122 // loop_footer_branch
              %377 = sbr.rel target = $region125
            $region130: #{expansive_block.5} parent=122 // loop_exit
              _
          $region123: #{expansive_block.5} parent=107 // pred_fallthru
            _
          %p387 = pneg %p373
          // Predicated region
          $region131: #{expansive_block.5} parent=107 // pred_check
            _
          $region132: #{expansive_block.5} parent=107 // pred_check_branch
            %389 = sbr.rel (%p373) target = $region134
          $region133: #{expansive_block.5} parent=107 // pred_region
            %s390 = sand.u32 8, 7
          $region134: #{expansive_block.5} parent=107 // pred_fallthru
            _
        $region108: #{expansive_block.5} parent=35 // pred_fallthru
          _
        // Predicated region
        $region109: #{expansive_block.5} parent=35 // pred_check
          %p358 = pneg %p354
        $region110: #{expansive_block.5} parent=35 // pred_check_branch
          %360 = sbr.rel (%p358) target = $region112
        $region111: #{expansive_block.5} parent=35 // pred_region
          %s361 = sshllo.u32 0, 8
          loop: start=0, step=1, limit=1
          $region113: #{expansive_block.5} parent=111 // loop_pre_header
            _
          $region114: #{expansive_block.5} parent=111 // loop_header
            %s363 = sphi 0, %s367
            %p364 = scmp.ge.s32.totalorder %s363, 1
            %s368 = sphi %s350, %s350
            %s369 = sphi %s351, %s351
          $region115: #{expansive_block.5} parent=111 // loop_header_branch
            %366 = sbr.rel (%p364) target = $region119
          $region116: #{expansive_block.5} parent=111 // loop_body
            %v370 = vld [vmem:[%s368] sm:%s361]
            %371 = vst [vmem:[%s369] sm:%s361] %v370
          $region117: #{expansive_block.5} parent=111 // loop_footer
            %s367 = sadd.s32 1, %s363
          $region118: #{expansive_block.5} parent=111 // loop_footer_branch
            %362 = sbr.rel target = $region114
          $region119: #{expansive_block.5} parent=111 // loop_exit
            _
        $region112: #{expansive_block.5} parent=35 // pred_fallthru
          _
        // Predicated region
        $region135: #{expansive_block.5} parent=35 // pred_check
          _
        $region136: #{expansive_block.5} parent=35 // pred_check_branch
          %393 = sbr.rel (0) target = $region138
        $region137: #{expansive_block.5} parent=35 // pred_region
          %394 = vsyncadd %s352, 128
        $region138: #{expansive_block.5} parent=35 // pred_fallthru
          _
        %s395 = smul.addr %s229, 4
        %s396 = scalar_lea.vmem %s1, %s395
        %p398 = scmp.lt.u32.totalorder 8, 8
        %p399 = pneg %p398
        // Predicated region
        $region139: #{expansive_block.5} parent=35 // pred_check
          _
        $region140: #{expansive_block.5} parent=35 // pred_check_branch
          %401 = sbr.rel (%p398) target = $region142
        $region141: #{expansive_block.5} parent=35 // pred_region
          %s416 = sand.u32 8, 7
          %p417 = scmp.eq.s32.totalorder %s416, 0
          // Predicated region
          $region154: #{expansive_block.5} parent=141 // pred_check
            %p418 = pneg %p417
          $region155: #{expansive_block.5} parent=141 // pred_check_branch
            %420 = sbr.rel (%p418) target = $region157
          $region156: #{expansive_block.5} parent=141 // pred_region
            loop: start=0, step=1, limit=1
            $region158: #{expansive_block.5} parent=156 // loop_pre_header
              _
            $region159: #{expansive_block.5} parent=156 // loop_header
              %s422 = sphi 0, %s426
              %p423 = scmp.ge.s32.totalorder %s422, 1
              %s427 = sphi %s396, %s396
              %s428 = sphi [#allocation3], [#allocation3]
            $region160: #{expansive_block.5} parent=156 // loop_header_branch
              %425 = sbr.rel (%p423) target = $region164
            $region161: #{expansive_block.5} parent=156 // loop_body
              %v429 = vld [vmem:[%s427] sm:$0xff]
              %430 = vst [vmem:[%s428] sm:$0xff] %v429
            $region162: #{expansive_block.5} parent=156 // loop_footer
              %s426 = sadd.s32 1, %s422
            $region163: #{expansive_block.5} parent=156 // loop_footer_branch
              %421 = sbr.rel target = $region159
            $region164: #{expansive_block.5} parent=156 // loop_exit
              _
          $region157: #{expansive_block.5} parent=141 // pred_fallthru
            _
          %p431 = pneg %p417
          // Predicated region
          $region165: #{expansive_block.5} parent=141 // pred_check
            _
          $region166: #{expansive_block.5} parent=141 // pred_check_branch
            %433 = sbr.rel (%p417) target = $region168
          $region167: #{expansive_block.5} parent=141 // pred_region
            %s434 = sand.u32 8, 7
          $region168: #{expansive_block.5} parent=141 // pred_fallthru
            _
        $region142: #{expansive_block.5} parent=35 // pred_fallthru
          _
        // Predicated region
        $region143: #{expansive_block.5} parent=35 // pred_check
          %p402 = pneg %p398
        $region144: #{expansive_block.5} parent=35 // pred_check_branch
          %404 = sbr.rel (%p402) target = $region146
        $region145: #{expansive_block.5} parent=35 // pred_region
          %s405 = sshllo.u32 0, 8
          loop: start=0, step=1, limit=1
          $region147: #{expansive_block.5} parent=145 // loop_pre_header
            _
          $region148: #{expansive_block.5} parent=145 // loop_header
            %s407 = sphi 0, %s411
            %p408 = scmp.ge.s32.totalorder %s407, 1
            %s412 = sphi %s396, %s396
            %s413 = sphi [#allocation3], [#allocation3]
          $region149: #{expansive_block.5} parent=145 // loop_header_branch
            %410 = sbr.rel (%p408) target = $region153
          $region150: #{expansive_block.5} parent=145 // loop_body
            %v414 = vld [vmem:[%s412] sm:%s405]
            %415 = vst [vmem:[%s413] sm:%s405] %v414
          $region151: #{expansive_block.5} parent=145 // loop_footer
            %s411 = sadd.s32 1, %s407
          $region152: #{expansive_block.5} parent=145 // loop_footer_branch
            %406 = sbr.rel target = $region148
          $region153: #{expansive_block.5} parent=145 // loop_exit
            _
        $region146: #{expansive_block.5} parent=35 // pred_fallthru
          _
        // Predicated region
        $region169: #{expansive_block.5} parent=35 // pred_check
          _
        $region170: #{expansive_block.5} parent=35 // pred_check_branch
          %437 = sbr.rel (0) target = $region172
        $region171: #{expansive_block.5} parent=35 // pred_region
          %438 = vsyncadd [#allocation5], 128
        $region172: #{expansive_block.5} parent=35 // pred_fallthru
          _
        %s439 = scalar_lea.vmem [#allocation3], 8
        %s440 = scalar_lea.sflag [#allocation5], 1
        %p442 = scmp.lt.u32.totalorder 128, 8
        %p443 = pneg %p442
        // Predicated region
        $region173: #{expansive_block.5} parent=35 // pred_check
          _
        $region174: #{expansive_block.5} parent=35 // pred_check_branch
          %445 = sbr.rel (%p442) target = $region176
        $region175: #{expansive_block.5} parent=35 // pred_region
          %s460 = sand.u32 128, 7
          %p461 = scmp.eq.s32.totalorder %s460, 0
          // Predicated region
          $region188: #{expansive_block.5} parent=175 // pred_check
            %p462 = pneg %p461
          $region189: #{expansive_block.5} parent=175 // pred_check_branch
            %464 = sbr.rel (%p462) target = $region191
          $region190: #{expansive_block.5} parent=175 // pred_region
            loop: start=0, step=1, limit=1
            $region192: #{expansive_block.5} parent=190 // loop_pre_header
              _
            $region193: #{expansive_block.5} parent=190 // loop_header
              %s466 = sphi 0, %s470
              %p467 = scmp.ge.s32.totalorder %s466, 1
              %s471 = sphi %s396, %s396
              %s472 = sphi %s439, %s439
            $region194: #{expansive_block.5} parent=190 // loop_header_branch
              %469 = sbr.rel (%p467) target = $region198
            $region195: #{expansive_block.5} parent=190 // loop_body
              %v473 = vld [vmem:[%s471] sm:$0xff]
              %474 = vst [vmem:[%s472] sm:$0xff] %v473
              %v475 = vld [vmem:[%s471 + $0x8] sm:$0xff]
              %476 = vst [vmem:[%s472 + $0x8] sm:$0xff] %v475
              %v477 = vld [vmem:[%s471 + $0x10] sm:$0xff]
              %478 = vst [vmem:[%s472 + $0x10] sm:$0xff] %v477
              %v479 = vld [vmem:[%s471 + $0x18] sm:$0xff]
              %480 = vst [vmem:[%s472 + $0x18] sm:$0xff] %v479
              %v481 = vld [vmem:[%s471 + $0x20] sm:$0xff]
              %482 = vst [vmem:[%s472 + $0x20] sm:$0xff] %v481
              %v483 = vld [vmem:[%s471 + $0x28] sm:$0xff]
              %484 = vst [vmem:[%s472 + $0x28] sm:$0xff] %v483
              %v485 = vld [vmem:[%s471 + $0x30] sm:$0xff]
              %486 = vst [vmem:[%s472 + $0x30] sm:$0xff] %v485
              %v487 = vld [vmem:[%s471 + $0x38] sm:$0xff]
              %488 = vst [vmem:[%s472 + $0x38] sm:$0xff] %v487
              %v489 = vld [vmem:[%s471 + $0x40] sm:$0xff]
              %490 = vst [vmem:[%s472 + $0x40] sm:$0xff] %v489
              %v491 = vld [vmem:[%s471 + $0x48] sm:$0xff]
              %492 = vst [vmem:[%s472 + $0x48] sm:$0xff] %v491
              %v493 = vld [vmem:[%s471 + $0x50] sm:$0xff]
              %494 = vst [vmem:[%s472 + $0x50] sm:$0xff] %v493
              %v495 = vld [vmem:[%s471 + $0x58] sm:$0xff]
              %496 = vst [vmem:[%s472 + $0x58] sm:$0xff] %v495
              %v497 = vld [vmem:[%s471 + $0x60] sm:$0xff]
              %498 = vst [vmem:[%s472 + $0x60] sm:$0xff] %v497
              %v499 = vld [vmem:[%s471 + $0x68] sm:$0xff]
              %500 = vst [vmem:[%s472 + $0x68] sm:$0xff] %v499
              %v501 = vld [vmem:[%s471 + $0x70] sm:$0xff]
              %502 = vst [vmem:[%s472 + $0x70] sm:$0xff] %v501
              %v503 = vld [vmem:[%s471 + $0x78] sm:$0xff]
              %504 = vst [vmem:[%s472 + $0x78] sm:$0xff] %v503
            $region196: #{expansive_block.5} parent=190 // loop_footer
              %s470 = sadd.s32 1, %s466
            $region197: #{expansive_block.5} parent=190 // loop_footer_branch
              %465 = sbr.rel target = $region193
            $region198: #{expansive_block.5} parent=190 // loop_exit
              _
          $region191: #{expansive_block.5} parent=175 // pred_fallthru
            _
          %p505 = pneg %p461
          // Predicated region
          $region199: #{expansive_block.5} parent=175 // pred_check
            _
          $region200: #{expansive_block.5} parent=175 // pred_check_branch
            %507 = sbr.rel (%p461) target = $region202
          $region201: #{expansive_block.5} parent=175 // pred_region
            %s508 = sand.u32 128, 7
          $region202: #{expansive_block.5} parent=175 // pred_fallthru
            _
        $region176: #{expansive_block.5} parent=35 // pred_fallthru
          _
        // Predicated region
        $region177: #{expansive_block.5} parent=35 // pred_check
          %p446 = pneg %p442
        $region178: #{expansive_block.5} parent=35 // pred_check_branch
          %448 = sbr.rel (%p446) target = $region180
        $region179: #{expansive_block.5} parent=35 // pred_region
          %s449 = sshllo.u32 0, 128
          loop: start=0, step=1, limit=1
          $region181: #{expansive_block.5} parent=179 // loop_pre_header
            _
          $region182: #{expansive_block.5} parent=179 // loop_header
            %s451 = sphi 0, %s455
            %p452 = scmp.ge.s32.totalorder %s451, 1
            %s456 = sphi %s396, %s396
            %s457 = sphi %s439, %s439
          $region183: #{expansive_block.5} parent=179 // loop_header_branch
            %454 = sbr.rel (%p452) target = $region187
          $region184: #{expansive_block.5} parent=179 // loop_body
            %v458 = vld [vmem:[%s456] sm:%s449]
            %459 = vst [vmem:[%s457] sm:%s449] %v458
          $region185: #{expansive_block.5} parent=179 // loop_footer
            %s455 = sadd.s32 1, %s451
          $region186: #{expansive_block.5} parent=179 // loop_footer_branch
            %450 = sbr.rel target = $region182
          $region187: #{expansive_block.5} parent=179 // loop_exit
            _
        $region180: #{expansive_block.5} parent=35 // pred_fallthru
          _
        // Predicated region
        $region203: #{expansive_block.5} parent=35 // pred_check
          _
        $region204: #{expansive_block.5} parent=35 // pred_check_branch
          %511 = sbr.rel (0) target = $region206
        $region205: #{expansive_block.5} parent=35 // pred_region
          %512 = vsyncadd %s440, 2048
        $region206: #{expansive_block.5} parent=35 // pred_fallthru
          _
        %s513 = smul.addr %s348, 4
        %s514 = scalar_lea.vmem %s1, %s513
        %s515 = scalar_lea.vmem [#allocation3], 136
        %s516 = scalar_lea.sflag [#allocation5], 2
        %p518 = scmp.lt.u32.totalorder 8, 8
        %p519 = pneg %p518
        // Predicated region
        $region207: #{expansive_block.5} parent=35 // pred_check
          _
        $region208: #{expansive_block.5} parent=35 // pred_check_branch
          %521 = sbr.rel (%p518) target = $region210
        $region209: #{expansive_block.5} parent=35 // pred_region
          %s536 = sand.u32 8, 7
          %p537 = scmp.eq.s32.totalorder %s536, 0
          // Predicated region
          $region222: #{expansive_block.5} parent=209 // pred_check
            %p538 = pneg %p537
          $region223: #{expansive_block.5} parent=209 // pred_check_branch
            %540 = sbr.rel (%p538) target = $region225
          $region224: #{expansive_block.5} parent=209 // pred_region
            loop: start=0, step=1, limit=1
            $region226: #{expansive_block.5} parent=224 // loop_pre_header
              _
            $region227: #{expansive_block.5} parent=224 // loop_header
              %s542 = sphi 0, %s546
              %p543 = scmp.ge.s32.totalorder %s542, 1
              %s547 = sphi %s514, %s514
              %s548 = sphi %s515, %s515
            $region228: #{expansive_block.5} parent=224 // loop_header_branch
              %545 = sbr.rel (%p543) target = $region232
            $region229: #{expansive_block.5} parent=224 // loop_body
              %v549 = vld [vmem:[%s547] sm:$0xff]
              %550 = vst [vmem:[%s548] sm:$0xff] %v549
            $region230: #{expansive_block.5} parent=224 // loop_footer
              %s546 = sadd.s32 1, %s542
            $region231: #{expansive_block.5} parent=224 // loop_footer_branch
              %541 = sbr.rel target = $region227
            $region232: #{expansive_block.5} parent=224 // loop_exit
              _
          $region225: #{expansive_block.5} parent=209 // pred_fallthru
            _
          %p551 = pneg %p537
          // Predicated region
          $region233: #{expansive_block.5} parent=209 // pred_check
            _
          $region234: #{expansive_block.5} parent=209 // pred_check_branch
            %553 = sbr.rel (%p537) target = $region236
          $region235: #{expansive_block.5} parent=209 // pred_region
            %s554 = sand.u32 8, 7
          $region236: #{expansive_block.5} parent=209 // pred_fallthru
            _
        $region210: #{expansive_block.5} parent=35 // pred_fallthru
          _
        // Predicated region
        $region211: #{expansive_block.5} parent=35 // pred_check
          %p522 = pneg %p518
        $region212: #{expansive_block.5} parent=35 // pred_check_branch
          %524 = sbr.rel (%p522) target = $region214
        $region213: #{expansive_block.5} parent=35 // pred_region
          %s525 = sshllo.u32 0, 8
          loop: start=0, step=1, limit=1
          $region215: #{expansive_block.5} parent=213 // loop_pre_header
            _
          $region216: #{expansive_block.5} parent=213 // loop_header
            %s527 = sphi 0, %s531
            %p528 = scmp.ge.s32.totalorder %s527, 1
            %s532 = sphi %s514, %s514
            %s533 = sphi %s515, %s515
          $region217: #{expansive_block.5} parent=213 // loop_header_branch
            %530 = sbr.rel (%p528) target = $region221
          $region218: #{expansive_block.5} parent=213 // loop_body
            %v534 = vld [vmem:[%s532] sm:%s525]
            %535 = vst [vmem:[%s533] sm:%s525] %v534
          $region219: #{expansive_block.5} parent=213 // loop_footer
            %s531 = sadd.s32 1, %s527
          $region220: #{expansive_block.5} parent=213 // loop_footer_branch
            %526 = sbr.rel target = $region216
          $region221: #{expansive_block.5} parent=213 // loop_exit
            _
        $region214: #{expansive_block.5} parent=35 // pred_fallthru
          _
        // Predicated region
        $region237: #{expansive_block.5} parent=35 // pred_check
          _
        $region238: #{expansive_block.5} parent=35 // pred_check_branch
          %557 = sbr.rel (0) target = $region240
        $region239: #{expansive_block.5} parent=35 // pred_region
          %558 = vsyncadd %s516, 128
        $region240: #{expansive_block.5} parent=35 // pred_fallthru
          _
      $region36: #{expansive_block.5} parent=31 // pred_fallthru
        _
      %s559 = sadd.s32 %s23, 1
      %p560 = scmp.lt.s32.totalorder %s559, 1
      // Predicated region
      $region241: #{expansive_block.5} parent=31 // pred_check
        %p561 = pneg %p560
      $region242: #{expansive_block.5} parent=31 // pred_check_branch
        %563 = sbr.rel (%p561) target = $region244
      $region243: #{expansive_block.5} parent=31 // pred_region
        %p564 = scmp.lt.s32.totalorder %s559, 0
        %s565 = ssub.s32 0, %s559
        %s566 = scalar_select %p564, %s565, %s559
        %s567 = sand.u32 %s566, 1
        %s568 = ssub.s32 0, %s567
        %s569 = scalar_select %p564, %s568, %s567
        %p570 = scmp.ne.s32.totalorder %s569, 0
        %p571 = scmp.lt.s32.totalorder %s569, 0
        %p572 = pnand %p571, %p570
        %p573 = pneg %p572
        %s574 = sadd.s32 %s569, 2
        %s575 = scalar_select %p573, %s574, %s569
        %s576 = smul.u32 %s559, 16
        %s577 = ssub.s32 %s576, 1
        %p578 = scmp.gt.s32.totalorder %s577, 0
        %s579 = scalar_select %p578, %s577, 0
        %p580 = scmp.lt.s32.totalorder %s579, 15
        %s581 = scalar_select %p580, %s579, 15
        %p582 = scmp.gt.s32.totalorder %s576, 0
        %s583 = scalar_select %p582, %s576, 0
        %p584 = scmp.lt.s32.totalorder %s583, 0
        %s585 = scalar_select %p584, %s583, 0
        %s586 = sadd.s32 %s576, 16
        %p587 = scmp.gt.s32.totalorder %s586, 0
        %s588 = scalar_select %p587, %s586, 0
        %p589 = scmp.lt.s32.totalorder %s588, 15
        %s590 = scalar_select %p589, %s588, 15
        %s591 = smul.u32 %s581, 2
        %s592 = smul.u32 %s22, 32
        %s593 = sadd.s32 %s591, %s592
        %s594 = smul.addr %s593, 4
        %s595 = scalar_lea.vmem %s0, %s594
        %s596 = smul.u32 %s575, 18
        %s597 = smul.addr %s596, 8
        %s598 = scalar_lea.vmem [#allocation2], %s597
        %s599 = smul.u32 %s575, 3
        %s600 = scalar_lea.sflag [#allocation4], %s599
        %p602 = scmp.lt.u32.totalorder 8, 8
        %p603 = pneg %p602
        // Predicated region
        $region245: #{expansive_block.5} parent=243 // pred_check
          _
        $region246: #{expansive_block.5} parent=243 // pred_check_branch
          %605 = sbr.rel (%p602) target = $region248
        $region247: #{expansive_block.5} parent=243 // pred_region
          %s620 = sand.u32 8, 7
          %p621 = scmp.eq.s32.totalorder %s620, 0
          // Predicated region
          $region260: #{expansive_block.5} parent=247 // pred_check
            %p622 = pneg %p621
          $region261: #{expansive_block.5} parent=247 // pred_check_branch
            %624 = sbr.rel (%p622) target = $region263
          $region262: #{expansive_block.5} parent=247 // pred_region
            loop: start=0, step=1, limit=1
            $region264: #{expansive_block.5} parent=262 // loop_pre_header
              _
            $region265: #{expansive_block.5} parent=262 // loop_header
              %s626 = sphi 0, %s630
              %p627 = scmp.ge.s32.totalorder %s626, 1
              %s631 = sphi %s595, %s595
              %s632 = sphi %s598, %s598
            $region266: #{expansive_block.5} parent=262 // loop_header_branch
              %629 = sbr.rel (%p627) target = $region270
            $region267: #{expansive_block.5} parent=262 // loop_body
              %v633 = vld [vmem:[%s631] sm:$0xff]
              %634 = vst [vmem:[%s632] sm:$0xff] %v633
            $region268: #{expansive_block.5} parent=262 // loop_footer
              %s630 = sadd.s32 1, %s626
            $region269: #{expansive_block.5} parent=262 // loop_footer_branch
              %625 = sbr.rel target = $region265
            $region270: #{expansive_block.5} parent=262 // loop_exit
              _
          $region263: #{expansive_block.5} parent=247 // pred_fallthru
            _
          %p635 = pneg %p621
          // Predicated region
          $region271: #{expansive_block.5} parent=247 // pred_check
            _
          $region272: #{expansive_block.5} parent=247 // pred_check_branch
            %637 = sbr.rel (%p621) target = $region274
          $region273: #{expansive_block.5} parent=247 // pred_region
            %s638 = sand.u32 8, 7
          $region274: #{expansive_block.5} parent=247 // pred_fallthru
            _
        $region248: #{expansive_block.5} parent=243 // pred_fallthru
          _
        // Predicated region
        $region249: #{expansive_block.5} parent=243 // pred_check
          %p606 = pneg %p602
        $region250: #{expansive_block.5} parent=243 // pred_check_branch
          %608 = sbr.rel (%p606) target = $region252
        $region251: #{expansive_block.5} parent=243 // pred_region
          %s609 = sshllo.u32 0, 8
          loop: start=0, step=1, limit=1
          $region253: #{expansive_block.5} parent=251 // loop_pre_header
            _
          $region254: #{expansive_block.5} parent=251 // loop_header
            %s611 = sphi 0, %s615
            %p612 = scmp.ge.s32.totalorder %s611, 1
            %s616 = sphi %s595, %s595
            %s617 = sphi %s598, %s598
          $region255: #{expansive_block.5} parent=251 // loop_header_branch
            %614 = sbr.rel (%p612) target = $region259
          $region256: #{expansive_block.5} parent=251 // loop_body
            %v618 = vld [vmem:[%s616] sm:%s609]
            %619 = vst [vmem:[%s617] sm:%s609] %v618
          $region257: #{expansive_block.5} parent=251 // loop_footer
            %s615 = sadd.s32 1, %s611
          $region258: #{expansive_block.5} parent=251 // loop_footer_branch
            %610 = sbr.rel target = $region254
          $region259: #{expansive_block.5} parent=251 // loop_exit
            _
        $region252: #{expansive_block.5} parent=243 // pred_fallthru
          _
        // Predicated region
        $region275: #{expansive_block.5} parent=243 // pred_check
          _
        $region276: #{expansive_block.5} parent=243 // pred_check_branch
          %641 = sbr.rel (0) target = $region278
        $region277: #{expansive_block.5} parent=243 // pred_region
          %642 = vsyncadd %s600, 128
        $region278: #{expansive_block.5} parent=243 // pred_fallthru
          _
        %s643 = smul.u32 %s585, 2
        %s644 = sadd.s32 %s643, %s592
        %s645 = smul.addr %s644, 4
        %s646 = scalar_lea.vmem %s0, %s645
        %s647 = sadd.s32 1, %s596
        %s648 = smul.addr %s647, 8
        %s649 = scalar_lea.vmem [#allocation2], %s648
        %s650 = sadd.s32 1, %s599
        %s651 = scalar_lea.sflag [#allocation4], %s650
        %p653 = scmp.lt.u32.totalorder 128, 8
        %p654 = pneg %p653
        // Predicated region
        $region279: #{expansive_block.5} parent=243 // pred_check
          _
        $region280: #{expansive_block.5} parent=243 // pred_check_branch
          %656 = sbr.rel (%p653) target = $region282
        $region281: #{expansive_block.5} parent=243 // pred_region
          %s671 = sand.u32 128, 7
          %p672 = scmp.eq.s32.totalorder %s671, 0
          // Predicated region
          $region294: #{expansive_block.5} parent=281 // pred_check
            %p673 = pneg %p672
          $region295: #{expansive_block.5} parent=281 // pred_check_branch
            %675 = sbr.rel (%p673) target = $region297
          $region296: #{expansive_block.5} parent=281 // pred_region
            loop: start=0, step=1, limit=1
            $region298: #{expansive_block.5} parent=296 // loop_pre_header
              _
            $region299: #{expansive_block.5} parent=296 // loop_header
              %s677 = sphi 0, %s681
              %p678 = scmp.ge.s32.totalorder %s677, 1
              %s682 = sphi %s646, %s646
              %s683 = sphi %s649, %s649
            $region300: #{expansive_block.5} parent=296 // loop_header_branch
              %680 = sbr.rel (%p678) target = $region304
            $region301: #{expansive_block.5} parent=296 // loop_body
              %v684 = vld [vmem:[%s682] sm:$0xff]
              %685 = vst [vmem:[%s683] sm:$0xff] %v684
              %v686 = vld [vmem:[%s682 + $0x8] sm:$0xff]
              %687 = vst [vmem:[%s683 + $0x8] sm:$0xff] %v686
              %v688 = vld [vmem:[%s682 + $0x10] sm:$0xff]
              %689 = vst [vmem:[%s683 + $0x10] sm:$0xff] %v688
              %v690 = vld [vmem:[%s682 + $0x18] sm:$0xff]
              %691 = vst [vmem:[%s683 + $0x18] sm:$0xff] %v690
              %v692 = vld [vmem:[%s682 + $0x20] sm:$0xff]
              %693 = vst [vmem:[%s683 + $0x20] sm:$0xff] %v692
              %v694 = vld [vmem:[%s682 + $0x28] sm:$0xff]
              %695 = vst [vmem:[%s683 + $0x28] sm:$0xff] %v694
              %v696 = vld [vmem:[%s682 + $0x30] sm:$0xff]
              %697 = vst [vmem:[%s683 + $0x30] sm:$0xff] %v696
              %v698 = vld [vmem:[%s682 + $0x38] sm:$0xff]
              %699 = vst [vmem:[%s683 + $0x38] sm:$0xff] %v698
              %v700 = vld [vmem:[%s682 + $0x40] sm:$0xff]
              %701 = vst [vmem:[%s683 + $0x40] sm:$0xff] %v700
              %v702 = vld [vmem:[%s682 + $0x48] sm:$0xff]
              %703 = vst [vmem:[%s683 + $0x48] sm:$0xff] %v702
              %v704 = vld [vmem:[%s682 + $0x50] sm:$0xff]
              %705 = vst [vmem:[%s683 + $0x50] sm:$0xff] %v704
              %v706 = vld [vmem:[%s682 + $0x58] sm:$0xff]
              %707 = vst [vmem:[%s683 + $0x58] sm:$0xff] %v706
              %v708 = vld [vmem:[%s682 + $0x60] sm:$0xff]
              %709 = vst [vmem:[%s683 + $0x60] sm:$0xff] %v708
              %v710 = vld [vmem:[%s682 + $0x68] sm:$0xff]
              %711 = vst [vmem:[%s683 + $0x68] sm:$0xff] %v710
              %v712 = vld [vmem:[%s682 + $0x70] sm:$0xff]
              %713 = vst [vmem:[%s683 + $0x70] sm:$0xff] %v712
              %v714 = vld [vmem:[%s682 + $0x78] sm:$0xff]
              %715 = vst [vmem:[%s683 + $0x78] sm:$0xff] %v714
            $region302: #{expansive_block.5} parent=296 // loop_footer
              %s681 = sadd.s32 1, %s677
            $region303: #{expansive_block.5} parent=296 // loop_footer_branch
              %676 = sbr.rel target = $region299
            $region304: #{expansive_block.5} parent=296 // loop_exit
              _
          $region297: #{expansive_block.5} parent=281 // pred_fallthru
            _
          %p716 = pneg %p672
          // Predicated region
          $region305: #{expansive_block.5} parent=281 // pred_check
            _
          $region306: #{expansive_block.5} parent=281 // pred_check_branch
            %718 = sbr.rel (%p672) target = $region308
          $region307: #{expansive_block.5} parent=281 // pred_region
            %s719 = sand.u32 128, 7
          $region308: #{expansive_block.5} parent=281 // pred_fallthru
            _
        $region282: #{expansive_block.5} parent=243 // pred_fallthru
          _
        // Predicated region
        $region283: #{expansive_block.5} parent=243 // pred_check
          %p657 = pneg %p653
        $region284: #{expansive_block.5} parent=243 // pred_check_branch
          %659 = sbr.rel (%p657) target = $region286
        $region285: #{expansive_block.5} parent=243 // pred_region
          %s660 = sshllo.u32 0, 128
          loop: start=0, step=1, limit=1
          $region287: #{expansive_block.5} parent=285 // loop_pre_header
            _
          $region288: #{expansive_block.5} parent=285 // loop_header
            %s662 = sphi 0, %s666
            %p663 = scmp.ge.s32.totalorder %s662, 1
            %s667 = sphi %s646, %s646
            %s668 = sphi %s649, %s649
          $region289: #{expansive_block.5} parent=285 // loop_header_branch
            %665 = sbr.rel (%p663) target = $region293
          $region290: #{expansive_block.5} parent=285 // loop_body
            %v669 = vld [vmem:[%s667] sm:%s660]
            %670 = vst [vmem:[%s668] sm:%s660] %v669
          $region291: #{expansive_block.5} parent=285 // loop_footer
            %s666 = sadd.s32 1, %s662
          $region292: #{expansive_block.5} parent=285 // loop_footer_branch
            %661 = sbr.rel target = $region288
          $region293: #{expansive_block.5} parent=285 // loop_exit
            _
        $region286: #{expansive_block.5} parent=243 // pred_fallthru
          _
        // Predicated region
        $region309: #{expansive_block.5} parent=243 // pred_check
          _
        $region310: #{expansive_block.5} parent=243 // pred_check_branch
          %722 = sbr.rel (0) target = $region312
        $region311: #{expansive_block.5} parent=243 // pred_region
          %723 = vsyncadd %s651, 2048
        $region312: #{expansive_block.5} parent=243 // pred_fallthru
          _
        %s724 = smul.u32 %s590, 2
        %s725 = sadd.s32 %s724, %s592
        %s726 = smul.addr %s725, 4
        %s727 = scalar_lea.vmem %s0, %s726
        %s728 = sadd.s32 17, %s596
        %s729 = smul.addr %s728, 8
        %s730 = scalar_lea.vmem [#allocation2], %s729
        %s731 = sadd.s32 2, %s599
        %s732 = scalar_lea.sflag [#allocation4], %s731
        %p734 = scmp.lt.u32.totalorder 8, 8
        %p735 = pneg %p734
        // Predicated region
        $region313: #{expansive_block.5} parent=243 // pred_check
          _
        $region314: #{expansive_block.5} parent=243 // pred_check_branch
          %737 = sbr.rel (%p734) target = $region316
        $region315: #{expansive_block.5} parent=243 // pred_region
          %s752 = sand.u32 8, 7
          %p753 = scmp.eq.s32.totalorder %s752, 0
          // Predicated region
          $region328: #{expansive_block.5} parent=315 // pred_check
            %p754 = pneg %p753
          $region329: #{expansive_block.5} parent=315 // pred_check_branch
            %756 = sbr.rel (%p754) target = $region331
          $region330: #{expansive_block.5} parent=315 // pred_region
            loop: start=0, step=1, limit=1
            $region332: #{expansive_block.5} parent=330 // loop_pre_header
              _
            $region333: #{expansive_block.5} parent=330 // loop_header
              %s758 = sphi 0, %s762
              %p759 = scmp.ge.s32.totalorder %s758, 1
              %s763 = sphi %s727, %s727
              %s764 = sphi %s730, %s730
            $region334: #{expansive_block.5} parent=330 // loop_header_branch
              %761 = sbr.rel (%p759) target = $region338
            $region335: #{expansive_block.5} parent=330 // loop_body
              %v765 = vld [vmem:[%s763] sm:$0xff]
              %766 = vst [vmem:[%s764] sm:$0xff] %v765
            $region336: #{expansive_block.5} parent=330 // loop_footer
              %s762 = sadd.s32 1, %s758
            $region337: #{expansive_block.5} parent=330 // loop_footer_branch
              %757 = sbr.rel target = $region333
            $region338: #{expansive_block.5} parent=330 // loop_exit
              _
          $region331: #{expansive_block.5} parent=315 // pred_fallthru
            _
          %p767 = pneg %p753
          // Predicated region
          $region339: #{expansive_block.5} parent=315 // pred_check
            _
          $region340: #{expansive_block.5} parent=315 // pred_check_branch
            %769 = sbr.rel (%p753) target = $region342
          $region341: #{expansive_block.5} parent=315 // pred_region
            %s770 = sand.u32 8, 7
          $region342: #{expansive_block.5} parent=315 // pred_fallthru
            _
        $region316: #{expansive_block.5} parent=243 // pred_fallthru
          _
        // Predicated region
        $region317: #{expansive_block.5} parent=243 // pred_check
          %p738 = pneg %p734
        $region318: #{expansive_block.5} parent=243 // pred_check_branch
          %740 = sbr.rel (%p738) target = $region320
        $region319: #{expansive_block.5} parent=243 // pred_region
          %s741 = sshllo.u32 0, 8
          loop: start=0, step=1, limit=1
          $region321: #{expansive_block.5} parent=319 // loop_pre_header
            _
          $region322: #{expansive_block.5} parent=319 // loop_header
            %s743 = sphi 0, %s747
            %p744 = scmp.ge.s32.totalorder %s743, 1
            %s748 = sphi %s727, %s727
            %s749 = sphi %s730, %s730
          $region323: #{expansive_block.5} parent=319 // loop_header_branch
            %746 = sbr.rel (%p744) target = $region327
          $region324: #{expansive_block.5} parent=319 // loop_body
            %v750 = vld [vmem:[%s748] sm:%s741]
            %751 = vst [vmem:[%s749] sm:%s741] %v750
          $region325: #{expansive_block.5} parent=319 // loop_footer
            %s747 = sadd.s32 1, %s743
          $region326: #{expansive_block.5} parent=319 // loop_footer_branch
            %742 = sbr.rel target = $region322
          $region327: #{expansive_block.5} parent=319 // loop_exit
            _
        $region320: #{expansive_block.5} parent=243 // pred_fallthru
          _
        // Predicated region
        $region343: #{expansive_block.5} parent=243 // pred_check
          _
        $region344: #{expansive_block.5} parent=243 // pred_check_branch
          %773 = sbr.rel (0) target = $region346
        $region345: #{expansive_block.5} parent=243 // pred_region
          %774 = vsyncadd %s732, 128
        $region346: #{expansive_block.5} parent=243 // pred_fallthru
          _
        %s775 = smul.addr %s593, 4
        %s776 = scalar_lea.vmem %s1, %s775
        %s777 = smul.addr %s596, 8
        %s778 = scalar_lea.vmem [#allocation3], %s777
        %s779 = scalar_lea.sflag [#allocation5], %s599
        %p781 = scmp.lt.u32.totalorder 8, 8
        %p782 = pneg %p781
        // Predicated region
        $region347: #{expansive_block.5} parent=243 // pred_check
          _
        $region348: #{expansive_block.5} parent=243 // pred_check_branch
          %784 = sbr.rel (%p781) target = $region350
        $region349: #{expansive_block.5} parent=243 // pred_region
          %s799 = sand.u32 8, 7
          %p800 = scmp.eq.s32.totalorder %s799, 0
          // Predicated region
          $region362: #{expansive_block.5} parent=349 // pred_check
            %p801 = pneg %p800
          $region363: #{expansive_block.5} parent=349 // pred_check_branch
            %803 = sbr.rel (%p801) target = $region365
          $region364: #{expansive_block.5} parent=349 // pred_region
            loop: start=0, step=1, limit=1
            $region366: #{expansive_block.5} parent=364 // loop_pre_header
              _
            $region367: #{expansive_block.5} parent=364 // loop_header
              %s805 = sphi 0, %s809
              %p806 = scmp.ge.s32.totalorder %s805, 1
              %s810 = sphi %s776, %s776
              %s811 = sphi %s778, %s778
            $region368: #{expansive_block.5} parent=364 // loop_header_branch
              %808 = sbr.rel (%p806) target = $region372
            $region369: #{expansive_block.5} parent=364 // loop_body
              %v812 = vld [vmem:[%s810] sm:$0xff]
              %813 = vst [vmem:[%s811] sm:$0xff] %v812
            $region370: #{expansive_block.5} parent=364 // loop_footer
              %s809 = sadd.s32 1, %s805
            $region371: #{expansive_block.5} parent=364 // loop_footer_branch
              %804 = sbr.rel target = $region367
            $region372: #{expansive_block.5} parent=364 // loop_exit
              _
          $region365: #{expansive_block.5} parent=349 // pred_fallthru
            _
          %p814 = pneg %p800
          // Predicated region
          $region373: #{expansive_block.5} parent=349 // pred_check
            _
          $region374: #{expansive_block.5} parent=349 // pred_check_branch
            %816 = sbr.rel (%p800) target = $region376
          $region375: #{expansive_block.5} parent=349 // pred_region
            %s817 = sand.u32 8, 7
          $region376: #{expansive_block.5} parent=349 // pred_fallthru
            _
        $region350: #{expansive_block.5} parent=243 // pred_fallthru
          _
        // Predicated region
        $region351: #{expansive_block.5} parent=243 // pred_check
          %p785 = pneg %p781
        $region352: #{expansive_block.5} parent=243 // pred_check_branch
          %787 = sbr.rel (%p785) target = $region354
        $region353: #{expansive_block.5} parent=243 // pred_region
          %s788 = sshllo.u32 0, 8
          loop: start=0, step=1, limit=1
          $region355: #{expansive_block.5} parent=353 // loop_pre_header
            _
          $region356: #{expansive_block.5} parent=353 // loop_header
            %s790 = sphi 0, %s794
            %p791 = scmp.ge.s32.totalorder %s790, 1
            %s795 = sphi %s776, %s776
            %s796 = sphi %s778, %s778
          $region357: #{expansive_block.5} parent=353 // loop_header_branch
            %793 = sbr.rel (%p791) target = $region361
          $region358: #{expansive_block.5} parent=353 // loop_body
            %v797 = vld [vmem:[%s795] sm:%s788]
            %798 = vst [vmem:[%s796] sm:%s788] %v797
          $region359: #{expansive_block.5} parent=353 // loop_footer
            %s794 = sadd.s32 1, %s790
          $region360: #{expansive_block.5} parent=353 // loop_footer_branch
            %789 = sbr.rel target = $region356
          $region361: #{expansive_block.5} parent=353 // loop_exit
            _
        $region354: #{expansive_block.5} parent=243 // pred_fallthru
          _
        // Predicated region
        $region377: #{expansive_block.5} parent=243 // pred_check
          _
        $region378: #{expansive_block.5} parent=243 // pred_check_branch
          %820 = sbr.rel (0) target = $region380
        $region379: #{expansive_block.5} parent=243 // pred_region
          %821 = vsyncadd %s779, 128
        $region380: #{expansive_block.5} parent=243 // pred_fallthru
          _
        %s822 = smul.addr %s644, 4
        %s823 = scalar_lea.vmem %s1, %s822
        %s824 = smul.addr %s647, 8
        %s825 = scalar_lea.vmem [#allocation3], %s824
        %s826 = scalar_lea.sflag [#allocation5], %s650
        %p828 = scmp.lt.u32.totalorder 128, 8
        %p829 = pneg %p828
        // Predicated region
        $region381: #{expansive_block.5} parent=243 // pred_check
          _
        $region382: #{expansive_block.5} parent=243 // pred_check_branch
          %831 = sbr.rel (%p828) target = $region384
        $region383: #{expansive_block.5} parent=243 // pred_region
          %s846 = sand.u32 128, 7
          %p847 = scmp.eq.s32.totalorder %s846, 0
          // Predicated region
          $region396: #{expansive_block.5} parent=383 // pred_check
            %p848 = pneg %p847
          $region397: #{expansive_block.5} parent=383 // pred_check_branch
            %850 = sbr.rel (%p848) target = $region399
          $region398: #{expansive_block.5} parent=383 // pred_region
            loop: start=0, step=1, limit=1
            $region400: #{expansive_block.5} parent=398 // loop_pre_header
              _
            $region401: #{expansive_block.5} parent=398 // loop_header
              %s852 = sphi 0, %s856
              %p853 = scmp.ge.s32.totalorder %s852, 1
              %s857 = sphi %s823, %s823
              %s858 = sphi %s825, %s825
            $region402: #{expansive_block.5} parent=398 // loop_header_branch
              %855 = sbr.rel (%p853) target = $region406
            $region403: #{expansive_block.5} parent=398 // loop_body
              %v859 = vld [vmem:[%s857] sm:$0xff]
              %860 = vst [vmem:[%s858] sm:$0xff] %v859
              %v861 = vld [vmem:[%s857 + $0x8] sm:$0xff]
              %862 = vst [vmem:[%s858 + $0x8] sm:$0xff] %v861
              %v863 = vld [vmem:[%s857 + $0x10] sm:$0xff]
              %864 = vst [vmem:[%s858 + $0x10] sm:$0xff] %v863
              %v865 = vld [vmem:[%s857 + $0x18] sm:$0xff]
              %866 = vst [vmem:[%s858 + $0x18] sm:$0xff] %v865
              %v867 = vld [vmem:[%s857 + $0x20] sm:$0xff]
              %868 = vst [vmem:[%s858 + $0x20] sm:$0xff] %v867
              %v869 = vld [vmem:[%s857 + $0x28] sm:$0xff]
              %870 = vst [vmem:[%s858 + $0x28] sm:$0xff] %v869
              %v871 = vld [vmem:[%s857 + $0x30] sm:$0xff]
              %872 = vst [vmem:[%s858 + $0x30] sm:$0xff] %v871
              %v873 = vld [vmem:[%s857 + $0x38] sm:$0xff]
              %874 = vst [vmem:[%s858 + $0x38] sm:$0xff] %v873
              %v875 = vld [vmem:[%s857 + $0x40] sm:$0xff]
              %876 = vst [vmem:[%s858 + $0x40] sm:$0xff] %v875
              %v877 = vld [vmem:[%s857 + $0x48] sm:$0xff]
              %878 = vst [vmem:[%s858 + $0x48] sm:$0xff] %v877
              %v879 = vld [vmem:[%s857 + $0x50] sm:$0xff]
              %880 = vst [vmem:[%s858 + $0x50] sm:$0xff] %v879
              %v881 = vld [vmem:[%s857 + $0x58] sm:$0xff]
              %882 = vst [vmem:[%s858 + $0x58] sm:$0xff] %v881
              %v883 = vld [vmem:[%s857 + $0x60] sm:$0xff]
              %884 = vst [vmem:[%s858 + $0x60] sm:$0xff] %v883
              %v885 = vld [vmem:[%s857 + $0x68] sm:$0xff]
              %886 = vst [vmem:[%s858 + $0x68] sm:$0xff] %v885
              %v887 = vld [vmem:[%s857 + $0x70] sm:$0xff]
              %888 = vst [vmem:[%s858 + $0x70] sm:$0xff] %v887
              %v889 = vld [vmem:[%s857 + $0x78] sm:$0xff]
              %890 = vst [vmem:[%s858 + $0x78] sm:$0xff] %v889
            $region404: #{expansive_block.5} parent=398 // loop_footer
              %s856 = sadd.s32 1, %s852
            $region405: #{expansive_block.5} parent=398 // loop_footer_branch
              %851 = sbr.rel target = $region401
            $region406: #{expansive_block.5} parent=398 // loop_exit
              _
          $region399: #{expansive_block.5} parent=383 // pred_fallthru
            _
          %p891 = pneg %p847
          // Predicated region
          $region407: #{expansive_block.5} parent=383 // pred_check
            _
          $region408: #{expansive_block.5} parent=383 // pred_check_branch
            %893 = sbr.rel (%p847) target = $region410
          $region409: #{expansive_block.5} parent=383 // pred_region
            %s894 = sand.u32 128, 7
          $region410: #{expansive_block.5} parent=383 // pred_fallthru
            _
        $region384: #{expansive_block.5} parent=243 // pred_fallthru
          _
        // Predicated region
        $region385: #{expansive_block.5} parent=243 // pred_check
          %p832 = pneg %p828
        $region386: #{expansive_block.5} parent=243 // pred_check_branch
          %834 = sbr.rel (%p832) target = $region388
        $region387: #{expansive_block.5} parent=243 // pred_region
          %s835 = sshllo.u32 0, 128
          loop: start=0, step=1, limit=1
          $region389: #{expansive_block.5} parent=387 // loop_pre_header
            _
          $region390: #{expansive_block.5} parent=387 // loop_header
            %s837 = sphi 0, %s841
            %p838 = scmp.ge.s32.totalorder %s837, 1
            %s842 = sphi %s823, %s823
            %s843 = sphi %s825, %s825
          $region391: #{expansive_block.5} parent=387 // loop_header_branch
            %840 = sbr.rel (%p838) target = $region395
          $region392: #{expansive_block.5} parent=387 // loop_body
            %v844 = vld [vmem:[%s842] sm:%s835]
            %845 = vst [vmem:[%s843] sm:%s835] %v844
          $region393: #{expansive_block.5} parent=387 // loop_footer
            %s841 = sadd.s32 1, %s837
          $region394: #{expansive_block.5} parent=387 // loop_footer_branch
            %836 = sbr.rel target = $region390
          $region395: #{expansive_block.5} parent=387 // loop_exit
            _
        $region388: #{expansive_block.5} parent=243 // pred_fallthru
          _
        // Predicated region
        $region411: #{expansive_block.5} parent=243 // pred_check
          _
        $region412: #{expansive_block.5} parent=243 // pred_check_branch
          %897 = sbr.rel (0) target = $region414
        $region413: #{expansive_block.5} parent=243 // pred_region
          %898 = vsyncadd %s826, 2048
        $region414: #{expansive_block.5} parent=243 // pred_fallthru
          _
        %s899 = smul.addr %s725, 4
        %s900 = scalar_lea.vmem %s1, %s899
        %s901 = smul.addr %s728, 8
        %s902 = scalar_lea.vmem [#allocation3], %s901
        %s903 = scalar_lea.sflag [#allocation5], %s731
        %p905 = scmp.lt.u32.totalorder 8, 8
        %p906 = pneg %p905
        // Predicated region
        $region415: #{expansive_block.5} parent=243 // pred_check
          _
        $region416: #{expansive_block.5} parent=243 // pred_check_branch
          %908 = sbr.rel (%p905) target = $region418
        $region417: #{expansive_block.5} parent=243 // pred_region
          %s923 = sand.u32 8, 7
          %p924 = scmp.eq.s32.totalorder %s923, 0
          // Predicated region
          $region430: #{expansive_block.5} parent=417 // pred_check
            %p925 = pneg %p924
          $region431: #{expansive_block.5} parent=417 // pred_check_branch
            %927 = sbr.rel (%p925) target = $region433
          $region432: #{expansive_block.5} parent=417 // pred_region
            loop: start=0, step=1, limit=1
            $region434: #{expansive_block.5} parent=432 // loop_pre_header
              _
            $region435: #{expansive_block.5} parent=432 // loop_header
              %s929 = sphi 0, %s933
              %p930 = scmp.ge.s32.totalorder %s929, 1
              %s934 = sphi %s900, %s900
              %s935 = sphi %s902, %s902
            $region436: #{expansive_block.5} parent=432 // loop_header_branch
              %932 = sbr.rel (%p930) target = $region440
            $region437: #{expansive_block.5} parent=432 // loop_body
              %v936 = vld [vmem:[%s934] sm:$0xff]
              %937 = vst [vmem:[%s935] sm:$0xff] %v936
            $region438: #{expansive_block.5} parent=432 // loop_footer
              %s933 = sadd.s32 1, %s929
            $region439: #{expansive_block.5} parent=432 // loop_footer_branch
              %928 = sbr.rel target = $region435
            $region440: #{expansive_block.5} parent=432 // loop_exit
              _
          $region433: #{expansive_block.5} parent=417 // pred_fallthru
            _
          %p938 = pneg %p924
          // Predicated region
          $region441: #{expansive_block.5} parent=417 // pred_check
            _
          $region442: #{expansive_block.5} parent=417 // pred_check_branch
            %940 = sbr.rel (%p924) target = $region444
          $region443: #{expansive_block.5} parent=417 // pred_region
            %s941 = sand.u32 8, 7
          $region444: #{expansive_block.5} parent=417 // pred_fallthru
            _
        $region418: #{expansive_block.5} parent=243 // pred_fallthru
          _
        // Predicated region
        $region419: #{expansive_block.5} parent=243 // pred_check
          %p909 = pneg %p905
        $region420: #{expansive_block.5} parent=243 // pred_check_branch
          %911 = sbr.rel (%p909) target = $region422
        $region421: #{expansive_block.5} parent=243 // pred_region
          %s912 = sshllo.u32 0, 8
          loop: start=0, step=1, limit=1
          $region423: #{expansive_block.5} parent=421 // loop_pre_header
            _
          $region424: #{expansive_block.5} parent=421 // loop_header
            %s914 = sphi 0, %s918
            %p915 = scmp.ge.s32.totalorder %s914, 1
            %s919 = sphi %s900, %s900
            %s920 = sphi %s902, %s902
          $region425: #{expansive_block.5} parent=421 // loop_header_branch
            %917 = sbr.rel (%p915) target = $region429
          $region426: #{expansive_block.5} parent=421 // loop_body
            %v921 = vld [vmem:[%s919] sm:%s912]
            %922 = vst [vmem:[%s920] sm:%s912] %v921
          $region427: #{expansive_block.5} parent=421 // loop_footer
            %s918 = sadd.s32 1, %s914
          $region428: #{expansive_block.5} parent=421 // loop_footer_branch
            %913 = sbr.rel target = $region424
          $region429: #{expansive_block.5} parent=421 // loop_exit
            _
        $region422: #{expansive_block.5} parent=243 // pred_fallthru
          _
        // Predicated region
        $region445: #{expansive_block.5} parent=243 // pred_check
          _
        $region446: #{expansive_block.5} parent=243 // pred_check_branch
          %944 = sbr.rel (0) target = $region448
        $region447: #{expansive_block.5} parent=243 // pred_region
          %945 = vsyncadd %s903, 128
        $region448: #{expansive_block.5} parent=243 // pred_fallthru
          _
      $region244: #{expansive_block.5} parent=31 // pred_fallthru
        _
      %p946 = scmp.lt.s32.totalorder %s23, 0
      %s947 = ssub.s32 0, %s23
      %s948 = scalar_select %p946, %s947, %s23
      %s949 = sand.u32 %s948, 1
      %s950 = ssub.s32 0, %s949
      %s951 = scalar_select %p946, %s950, %s949
      %p952 = scmp.ne.s32.totalorder %s951, 0
      %p953 = scmp.lt.s32.totalorder %s951, 0
      %p954 = pnand %p953, %p952
      %p955 = pneg %p954
      %s956 = sadd.s32 %s951, 2
      %s957 = scalar_select %p955, %s956, %s951
      %s958 = smul.u32 %s957, 3
      %s959 = scalar_lea.sflag [#allocation4], %s958
      %s960 = smul.u32 4, 1
      %s961 = smul.u32 %s960, 2
      %s962 = smul.u32 %s961, 1
      %s963 = sshll.u32 %s962, 4
      %964 = dma.done %s959, %s963
      %s965 = sadd.s32 1, %s958
      %s966 = scalar_lea.sflag [#allocation4], %s965
      %s967 = smul.u32 4, 16
      %s968 = smul.u32 %s967, 2
      %s969 = smul.u32 %s968, 1
      %s970 = sshll.u32 %s969, 4
      %971 = dma.done %s966, %s970
      %s972 = sadd.s32 2, %s958
      %s973 = scalar_lea.sflag [#allocation4], %s972
      %s974 = sshll.u32 %s962, 4
      %975 = dma.done %s973, %s974
      %s976 = scalar_lea.sflag [#allocation5], %s958
      %s977 = sshll.u32 %s962, 4
      %978 = dma.done %s976, %s977
      %s979 = scalar_lea.sflag [#allocation5], %s965
      %s980 = sshll.u32 %s969, 4
      %981 = dma.done %s979, %s980
      %s982 = scalar_lea.sflag [#allocation5], %s972
      %s983 = sshll.u32 %s962, 4
      %984 = dma.done %s982, %s983
      %s985 = scalar_select %p225, 1, 0
      %s986 = scalar_select %p225, 17, 18
      %v987 = vstv %s985
      %vm988 = vcmp.le.s32.totalorder %v987, 0
      %vm989 = vcmp.le.s32.totalorder %v987, 1
      %vm990 = vcmp.le.s32.totalorder %v987, 2
      %vm991 = vcmp.le.s32.totalorder %v987, 3
      %vm992 = vcmp.le.s32.totalorder %v987, 4
      %vm993 = vcmp.le.s32.totalorder %v987, 5
      %vm994 = vcmp.le.s32.totalorder %v987, 6
      %vm995 = vcmp.le.s32.totalorder %v987, 7
      %vm996 = vcmp.le.s32.totalorder %v987, 8
      %vm997 = vcmp.le.s32.totalorder %v987, 9
      %vm998 = vcmp.le.s32.totalorder %v987, 10
      %vm999 = vcmp.le.s32.totalorder %v987, 11
      %vm1000 = vcmp.le.s32.totalorder %v987, 12
      %vm1001 = vcmp.le.s32.totalorder %v987, 13
      %vm1002 = vcmp.le.s32.totalorder %v987, 14
      %vm1003 = vcmp.le.s32.totalorder %v987, 15
      %vm1004 = vcmp.le.s32.totalorder %v987, 16
      %vm1005 = vcmp.le.s32.totalorder %v987, 17
      %v1006 = vstv %s986
      %vm1007 = vcmp.gt.s32.totalorder %v1006, 0
      %vm1008 = vcmp.gt.s32.totalorder %v1006, 1
      %vm1009 = vcmp.gt.s32.totalorder %v1006, 2
      %vm1010 = vcmp.gt.s32.totalorder %v1006, 3
      %vm1011 = vcmp.gt.s32.totalorder %v1006, 4
      %vm1012 = vcmp.gt.s32.totalorder %v1006, 5
      %vm1013 = vcmp.gt.s32.totalorder %v1006, 6
      %vm1014 = vcmp.gt.s32.totalorder %v1006, 7
      %vm1015 = vcmp.gt.s32.totalorder %v1006, 8
      %vm1016 = vcmp.gt.s32.totalorder %v1006, 9
      %vm1017 = vcmp.gt.s32.totalorder %v1006, 10
      %vm1018 = vcmp.gt.s32.totalorder %v1006, 11
      %vm1019 = vcmp.gt.s32.totalorder %v1006, 12
      %vm1020 = vcmp.gt.s32.totalorder %v1006, 13
      %vm1021 = vcmp.gt.s32.totalorder %v1006, 14
      %vm1022 = vcmp.gt.s32.totalorder %v1006, 15
      %vm1023 = vcmp.gt.s32.totalorder %v1006, 16
      %vm1024 = vcmp.gt.s32.totalorder %v1006, 17
      %vm1025 = vmand %vm988, %vm1007
      %vm1026 = vmand %vm989, %vm1008
      %vm1027 = vmand %vm990, %vm1009
      %vm1028 = vmand %vm991, %vm1010
      %vm1029 = vmand %vm992, %vm1011
      %vm1030 = vmand %vm993, %vm1012
      %vm1031 = vmand %vm994, %vm1013
      %vm1032 = vmand %vm995, %vm1014
      %vm1033 = vmand %vm996, %vm1015
      %vm1034 = vmand %vm997, %vm1016
      %vm1035 = vmand %vm998, %vm1017
      %vm1036 = vmand %vm999, %vm1018
      %vm1037 = vmand %vm1000, %vm1019
      %vm1038 = vmand %vm1001, %vm1020
      %vm1039 = vmand %vm1002, %vm1021
      %vm1040 = vmand %vm1003, %vm1022
      %vm1041 = vmand %vm1004, %vm1023
      %vm1042 = vmand %vm1005, %vm1024
      %s1043 = smul.u32 %s957, 18
      %s1044 = smul.addr %s1043, 8
      %s1045 = scalar_lea.vmem [#allocation2], %s1044
      %v1046 = vld [vmem:[%s1045] sm:$0xff]
      %v1047 = vld [vmem:[%s1045 + $0x8] sm:$0xff]
      %v1048 = vld [vmem:[%s1045 + $0x10] sm:$0xff]
      %v1049 = vld [vmem:[%s1045 + $0x18] sm:$0xff]
      %v1050 = vld [vmem:[%s1045 + $0x20] sm:$0xff]
      %v1051 = vld [vmem:[%s1045 + $0x28] sm:$0xff]
      %v1052 = vld [vmem:[%s1045 + $0x30] sm:$0xff]
      %v1053 = vld [vmem:[%s1045 + $0x38] sm:$0xff]
      %v1054 = vld [vmem:[%s1045 + $0x40] sm:$0xff]
      %v1055 = vld [vmem:[%s1045 + $0x48] sm:$0xff]
      %v1056 = vld [vmem:[%s1045 + $0x50] sm:$0xff]
      %v1057 = vld [vmem:[%s1045 + $0x58] sm:$0xff]
      %v1058 = vld [vmem:[%s1045 + $0x60] sm:$0xff]
      %v1059 = vld [vmem:[%s1045 + $0x68] sm:$0xff]
      %v1060 = vld [vmem:[%s1045 + $0x70] sm:$0xff]
      %v1061 = vld [vmem:[%s1045 + $0x78] sm:$0xff]
      %v1062 = vld [vmem:[%s1045 + $0x80] sm:$0xff]
      %v1063 = vld [vmem:[%s1045 + $0x88] sm:$0xff]
      %v1064 = vsel %vm1025, 1, 0
      %v1065 = vsel %vm1026, 1, 0
      %v1066 = vsel %vm1027, 1, 0
      %v1067 = vsel %vm1028, 1, 0
      %v1068 = vsel %vm1029, 1, 0
      %v1069 = vsel %vm1030, 1, 0
      %v1070 = vsel %vm1031, 1, 0
      %v1071 = vsel %vm1032, 1, 0
      %v1072 = vsel %vm1033, 1, 0
      %v1073 = vsel %vm1034, 1, 0
      %v1074 = vsel %vm1035, 1, 0
      %v1075 = vsel %vm1036, 1, 0
      %v1076 = vsel %vm1037, 1, 0
      %v1077 = vsel %vm1038, 1, 0
      %v1078 = vsel %vm1039, 1, 0
      %v1079 = vsel %vm1040, 1, 0
      %v1080 = vsel %vm1041, 1, 0
      %v1081 = vsel %vm1042, 1, 0
      %vm1082 = vcmp.eq.s32.totalorder %v1064, 1
      %vm1083 = vcmp.eq.s32.totalorder %v1065, 1
      %vm1084 = vcmp.eq.s32.totalorder %v1066, 1
      %vm1085 = vcmp.eq.s32.totalorder %v1067, 1
      %vm1086 = vcmp.eq.s32.totalorder %v1068, 1
      %vm1087 = vcmp.eq.s32.totalorder %v1069, 1
      %vm1088 = vcmp.eq.s32.totalorder %v1070, 1
      %vm1089 = vcmp.eq.s32.totalorder %v1071, 1
      %vm1090 = vcmp.eq.s32.totalorder %v1072, 1
      %vm1091 = vcmp.eq.s32.totalorder %v1073, 1
      %vm1092 = vcmp.eq.s32.totalorder %v1074, 1
      %vm1093 = vcmp.eq.s32.totalorder %v1075, 1
      %vm1094 = vcmp.eq.s32.totalorder %v1076, 1
      %vm1095 = vcmp.eq.s32.totalorder %v1077, 1
      %vm1096 = vcmp.eq.s32.totalorder %v1078, 1
      %vm1097 = vcmp.eq.s32.totalorder %v1079, 1
      %vm1098 = vcmp.eq.s32.totalorder %v1080, 1
      %vm1099 = vcmp.eq.s32.totalorder %v1081, 1
      %v1100 = vsel %vm1082, %v1046, 0
      %v1101 = vsel %vm1083, %v1047, 0
      %v1102 = vsel %vm1084, %v1048, 0
      %v1103 = vsel %vm1085, %v1049, 0
      %v1104 = vsel %vm1086, %v1050, 0
      %v1105 = vsel %vm1087, %v1051, 0
      %v1106 = vsel %vm1088, %v1052, 0
      %v1107 = vsel %vm1089, %v1053, 0
      %v1108 = vsel %vm1090, %v1054, 0
      %v1109 = vsel %vm1091, %v1055, 0
      %v1110 = vsel %vm1092, %v1056, 0
      %v1111 = vsel %vm1093, %v1057, 0
      %v1112 = vsel %vm1094, %v1058, 0
      %v1113 = vsel %vm1095, %v1059, 0
      %v1114 = vsel %vm1096, %v1060, 0
      %v1115 = vsel %vm1097, %v1061, 0
      %v1116 = vsel %vm1098, %v1062, 0
      %v1117 = vsel %vm1099, %v1063, 0
      %v1119 = vshrl.u32 %v1100, 16
      %v1121 = vrot.slane %v1119, 7
      %v1122 = vshll.u32 %v1100, 16
      %v1124 = vor.u32 %v1121, %v1122
      %v1126 = vshrl.u32 %v1101, 16
      %v1128 = vrot.slane %v1126, 7
      %v1129 = vshll.u32 %v1101, 16
      %v1131 = vor.u32 %v1128, %v1129
      %v1133 = vshrl.u32 %v1102, 16
      %v1135 = vrot.slane %v1133, 7
      %v1136 = vshll.u32 %v1102, 16
      %v1138 = vor.u32 %v1135, %v1136
      %v1140 = vshrl.u32 %v1103, 16
      %v1142 = vrot.slane %v1140, 7
      %v1143 = vshll.u32 %v1103, 16
      %v1145 = vor.u32 %v1142, %v1143
      %v1147 = vshrl.u32 %v1104, 16
      %v1149 = vrot.slane %v1147, 7
      %v1150 = vshll.u32 %v1104, 16
      %v1152 = vor.u32 %v1149, %v1150
      %v1154 = vshrl.u32 %v1105, 16
      %v1156 = vrot.slane %v1154, 7
      %v1157 = vshll.u32 %v1105, 16
      %v1159 = vor.u32 %v1156, %v1157
      %v1161 = vshrl.u32 %v1106, 16
      %v1163 = vrot.slane %v1161, 7
      %v1164 = vshll.u32 %v1106, 16
      %v1166 = vor.u32 %v1163, %v1164
      %v1168 = vshrl.u32 %v1107, 16
      %v1170 = vrot.slane %v1168, 7
      %v1171 = vshll.u32 %v1107, 16
      %v1173 = vor.u32 %v1170, %v1171
      %v1175 = vshrl.u32 %v1108, 16
      %v1177 = vrot.slane %v1175, 7
      %v1178 = vshll.u32 %v1108, 16
      %v1180 = vor.u32 %v1177, %v1178
      %v1182 = vshrl.u32 %v1109, 16
      %v1184 = vrot.slane %v1182, 7
      %v1185 = vshll.u32 %v1109, 16
      %v1187 = vor.u32 %v1184, %v1185
      %v1189 = vshrl.u32 %v1110, 16
      %v1191 = vrot.slane %v1189, 7
      %v1192 = vshll.u32 %v1110, 16
      %v1194 = vor.u32 %v1191, %v1192
      %v1196 = vshrl.u32 %v1111, 16
      %v1198 = vrot.slane %v1196, 7
      %v1199 = vshll.u32 %v1111, 16
      %v1201 = vor.u32 %v1198, %v1199
      %v1203 = vshrl.u32 %v1112, 16
      %v1205 = vrot.slane %v1203, 7
      %v1206 = vshll.u32 %v1112, 16
      %v1208 = vor.u32 %v1205, %v1206
      %v1210 = vshrl.u32 %v1113, 16
      %v1212 = vrot.slane %v1210, 7
      %v1213 = vshll.u32 %v1113, 16
      %v1215 = vor.u32 %v1212, %v1213
      %v1217 = vshrl.u32 %v1114, 16
      %v1219 = vrot.slane %v1217, 7
      %v1220 = vshll.u32 %v1114, 16
      %v1222 = vor.u32 %v1219, %v1220
      %v1224 = vshrl.u32 %v1115, 16
      %v1226 = vrot.slane %v1224, 7
      %v1227 = vshll.u32 %v1115, 16
      %v1229 = vor.u32 %v1226, %v1227
      %v1231 = vshrl.u32 %v1116, 16
      %v1233 = vrot.slane %v1231, 7
      %v1234 = vshll.u32 %v1116, 16
      %v1236 = vor.u32 %v1233, %v1234
      %v1238 = vshrl.u32 %v1117, 16
      %v1240 = vrot.slane %v1238, 7
      %v1241 = vshll.u32 %v1117, 16
      %v1243 = vor.u32 %v1240, %v1241
      %vm1262 = vcmask 1040384
      %vm1263 = vsmask.f32 256
      %vm1264 = vmand %vm1262, %vm1263
      %v1265 = vsel %vm1264, 0, %v1124
      %v1266 = vsel %vm1264, 0, %v1131
      %v1267 = vsel %vm1264, 0, %v1138
      %v1268 = vsel %vm1264, 0, %v1145
      %v1269 = vsel %vm1264, 0, %v1152
      %v1270 = vsel %vm1264, 0, %v1159
      %v1271 = vsel %vm1264, 0, %v1166
      %v1272 = vsel %vm1264, 0, %v1173
      %v1273 = vsel %vm1264, 0, %v1180
      %v1274 = vsel %vm1264, 0, %v1187
      %v1275 = vsel %vm1264, 0, %v1194
      %v1276 = vsel %vm1264, 0, %v1201
      %v1277 = vsel %vm1264, 0, %v1208
      %v1278 = vsel %vm1264, 0, %v1215
      %v1279 = vsel %vm1264, 0, %v1222
      %v1280 = vsel %vm1264, 0, %v1229
      %v1281 = vsel %vm1264, 0, %v1236
      %v1282 = vsel %vm1264, 0, %v1243
      %v1283 = vrot.slane %v1122, 1
      %v1284 = vor.u32 %v1119, %v1283
      %v1285 = vrot.slane %v1129, 1
      %v1286 = vor.u32 %v1126, %v1285
      %v1287 = vrot.slane %v1136, 1
      %v1288 = vor.u32 %v1133, %v1287
      %v1289 = vrot.slane %v1143, 1
      %v1290 = vor.u32 %v1140, %v1289
      %v1291 = vrot.slane %v1150, 1
      %v1292 = vor.u32 %v1147, %v1291
      %v1293 = vrot.slane %v1157, 1
      %v1294 = vor.u32 %v1154, %v1293
      %v1295 = vrot.slane %v1164, 1
      %v1296 = vor.u32 %v1161, %v1295
      %v1297 = vrot.slane %v1171, 1
      %v1298 = vor.u32 %v1168, %v1297
      %v1299 = vrot.slane %v1178, 1
      %v1300 = vor.u32 %v1175, %v1299
      %v1301 = vrot.slane %v1185, 1
      %v1302 = vor.u32 %v1182, %v1301
      %v1303 = vrot.slane %v1192, 1
      %v1304 = vor.u32 %v1189, %v1303
      %v1305 = vrot.slane %v1199, 1
      %v1306 = vor.u32 %v1196, %v1305
      %v1307 = vrot.slane %v1206, 1
      %v1308 = vor.u32 %v1203, %v1307
      %v1309 = vrot.slane %v1213, 1
      %v1310 = vor.u32 %v1210, %v1309
      %v1311 = vrot.slane %v1220, 1
      %v1312 = vor.u32 %v1217, %v1311
      %v1313 = vrot.slane %v1227, 1
      %v1314 = vor.u32 %v1224, %v1313
      %v1315 = vrot.slane %v1234, 1
      %v1316 = vor.u32 %v1231, %v1315
      %v1317 = vrot.slane %v1241, 1
      %v1318 = vor.u32 %v1238, %v1317
      %vm1337 = vcmask 1047552
      %vm1338 = vsmask.f32 7424
      %vm1339 = vmand %vm1337, %vm1338
      %v1340 = vsel %vm1339, %v1284, 0
      %v1341 = vsel %vm1339, %v1286, 0
      %v1342 = vsel %vm1339, %v1288, 0
      %v1343 = vsel %vm1339, %v1290, 0
      %v1344 = vsel %vm1339, %v1292, 0
      %v1345 = vsel %vm1339, %v1294, 0
      %v1346 = vsel %vm1339, %v1296, 0
      %v1347 = vsel %vm1339, %v1298, 0
      %v1348 = vsel %vm1339, %v1300, 0
      %v1349 = vsel %vm1339, %v1302, 0
      %v1350 = vsel %vm1339, %v1304, 0
      %v1351 = vsel %vm1339, %v1306, 0
      %v1352 = vsel %vm1339, %v1308, 0
      %v1353 = vsel %vm1339, %v1310, 0
      %v1354 = vsel %vm1339, %v1312, 0
      %v1355 = vsel %vm1339, %v1314, 0
      %v1356 = vsel %vm1339, %v1316, 0
      %v1357 = vsel %vm1339, %v1318, 0
      %v1358 = vld [vmem:[%s2] sm:$0xf]
      %v1359 = vld [vmem:[%s2 + $0x4] sm:$0xf]
      %v1360 = vld [vmem:[%s2 + $0x8] sm:$0xf]
      %v1361 = vld [vmem:[%s2 + $0xc] sm:$0xf]
      %v1362 = vld [vmem:[%s2 + $0x10] sm:$0xf]
      %v1363 = vld [vmem:[%s2 + $0x14] sm:$0xf]
      %v1364 = vld [vmem:[%s2 + $0x18] sm:$0xf]
      %v1365 = vld [vmem:[%s2 + $0x1c] sm:$0xf]
      %v1366 = vld [vmem:[%s2 + $0x20] sm:$0xf]
      %v1367 = vld [vmem:[%s2 + $0x24] sm:$0xf]
      %v1368 = vld [vmem:[%s2 + $0x28] sm:$0xf]
      %v1369 = vld [vmem:[%s2 + $0x2c] sm:$0xf]
      %v1370 = vld [vmem:[%s2 + $0x30] sm:$0xf]
      %v1371 = vld [vmem:[%s2 + $0x34] sm:$0xf]
      %v1372 = vld [vmem:[%s2 + $0x38] sm:$0xf]
      %v1373 = vld [vmem:[%s2 + $0x3c] sm:$0xf]
      %v1374 = vld [vmem:[%s2 + $0x40] sm:$0xf]
      %v1375 = vld [vmem:[%s2 + $0x44] sm:$0xf]
      %v1376 = vld [vmem:[%s2 + $0x48] sm:$0xf]
      %v1377 = vld [vmem:[%s2 + $0x4c] sm:$0xf]
      %v1378 = vld [vmem:[%s2 + $0x50] sm:$0xf]
      %v1379 = vld [vmem:[%s2 + $0x54] sm:$0xf]
      %v1380 = vld [vmem:[%s2 + $0x58] sm:$0xf]
      %v1381 = vld [vmem:[%s2 + $0x5c] sm:$0xf]
      %v1382 = vld [vmem:[%s2 + $0x60] sm:$0xf]
      %v1383 = vld [vmem:[%s2 + $0x64] sm:$0xf]
      %v1384 = vld [vmem:[%s2 + $0x68] sm:$0xf]
      %v1385 = vld [vmem:[%s2 + $0x6c] sm:$0xf]
      %v1386 = vld [vmem:[%s2 + $0x70] sm:$0xf]
      %v1387 = vld [vmem:[%s2 + $0x74] sm:$0xf]
      %v1388 = vld [vmem:[%s2 + $0x78] sm:$0xf]
      %v1389 = vld [vmem:[%s2 + $0x7c] sm:$0xf]
      %v1390 = vld [vmem:[%s2 + $0x80] sm:$0xf]
      %v1391 = vld [vmem:[%s2 + $0x84] sm:$0xf]
      %v1392 = vld [vmem:[%s2 + $0x88] sm:$0xf]
      %v1393 = vld [vmem:[%s2 + $0x8c] sm:$0xf]
      %v1394 = vld [vmem:[%s2 + $0x90] sm:$0xf]
      %v1395 = vld [vmem:[%s2 + $0x94] sm:$0xf]
      %v1396 = vld [vmem:[%s2 + $0x98] sm:$0xf]
      %v1397 = vld [vmem:[%s2 + $0x9c] sm:$0xf]
      %v1398 = vld [vmem:[%s2 + $0xa0] sm:$0xf]
      %v1399 = vld [vmem:[%s2 + $0xa4] sm:$0xf]
      %v1400 = vld [vmem:[%s2 + $0xa8] sm:$0xf]
      %v1401 = vld [vmem:[%s2 + $0xac] sm:$0xf]
      %v1402 = vld [vmem:[%s2 + $0xb0] sm:$0xf]
      %v1403 = vld [vmem:[%s2 + $0xb4] sm:$0xf]
      %v1404 = vld [vmem:[%s2 + $0xb8] sm:$0xf]
      %v1405 = vld [vmem:[%s2 + $0xbc] sm:$0xf]
      %v1406 = vld [vmem:[%s2 + $0xc0] sm:$0xf]
      %v1407 = vld [vmem:[%s2 + $0xc4] sm:$0xf]
      %v1408 = vld [vmem:[%s2 + $0xc8] sm:$0xf]
      %v1409 = vld [vmem:[%s2 + $0xcc] sm:$0xf]
      %v1410 = vld [vmem:[%s2 + $0xd0] sm:$0xf]
      %v1411 = vld [vmem:[%s2 + $0xd4] sm:$0xf]
      %v1412 = vld [vmem:[%s2 + $0xd8] sm:$0xf]
      %v1413 = vld [vmem:[%s2 + $0xdc] sm:$0xf]
      %v1414 = vld [vmem:[%s2 + $0xe0] sm:$0xf]
      %v1415 = vld [vmem:[%s2 + $0xe4] sm:$0xf]
      %v1416 = vld [vmem:[%s2 + $0xe8] sm:$0xf]
      %v1417 = vld [vmem:[%s2 + $0xec] sm:$0xf]
      %v1418 = vld [vmem:[%s2 + $0xf0] sm:$0xf]
      %v1419 = vld [vmem:[%s2 + $0xf4] sm:$0xf]
      %v1420 = vld [vmem:[%s2 + $0xf8] sm:$0xf]
      %v1421 = vld [vmem:[%s2 + $0xfc] sm:$0xf]
      %v1422 = vld [vmem:[%s2 + $0x100] sm:$0xf]
      %v1423 = vld [vmem:[%s2 + $0x104] sm:$0xf]
      %v1424 = vld [vmem:[%s2 + $0x108] sm:$0xf]
      %v1425 = vld [vmem:[%s2 + $0x10c] sm:$0xf]
      %v1426 = vld [vmem:[%s2 + $0x110] sm:$0xf]
      %v1427 = vld [vmem:[%s2 + $0x114] sm:$0xf]
      %v1428 = vld [vmem:[%s2 + $0x118] sm:$0xf]
      %v1429 = vld [vmem:[%s2 + $0x11c] sm:$0xf]
      %v1430 = vld [vmem:[%s2 + $0x120] sm:$0xf]
      %v1431 = vld [vmem:[%s2 + $0x124] sm:$0xf]
      %v1432 = vld [vmem:[%s2 + $0x128] sm:$0xf]
      %v1433 = vld [vmem:[%s2 + $0x12c] sm:$0xf]
      %v1434 = vld [vmem:[%s2 + $0x130] sm:$0xf]
      %v1435 = vld [vmem:[%s2 + $0x134] sm:$0xf]
      %v1436 = vld [vmem:[%s2 + $0x138] sm:$0xf]
      %v1437 = vld [vmem:[%s2 + $0x13c] sm:$0xf]
      %v1438 = vld [vmem:[%s2 + $0x140] sm:$0xf]
      %v1439 = vld [vmem:[%s2 + $0x144] sm:$0xf]
      %v1440 = vld [vmem:[%s2 + $0x148] sm:$0xf]
      %v1441 = vld [vmem:[%s2 + $0x14c] sm:$0xf]
      %v1442 = vld [vmem:[%s2 + $0x150] sm:$0xf]
      %v1443 = vld [vmem:[%s2 + $0x154] sm:$0xf]
      %v1444 = vld [vmem:[%s2 + $0x158] sm:$0xf]
      %v1445 = vld [vmem:[%s2 + $0x15c] sm:$0xf]
      %v1446 = vld [vmem:[%s2 + $0x160] sm:$0xf]
      %v1447 = vld [vmem:[%s2 + $0x164] sm:$0xf]
      %v1448 = vld [vmem:[%s2 + $0x168] sm:$0xf]
      %v1449 = vld [vmem:[%s2 + $0x16c] sm:$0xf]
      %v1450 = vld [vmem:[%s2 + $0x170] sm:$0xf]
      %v1451 = vld [vmem:[%s2 + $0x174] sm:$0xf]
      %v1452 = vld [vmem:[%s2 + $0x178] sm:$0xf]
      %v1453 = vld [vmem:[%s2 + $0x17c] sm:$0xf]
      %v1454 = vld [vmem:[%s2 + $0x180] sm:$0xf]
      %v1455 = vld [vmem:[%s2 + $0x184] sm:$0xf]
      %v1456 = vld [vmem:[%s2 + $0x188] sm:$0xf]
      %v1457 = vld [vmem:[%s2 + $0x18c] sm:$0xf]
      %v1458 = vld [vmem:[%s2 + $0x190] sm:$0xf]
      %v1459 = vld [vmem:[%s2 + $0x194] sm:$0xf]
      %v1460 = vld [vmem:[%s2 + $0x198] sm:$0xf]
      %v1461 = vld [vmem:[%s2 + $0x19c] sm:$0xf]
      %v1462 = vld [vmem:[%s2 + $0x1a0] sm:$0xf]
      %v1463 = vld [vmem:[%s2 + $0x1a4] sm:$0xf]
      %v1464 = vld [vmem:[%s2 + $0x1a8] sm:$0xf]
      %v1465 = vld [vmem:[%s2 + $0x1ac] sm:$0xf]
      %v1466 = vld [vmem:[%s2 + $0x1b0] sm:$0xf]
      %v1467 = vld [vmem:[%s2 + $0x1b4] sm:$0xf]
      %v1468 = vld [vmem:[%s2 + $0x1b8] sm:$0xf]
      %v1469 = vld [vmem:[%s2 + $0x1bc] sm:$0xf]
      %v1470 = vld [vmem:[%s2 + $0x1c0] sm:$0xf]
      %v1471 = vld [vmem:[%s2 + $0x1c4] sm:$0xf]
      %v1472 = vld [vmem:[%s2 + $0x1c8] sm:$0xf]
      %v1473 = vld [vmem:[%s2 + $0x1cc] sm:$0xf]
      %v1474 = vld [vmem:[%s2 + $0x1d0] sm:$0xf]
      %v1475 = vld [vmem:[%s2 + $0x1d4] sm:$0xf]
      %v1476 = vld [vmem:[%s2 + $0x1d8] sm:$0xf]
      %v1477 = vld [vmem:[%s2 + $0x1dc] sm:$0xf]
      %v1478 = vld [vmem:[%s2 + $0x1e0] sm:$0xf]
      %v1479 = vld [vmem:[%s2 + $0x1e4] sm:$0xf]
      %v1480 = vld [vmem:[%s2 + $0x1e8] sm:$0xf]
      %v1481 = vld [vmem:[%s2 + $0x1ec] sm:$0xf]
      %v1482 = vld [vmem:[%s2 + $0x1f0] sm:$0xf]
      %v1483 = vld [vmem:[%s2 + $0x1f4] sm:$0xf]
      %v1484 = vld [vmem:[%s2 + $0x1f8] sm:$0xf]
      %v1485 = vld [vmem:[%s2 + $0x1fc] sm:$0xf]
      %v1486 = vld [vmem:[%s2 + $0x200] sm:$0xf]
      %v1487 = vld [vmem:[%s2 + $0x204] sm:$0xf]
      %v1488 = vld [vmem:[%s2 + $0x208] sm:$0xf]
      %v1489 = vld [vmem:[%s2 + $0x20c] sm:$0xf]
      %v1490 = vld [vmem:[%s2 + $0x210] sm:$0xf]
      %v1491 = vld [vmem:[%s2 + $0x214] sm:$0xf]
      %v1492 = vld [vmem:[%s2 + $0x218] sm:$0xf]
      %v1493 = vld [vmem:[%s2 + $0x21c] sm:$0xf]
      %v1494 = vld [vmem:[%s2 + $0x220] sm:$0xf]
      %v1495 = vld [vmem:[%s2 + $0x224] sm:$0xf]
      %v1496 = vld [vmem:[%s2 + $0x228] sm:$0xf]
      %v1497 = vld [vmem:[%s2 + $0x22c] sm:$0xf]
      %v1498 = vld [vmem:[%s2 + $0x230] sm:$0xf]
      %v1499 = vld [vmem:[%s2 + $0x234] sm:$0xf]
      %v1500 = vld [vmem:[%s2 + $0x238] sm:$0xf]
      %v1501 = vld [vmem:[%s2 + $0x23c] sm:$0xf]
      %s1502 = smul.addr %s1043, 8
      %s1503 = scalar_lea.vmem [#allocation3], %s1502
      %v1504 = vld [vmem:[%s1503] sm:$0xff]
      %v1505 = vld [vmem:[%s1503 + $0x8] sm:$0xff]
      %v1506 = vld [vmem:[%s1503 + $0x10] sm:$0xff]
      %v1507 = vld [vmem:[%s1503 + $0x18] sm:$0xff]
      %v1508 = vld [vmem:[%s1503 + $0x20] sm:$0xff]
      %v1509 = vld [vmem:[%s1503 + $0x28] sm:$0xff]
      %v1510 = vld [vmem:[%s1503 + $0x30] sm:$0xff]
      %v1511 = vld [vmem:[%s1503 + $0x38] sm:$0xff]
      %v1512 = vld [vmem:[%s1503 + $0x40] sm:$0xff]
      %v1513 = vld [vmem:[%s1503 + $0x48] sm:$0xff]
      %v1514 = vld [vmem:[%s1503 + $0x50] sm:$0xff]
      %v1515 = vld [vmem:[%s1503 + $0x58] sm:$0xff]
      %v1516 = vld [vmem:[%s1503 + $0x60] sm:$0xff]
      %v1517 = vld [vmem:[%s1503 + $0x68] sm:$0xff]
      %v1518 = vld [vmem:[%s1503 + $0x70] sm:$0xff]
      %v1519 = vld [vmem:[%s1503 + $0x78] sm:$0xff]
      %v1520 = vld [vmem:[%s1503 + $0x80] sm:$0xff]
      %v1521 = vld [vmem:[%s1503 + $0x88] sm:$0xff]
      %v1522 = vsel %vm1082, %v1504, 0
      %v1523 = vsel %vm1083, %v1505, 0
      %v1524 = vsel %vm1084, %v1506, 0
      %v1525 = vsel %vm1085, %v1507, 0
      %v1526 = vsel %vm1086, %v1508, 0
      %v1527 = vsel %vm1087, %v1509, 0
      %v1528 = vsel %vm1088, %v1510, 0
      %v1529 = vsel %vm1089, %v1511, 0
      %v1530 = vsel %vm1090, %v1512, 0
      %v1531 = vsel %vm1091, %v1513, 0
      %v1532 = vsel %vm1092, %v1514, 0
      %v1533 = vsel %vm1093, %v1515, 0
      %v1534 = vsel %vm1094, %v1516, 0
      %v1535 = vsel %vm1095, %v1517, 0
      %v1536 = vsel %vm1096, %v1518, 0
      %v1537 = vsel %vm1097, %v1519, 0
      %v1538 = vsel %vm1098, %v1520, 0
      %v1539 = vsel %vm1099, %v1521, 0
      %v1541 = vshrl.u32 %v1522, 16
      %v1543 = vrot.slane %v1541, 7
      %v1544 = vshll.u32 %v1522, 16
      %v1546 = vor.u32 %v1543, %v1544
      %v1548 = vshrl.u32 %v1523, 16
      %v1550 = vrot.slane %v1548, 7
      %v1551 = vshll.u32 %v1523, 16
      %v1553 = vor.u32 %v1550, %v1551
      %v1555 = vshrl.u32 %v1524, 16
      %v1557 = vrot.slane %v1555, 7
      %v1558 = vshll.u32 %v1524, 16
      %v1560 = vor.u32 %v1557, %v1558
      %v1562 = vshrl.u32 %v1525, 16
      %v1564 = vrot.slane %v1562, 7
      %v1565 = vshll.u32 %v1525, 16
      %v1567 = vor.u32 %v1564, %v1565
      %v1569 = vshrl.u32 %v1526, 16
      %v1571 = vrot.slane %v1569, 7
      %v1572 = vshll.u32 %v1526, 16
      %v1574 = vor.u32 %v1571, %v1572
      %v1576 = vshrl.u32 %v1527, 16
      %v1578 = vrot.slane %v1576, 7
      %v1579 = vshll.u32 %v1527, 16
      %v1581 = vor.u32 %v1578, %v1579
      %v1583 = vshrl.u32 %v1528, 16
      %v1585 = vrot.slane %v1583, 7
      %v1586 = vshll.u32 %v1528, 16
      %v1588 = vor.u32 %v1585, %v1586
      %v1590 = vshrl.u32 %v1529, 16
      %v1592 = vrot.slane %v1590, 7
      %v1593 = vshll.u32 %v1529, 16
      %v1595 = vor.u32 %v1592, %v1593
      %v1597 = vshrl.u32 %v1530, 16
      %v1599 = vrot.slane %v1597, 7
      %v1600 = vshll.u32 %v1530, 16
      %v1602 = vor.u32 %v1599, %v1600
      %v1604 = vshrl.u32 %v1531, 16
      %v1606 = vrot.slane %v1604, 7
      %v1607 = vshll.u32 %v1531, 16
      %v1609 = vor.u32 %v1606, %v1607
      %v1611 = vshrl.u32 %v1532, 16
      %v1613 = vrot.slane %v1611, 7
      %v1614 = vshll.u32 %v1532, 16
      %v1616 = vor.u32 %v1613, %v1614
      %v1618 = vshrl.u32 %v1533, 16
      %v1620 = vrot.slane %v1618, 7
      %v1621 = vshll.u32 %v1533, 16
      %v1623 = vor.u32 %v1620, %v1621
      %v1625 = vshrl.u32 %v1534, 16
      %v1627 = vrot.slane %v1625, 7
      %v1628 = vshll.u32 %v1534, 16
      %v1630 = vor.u32 %v1627, %v1628
      %v1632 = vshrl.u32 %v1535, 16
      %v1634 = vrot.slane %v1632, 7
      %v1635 = vshll.u32 %v1535, 16
      %v1637 = vor.u32 %v1634, %v1635
      %v1639 = vshrl.u32 %v1536, 16
      %v1641 = vrot.slane %v1639, 7
      %v1642 = vshll.u32 %v1536, 16
      %v1644 = vor.u32 %v1641, %v1642
      %v1646 = vshrl.u32 %v1537, 16
      %v1648 = vrot.slane %v1646, 7
      %v1649 = vshll.u32 %v1537, 16
      %v1651 = vor.u32 %v1648, %v1649
      %v1653 = vshrl.u32 %v1538, 16
      %v1655 = vrot.slane %v1653, 7
      %v1656 = vshll.u32 %v1538, 16
      %v1658 = vor.u32 %v1655, %v1656
      %v1660 = vshrl.u32 %v1539, 16
      %v1662 = vrot.slane %v1660, 7
      %v1663 = vshll.u32 %v1539, 16
      %v1665 = vor.u32 %v1662, %v1663
      %v1684 = vsel %vm1264, 0, %v1546
      %v1685 = vsel %vm1264, 0, %v1553
      %v1686 = vsel %vm1264, 0, %v1560
      %v1687 = vsel %vm1264, 0, %v1567
      %v1688 = vsel %vm1264, 0, %v1574
      %v1689 = vsel %vm1264, 0, %v1581
      %v1690 = vsel %vm1264, 0, %v1588
      %v1691 = vsel %vm1264, 0, %v1595
      %v1692 = vsel %vm1264, 0, %v1602
      %v1693 = vsel %vm1264, 0, %v1609
      %v1694 = vsel %vm1264, 0, %v1616
      %v1695 = vsel %vm1264, 0, %v1623
      %v1696 = vsel %vm1264, 0, %v1630
      %v1697 = vsel %vm1264, 0, %v1637
      %v1698 = vsel %vm1264, 0, %v1644
      %v1699 = vsel %vm1264, 0, %v1651
      %v1700 = vsel %vm1264, 0, %v1658
      %v1701 = vsel %vm1264, 0, %v1665
      %v1702 = vrot.slane %v1544, 1
      %v1703 = vor.u32 %v1541, %v1702
      %v1704 = vrot.slane %v1551, 1
      %v1705 = vor.u32 %v1548, %v1704
      %v1706 = vrot.slane %v1558, 1
      %v1707 = vor.u32 %v1555, %v1706
      %v1708 = vrot.slane %v1565, 1
      %v1709 = vor.u32 %v1562, %v1708
      %v1710 = vrot.slane %v1572, 1
      %v1711 = vor.u32 %v1569, %v1710
      %v1712 = vrot.slane %v1579, 1
      %v1713 = vor.u32 %v1576, %v1712
      %v1714 = vrot.slane %v1586, 1
      %v1715 = vor.u32 %v1583, %v1714
      %v1716 = vrot.slane %v1593, 1
      %v1717 = vor.u32 %v1590, %v1716
      %v1718 = vrot.slane %v1600, 1
      %v1719 = vor.u32 %v1597, %v1718
      %v1720 = vrot.slane %v1607, 1
      %v1721 = vor.u32 %v1604, %v1720
      %v1722 = vrot.slane %v1614, 1
      %v1723 = vor.u32 %v1611, %v1722
      %v1724 = vrot.slane %v1621, 1
      %v1725 = vor.u32 %v1618, %v1724
      %v1726 = vrot.slane %v1628, 1
      %v1727 = vor.u32 %v1625, %v1726
      %v1728 = vrot.slane %v1635, 1
      %v1729 = vor.u32 %v1632, %v1728
      %v1730 = vrot.slane %v1642, 1
      %v1731 = vor.u32 %v1639, %v1730
      %v1732 = vrot.slane %v1649, 1
      %v1733 = vor.u32 %v1646, %v1732
      %v1734 = vrot.slane %v1656, 1
      %v1735 = vor.u32 %v1653, %v1734
      %v1736 = vrot.slane %v1663, 1
      %v1737 = vor.u32 %v1660, %v1736
      %v1756 = vsel %vm1339, %v1703, 0
      %v1757 = vsel %vm1339, %v1705, 0
      %v1758 = vsel %vm1339, %v1707, 0
      %v1759 = vsel %vm1339, %v1709, 0
      %v1760 = vsel %vm1339, %v1711, 0
      %v1761 = vsel %vm1339, %v1713, 0
      %v1762 = vsel %vm1339, %v1715, 0
      %v1763 = vsel %vm1339, %v1717, 0
      %v1764 = vsel %vm1339, %v1719, 0
      %v1765 = vsel %vm1339, %v1721, 0
      %v1766 = vsel %vm1339, %v1723, 0
      %v1767 = vsel %vm1339, %v1725, 0
      %v1768 = vsel %vm1339, %v1727, 0
      %v1769 = vsel %vm1339, %v1729, 0
      %v1770 = vsel %vm1339, %v1731, 0
      %v1771 = vsel %vm1339, %v1733, 0
      %v1772 = vsel %vm1339, %v1735, 0
      %v1773 = vsel %vm1339, %v1737, 0
      %v1774 = vld [vmem:[%s3] sm:$0xf]
      %v1775 = vld [vmem:[%s3 + $0x4] sm:$0xf]
      %v1776 = vld [vmem:[%s3 + $0x8] sm:$0xf]
      %v1777 = vld [vmem:[%s3 + $0xc] sm:$0xf]
      %v1778 = vld [vmem:[%s3 + $0x10] sm:$0xf]
      %v1779 = vld [vmem:[%s3 + $0x14] sm:$0xf]
      %v1780 = vld [vmem:[%s3 + $0x18] sm:$0xf]
      %v1781 = vld [vmem:[%s3 + $0x1c] sm:$0xf]
      %v1782 = vld [vmem:[%s3 + $0x20] sm:$0xf]
      %v1783 = vld [vmem:[%s3 + $0x24] sm:$0xf]
      %v1784 = vld [vmem:[%s3 + $0x28] sm:$0xf]
      %v1785 = vld [vmem:[%s3 + $0x2c] sm:$0xf]
      %v1786 = vld [vmem:[%s3 + $0x30] sm:$0xf]
      %v1787 = vld [vmem:[%s3 + $0x34] sm:$0xf]
      %v1788 = vld [vmem:[%s3 + $0x38] sm:$0xf]
      %v1789 = vld [vmem:[%s3 + $0x3c] sm:$0xf]
      %v1790 = vld [vmem:[%s3 + $0x40] sm:$0xf]
      %v1791 = vld [vmem:[%s3 + $0x44] sm:$0xf]
      %v1792 = vld [vmem:[%s3 + $0x48] sm:$0xf]
      %v1793 = vld [vmem:[%s3 + $0x4c] sm:$0xf]
      %v1794 = vld [vmem:[%s3 + $0x50] sm:$0xf]
      %v1795 = vld [vmem:[%s3 + $0x54] sm:$0xf]
      %v1796 = vld [vmem:[%s3 + $0x58] sm:$0xf]
      %v1797 = vld [vmem:[%s3 + $0x5c] sm:$0xf]
      %v1798 = vld [vmem:[%s3 + $0x60] sm:$0xf]
      %v1799 = vld [vmem:[%s3 + $0x64] sm:$0xf]
      %v1800 = vld [vmem:[%s3 + $0x68] sm:$0xf]
      %v1801 = vld [vmem:[%s3 + $0x6c] sm:$0xf]
      %v1802 = vld [vmem:[%s3 + $0x70] sm:$0xf]
      %v1803 = vld [vmem:[%s3 + $0x74] sm:$0xf]
      %v1804 = vld [vmem:[%s3 + $0x78] sm:$0xf]
      %v1805 = vld [vmem:[%s3 + $0x7c] sm:$0xf]
      %v1806 = vld [vmem:[%s3 + $0x80] sm:$0xf]
      %v1807 = vld [vmem:[%s3 + $0x84] sm:$0xf]
      %v1808 = vld [vmem:[%s3 + $0x88] sm:$0xf]
      %v1809 = vld [vmem:[%s3 + $0x8c] sm:$0xf]
      %v1810 = vld [vmem:[%s3 + $0x90] sm:$0xf]
      %v1811 = vld [vmem:[%s3 + $0x94] sm:$0xf]
      %v1812 = vld [vmem:[%s3 + $0x98] sm:$0xf]
      %v1813 = vld [vmem:[%s3 + $0x9c] sm:$0xf]
      %v1814 = vld [vmem:[%s3 + $0xa0] sm:$0xf]
      %v1815 = vld [vmem:[%s3 + $0xa4] sm:$0xf]
      %v1816 = vld [vmem:[%s3 + $0xa8] sm:$0xf]
      %v1817 = vld [vmem:[%s3 + $0xac] sm:$0xf]
      %v1818 = vld [vmem:[%s3 + $0xb0] sm:$0xf]
      %v1819 = vld [vmem:[%s3 + $0xb4] sm:$0xf]
      %v1820 = vld [vmem:[%s3 + $0xb8] sm:$0xf]
      %v1821 = vld [vmem:[%s3 + $0xbc] sm:$0xf]
      %v1822 = vld [vmem:[%s3 + $0xc0] sm:$0xf]
      %v1823 = vld [vmem:[%s3 + $0xc4] sm:$0xf]
      %v1824 = vld [vmem:[%s3 + $0xc8] sm:$0xf]
      %v1825 = vld [vmem:[%s3 + $0xcc] sm:$0xf]
      %v1826 = vld [vmem:[%s3 + $0xd0] sm:$0xf]
      %v1827 = vld [vmem:[%s3 + $0xd4] sm:$0xf]
      %v1828 = vld [vmem:[%s3 + $0xd8] sm:$0xf]
      %v1829 = vld [vmem:[%s3 + $0xdc] sm:$0xf]
      %v1830 = vld [vmem:[%s3 + $0xe0] sm:$0xf]
      %v1831 = vld [vmem:[%s3 + $0xe4] sm:$0xf]
      %v1832 = vld [vmem:[%s3 + $0xe8] sm:$0xf]
      %v1833 = vld [vmem:[%s3 + $0xec] sm:$0xf]
      %v1834 = vld [vmem:[%s3 + $0xf0] sm:$0xf]
      %v1835 = vld [vmem:[%s3 + $0xf4] sm:$0xf]
      %v1836 = vld [vmem:[%s3 + $0xf8] sm:$0xf]
      %v1837 = vld [vmem:[%s3 + $0xfc] sm:$0xf]
      %v1838 = vld [vmem:[%s3 + $0x100] sm:$0xf]
      %v1839 = vld [vmem:[%s3 + $0x104] sm:$0xf]
      %v1840 = vld [vmem:[%s3 + $0x108] sm:$0xf]
      %v1841 = vld [vmem:[%s3 + $0x10c] sm:$0xf]
      %v1842 = vld [vmem:[%s3 + $0x110] sm:$0xf]
      %v1843 = vld [vmem:[%s3 + $0x114] sm:$0xf]
      %v1844 = vld [vmem:[%s3 + $0x118] sm:$0xf]
      %v1845 = vld [vmem:[%s3 + $0x11c] sm:$0xf]
      %v1846 = vld [vmem:[%s3 + $0x120] sm:$0xf]
      %v1847 = vld [vmem:[%s3 + $0x124] sm:$0xf]
      %v1848 = vld [vmem:[%s3 + $0x128] sm:$0xf]
      %v1849 = vld [vmem:[%s3 + $0x12c] sm:$0xf]
      %v1850 = vld [vmem:[%s3 + $0x130] sm:$0xf]
      %v1851 = vld [vmem:[%s3 + $0x134] sm:$0xf]
      %v1852 = vld [vmem:[%s3 + $0x138] sm:$0xf]
      %v1853 = vld [vmem:[%s3 + $0x13c] sm:$0xf]
      %v1854 = vld [vmem:[%s3 + $0x140] sm:$0xf]
      %v1855 = vld [vmem:[%s3 + $0x144] sm:$0xf]
      %v1856 = vld [vmem:[%s3 + $0x148] sm:$0xf]
      %v1857 = vld [vmem:[%s3 + $0x14c] sm:$0xf]
      %v1858 = vld [vmem:[%s3 + $0x150] sm:$0xf]
      %v1859 = vld [vmem:[%s3 + $0x154] sm:$0xf]
      %v1860 = vld [vmem:[%s3 + $0x158] sm:$0xf]
      %v1861 = vld [vmem:[%s3 + $0x15c] sm:$0xf]
      %v1862 = vld [vmem:[%s3 + $0x160] sm:$0xf]
      %v1863 = vld [vmem:[%s3 + $0x164] sm:$0xf]
      %v1864 = vld [vmem:[%s3 + $0x168] sm:$0xf]
      %v1865 = vld [vmem:[%s3 + $0x16c] sm:$0xf]
      %v1866 = vld [vmem:[%s3 + $0x170] sm:$0xf]
      %v1867 = vld [vmem:[%s3 + $0x174] sm:$0xf]
      %v1868 = vld [vmem:[%s3 + $0x178] sm:$0xf]
      %v1869 = vld [vmem:[%s3 + $0x17c] sm:$0xf]
      %v1870 = vld [vmem:[%s3 + $0x180] sm:$0xf]
      %v1871 = vld [vmem:[%s3 + $0x184] sm:$0xf]
      %v1872 = vld [vmem:[%s3 + $0x188] sm:$0xf]
      %v1873 = vld [vmem:[%s3 + $0x18c] sm:$0xf]
      %v1874 = vld [vmem:[%s3 + $0x190] sm:$0xf]
      %v1875 = vld [vmem:[%s3 + $0x194] sm:$0xf]
      %v1876 = vld [vmem:[%s3 + $0x198] sm:$0xf]
      %v1877 = vld [vmem:[%s3 + $0x19c] sm:$0xf]
      %v1878 = vld [vmem:[%s3 + $0x1a0] sm:$0xf]
      %v1879 = vld [vmem:[%s3 + $0x1a4] sm:$0xf]
      %v1880 = vld [vmem:[%s3 + $0x1a8] sm:$0xf]
      %v1881 = vld [vmem:[%s3 + $0x1ac] sm:$0xf]
      %v1882 = vld [vmem:[%s3 + $0x1b0] sm:$0xf]
      %v1883 = vld [vmem:[%s3 + $0x1b4] sm:$0xf]
      %v1884 = vld [vmem:[%s3 + $0x1b8] sm:$0xf]
      %v1885 = vld [vmem:[%s3 + $0x1bc] sm:$0xf]
      %v1886 = vld [vmem:[%s3 + $0x1c0] sm:$0xf]
      %v1887 = vld [vmem:[%s3 + $0x1c4] sm:$0xf]
      %v1888 = vld [vmem:[%s3 + $0x1c8] sm:$0xf]
      %v1889 = vld [vmem:[%s3 + $0x1cc] sm:$0xf]
      %v1890 = vld [vmem:[%s3 + $0x1d0] sm:$0xf]
      %v1891 = vld [vmem:[%s3 + $0x1d4] sm:$0xf]
      %v1892 = vld [vmem:[%s3 + $0x1d8] sm:$0xf]
      %v1893 = vld [vmem:[%s3 + $0x1dc] sm:$0xf]
      %v1894 = vld [vmem:[%s3 + $0x1e0] sm:$0xf]
      %v1895 = vld [vmem:[%s3 + $0x1e4] sm:$0xf]
      %v1896 = vld [vmem:[%s3 + $0x1e8] sm:$0xf]
      %v1897 = vld [vmem:[%s3 + $0x1ec] sm:$0xf]
      %v1898 = vld [vmem:[%s3 + $0x1f0] sm:$0xf]
      %v1899 = vld [vmem:[%s3 + $0x1f4] sm:$0xf]
      %v1900 = vld [vmem:[%s3 + $0x1f8] sm:$0xf]
      %v1901 = vld [vmem:[%s3 + $0x1fc] sm:$0xf]
      %v1902 = vld [vmem:[%s3 + $0x200] sm:$0xf]
      %v1903 = vld [vmem:[%s3 + $0x204] sm:$0xf]
      %v1904 = vld [vmem:[%s3 + $0x208] sm:$0xf]
      %v1905 = vld [vmem:[%s3 + $0x20c] sm:$0xf]
      %v1906 = vld [vmem:[%s3 + $0x210] sm:$0xf]
      %v1907 = vld [vmem:[%s3 + $0x214] sm:$0xf]
      %v1908 = vld [vmem:[%s3 + $0x218] sm:$0xf]
      %v1909 = vld [vmem:[%s3 + $0x21c] sm:$0xf]
      %v1910 = vld [vmem:[%s3 + $0x220] sm:$0xf]
      %v1911 = vld [vmem:[%s3 + $0x224] sm:$0xf]
      %v1912 = vld [vmem:[%s3 + $0x228] sm:$0xf]
      %v1913 = vld [vmem:[%s3 + $0x22c] sm:$0xf]
      %v1914 = vld [vmem:[%s3 + $0x230] sm:$0xf]
      %v1915 = vld [vmem:[%s3 + $0x234] sm:$0xf]
      %v1916 = vld [vmem:[%s3 + $0x238] sm:$0xf]
      %v1917 = vld [vmem:[%s3 + $0x23c] sm:$0xf]
      %v2062 = vunpack.c.l.b16 %v1774
      %v2063 = vunpack.c.l.b16 %v1775
      %v2064 = vunpack.c.l.b16 %v1776
      %v2065 = vunpack.c.l.b16 %v1777
      %v2066 = vunpack.c.l.b16 %v1778
      %v2067 = vunpack.c.l.b16 %v1779
      %v2068 = vunpack.c.l.b16 %v1780
      %v2069 = vunpack.c.l.b16 %v1781
      %v2070 = vunpack.c.l.b16 %v1782
      %v2071 = vunpack.c.l.b16 %v1783
      %v2072 = vunpack.c.l.b16 %v1784
      %v2073 = vunpack.c.l.b16 %v1785
      %v2074 = vunpack.c.l.b16 %v1786
      %v2075 = vunpack.c.l.b16 %v1787
      %v2076 = vunpack.c.l.b16 %v1788
      %v2077 = vunpack.c.l.b16 %v1789
      %v2078 = vunpack.c.l.b16 %v1790
      %v2079 = vunpack.c.l.b16 %v1791
      %v2080 = vunpack.c.l.b16 %v1792
      %v2081 = vunpack.c.l.b16 %v1793
      %v2082 = vunpack.c.l.b16 %v1794
      %v2083 = vunpack.c.l.b16 %v1795
      %v2084 = vunpack.c.l.b16 %v1796
      %v2085 = vunpack.c.l.b16 %v1797
      %v2086 = vunpack.c.l.b16 %v1798
      %v2087 = vunpack.c.l.b16 %v1799
      %v2088 = vunpack.c.l.b16 %v1800
      %v2089 = vunpack.c.l.b16 %v1801
      %v2090 = vunpack.c.l.b16 %v1802
      %v2091 = vunpack.c.l.b16 %v1803
      %v2092 = vunpack.c.l.b16 %v1804
      %v2093 = vunpack.c.l.b16 %v1805
      %v2094 = vunpack.c.l.b16 %v1806
      %v2095 = vunpack.c.l.b16 %v1807
      %v2096 = vunpack.c.l.b16 %v1808
      %v2097 = vunpack.c.l.b16 %v1809
      %v2098 = vunpack.c.l.b16 %v1810
      %v2099 = vunpack.c.l.b16 %v1811
      %v2100 = vunpack.c.l.b16 %v1812
      %v2101 = vunpack.c.l.b16 %v1813
      %v2102 = vunpack.c.l.b16 %v1814
      %v2103 = vunpack.c.l.b16 %v1815
      %v2104 = vunpack.c.l.b16 %v1816
      %v2105 = vunpack.c.l.b16 %v1817
      %v2106 = vunpack.c.l.b16 %v1818
      %v2107 = vunpack.c.l.b16 %v1819
      %v2108 = vunpack.c.l.b16 %v1820
      %v2109 = vunpack.c.l.b16 %v1821
      %v2110 = vunpack.c.l.b16 %v1822
      %v2111 = vunpack.c.l.b16 %v1823
      %v2112 = vunpack.c.l.b16 %v1824
      %v2113 = vunpack.c.l.b16 %v1825
      %v2114 = vunpack.c.l.b16 %v1826
      %v2115 = vunpack.c.l.b16 %v1827
      %v2116 = vunpack.c.l.b16 %v1828
      %v2117 = vunpack.c.l.b16 %v1829
      %v2118 = vunpack.c.l.b16 %v1830
      %v2119 = vunpack.c.l.b16 %v1831
      %v2120 = vunpack.c.l.b16 %v1832
      %v2121 = vunpack.c.l.b16 %v1833
      %v2122 = vunpack.c.l.b16 %v1834
      %v2123 = vunpack.c.l.b16 %v1835
      %v2124 = vunpack.c.l.b16 %v1836
      %v2125 = vunpack.c.l.b16 %v1837
      %v2126 = vunpack.c.l.b16 %v1838
      %v2127 = vunpack.c.l.b16 %v1839
      %v2128 = vunpack.c.l.b16 %v1840
      %v2129 = vunpack.c.l.b16 %v1841
      %v2130 = vunpack.c.l.b16 %v1842
      %v2131 = vunpack.c.l.b16 %v1843
      %v2132 = vunpack.c.l.b16 %v1844
      %v2133 = vunpack.c.l.b16 %v1845
      %v2134 = vunpack.c.l.b16 %v1846
      %v2135 = vunpack.c.l.b16 %v1847
      %v2136 = vunpack.c.l.b16 %v1848
      %v2137 = vunpack.c.l.b16 %v1849
      %v2138 = vunpack.c.l.b16 %v1850
      %v2139 = vunpack.c.l.b16 %v1851
      %v2140 = vunpack.c.l.b16 %v1852
      %v2141 = vunpack.c.l.b16 %v1853
      %v2142 = vunpack.c.l.b16 %v1854
      %v2143 = vunpack.c.l.b16 %v1855
      %v2144 = vunpack.c.l.b16 %v1856
      %v2145 = vunpack.c.l.b16 %v1857
      %v2146 = vunpack.c.l.b16 %v1858
      %v2147 = vunpack.c.l.b16 %v1859
      %v2148 = vunpack.c.l.b16 %v1860
      %v2149 = vunpack.c.l.b16 %v1861
      %v2150 = vunpack.c.l.b16 %v1862
      %v2151 = vunpack.c.l.b16 %v1863
      %v2152 = vunpack.c.l.b16 %v1864
      %v2153 = vunpack.c.l.b16 %v1865
      %v2154 = vunpack.c.l.b16 %v1866
      %v2155 = vunpack.c.l.b16 %v1867
      %v2156 = vunpack.c.l.b16 %v1868
      %v2157 = vunpack.c.l.b16 %v1869
      %v2158 = vunpack.c.l.b16 %v1870
      %v2159 = vunpack.c.l.b16 %v1871
      %v2160 = vunpack.c.l.b16 %v1872
      %v2161 = vunpack.c.l.b16 %v1873
      %v2162 = vunpack.c.l.b16 %v1874
      %v2163 = vunpack.c.l.b16 %v1875
      %v2164 = vunpack.c.l.b16 %v1876
      %v2165 = vunpack.c.l.b16 %v1877
      %v2166 = vunpack.c.l.b16 %v1878
      %v2167 = vunpack.c.l.b16 %v1879
      %v2168 = vunpack.c.l.b16 %v1880
      %v2169 = vunpack.c.l.b16 %v1881
      %v2170 = vunpack.c.l.b16 %v1882
      %v2171 = vunpack.c.l.b16 %v1883
      %v2172 = vunpack.c.l.b16 %v1884
      %v2173 = vunpack.c.l.b16 %v1885
      %v2174 = vunpack.c.l.b16 %v1886
      %v2175 = vunpack.c.l.b16 %v1887
      %v2176 = vunpack.c.l.b16 %v1888
      %v2177 = vunpack.c.l.b16 %v1889
      %v2178 = vunpack.c.l.b16 %v1890
      %v2179 = vunpack.c.l.b16 %v1891
      %v2180 = vunpack.c.l.b16 %v1892
      %v2181 = vunpack.c.l.b16 %v1893
      %v2182 = vunpack.c.l.b16 %v1894
      %v2183 = vunpack.c.l.b16 %v1895
      %v2184 = vunpack.c.l.b16 %v1896
      %v2185 = vunpack.c.l.b16 %v1897
      %v2186 = vunpack.c.l.b16 %v1898
      %v2187 = vunpack.c.l.b16 %v1899
      %v2188 = vunpack.c.l.b16 %v1900
      %v2189 = vunpack.c.l.b16 %v1901
      %v2190 = vunpack.c.l.b16 %v1902
      %v2191 = vunpack.c.l.b16 %v1903
      %v2192 = vunpack.c.l.b16 %v1904
      %v2193 = vunpack.c.l.b16 %v1905
      %v2194 = vunpack.c.l.b16 %v1906
      %v2195 = vunpack.c.l.b16 %v1907
      %v2196 = vunpack.c.l.b16 %v1908
      %v2197 = vunpack.c.l.b16 %v1909
      %v2198 = vunpack.c.l.b16 %v1910
      %v2199 = vunpack.c.l.b16 %v1911
      %v2200 = vunpack.c.l.b16 %v1912
      %v2201 = vunpack.c.l.b16 %v1913
      %v2202 = vunpack.c.l.b16 %v1914
      %v2203 = vunpack.c.l.b16 %v1915
      %v2204 = vunpack.c.l.b16 %v1916
      %v2205 = vunpack.c.l.b16 %v1917
      %v2206 = vpack.c.b16 %v2063, %v2062
      %v2207 = vpack.c.b16 %v2065, %v2064
      %v2208 = vpack.c.b16 %v2067, %v2066
      %v2209 = vpack.c.b16 %v2069, %v2068
      %v2210 = vpack.c.b16 %v2071, %v2070
      %v2211 = vpack.c.b16 %v2073, %v2072
      %v2212 = vpack.c.b16 %v2075, %v2074
      %v2213 = vpack.c.b16 %v2077, %v2076
      %v2214 = vpack.c.b16 %v2079, %v2078
      %v2215 = vpack.c.b16 %v2081, %v2080
      %v2216 = vpack.c.b16 %v2083, %v2082
      %v2217 = vpack.c.b16 %v2085, %v2084
      %v2218 = vpack.c.b16 %v2087, %v2086
      %v2219 = vpack.c.b16 %v2089, %v2088
      %v2220 = vpack.c.b16 %v2091, %v2090
      %v2221 = vpack.c.b16 %v2093, %v2092
      %v2222 = vpack.c.b16 %v2095, %v2094
      %v2223 = vpack.c.b16 %v2097, %v2096
      %v2224 = vpack.c.b16 %v2099, %v2098
      %v2225 = vpack.c.b16 %v2101, %v2100
      %v2226 = vpack.c.b16 %v2103, %v2102
      %v2227 = vpack.c.b16 %v2105, %v2104
      %v2228 = vpack.c.b16 %v2107, %v2106
      %v2229 = vpack.c.b16 %v2109, %v2108
      %v2230 = vpack.c.b16 %v2111, %v2110
      %v2231 = vpack.c.b16 %v2113, %v2112
      %v2232 = vpack.c.b16 %v2115, %v2114
      %v2233 = vpack.c.b16 %v2117, %v2116
      %v2234 = vpack.c.b16 %v2119, %v2118
      %v2235 = vpack.c.b16 %v2121, %v2120
      %v2236 = vpack.c.b16 %v2123, %v2122
      %v2237 = vpack.c.b16 %v2125, %v2124
      %v2238 = vpack.c.b16 %v2127, %v2126
      %v2239 = vpack.c.b16 %v2129, %v2128
      %v2240 = vpack.c.b16 %v2131, %v2130
      %v2241 = vpack.c.b16 %v2133, %v2132
      %v2242 = vpack.c.b16 %v2135, %v2134
      %v2243 = vpack.c.b16 %v2137, %v2136
      %v2244 = vpack.c.b16 %v2139, %v2138
      %v2245 = vpack.c.b16 %v2141, %v2140
      %v2246 = vpack.c.b16 %v2143, %v2142
      %v2247 = vpack.c.b16 %v2145, %v2144
      %v2248 = vpack.c.b16 %v2147, %v2146
      %v2249 = vpack.c.b16 %v2149, %v2148
      %v2250 = vpack.c.b16 %v2151, %v2150
      %v2251 = vpack.c.b16 %v2153, %v2152
      %v2252 = vpack.c.b16 %v2155, %v2154
      %v2253 = vpack.c.b16 %v2157, %v2156
      %v2254 = vpack.c.b16 %v2159, %v2158
      %v2255 = vpack.c.b16 %v2161, %v2160
      %v2256 = vpack.c.b16 %v2163, %v2162
      %v2257 = vpack.c.b16 %v2165, %v2164
      %v2258 = vpack.c.b16 %v2167, %v2166
      %v2259 = vpack.c.b16 %v2169, %v2168
      %v2260 = vpack.c.b16 %v2171, %v2170
      %v2261 = vpack.c.b16 %v2173, %v2172
      %v2262 = vpack.c.b16 %v2175, %v2174
      %v2263 = vpack.c.b16 %v2177, %v2176
      %v2264 = vpack.c.b16 %v2179, %v2178
      %v2265 = vpack.c.b16 %v2181, %v2180
      %v2266 = vpack.c.b16 %v2183, %v2182
      %v2267 = vpack.c.b16 %v2185, %v2184
      %v2268 = vpack.c.b16 %v2187, %v2186
      %v2269 = vpack.c.b16 %v2189, %v2188
      %v2270 = vpack.c.b16 %v2191, %v2190
      %v2271 = vpack.c.b16 %v2193, %v2192
      %v2272 = vpack.c.b16 %v2195, %v2194
      %v2273 = vpack.c.b16 %v2197, %v2196
      %v2274 = vpack.c.b16 %v2199, %v2198
      %v2275 = vpack.c.b16 %v2201, %v2200
      %v2276 = vpack.c.b16 %v2203, %v2202
      %v2277 = vpack.c.b16 %v2205, %v2204
      %2350 = vmatprep.subr.bf16.mxu0 0
      %2351 = vmatpush1.bf16.msra.mxu0 %v2206
      %2352 = vmatprep.subr.bf16.mxu0 0
      %2353 = vmatpush1.bf16.msra.mxu0 %v2207
      %2354 = vmatprep.subr.bf16.mxu0 0
      %2355 = vmatpush1.bf16.msra.mxu0 %v2208
      %2356 = vmatprep.subr.bf16.mxu0 0
      %2357 = vmatpush1.bf16.msra.mxu0 %v2209
      %2358 = vmatprep.subr.bf16.mxu0 0
      %2359 = vmatpush1.bf16.msra.mxu0 %v2210
      %2360 = vmatprep.subr.bf16.mxu0 0
      %2361 = vmatpush1.bf16.msra.mxu0 %v2211
      %2362 = vmatprep.subr.bf16.mxu0 0
      %2363 = vmatpush1.bf16.msra.mxu0 %v2212
      %2364 = vmatprep.subr.bf16.mxu0 0
      %2365 = vmatpush1.bf16.msra.mxu0 %v2213
      %2366 = vmatprep.subr.bf16.mxu0 0
      %2367 = vmatpush1.bf16.msra.mxu0 %v2214
      %2368 = vmatprep.subr.bf16.mxu0 0
      %2369 = vmatpush1.bf16.msra.mxu0 %v2215
      %2370 = vmatprep.subr.bf16.mxu0 0
      %2371 = vmatpush1.bf16.msra.mxu0 %v2216
      %2372 = vmatprep.subr.bf16.mxu0 0
      %2373 = vmatpush1.bf16.msra.mxu0 %v2217
      %2374 = vmatprep.subr.bf16.mxu0 0
      %2375 = vmatpush1.bf16.msra.mxu0 %v2218
      %2376 = vmatprep.subr.bf16.mxu0 0
      %2377 = vmatpush1.bf16.msra.mxu0 %v2219
      %2378 = vmatprep.subr.bf16.mxu0 0
      %2379 = vmatpush1.bf16.msra.mxu0 %v2220
      %2380 = vmatprep.subr.bf16.mxu0 0
      %2381 = vmatpush1.bf16.msra.mxu0 %v2221
      %2382 = vmatprep.mubr.bf16.mxu0 %v1522
      %2383 = vmatmul.mubr.bf16.gmra.mrb[0].mxu0 %v1684
      %v2384 = vpop.f32.mrb[0].mxu0
      %v2385 = vadd.f32 0.0, %v2384
      %v2386 = vpop.f32.mrb[0].mxu0
      %v2387 = vpop.f32.mrb[0].mxu0
      %v2388 = vadd.f32 0.0, %v2387
      %v2389 = vpop.f32.mrb[0].mxu0
      %2390 = vmatprep.mubr.bf16.mxu0 %v1523
      %2391 = vmatmul.mubr.bf16.gmra.mrb[0].mxu0 %v1685
      %v2392 = vpop.f32.mrb[0].mxu0
      %v2393 = vadd.f32 0.0, %v2392
      %v2394 = vpop.f32.mrb[0].mxu0
      %v2395 = vpop.f32.mrb[0].mxu0
      %v2396 = vadd.f32 0.0, %v2395
      %v2397 = vpop.f32.mrb[0].mxu0
      %2398 = vmatprep.mubr.bf16.mxu0 %v1524
      %2399 = vmatmul.mubr.bf16.gmra.mrb[0].mxu0 %v1686
      %v2400 = vpop.f32.mrb[0].mxu0
      %v2401 = vadd.f32 0.0, %v2400
      %v2402 = vpop.f32.mrb[0].mxu0
      %v2403 = vpop.f32.mrb[0].mxu0
      %v2404 = vadd.f32 0.0, %v2403
      %v2405 = vpop.f32.mrb[0].mxu0
      %2406 = vmatprep.mubr.bf16.mxu0 %v1525
      %2407 = vmatmul.mubr.bf16.gmra.mrb[0].mxu0 %v1687
      %v2408 = vpop.f32.mrb[0].mxu0
      %v2409 = vadd.f32 0.0, %v2408
      %v2410 = vpop.f32.mrb[0].mxu0
      %v2411 = vpop.f32.mrb[0].mxu0
      %v2412 = vadd.f32 0.0, %v2411
      %v2413 = vpop.f32.mrb[0].mxu0
      %2414 = vmatprep.mubr.bf16.mxu0 %v1526
      %2415 = vmatmul.mubr.bf16.gmra.mrb[0].mxu0 %v1688
      %v2416 = vpop.f32.mrb[0].mxu0
      %v2417 = vadd.f32 0.0, %v2416
      %v2418 = vpop.f32.mrb[0].mxu0
      %v2419 = vpop.f32.mrb[0].mxu0
      %v2420 = vadd.f32 0.0, %v2419
      %v2421 = vpop.f32.mrb[0].mxu0
      %2422 = vmatprep.mubr.bf16.mxu0 %v1527
      %2423 = vmatmul.mubr.bf16.gmra.mrb[0].mxu0 %v1689
      %v2424 = vpop.f32.mrb[0].mxu0
      %v2425 = vadd.f32 0.0, %v2424
      %v2426 = vpop.f32.mrb[0].mxu0
      %v2427 = vpop.f32.mrb[0].mxu0
      %v2428 = vadd.f32 0.0, %v2427
      %v2429 = vpop.f32.mrb[0].mxu0
      %2430 = vmatprep.mubr.bf16.mxu0 %v1528
      %2431 = vmatmul.mubr.bf16.gmra.mrb[0].mxu0 %v1690
      %v2432 = vpop.f32.mrb[0].mxu0
      %v2433 = vadd.f32 0.0, %v2432
      %v2434 = vpop.f32.mrb[0].mxu0
      %v2435 = vpop.f32.mrb[0].mxu0
      %v2436 = vadd.f32 0.0, %v2435
      %v2437 = vpop.f32.mrb[0].mxu0
      %2438 = vmatprep.mubr.bf16.mxu0 %v1529
      %2439 = vmatmul.mubr.bf16.gmra.mrb[0].mxu0 %v1691
      %v2440 = vpop.f32.mrb[0].mxu0
      %v2441 = vadd.f32 0.0, %v2440
      %v2442 = vpop.f32.mrb[0].mxu0
      %v2443 = vpop.f32.mrb[0].mxu0
      %v2444 = vadd.f32 0.0, %v2443
      %v2445 = vpop.f32.mrb[0].mxu0
      %2446 = vmatprep.mubr.bf16.mxu0 %v1530
      %2447 = vmatmul.mubr.bf16.gmra.mrb[0].mxu0 %v1692
      %v2448 = vpop.f32.mrb[0].mxu0
      %v2449 = vadd.f32 0.0, %v2448
      %v2450 = vpop.f32.mrb[0].mxu0
      %v2451 = vpop.f32.mrb[0].mxu0
      %v2452 = vadd.f32 0.0, %v2451
      %v2453 = vpop.f32.mrb[0].mxu0
      %2454 = vmatprep.mubr.bf16.mxu0 %v1531
      %2455 = vmatmul.mubr.bf16.gmra.mrb[0].mxu0 %v1693
      %v2456 = vpop.f32.mrb[0].mxu0
      %v2457 = vadd.f32 0.0, %v2456
      %v2458 = vpop.f32.mrb[0].mxu0
      %v2459 = vpop.f32.mrb[0].mxu0
      %v2460 = vadd.f32 0.0, %v2459
      %v2461 = vpop.f32.mrb[0].mxu0
      %2462 = vmatprep.mubr.bf16.mxu0 %v1532
      %2463 = vmatmul.mubr.bf16.gmra.mrb[0].mxu0 %v1694
      %v2464 = vpop.f32.mrb[0].mxu0
      %v2465 = vadd.f32 0.0, %v2464
      %v2466 = vpop.f32.mrb[0].mxu0
      %v2467 = vpop.f32.mrb[0].mxu0
      %v2468 = vadd.f32 0.0, %v2467
      %v2469 = vpop.f32.mrb[0].mxu0
      %2470 = vmatprep.mubr.bf16.mxu0 %v1533
      %2471 = vmatmul.mubr.bf16.gmra.mrb[0].mxu0 %v1695
      %v2472 = vpop.f32.mrb[0].mxu0
      %v2473 = vadd.f32 0.0, %v2472
      %v2474 = vpop.f32.mrb[0].mxu0
      %v2475 = vpop.f32.mrb[0].mxu0
      %v2476 = vadd.f32 0.0, %v2475
      %v2477 = vpop.f32.mrb[0].mxu0
      %2478 = vmatprep.mubr.bf16.mxu0 %v1534
      %2479 = vmatmul.mubr.bf16.gmra.mrb[0].mxu0 %v1696
      %v2480 = vpop.f32.mrb[0].mxu0
      %v2481 = vadd.f32 0.0, %v2480
      %v2482 = vpop.f32.mrb[0].mxu0
      %v2483 = vpop.f32.mrb[0].mxu0
      %v2484 = vadd.f32 0.0, %v2483
      %v2485 = vpop.f32.mrb[0].mxu0
      %2486 = vmatprep.mubr.bf16.mxu0 %v1535
      %2487 = vmatmul.mubr.bf16.gmra.mrb[0].mxu0 %v1697
      %v2488 = vpop.f32.mrb[0].mxu0
      %v2489 = vadd.f32 0.0, %v2488
      %v2490 = vpop.f32.mrb[0].mxu0
      %v2491 = vpop.f32.mrb[0].mxu0
      %v2492 = vadd.f32 0.0, %v2491
      %v2493 = vpop.f32.mrb[0].mxu0
      %2494 = vmatprep.mubr.bf16.mxu0 %v1536
      %2495 = vmatmul.mubr.bf16.gmra.mrb[0].mxu0 %v1698
      %v2496 = vpop.f32.mrb[0].mxu0
      %v2497 = vadd.f32 0.0, %v2496
      %v2498 = vpop.f32.mrb[0].mxu0
      %v2499 = vpop.f32.mrb[0].mxu0
      %v2500 = vadd.f32 0.0, %v2499
      %v2501 = vpop.f32.mrb[0].mxu0
      %2502 = vmatprep.mubr.bf16.mxu0 %v1537
      %2503 = vmatmul.mubr.bf16.gmra.mrb[0].mxu0 %v1699
      %v2504 = vpop.f32.mrb[0].mxu0
      %v2505 = vadd.f32 0.0, %v2504
      %v2506 = vpop.f32.mrb[0].mxu0
      %v2507 = vpop.f32.mrb[0].mxu0
      %v2508 = vadd.f32 0.0, %v2507
      %v2509 = vpop.f32.mrb[0].mxu0
      %2510 = vdwg.mxu0
      %2511 = vmatprep.subr.bf16.mxu0 0
      %2512 = vmatpush1.bf16.msra.mxu0 %v2222
      %2513 = vmatprep.subr.bf16.mxu0 0
      %2514 = vmatpush1.bf16.msra.mxu0 %v2223
      %2515 = vmatprep.subr.bf16.mxu0 0
      %2516 = vmatpush1.bf16.msra.mxu0 %v2224
      %2517 = vmatprep.subr.bf16.mxu0 0
      %2518 = vmatpush1.bf16.msra.mxu0 %v2225
      %2519 = vmatprep.subr.bf16.mxu0 0
      %2520 = vmatpush1.bf16.msra.mxu0 %v2226
      %2521 = vmatprep.subr.bf16.mxu0 0
      %2522 = vmatpush1.bf16.msra.mxu0 %v2227
      %2523 = vmatprep.subr.bf16.mxu0 0
      %2524 = vmatpush1.bf16.msra.mxu0 %v2228
      %2525 = vmatprep.subr.bf16.mxu0 0
      %2526 = vmatpush1.bf16.msra.mxu0 %v2229
      %2527 = vmatprep.subr.bf16.mxu0 0
      %2528 = vmatpush1.bf16.msra.mxu0 %v2230
      %2529 = vmatprep.subr.bf16.mxu0 0
      %2530 = vmatpush1.bf16.msra.mxu0 %v2231
      %2531 = vmatprep.subr.bf16.mxu0 0
      %2532 = vmatpush1.bf16.msra.mxu0 %v2232
      %2533 = vmatprep.subr.bf16.mxu0 0
      %2534 = vmatpush1.bf16.msra.mxu0 %v2233
      %2535 = vmatprep.subr.bf16.mxu0 0
      %2536 = vmatpush1.bf16.msra.mxu0 %v2234
      %2537 = vmatprep.subr.bf16.mxu0 0
      %2538 = vmatpush1.bf16.msra.mxu0 %v2235
      %2539 = vmatprep.subr.bf16.mxu0 0
      %2540 = vmatpush1.bf16.msra.mxu0 %v2236
      %2541 = vmatprep.subr.bf16.mxu0 0
      %2542 = vmatpush1.bf16.msra.mxu0 %v2237
      %2543 = vmatprep.mubr.bf16.mxu0 %v1685
      %2544 = vmatmul.mubr.bf16.gmra.mrb[0].mxu0 %v1756
      %v2545 = vpop.f32.mrb[0].mxu0
      %v2546 = vadd.f32 %v2385, %v2545
      %v2547 = vpop.f32.mrb[0].mxu0
      %v2548 = vpop.f32.mrb[0].mxu0
      %v2549 = vadd.f32 %v2388, %v2548
      %v2550 = vpop.f32.mrb[0].mxu0
      %2551 = vmatprep.mubr.bf16.mxu0 %v1686
      %2552 = vmatmul.mubr.bf16.gmra.mrb[0].mxu0 %v1757
      %v2553 = vpop.f32.mrb[0].mxu0
      %v2554 = vadd.f32 %v2393, %v2553
      %v2555 = vpop.f32.mrb[0].mxu0
      %v2556 = vpop.f32.mrb[0].mxu0
      %v2557 = vadd.f32 %v2396, %v2556
      %v2558 = vpop.f32.mrb[0].mxu0
      %2559 = vmatprep.mubr.bf16.mxu0 %v1687
      %2560 = vmatmul.mubr.bf16.gmra.mrb[0].mxu0 %v1758
      %v2561 = vpop.f32.mrb[0].mxu0
      %v2562 = vadd.f32 %v2401, %v2561
      %v2563 = vpop.f32.mrb[0].mxu0
      %v2564 = vpop.f32.mrb[0].mxu0
      %v2565 = vadd.f32 %v2404, %v2564
      %v2566 = vpop.f32.mrb[0].mxu0
      %2567 = vmatprep.mubr.bf16.mxu0 %v1688
      %2568 = vmatmul.mubr.bf16.gmra.mrb[0].mxu0 %v1759
      %v2569 = vpop.f32.mrb[0].mxu0
      %v2570 = vadd.f32 %v2409, %v2569
      %v2571 = vpop.f32.mrb[0].mxu0
      %v2572 = vpop.f32.mrb[0].mxu0
      %v2573 = vadd.f32 %v2412, %v2572
      %v2574 = vpop.f32.mrb[0].mxu0
      %2575 = vmatprep.mubr.bf16.mxu0 %v1689
      %2576 = vmatmul.mubr.bf16.gmra.mrb[0].mxu0 %v1760
      %v2577 = vpop.f32.mrb[0].mxu0
      %v2578 = vadd.f32 %v2417, %v2577
      %v2579 = vpop.f32.mrb[0].mxu0
      %v2580 = vpop.f32.mrb[0].mxu0
      %v2581 = vadd.f32 %v2420, %v2580
      %v2582 = vpop.f32.mrb[0].mxu0
      %2583 = vmatprep.mubr.bf16.mxu0 %v1690
      %2584 = vmatmul.mubr.bf16.gmra.mrb[0].mxu0 %v1761
      %v2585 = vpop.f32.mrb[0].mxu0
      %v2586 = vadd.f32 %v2425, %v2585
      %v2587 = vpop.f32.mrb[0].mxu0
      %v2588 = vpop.f32.mrb[0].mxu0
      %v2589 = vadd.f32 %v2428, %v2588
      %v2590 = vpop.f32.mrb[0].mxu0
      %2591 = vmatprep.mubr.bf16.mxu0 %v1691
      %2592 = vmatmul.mubr.bf16.gmra.mrb[0].mxu0 %v1762
      %v2593 = vpop.f32.mrb[0].mxu0
      %v2594 = vadd.f32 %v2433, %v2593
      %v2595 = vpop.f32.mrb[0].mxu0
      %v2596 = vpop.f32.mrb[0].mxu0
      %v2597 = vadd.f32 %v2436, %v2596
      %v2598 = vpop.f32.mrb[0].mxu0
      %2599 = vmatprep.mubr.bf16.mxu0 %v1692
      %2600 = vmatmul.mubr.bf16.gmra.mrb[0].mxu0 %v1763
      %v2601 = vpop.f32.mrb[0].mxu0
      %v2602 = vadd.f32 %v2441, %v2601
      %v2603 = vpop.f32.mrb[0].mxu0
      %v2604 = vpop.f32.mrb[0].mxu0
      %v2605 = vadd.f32 %v2444, %v2604
      %v2606 = vpop.f32.mrb[0].mxu0
      %2607 = vmatprep.mubr.bf16.mxu0 %v1693
      %2608 = vmatmul.mubr.bf16.gmra.mrb[0].mxu0 %v1764
      %v2609 = vpop.f32.mrb[0].mxu0
      %v2610 = vadd.f32 %v2449, %v2609
      %v2611 = vpop.f32.mrb[0].mxu0
      %v2612 = vpop.f32.mrb[0].mxu0
      %v2613 = vadd.f32 %v2452, %v2612
      %v2614 = vpop.f32.mrb[0].mxu0
      %2615 = vmatprep.mubr.bf16.mxu0 %v1694
      %2616 = vmatmul.mubr.bf16.gmra.mrb[0].mxu0 %v1765
      %v2617 = vpop.f32.mrb[0].mxu0
      %v2618 = vadd.f32 %v2457, %v2617
      %v2619 = vpop.f32.mrb[0].mxu0
      %v2620 = vpop.f32.mrb[0].mxu0
      %v2621 = vadd.f32 %v2460, %v2620
      %v2622 = vpop.f32.mrb[0].mxu0
      %2623 = vmatprep.mubr.bf16.mxu0 %v1695
      %2624 = vmatmul.mubr.bf16.gmra.mrb[0].mxu0 %v1766
      %v2625 = vpop.f32.mrb[0].mxu0
      %v2626 = vadd.f32 %v2465, %v2625
      %v2627 = vpop.f32.mrb[0].mxu0
      %v2628 = vpop.f32.mrb[0].mxu0
      %v2629 = vadd.f32 %v2468, %v2628
      %v2630 = vpop.f32.mrb[0].mxu0
      %2631 = vmatprep.mubr.bf16.mxu0 %v1696
      %2632 = vmatmul.mubr.bf16.gmra.mrb[0].mxu0 %v1767
      %v2633 = vpop.f32.mrb[0].mxu0
      %v2634 = vadd.f32 %v2473, %v2633
      %v2635 = vpop.f32.mrb[0].mxu0
      %v2636 = vpop.f32.mrb[0].mxu0
      %v2637 = vadd.f32 %v2476, %v2636
      %v2638 = vpop.f32.mrb[0].mxu0
      %2639 = vmatprep.mubr.bf16.mxu0 %v1697
      %2640 = vmatmul.mubr.bf16.gmra.mrb[0].mxu0 %v1768
      %v2641 = vpop.f32.mrb[0].mxu0
      %v2642 = vadd.f32 %v2481, %v2641
      %v2643 = vpop.f32.mrb[0].mxu0
      %v2644 = vpop.f32.mrb[0].mxu0
      %v2645 = vadd.f32 %v2484, %v2644
      %v2646 = vpop.f32.mrb[0].mxu0
      %2647 = vmatprep.mubr.bf16.mxu0 %v1698
      %2648 = vmatmul.mubr.bf16.gmra.mrb[0].mxu0 %v1769
      %v2649 = vpop.f32.mrb[0].mxu0
      %v2650 = vadd.f32 %v2489, %v2649
      %v2651 = vpop.f32.mrb[0].mxu0
      %v2652 = vpop.f32.mrb[0].mxu0
      %v2653 = vadd.f32 %v2492, %v2652
      %v2654 = vpop.f32.mrb[0].mxu0
      %2655 = vmatprep.mubr.bf16.mxu0 %v1699
      %2656 = vmatmul.mubr.bf16.gmra.mrb[0].mxu0 %v1770
      %v2657 = vpop.f32.mrb[0].mxu0
      %v2658 = vadd.f32 %v2497, %v2657
      %v2659 = vpop.f32.mrb[0].mxu0
      %v2660 = vpop.f32.mrb[0].mxu0
      %v2661 = vadd.f32 %v2500, %v2660
      %v2662 = vpop.f32.mrb[0].mxu0
      %2663 = vmatprep.mubr.bf16.mxu0 %v1700
      %2664 = vmatmul.mubr.bf16.gmra.mrb[0].mxu0 %v1771
      %v2665 = vpop.f32.mrb[0].mxu0
      %v2666 = vadd.f32 %v2505, %v2665
      %v2667 = vpop.f32.mrb[0].mxu0
      %v2668 = vpop.f32.mrb[0].mxu0
      %v2669 = vadd.f32 %v2508, %v2668
      %v2670 = vpop.f32.mrb[0].mxu0
      %2671 = vdwg.mxu0
      %2672 = vmatprep.subr.bf16.mxu0 0
      %2673 = vmatpush1.bf16.msra.mxu0 %v2238
      %2674 = vmatprep.subr.bf16.mxu0 0
      %2675 = vmatpush1.bf16.msra.mxu0 %v2239
      %2676 = vmatprep.subr.bf16.mxu0 0
      %2677 = vmatpush1.bf16.msra.mxu0 %v2240
      %2678 = vmatprep.subr.bf16.mxu0 0
      %2679 = vmatpush1.bf16.msra.mxu0 %v2241
      %2680 = vmatprep.subr.bf16.mxu0 0
      %2681 = vmatpush1.bf16.msra.mxu0 %v2242
      %2682 = vmatprep.subr.bf16.mxu0 0
      %2683 = vmatpush1.bf16.msra.mxu0 %v2243
      %2684 = vmatprep.subr.bf16.mxu0 0
      %2685 = vmatpush1.bf16.msra.mxu0 %v2244
      %2686 = vmatprep.subr.bf16.mxu0 0
      %2687 = vmatpush1.bf16.msra.mxu0 %v2245
      %2688 = vmatprep.subr.bf16.mxu0 0
      %2689 = vmatpush1.bf16.msra.mxu0 %v2246
      %2690 = vmatprep.subr.bf16.mxu0 0
      %2691 = vmatpush1.bf16.msra.mxu0 %v2247
      %2692 = vmatprep.subr.bf16.mxu0 0
      %2693 = vmatpush1.bf16.msra.mxu0 %v2248
      %2694 = vmatprep.subr.bf16.mxu0 0
      %2695 = vmatpush1.bf16.msra.mxu0 %v2249
      %2696 = vmatprep.subr.bf16.mxu0 0
      %2697 = vmatpush1.bf16.msra.mxu0 %v2250
      %2698 = vmatprep.subr.bf16.mxu0 0
      %2699 = vmatpush1.bf16.msra.mxu0 %v2251
      %2700 = vmatprep.subr.bf16.mxu0 0
      %2701 = vmatpush1.bf16.msra.mxu0 %v2252
      %2702 = vmatprep.subr.bf16.mxu0 0
      %2703 = vmatpush1.bf16.msra.mxu0 %v2253
      %2704 = vmatprep.mubr.bf16.mxu0 %v1757
      %2705 = vmatmul.mubr.bf16.gmra.mrb[0].mxu0 %v1523
      %v2706 = vpop.f32.mrb[0].mxu0
      %v2707 = vadd.f32 %v2546, %v2706
      %v2708 = vpop.f32.mrb[0].mxu0
      %v2709 = vpop.f32.mrb[0].mxu0
      %v2710 = vadd.f32 %v2549, %v2709
      %v2711 = vpop.f32.mrb[0].mxu0
      %2712 = vmatprep.mubr.bf16.mxu0 %v1758
      %2713 = vmatmul.mubr.bf16.gmra.mrb[0].mxu0 %v1524
      %v2714 = vpop.f32.mrb[0].mxu0
      %v2715 = vadd.f32 %v2554, %v2714
      %v2716 = vpop.f32.mrb[0].mxu0
      %v2717 = vpop.f32.mrb[0].mxu0
      %v2718 = vadd.f32 %v2557, %v2717
      %v2719 = vpop.f32.mrb[0].mxu0
      %2720 = vmatprep.mubr.bf16.mxu0 %v1759
      %2721 = vmatmul.mubr.bf16.gmra.mrb[0].mxu0 %v1525
      %v2722 = vpop.f32.mrb[0].mxu0
      %v2723 = vadd.f32 %v2562, %v2722
      %v2724 = vpop.f32.mrb[0].mxu0
      %v2725 = vpop.f32.mrb[0].mxu0
      %v2726 = vadd.f32 %v2565, %v2725
      %v2727 = vpop.f32.mrb[0].mxu0
      %2728 = vmatprep.mubr.bf16.mxu0 %v1760
      %2729 = vmatmul.mubr.bf16.gmra.mrb[0].mxu0 %v1526
      %v2730 = vpop.f32.mrb[0].mxu0
      %v2731 = vadd.f32 %v2570, %v2730
      %v2732 = vpop.f32.mrb[0].mxu0
      %v2733 = vpop.f32.mrb[0].mxu0
      %v2734 = vadd.f32 %v2573, %v2733
      %v2735 = vpop.f32.mrb[0].mxu0
      %2736 = vmatprep.mubr.bf16.mxu0 %v1761
      %2737 = vmatmul.mubr.bf16.gmra.mrb[0].mxu0 %v1527
      %v2738 = vpop.f32.mrb[0].mxu0
      %v2739 = vadd.f32 %v2578, %v2738
      %v2740 = vpop.f32.mrb[0].mxu0
      %v2741 = vpop.f32.mrb[0].mxu0
      %v2742 = vadd.f32 %v2581, %v2741
      %v2743 = vpop.f32.mrb[0].mxu0
      %2744 = vmatprep.mubr.bf16.mxu0 %v1762
      %2745 = vmatmul.mubr.bf16.gmra.mrb[0].mxu0 %v1528
      %v2746 = vpop.f32.mrb[0].mxu0
      %v2747 = vadd.f32 %v2586, %v2746
      %v2748 = vpop.f32.mrb[0].mxu0
      %v2749 = vpop.f32.mrb[0].mxu0
      %v2750 = vadd.f32 %v2589, %v2749
      %v2751 = vpop.f32.mrb[0].mxu0
      %2752 = vmatprep.mubr.bf16.mxu0 %v1763
      %2753 = vmatmul.mubr.bf16.gmra.mrb[0].mxu0 %v1529
      %v2754 = vpop.f32.mrb[0].mxu0
      %v2755 = vadd.f32 %v2594, %v2754
      %v2756 = vpop.f32.mrb[0].mxu0
      %v2757 = vpop.f32.mrb[0].mxu0
      %v2758 = vadd.f32 %v2597, %v2757
      %v2759 = vpop.f32.mrb[0].mxu0
      %2760 = vmatprep.mubr.bf16.mxu0 %v1764
      %2761 = vmatmul.mubr.bf16.gmra.mrb[0].mxu0 %v1530
      %v2762 = vpop.f32.mrb[0].mxu0
      %v2763 = vadd.f32 %v2602, %v2762
      %v2764 = vpop.f32.mrb[0].mxu0
      %v2765 = vpop.f32.mrb[0].mxu0
      %v2766 = vadd.f32 %v2605, %v2765
      %v2767 = vpop.f32.mrb[0].mxu0
      %2768 = vmatprep.mubr.bf16.mxu0 %v1765
      %2769 = vmatmul.mubr.bf16.gmra.mrb[0].mxu0 %v1531
      %v2770 = vpop.f32.mrb[0].mxu0
      %v2771 = vadd.f32 %v2610, %v2770
      %v2772 = vpop.f32.mrb[0].mxu0
      %v2773 = vpop.f32.mrb[0].mxu0
      %v2774 = vadd.f32 %v2613, %v2773
      %v2775 = vpop.f32.mrb[0].mxu0
      %2776 = vmatprep.mubr.bf16.mxu0 %v1766
      %2777 = vmatmul.mubr.bf16.gmra.mrb[0].mxu0 %v1532
      %v2778 = vpop.f32.mrb[0].mxu0
      %v2779 = vadd.f32 %v2618, %v2778
      %v2780 = vpop.f32.mrb[0].mxu0
      %v2781 = vpop.f32.mrb[0].mxu0
      %v2782 = vadd.f32 %v2621, %v2781
      %v2783 = vpop.f32.mrb[0].mxu0
      %2784 = vmatprep.mubr.bf16.mxu0 %v1767
      %2785 = vmatmul.mubr.bf16.gmra.mrb[0].mxu0 %v1533
      %v2786 = vpop.f32.mrb[0].mxu0
      %v2787 = vadd.f32 %v2626, %v2786
      %v2788 = vpop.f32.mrb[0].mxu0
      %v2789 = vpop.f32.mrb[0].mxu0
      %v2790 = vadd.f32 %v2629, %v2789
      %v2791 = vpop.f32.mrb[0].mxu0
      %2792 = vmatprep.mubr.bf16.mxu0 %v1768
      %2793 = vmatmul.mubr.bf16.gmra.mrb[0].mxu0 %v1534
      %v2794 = vpop.f32.mrb[0].mxu0
      %v2795 = vadd.f32 %v2634, %v2794
      %v2796 = vpop.f32.mrb[0].mxu0
      %v2797 = vpop.f32.mrb[0].mxu0
      %v2798 = vadd.f32 %v2637, %v2797
      %v2799 = vpop.f32.mrb[0].mxu0
      %2800 = vmatprep.mubr.bf16.mxu0 %v1769
      %2801 = vmatmul.mubr.bf16.gmra.mrb[0].mxu0 %v1535
      %v2802 = vpop.f32.mrb[0].mxu0
      %v2803 = vadd.f32 %v2642, %v2802
      %v2804 = vpop.f32.mrb[0].mxu0
      %v2805 = vpop.f32.mrb[0].mxu0
      %v2806 = vadd.f32 %v2645, %v2805
      %v2807 = vpop.f32.mrb[0].mxu0
      %2808 = vmatprep.mubr.bf16.mxu0 %v1770
      %2809 = vmatmul.mubr.bf16.gmra.mrb[0].mxu0 %v1536
      %v2810 = vpop.f32.mrb[0].mxu0
      %v2811 = vadd.f32 %v2650, %v2810
      %v2812 = vpop.f32.mrb[0].mxu0
      %v2813 = vpop.f32.mrb[0].mxu0
      %v2814 = vadd.f32 %v2653, %v2813
      %v2815 = vpop.f32.mrb[0].mxu0
      %2816 = vmatprep.mubr.bf16.mxu0 %v1771
      %2817 = vmatmul.mubr.bf16.gmra.mrb[0].mxu0 %v1537
      %v2818 = vpop.f32.mrb[0].mxu0
      %v2819 = vadd.f32 %v2658, %v2818
      %v2820 = vpop.f32.mrb[0].mxu0
      %v2821 = vpop.f32.mrb[0].mxu0
      %v2822 = vadd.f32 %v2661, %v2821
      %v2823 = vpop.f32.mrb[0].mxu0
      %2824 = vmatprep.mubr.bf16.mxu0 %v1772
      %2825 = vmatmul.mubr.bf16.gmra.mrb[0].mxu0 %v1538
      %v2826 = vpop.f32.mrb[0].mxu0
      %v2827 = vadd.f32 %v2666, %v2826
      %v2828 = vpop.f32.mrb[0].mxu0
      %v2829 = vpop.f32.mrb[0].mxu0
      %v2830 = vadd.f32 %v2669, %v2829
      %v2831 = vpop.f32.mrb[0].mxu0
      %2832 = vdwg.mxu0
      %2833 = vmatprep.subr.bf16.mxu0 0
      %2834 = vmatpush1.bf16.msra.mxu0 %v2254
      %2835 = vmatprep.subr.bf16.mxu0 0
      %2836 = vmatpush1.bf16.msra.mxu0 %v2255
      %2837 = vmatprep.subr.bf16.mxu0 0
      %2838 = vmatpush1.bf16.msra.mxu0 %v2256
      %2839 = vmatprep.subr.bf16.mxu0 0
      %2840 = vmatpush1.bf16.msra.mxu0 %v2257
      %2841 = vmatprep.subr.bf16.mxu0 0
      %2842 = vmatpush1.bf16.msra.mxu0 %v2258
      %2843 = vmatprep.subr.bf16.mxu0 0
      %2844 = vmatpush1.bf16.msra.mxu0 %v2259
      %2845 = vmatprep.subr.bf16.mxu0 0
      %2846 = vmatpush1.bf16.msra.mxu0 %v2260
      %2847 = vmatprep.subr.bf16.mxu0 0
      %2848 = vmatpush1.bf16.msra.mxu0 %v2261
      %2849 = vmatprep.subr.bf16.mxu0 0
      %2850 = vmatpush1.bf16.msra.mxu0 %v2262
      %2851 = vmatprep.subr.bf16.mxu0 0
      %2852 = vmatpush1.bf16.msra.mxu0 %v2263
      %2853 = vmatprep.subr.bf16.mxu0 0
      %2854 = vmatpush1.bf16.msra.mxu0 %v2264
      %2855 = vmatprep.subr.bf16.mxu0 0
      %2856 = vmatpush1.bf16.msra.mxu0 %v2265
      %2857 = vmatprep.subr.bf16.mxu0 0
      %2858 = vmatpush1.bf16.msra.mxu0 %v2266
      %2859 = vmatprep.subr.bf16.mxu0 0
      %2860 = vmatpush1.bf16.msra.mxu0 %v2267
      %2861 = vmatprep.subr.bf16.mxu0 0
      %2862 = vmatpush1.bf16.msra.mxu0 %v2268
      %2863 = vmatprep.subr.bf16.mxu0 0
      %2864 = vmatpush1.bf16.msra.mxu0 %v2269
      %2865 = vmatprep.mubr.bf16.mxu0 %v1524
      %2866 = vmatmul.mubr.bf16.gmra.mrb[0].mxu0 %v1686
      %v2867 = vpop.f32.mrb[0].mxu0
      %v2868 = vadd.f32 %v2707, %v2867
      %v2869 = vpop.f32.mrb[0].mxu0
      %v2870 = vpop.f32.mrb[0].mxu0
      %v2871 = vadd.f32 %v2710, %v2870
      %v2872 = vpop.f32.mrb[0].mxu0
      %2873 = vmatprep.mubr.bf16.mxu0 %v1525
      %2874 = vmatmul.mubr.bf16.gmra.mrb[0].mxu0 %v1687
      %v2875 = vpop.f32.mrb[0].mxu0
      %v2876 = vadd.f32 %v2715, %v2875
      %v2877 = vpop.f32.mrb[0].mxu0
      %v2878 = vpop.f32.mrb[0].mxu0
      %v2879 = vadd.f32 %v2718, %v2878
      %v2880 = vpop.f32.mrb[0].mxu0
      %2881 = vmatprep.mubr.bf16.mxu0 %v1526
      %2882 = vmatmul.mubr.bf16.gmra.mrb[0].mxu0 %v1688
      %v2883 = vpop.f32.mrb[0].mxu0
      %v2884 = vadd.f32 %v2723, %v2883
      %v2885 = vpop.f32.mrb[0].mxu0
      %v2886 = vpop.f32.mrb[0].mxu0
      %v2887 = vadd.f32 %v2726, %v2886
      %v2888 = vpop.f32.mrb[0].mxu0
      %2889 = vmatprep.mubr.bf16.mxu0 %v1527
      %2890 = vmatmul.mubr.bf16.gmra.mrb[0].mxu0 %v1689
      %v2891 = vpop.f32.mrb[0].mxu0
      %v2892 = vadd.f32 %v2731, %v2891
      %v2893 = vpop.f32.mrb[0].mxu0
      %v2894 = vpop.f32.mrb[0].mxu0
      %v2895 = vadd.f32 %v2734, %v2894
      %v2896 = vpop.f32.mrb[0].mxu0
      %2897 = vmatprep.mubr.bf16.mxu0 %v1528
      %2898 = vmatmul.mubr.bf16.gmra.mrb[0].mxu0 %v1690
      %v2899 = vpop.f32.mrb[0].mxu0
      %v2900 = vadd.f32 %v2739, %v2899
      %v2901 = vpop.f32.mrb[0].mxu0
      %v2902 = vpop.f32.mrb[0].mxu0
      %v2903 = vadd.f32 %v2742, %v2902
      %v2904 = vpop.f32.mrb[0].mxu0
      %2905 = vmatprep.mubr.bf16.mxu0 %v1529
      %2906 = vmatmul.mubr.bf16.gmra.mrb[0].mxu0 %v1691
      %v2907 = vpop.f32.mrb[0].mxu0
      %v2908 = vadd.f32 %v2747, %v2907
      %v2909 = vpop.f32.mrb[0].mxu0
      %v2910 = vpop.f32.mrb[0].mxu0
      %v2911 = vadd.f32 %v2750, %v2910
      %v2912 = vpop.f32.mrb[0].mxu0
      %2913 = vmatprep.mubr.bf16.mxu0 %v1530
      %2914 = vmatmul.mubr.bf16.gmra.mrb[0].mxu0 %v1692
      %v2915 = vpop.f32.mrb[0].mxu0
      %v2916 = vadd.f32 %v2755, %v2915
      %v2917 = vpop.f32.mrb[0].mxu0
      %v2918 = vpop.f32.mrb[0].mxu0
      %v2919 = vadd.f32 %v2758, %v2918
      %v2920 = vpop.f32.mrb[0].mxu0
      %2921 = vmatprep.mubr.bf16.mxu0 %v1531
      %2922 = vmatmul.mubr.bf16.gmra.mrb[0].mxu0 %v1693
      %v2923 = vpop.f32.mrb[0].mxu0
      %v2924 = vadd.f32 %v2763, %v2923
      %v2925 = vpop.f32.mrb[0].mxu0
      %v2926 = vpop.f32.mrb[0].mxu0
      %v2927 = vadd.f32 %v2766, %v2926
      %v2928 = vpop.f32.mrb[0].mxu0
      %2929 = vmatprep.mubr.bf16.mxu0 %v1532
      %2930 = vmatmul.mubr.bf16.gmra.mrb[0].mxu0 %v1694
      %v2931 = vpop.f32.mrb[0].mxu0
      %v2932 = vadd.f32 %v2771, %v2931
      %v2933 = vpop.f32.mrb[0].mxu0
      %v2934 = vpop.f32.mrb[0].mxu0
      %v2935 = vadd.f32 %v2774, %v2934
      %v2936 = vpop.f32.mrb[0].mxu0
      %2937 = vmatprep.mubr.bf16.mxu0 %v1533
      %2938 = vmatmul.mubr.bf16.gmra.mrb[0].mxu0 %v1695
      %v2939 = vpop.f32.mrb[0].mxu0
      %v2940 = vadd.f32 %v2779, %v2939
      %v2941 = vpop.f32.mrb[0].mxu0
      %v2942 = vpop.f32.mrb[0].mxu0
      %v2943 = vadd.f32 %v2782, %v2942
      %v2944 = vpop.f32.mrb[0].mxu0
      %2945 = vmatprep.mubr.bf16.mxu0 %v1534
      %2946 = vmatmul.mubr.bf16.gmra.mrb[0].mxu0 %v1696
      %v2947 = vpop.f32.mrb[0].mxu0
      %v2948 = vadd.f32 %v2787, %v2947
      %v2949 = vpop.f32.mrb[0].mxu0
      %v2950 = vpop.f32.mrb[0].mxu0
      %v2951 = vadd.f32 %v2790, %v2950
      %v2952 = vpop.f32.mrb[0].mxu0
      %2953 = vmatprep.mubr.bf16.mxu0 %v1535
      %2954 = vmatmul.mubr.bf16.gmra.mrb[0].mxu0 %v1697
      %v2955 = vpop.f32.mrb[0].mxu0
      %v2956 = vadd.f32 %v2795, %v2955
      %v2957 = vpop.f32.mrb[0].mxu0
      %v2958 = vpop.f32.mrb[0].mxu0
      %v2959 = vadd.f32 %v2798, %v2958
      %v2960 = vpop.f32.mrb[0].mxu0
      %2961 = vmatprep.mubr.bf16.mxu0 %v1536
      %2962 = vmatmul.mubr.bf16.gmra.mrb[0].mxu0 %v1698
      %v2963 = vpop.f32.mrb[0].mxu0
      %v2964 = vadd.f32 %v2803, %v2963
      %v2965 = vpop.f32.mrb[0].mxu0
      %v2966 = vpop.f32.mrb[0].mxu0
      %v2967 = vadd.f32 %v2806, %v2966
      %v2968 = vpop.f32.mrb[0].mxu0
      %2969 = vmatprep.mubr.bf16.mxu0 %v1537
      %2970 = vmatmul.mubr.bf16.gmra.mrb[0].mxu0 %v1699
      %v2971 = vpop.f32.mrb[0].mxu0
      %v2972 = vadd.f32 %v2811, %v2971
      %v2973 = vpop.f32.mrb[0].mxu0
      %v2974 = vpop.f32.mrb[0].mxu0
      %v2975 = vadd.f32 %v2814, %v2974
      %v2976 = vpop.f32.mrb[0].mxu0
      %2977 = vmatprep.mubr.bf16.mxu0 %v1538
      %2978 = vmatmul.mubr.bf16.gmra.mrb[0].mxu0 %v1700
      %v2979 = vpop.f32.mrb[0].mxu0
      %v2980 = vadd.f32 %v2819, %v2979
      %v2981 = vpop.f32.mrb[0].mxu0
      %v2982 = vpop.f32.mrb[0].mxu0
      %v2983 = vadd.f32 %v2822, %v2982
      %v2984 = vpop.f32.mrb[0].mxu0
      %2985 = vmatprep.mubr.bf16.mxu0 %v1539
      %2986 = vmatmul.mubr.bf16.gmra.mrb[0].mxu0 %v1701
      %v2987 = vpop.f32.mrb[0].mxu0
      %v2988 = vadd.f32 %v2827, %v2987
      %v2989 = vpop.f32.mrb[0].mxu0
      %v2990 = vpop.f32.mrb[0].mxu0
      %v2991 = vadd.f32 %v2830, %v2990
      %v2992 = vpop.f32.mrb[0].mxu0
      %2993 = vdwg.mxu0
      %2994 = vmatprep.subr.bf16.mxu0 0
      %2995 = vmatpush1.bf16.msra.mxu0 %v2270
      %2996 = vmatprep.subr.bf16.mxu0 0
      %2997 = vmatpush1.bf16.msra.mxu0 %v2271
      %2998 = vmatprep.subr.bf16.mxu0 0
      %2999 = vmatpush1.bf16.msra.mxu0 %v2272
      %3000 = vmatprep.subr.bf16.mxu0 0
      %3001 = vmatpush1.bf16.msra.mxu0 %v2273
      %3002 = vmatprep.subr.bf16.mxu0 0
      %3003 = vmatpush1.bf16.msra.mxu0 %v2274
      %3004 = vmatprep.subr.bf16.mxu0 0
      %3005 = vmatpush1.bf16.msra.mxu0 %v2275
      %3006 = vmatprep.subr.bf16.mxu0 0
      %3007 = vmatpush1.bf16.msra.mxu0 %v2276
      %3008 = vmatprep.subr.bf16.mxu0 0
      %3009 = vmatpush1.bf16.msra.mxu0 %v2277
      %3010 = vmatprep.subr.bf16.mxu0 0
      %3011 = vmatpush1.bf16.msra.mxu0 0
      %3012 = vmatprep.subr.bf16.mxu0 0
      %3013 = vmatpush1.bf16.msra.mxu0 0
      %3014 = vmatprep.subr.bf16.mxu0 0
      %3015 = vmatpush1.bf16.msra.mxu0 0
      %3016 = vmatprep.subr.bf16.mxu0 0
      %3017 = vmatpush1.bf16.msra.mxu0 0
      %3018 = vmatprep.subr.bf16.mxu0 0
      %3019 = vmatpush1.bf16.msra.mxu0 0
      %3020 = vmatprep.subr.bf16.mxu0 0
      %3021 = vmatpush1.bf16.msra.mxu0 0
      %3022 = vmatprep.subr.bf16.mxu0 0
      %3023 = vmatpush1.bf16.msra.mxu0 0
      %3024 = vmatprep.subr.bf16.mxu0 0
      %3025 = vmatpush1.bf16.msra.mxu0 0
      %3026 = vmatprep.mubr.bf16.mxu0 0
      %3027 = vmatmul.mubr.bf16.gmra.mrb[0].mxu0 %v1758
      %v3028 = vpop.f32.mrb[0].mxu0
      %v3029 = vadd.f32 %v2868, %v3028
      %v3030 = vpop.f32.mrb[0].mxu0
      %v3031 = vpop.f32.mrb[0].mxu0
      %v3032 = vadd.f32 %v2871, %v3031
      %v3033 = vpop.f32.mrb[0].mxu0
      %3034 = vmatprep.mubr.bf16.mxu0 0
      %3035 = vmatmul.mubr.bf16.gmra.mrb[0].mxu0 %v1759
      %v3036 = vpop.f32.mrb[0].mxu0
      %v3037 = vadd.f32 %v2876, %v3036
      %v3038 = vpop.f32.mrb[0].mxu0
      %v3039 = vpop.f32.mrb[0].mxu0
      %v3040 = vadd.f32 %v2879, %v3039
      %v3041 = vpop.f32.mrb[0].mxu0
      %3042 = vmatprep.mubr.bf16.mxu0 0
      %3043 = vmatmul.mubr.bf16.gmra.mrb[0].mxu0 %v1760
      %v3044 = vpop.f32.mrb[0].mxu0
      %v3045 = vadd.f32 %v2884, %v3044
      %v3046 = vpop.f32.mrb[0].mxu0
      %v3047 = vpop.f32.mrb[0].mxu0
      %v3048 = vadd.f32 %v2887, %v3047
      %v3049 = vpop.f32.mrb[0].mxu0
      %3050 = vmatprep.mubr.bf16.mxu0 0
      %3051 = vmatmul.mubr.bf16.gmra.mrb[0].mxu0 %v1761
      %v3052 = vpop.f32.mrb[0].mxu0
      %v3053 = vadd.f32 %v2892, %v3052
      %v3054 = vpop.f32.mrb[0].mxu0
      %v3055 = vpop.f32.mrb[0].mxu0
      %v3056 = vadd.f32 %v2895, %v3055
      %v3057 = vpop.f32.mrb[0].mxu0
      %3058 = vmatprep.mubr.bf16.mxu0 0
      %3059 = vmatmul.mubr.bf16.gmra.mrb[0].mxu0 %v1762
      %v3060 = vpop.f32.mrb[0].mxu0
      %v3061 = vadd.f32 %v2900, %v3060
      %v3062 = vpop.f32.mrb[0].mxu0
      %v3063 = vpop.f32.mrb[0].mxu0
      %v3064 = vadd.f32 %v2903, %v3063
      %v3065 = vpop.f32.mrb[0].mxu0
      %3066 = vmatprep.mubr.bf16.mxu0 0
      %3067 = vmatmul.mubr.bf16.gmra.mrb[0].mxu0 %v1763
      %v3068 = vpop.f32.mrb[0].mxu0
      %v3069 = vadd.f32 %v2908, %v3068
      %v3070 = vpop.f32.mrb[0].mxu0
      %v3071 = vpop.f32.mrb[0].mxu0
      %v3072 = vadd.f32 %v2911, %v3071
      %v3073 = vpop.f32.mrb[0].mxu0
      %3074 = vmatprep.mubr.bf16.mxu0 0
      %3075 = vmatmul.mubr.bf16.gmra.mrb[0].mxu0 %v1764
      %v3076 = vpop.f32.mrb[0].mxu0
      %v3077 = vadd.f32 %v2916, %v3076
      %v3078 = vpop.f32.mrb[0].mxu0
      %v3079 = vpop.f32.mrb[0].mxu0
      %v3080 = vadd.f32 %v2919, %v3079
      %v3081 = vpop.f32.mrb[0].mxu0
      %3082 = vmatprep.mubr.bf16.mxu0 0
      %3083 = vmatmul.mubr.bf16.gmra.mrb[0].mxu0 %v1765
      %v3084 = vpop.f32.mrb[0].mxu0
      %v3085 = vadd.f32 %v2924, %v3084
      %v3086 = vpop.f32.mrb[0].mxu0
      %v3087 = vpop.f32.mrb[0].mxu0
      %v3088 = vadd.f32 %v2927, %v3087
      %v3089 = vpop.f32.mrb[0].mxu0
      %3090 = vmatprep.mubr.bf16.mxu0 0
      %3091 = vmatmul.mubr.bf16.gmra.mrb[0].mxu0 %v1766
      %v3092 = vpop.f32.mrb[0].mxu0
      %v3093 = vadd.f32 %v2932, %v3092
      %v3094 = vpop.f32.mrb[0].mxu0
      %v3095 = vpop.f32.mrb[0].mxu0
      %v3096 = vadd.f32 %v2935, %v3095
      %v3097 = vpop.f32.mrb[0].mxu0
      %3098 = vmatprep.mubr.bf16.mxu0 0
      %3099 = vmatmul.mubr.bf16.gmra.mrb[0].mxu0 %v1767
      %v3100 = vpop.f32.mrb[0].mxu0
      %v3101 = vadd.f32 %v2940, %v3100
      %v3102 = vpop.f32.mrb[0].mxu0
      %v3103 = vpop.f32.mrb[0].mxu0
      %v3104 = vadd.f32 %v2943, %v3103
      %v3105 = vpop.f32.mrb[0].mxu0
      %3106 = vmatprep.mubr.bf16.mxu0 0
      %3107 = vmatmul.mubr.bf16.gmra.mrb[0].mxu0 %v1768
      %v3108 = vpop.f32.mrb[0].mxu0
      %v3109 = vadd.f32 %v2948, %v3108
      %v3110 = vpop.f32.mrb[0].mxu0
      %v3111 = vpop.f32.mrb[0].mxu0
      %v3112 = vadd.f32 %v2951, %v3111
      %v3113 = vpop.f32.mrb[0].mxu0
      %3114 = vmatprep.mubr.bf16.mxu0 0
      %3115 = vmatmul.mubr.bf16.gmra.mrb[0].mxu0 %v1769
      %v3116 = vpop.f32.mrb[0].mxu0
      %v3117 = vadd.f32 %v2956, %v3116
      %v3118 = vpop.f32.mrb[0].mxu0
      %v3119 = vpop.f32.mrb[0].mxu0
      %v3120 = vadd.f32 %v2959, %v3119
      %v3121 = vpop.f32.mrb[0].mxu0
      %3122 = vmatprep.mubr.bf16.mxu0 0
      %3123 = vmatmul.mubr.bf16.gmra.mrb[0].mxu0 %v1770
      %v3124 = vpop.f32.mrb[0].mxu0
      %v3125 = vadd.f32 %v2964, %v3124
      %v3126 = vpop.f32.mrb[0].mxu0
      %v3127 = vpop.f32.mrb[0].mxu0
      %v3128 = vadd.f32 %v2967, %v3127
      %v3129 = vpop.f32.mrb[0].mxu0
      %3130 = vmatprep.mubr.bf16.mxu0 0
      %3131 = vmatmul.mubr.bf16.gmra.mrb[0].mxu0 %v1771
      %v3132 = vpop.f32.mrb[0].mxu0
      %v3133 = vadd.f32 %v2972, %v3132
      %v3134 = vpop.f32.mrb[0].mxu0
      %v3135 = vpop.f32.mrb[0].mxu0
      %v3136 = vadd.f32 %v2975, %v3135
      %v3137 = vpop.f32.mrb[0].mxu0
      %3138 = vmatprep.mubr.bf16.mxu0 0
      %3139 = vmatmul.mubr.bf16.gmra.mrb[0].mxu0 %v1772
      %v3140 = vpop.f32.mrb[0].mxu0
      %v3141 = vadd.f32 %v2980, %v3140
      %v3142 = vpop.f32.mrb[0].mxu0
      %v3143 = vpop.f32.mrb[0].mxu0
      %v3144 = vadd.f32 %v2983, %v3143
      %v3145 = vpop.f32.mrb[0].mxu0
      %3146 = vmatprep.mubr.bf16.mxu0 0
      %3147 = vmatmul.mubr.bf16.gmra.mrb[0].mxu0 %v1773
      %v3148 = vpop.f32.mrb[0].mxu0
      %v3149 = vadd.f32 %v2988, %v3148
      %v3150 = vpop.f32.mrb[0].mxu0
      %v3151 = vpop.f32.mrb[0].mxu0
      %v3152 = vadd.f32 %v2991, %v3151
      %v3153 = vpop.f32.mrb[0].mxu0
      %3154 = vdwg.mxu0
      %v3299 = vunpack.c.l.b16 %v1358
      %v3300 = vunpack.c.l.b16 %v1359
      %v3301 = vunpack.c.l.b16 %v1360
      %v3302 = vunpack.c.l.b16 %v1361
      %v3303 = vunpack.c.l.b16 %v1362
      %v3304 = vunpack.c.l.b16 %v1363
      %v3305 = vunpack.c.l.b16 %v1364
      %v3306 = vunpack.c.l.b16 %v1365
      %v3307 = vunpack.c.l.b16 %v1366
      %v3308 = vunpack.c.l.b16 %v1367
      %v3309 = vunpack.c.l.b16 %v1368
      %v3310 = vunpack.c.l.b16 %v1369
      %v3311 = vunpack.c.l.b16 %v1370
      %v3312 = vunpack.c.l.b16 %v1371
      %v3313 = vunpack.c.l.b16 %v1372
      %v3314 = vunpack.c.l.b16 %v1373
      %v3315 = vunpack.c.l.b16 %v1374
      %v3316 = vunpack.c.l.b16 %v1375
      %v3317 = vunpack.c.l.b16 %v1376
      %v3318 = vunpack.c.l.b16 %v1377
      %v3319 = vunpack.c.l.b16 %v1378
      %v3320 = vunpack.c.l.b16 %v1379
      %v3321 = vunpack.c.l.b16 %v1380
      %v3322 = vunpack.c.l.b16 %v1381
      %v3323 = vunpack.c.l.b16 %v1382
      %v3324 = vunpack.c.l.b16 %v1383
      %v3325 = vunpack.c.l.b16 %v1384
      %v3326 = vunpack.c.l.b16 %v1385
      %v3327 = vunpack.c.l.b16 %v1386
      %v3328 = vunpack.c.l.b16 %v1387
      %v3329 = vunpack.c.l.b16 %v1388
      %v3330 = vunpack.c.l.b16 %v1389
      %v3331 = vunpack.c.l.b16 %v1390
      %v3332 = vunpack.c.l.b16 %v1391
      %v3333 = vunpack.c.l.b16 %v1392
      %v3334 = vunpack.c.l.b16 %v1393
      %v3335 = vunpack.c.l.b16 %v1394
      %v3336 = vunpack.c.l.b16 %v1395
      %v3337 = vunpack.c.l.b16 %v1396
      %v3338 = vunpack.c.l.b16 %v1397
      %v3339 = vunpack.c.l.b16 %v1398
      %v3340 = vunpack.c.l.b16 %v1399
      %v3341 = vunpack.c.l.b16 %v1400
      %v3342 = vunpack.c.l.b16 %v1401
      %v3343 = vunpack.c.l.b16 %v1402
      %v3344 = vunpack.c.l.b16 %v1403
      %v3345 = vunpack.c.l.b16 %v1404
      %v3346 = vunpack.c.l.b16 %v1405
      %v3347 = vunpack.c.l.b16 %v1406
      %v3348 = vunpack.c.l.b16 %v1407
      %v3349 = vunpack.c.l.b16 %v1408
      %v3350 = vunpack.c.l.b16 %v1409
      %v3351 = vunpack.c.l.b16 %v1410
      %v3352 = vunpack.c.l.b16 %v1411
      %v3353 = vunpack.c.l.b16 %v1412
      %v3354 = vunpack.c.l.b16 %v1413
      %v3355 = vunpack.c.l.b16 %v1414
      %v3356 = vunpack.c.l.b16 %v1415
      %v3357 = vunpack.c.l.b16 %v1416
      %v3358 = vunpack.c.l.b16 %v1417
      %v3359 = vunpack.c.l.b16 %v1418
      %v3360 = vunpack.c.l.b16 %v1419
      %v3361 = vunpack.c.l.b16 %v1420
      %v3362 = vunpack.c.l.b16 %v1421
      %v3363 = vunpack.c.l.b16 %v1422
      %v3364 = vunpack.c.l.b16 %v1423
      %v3365 = vunpack.c.l.b16 %v1424
      %v3366 = vunpack.c.l.b16 %v1425
      %v3367 = vunpack.c.l.b16 %v1426
      %v3368 = vunpack.c.l.b16 %v1427
      %v3369 = vunpack.c.l.b16 %v1428
      %v3370 = vunpack.c.l.b16 %v1429
      %v3371 = vunpack.c.l.b16 %v1430
      %v3372 = vunpack.c.l.b16 %v1431
      %v3373 = vunpack.c.l.b16 %v1432
      %v3374 = vunpack.c.l.b16 %v1433
      %v3375 = vunpack.c.l.b16 %v1434
      %v3376 = vunpack.c.l.b16 %v1435
      %v3377 = vunpack.c.l.b16 %v1436
      %v3378 = vunpack.c.l.b16 %v1437
      %v3379 = vunpack.c.l.b16 %v1438
      %v3380 = vunpack.c.l.b16 %v1439
      %v3381 = vunpack.c.l.b16 %v1440
      %v3382 = vunpack.c.l.b16 %v1441
      %v3383 = vunpack.c.l.b16 %v1442
      %v3384 = vunpack.c.l.b16 %v1443
      %v3385 = vunpack.c.l.b16 %v1444
      %v3386 = vunpack.c.l.b16 %v1445
      %v3387 = vunpack.c.l.b16 %v1446
      %v3388 = vunpack.c.l.b16 %v1447
      %v3389 = vunpack.c.l.b16 %v1448
      %v3390 = vunpack.c.l.b16 %v1449
      %v3391 = vunpack.c.l.b16 %v1450
      %v3392 = vunpack.c.l.b16 %v1451
      %v3393 = vunpack.c.l.b16 %v1452
      %v3394 = vunpack.c.l.b16 %v1453
      %v3395 = vunpack.c.l.b16 %v1454
      %v3396 = vunpack.c.l.b16 %v1455
      %v3397 = vunpack.c.l.b16 %v1456
      %v3398 = vunpack.c.l.b16 %v1457
      %v3399 = vunpack.c.l.b16 %v1458
      %v3400 = vunpack.c.l.b16 %v1459
      %v3401 = vunpack.c.l.b16 %v1460
      %v3402 = vunpack.c.l.b16 %v1461
      %v3403 = vunpack.c.l.b16 %v1462
      %v3404 = vunpack.c.l.b16 %v1463
      %v3405 = vunpack.c.l.b16 %v1464
      %v3406 = vunpack.c.l.b16 %v1465
      %v3407 = vunpack.c.l.b16 %v1466
      %v3408 = vunpack.c.l.b16 %v1467
      %v3409 = vunpack.c.l.b16 %v1468
      %v3410 = vunpack.c.l.b16 %v1469
      %v3411 = vunpack.c.l.b16 %v1470
      %v3412 = vunpack.c.l.b16 %v1471
      %v3413 = vunpack.c.l.b16 %v1472
      %v3414 = vunpack.c.l.b16 %v1473
      %v3415 = vunpack.c.l.b16 %v1474
      %v3416 = vunpack.c.l.b16 %v1475
      %v3417 = vunpack.c.l.b16 %v1476
      %v3418 = vunpack.c.l.b16 %v1477
      %v3419 = vunpack.c.l.b16 %v1478
      %v3420 = vunpack.c.l.b16 %v1479
      %v3421 = vunpack.c.l.b16 %v1480
      %v3422 = vunpack.c.l.b16 %v1481
      %v3423 = vunpack.c.l.b16 %v1482
      %v3424 = vunpack.c.l.b16 %v1483
      %v3425 = vunpack.c.l.b16 %v1484
      %v3426 = vunpack.c.l.b16 %v1485
      %v3427 = vunpack.c.l.b16 %v1486
      %v3428 = vunpack.c.l.b16 %v1487
      %v3429 = vunpack.c.l.b16 %v1488
      %v3430 = vunpack.c.l.b16 %v1489
      %v3431 = vunpack.c.l.b16 %v1490
      %v3432 = vunpack.c.l.b16 %v1491
      %v3433 = vunpack.c.l.b16 %v1492
      %v3434 = vunpack.c.l.b16 %v1493
      %v3435 = vunpack.c.l.b16 %v1494
      %v3436 = vunpack.c.l.b16 %v1495
      %v3437 = vunpack.c.l.b16 %v1496
      %v3438 = vunpack.c.l.b16 %v1497
      %v3439 = vunpack.c.l.b16 %v1498
      %v3440 = vunpack.c.l.b16 %v1499
      %v3441 = vunpack.c.l.b16 %v1500
      %v3442 = vunpack.c.l.b16 %v1501
      %v3443 = vpack.c.b16 %v3300, %v3299
      %v3444 = vpack.c.b16 %v3302, %v3301
      %v3445 = vpack.c.b16 %v3304, %v3303
      %v3446 = vpack.c.b16 %v3306, %v3305
      %v3447 = vpack.c.b16 %v3308, %v3307
      %v3448 = vpack.c.b16 %v3310, %v3309
      %v3449 = vpack.c.b16 %v3312, %v3311
      %v3450 = vpack.c.b16 %v3314, %v3313
      %v3451 = vpack.c.b16 %v3316, %v3315
      %v3452 = vpack.c.b16 %v3318, %v3317
      %v3453 = vpack.c.b16 %v3320, %v3319
      %v3454 = vpack.c.b16 %v3322, %v3321
      %v3455 = vpack.c.b16 %v3324, %v3323
      %v3456 = vpack.c.b16 %v3326, %v3325
      %v3457 = vpack.c.b16 %v3328, %v3327
      %v3458 = vpack.c.b16 %v3330, %v3329
      %v3459 = vpack.c.b16 %v3332, %v3331
      %v3460 = vpack.c.b16 %v3334, %v3333
      %v3461 = vpack.c.b16 %v3336, %v3335
      %v3462 = vpack.c.b16 %v3338, %v3337
      %v3463 = vpack.c.b16 %v3340, %v3339
      %v3464 = vpack.c.b16 %v3342, %v3341
      %v3465 = vpack.c.b16 %v3344, %v3343
      %v3466 = vpack.c.b16 %v3346, %v3345
      %v3467 = vpack.c.b16 %v3348, %v3347
      %v3468 = vpack.c.b16 %v3350, %v3349
      %v3469 = vpack.c.b16 %v3352, %v3351
      %v3470 = vpack.c.b16 %v3354, %v3353
      %v3471 = vpack.c.b16 %v3356, %v3355
      %v3472 = vpack.c.b16 %v3358, %v3357
      %v3473 = vpack.c.b16 %v3360, %v3359
      %v3474 = vpack.c.b16 %v3362, %v3361
      %v3475 = vpack.c.b16 %v3364, %v3363
      %v3476 = vpack.c.b16 %v3366, %v3365
      %v3477 = vpack.c.b16 %v3368, %v3367
      %v3478 = vpack.c.b16 %v3370, %v3369
      %v3479 = vpack.c.b16 %v3372, %v3371
      %v3480 = vpack.c.b16 %v3374, %v3373
      %v3481 = vpack.c.b16 %v3376, %v3375
      %v3482 = vpack.c.b16 %v3378, %v3377
      %v3483 = vpack.c.b16 %v3380, %v3379
      %v3484 = vpack.c.b16 %v3382, %v3381
      %v3485 = vpack.c.b16 %v3384, %v3383
      %v3486 = vpack.c.b16 %v3386, %v3385
      %v3487 = vpack.c.b16 %v3388, %v3387
      %v3488 = vpack.c.b16 %v3390, %v3389
      %v3489 = vpack.c.b16 %v3392, %v3391
      %v3490 = vpack.c.b16 %v3394, %v3393
      %v3491 = vpack.c.b16 %v3396, %v3395
      %v3492 = vpack.c.b16 %v3398, %v3397
      %v3493 = vpack.c.b16 %v3400, %v3399
      %v3494 = vpack.c.b16 %v3402, %v3401
      %v3495 = vpack.c.b16 %v3404, %v3403
      %v3496 = vpack.c.b16 %v3406, %v3405
      %v3497 = vpack.c.b16 %v3408, %v3407
      %v3498 = vpack.c.b16 %v3410, %v3409
      %v3499 = vpack.c.b16 %v3412, %v3411
      %v3500 = vpack.c.b16 %v3414, %v3413
      %v3501 = vpack.c.b16 %v3416, %v3415
      %v3502 = vpack.c.b16 %v3418, %v3417
      %v3503 = vpack.c.b16 %v3420, %v3419
      %v3504 = vpack.c.b16 %v3422, %v3421
      %v3505 = vpack.c.b16 %v3424, %v3423
      %v3506 = vpack.c.b16 %v3426, %v3425
      %v3507 = vpack.c.b16 %v3428, %v3427
      %v3508 = vpack.c.b16 %v3430, %v3429
      %v3509 = vpack.c.b16 %v3432, %v3431
      %v3510 = vpack.c.b16 %v3434, %v3433
      %v3511 = vpack.c.b16 %v3436, %v3435
      %v3512 = vpack.c.b16 %v3438, %v3437
      %v3513 = vpack.c.b16 %v3440, %v3439
      %v3514 = vpack.c.b16 %v3442, %v3441
      %3587 = vmatprep.subr.bf16.mxu0 0
      %3588 = vmatpush1.bf16.msra.mxu0 %v3443
      %3589 = vmatprep.subr.bf16.mxu0 0
      %3590 = vmatpush1.bf16.msra.mxu0 %v3444
      %3591 = vmatprep.subr.bf16.mxu0 0
      %3592 = vmatpush1.bf16.msra.mxu0 %v3445
      %3593 = vmatprep.subr.bf16.mxu0 0
      %3594 = vmatpush1.bf16.msra.mxu0 %v3446
      %3595 = vmatprep.subr.bf16.mxu0 0
      %3596 = vmatpush1.bf16.msra.mxu0 %v3447
      %3597 = vmatprep.subr.bf16.mxu0 0
      %3598 = vmatpush1.bf16.msra.mxu0 %v3448
      %3599 = vmatprep.subr.bf16.mxu0 0
      %3600 = vmatpush1.bf16.msra.mxu0 %v3449
      %3601 = vmatprep.subr.bf16.mxu0 0
      %3602 = vmatpush1.bf16.msra.mxu0 %v3450
      %3603 = vmatprep.subr.bf16.mxu0 0
      %3604 = vmatpush1.bf16.msra.mxu0 %v3451
      %3605 = vmatprep.subr.bf16.mxu0 0
      %3606 = vmatpush1.bf16.msra.mxu0 %v3452
      %3607 = vmatprep.subr.bf16.mxu0 0
      %3608 = vmatpush1.bf16.msra.mxu0 %v3453
      %3609 = vmatprep.subr.bf16.mxu0 0
      %3610 = vmatpush1.bf16.msra.mxu0 %v3454
      %3611 = vmatprep.subr.bf16.mxu0 0
      %3612 = vmatpush1.bf16.msra.mxu0 %v3455
      %3613 = vmatprep.subr.bf16.mxu0 0
      %3614 = vmatpush1.bf16.msra.mxu0 %v3456
      %3615 = vmatprep.subr.bf16.mxu0 0
      %3616 = vmatpush1.bf16.msra.mxu0 %v3457
      %3617 = vmatprep.subr.bf16.mxu0 0
      %3618 = vmatpush1.bf16.msra.mxu0 %v3458
      %3619 = vmatprep.mubr.bf16.mxu0 %v1100
      %3620 = vmatmul.mubr.bf16.gmra.mrb[0].mxu0 %v1265
      %v3621 = vpop.f32.mrb[0].mxu0
      %v3622 = vadd.f32 %v3029, %v3621
      %v3623 = vpop.f32.mrb[0].mxu0
      %v3624 = vpop.f32.mrb[0].mxu0
      %v3625 = vadd.f32 %v3032, %v3624
      %v3626 = vpop.f32.mrb[0].mxu0
      %3627 = vmatprep.mubr.bf16.mxu0 %v1101
      %3628 = vmatmul.mubr.bf16.gmra.mrb[0].mxu0 %v1266
      %v3629 = vpop.f32.mrb[0].mxu0
      %v3630 = vadd.f32 %v3037, %v3629
      %v3631 = vpop.f32.mrb[0].mxu0
      %v3632 = vpop.f32.mrb[0].mxu0
      %v3633 = vadd.f32 %v3040, %v3632
      %v3634 = vpop.f32.mrb[0].mxu0
      %3635 = vmatprep.mubr.bf16.mxu0 %v1102
      %3636 = vmatmul.mubr.bf16.gmra.mrb[0].mxu0 %v1267
      %v3637 = vpop.f32.mrb[0].mxu0
      %v3638 = vadd.f32 %v3045, %v3637
      %v3639 = vpop.f32.mrb[0].mxu0
      %v3640 = vpop.f32.mrb[0].mxu0
      %v3641 = vadd.f32 %v3048, %v3640
      %v3642 = vpop.f32.mrb[0].mxu0
      %3643 = vmatprep.mubr.bf16.mxu0 %v1103
      %3644 = vmatmul.mubr.bf16.gmra.mrb[0].mxu0 %v1268
      %v3645 = vpop.f32.mrb[0].mxu0
      %v3646 = vadd.f32 %v3053, %v3645
      %v3647 = vpop.f32.mrb[0].mxu0
      %v3648 = vpop.f32.mrb[0].mxu0
      %v3649 = vadd.f32 %v3056, %v3648
      %v3650 = vpop.f32.mrb[0].mxu0
      %3651 = vmatprep.mubr.bf16.mxu0 %v1104
      %3652 = vmatmul.mubr.bf16.gmra.mrb[0].mxu0 %v1269
      %v3653 = vpop.f32.mrb[0].mxu0
      %v3654 = vadd.f32 %v3061, %v3653
      %v3655 = vpop.f32.mrb[0].mxu0
      %v3656 = vpop.f32.mrb[0].mxu0
      %v3657 = vadd.f32 %v3064, %v3656
      %v3658 = vpop.f32.mrb[0].mxu0
      %3659 = vmatprep.mubr.bf16.mxu0 %v1105
      %3660 = vmatmul.mubr.bf16.gmra.mrb[0].mxu0 %v1270
      %v3661 = vpop.f32.mrb[0].mxu0
      %v3662 = vadd.f32 %v3069, %v3661
      %v3663 = vpop.f32.mrb[0].mxu0
      %v3664 = vpop.f32.mrb[0].mxu0
      %v3665 = vadd.f32 %v3072, %v3664
      %v3666 = vpop.f32.mrb[0].mxu0
      %3667 = vmatprep.mubr.bf16.mxu0 %v1106
      %3668 = vmatmul.mubr.bf16.gmra.mrb[0].mxu0 %v1271
      %v3669 = vpop.f32.mrb[0].mxu0
      %v3670 = vadd.f32 %v3077, %v3669
      %v3671 = vpop.f32.mrb[0].mxu0
      %v3672 = vpop.f32.mrb[0].mxu0
      %v3673 = vadd.f32 %v3080, %v3672
      %v3674 = vpop.f32.mrb[0].mxu0
      %3675 = vmatprep.mubr.bf16.mxu0 %v1107
      %3676 = vmatmul.mubr.bf16.gmra.mrb[0].mxu0 %v1272
      %v3677 = vpop.f32.mrb[0].mxu0
      %v3678 = vadd.f32 %v3085, %v3677
      %v3679 = vpop.f32.mrb[0].mxu0
      %v3680 = vpop.f32.mrb[0].mxu0
      %v3681 = vadd.f32 %v3088, %v3680
      %v3682 = vpop.f32.mrb[0].mxu0
      %3683 = vmatprep.mubr.bf16.mxu0 %v1108
      %3684 = vmatmul.mubr.bf16.gmra.mrb[0].mxu0 %v1273
      %v3685 = vpop.f32.mrb[0].mxu0
      %v3686 = vadd.f32 %v3093, %v3685
      %v3687 = vpop.f32.mrb[0].mxu0
      %v3688 = vpop.f32.mrb[0].mxu0
      %v3689 = vadd.f32 %v3096, %v3688
      %v3690 = vpop.f32.mrb[0].mxu0
      %3691 = vmatprep.mubr.bf16.mxu0 %v1109
      %3692 = vmatmul.mubr.bf16.gmra.mrb[0].mxu0 %v1274
      %v3693 = vpop.f32.mrb[0].mxu0
      %v3694 = vadd.f32 %v3101, %v3693
      %v3695 = vpop.f32.mrb[0].mxu0
      %v3696 = vpop.f32.mrb[0].mxu0
      %v3697 = vadd.f32 %v3104, %v3696
      %v3698 = vpop.f32.mrb[0].mxu0
      %3699 = vmatprep.mubr.bf16.mxu0 %v1110
      %3700 = vmatmul.mubr.bf16.gmra.mrb[0].mxu0 %v1275
      %v3701 = vpop.f32.mrb[0].mxu0
      %v3702 = vadd.f32 %v3109, %v3701
      %v3703 = vpop.f32.mrb[0].mxu0
      %v3704 = vpop.f32.mrb[0].mxu0
      %v3705 = vadd.f32 %v3112, %v3704
      %v3706 = vpop.f32.mrb[0].mxu0
      %3707 = vmatprep.mubr.bf16.mxu0 %v1111
      %3708 = vmatmul.mubr.bf16.gmra.mrb[0].mxu0 %v1276
      %v3709 = vpop.f32.mrb[0].mxu0
      %v3710 = vadd.f32 %v3117, %v3709
      %v3711 = vpop.f32.mrb[0].mxu0
      %v3712 = vpop.f32.mrb[0].mxu0
      %v3713 = vadd.f32 %v3120, %v3712
      %v3714 = vpop.f32.mrb[0].mxu0
      %3715 = vmatprep.mubr.bf16.mxu0 %v1112
      %3716 = vmatmul.mubr.bf16.gmra.mrb[0].mxu0 %v1277
      %v3717 = vpop.f32.mrb[0].mxu0
      %v3718 = vadd.f32 %v3125, %v3717
      %v3719 = vpop.f32.mrb[0].mxu0
      %v3720 = vpop.f32.mrb[0].mxu0
      %v3721 = vadd.f32 %v3128, %v3720
      %v3722 = vpop.f32.mrb[0].mxu0
      %3723 = vmatprep.mubr.bf16.mxu0 %v1113
      %3724 = vmatmul.mubr.bf16.gmra.mrb[0].mxu0 %v1278
      %v3725 = vpop.f32.mrb[0].mxu0
      %v3726 = vadd.f32 %v3133, %v3725
      %v3727 = vpop.f32.mrb[0].mxu0
      %v3728 = vpop.f32.mrb[0].mxu0
      %v3729 = vadd.f32 %v3136, %v3728
      %v3730 = vpop.f32.mrb[0].mxu0
      %3731 = vmatprep.mubr.bf16.mxu0 %v1114
      %3732 = vmatmul.mubr.bf16.gmra.mrb[0].mxu0 %v1279
      %v3733 = vpop.f32.mrb[0].mxu0
      %v3734 = vadd.f32 %v3141, %v3733
      %v3735 = vpop.f32.mrb[0].mxu0
      %v3736 = vpop.f32.mrb[0].mxu0
      %v3737 = vadd.f32 %v3144, %v3736
      %v3738 = vpop.f32.mrb[0].mxu0
      %3739 = vmatprep.mubr.bf16.mxu0 %v1115
      %3740 = vmatmul.mubr.bf16.gmra.mrb[0].mxu0 %v1280
      %v3741 = vpop.f32.mrb[0].mxu0
      %v3742 = vadd.f32 %v3149, %v3741
      %v3743 = vpop.f32.mrb[0].mxu0
      %v3744 = vpop.f32.mrb[0].mxu0
      %v3745 = vadd.f32 %v3152, %v3744
      %v3746 = vpop.f32.mrb[0].mxu0
      %3747 = vdwg.mxu0
      %3748 = vmatprep.subr.bf16.mxu0 0
      %3749 = vmatpush1.bf16.msra.mxu0 %v3459
      %3750 = vmatprep.subr.bf16.mxu0 0
      %3751 = vmatpush1.bf16.msra.mxu0 %v3460
      %3752 = vmatprep.subr.bf16.mxu0 0
      %3753 = vmatpush1.bf16.msra.mxu0 %v3461
      %3754 = vmatprep.subr.bf16.mxu0 0
      %3755 = vmatpush1.bf16.msra.mxu0 %v3462
      %3756 = vmatprep.subr.bf16.mxu0 0
      %3757 = vmatpush1.bf16.msra.mxu0 %v3463
      %3758 = vmatprep.subr.bf16.mxu0 0
      %3759 = vmatpush1.bf16.msra.mxu0 %v3464
      %3760 = vmatprep.subr.bf16.mxu0 0
      %3761 = vmatpush1.bf16.msra.mxu0 %v3465
      %3762 = vmatprep.subr.bf16.mxu0 0
      %3763 = vmatpush1.bf16.msra.mxu0 %v3466
      %3764 = vmatprep.subr.bf16.mxu0 0
      %3765 = vmatpush1.bf16.msra.mxu0 %v3467
      %3766 = vmatprep.subr.bf16.mxu0 0
      %3767 = vmatpush1.bf16.msra.mxu0 %v3468
      %3768 = vmatprep.subr.bf16.mxu0 0
      %3769 = vmatpush1.bf16.msra.mxu0 %v3469
      %3770 = vmatprep.subr.bf16.mxu0 0
      %3771 = vmatpush1.bf16.msra.mxu0 %v3470
      %3772 = vmatprep.subr.bf16.mxu0 0
      %3773 = vmatpush1.bf16.msra.mxu0 %v3471
      %3774 = vmatprep.subr.bf16.mxu0 0
      %3775 = vmatpush1.bf16.msra.mxu0 %v3472
      %3776 = vmatprep.subr.bf16.mxu0 0
      %3777 = vmatpush1.bf16.msra.mxu0 %v3473
      %3778 = vmatprep.subr.bf16.mxu0 0
      %3779 = vmatpush1.bf16.msra.mxu0 %v3474
      %3780 = vmatprep.mubr.bf16.mxu0 %v1266
      %3781 = vmatmul.mubr.bf16.gmra.mrb[0].mxu0 %v1340
      %v3782 = vpop.f32.mrb[0].mxu0
      %v3783 = vadd.f32 %v3622, %v3782
      %v3784 = vpop.f32.mrb[0].mxu0
      %v3785 = vpop.f32.mrb[0].mxu0
      %v3786 = vadd.f32 %v3625, %v3785
      %v3787 = vpop.f32.mrb[0].mxu0
      %3788 = vmatprep.mubr.bf16.mxu0 %v1267
      %3789 = vmatmul.mubr.bf16.gmra.mrb[0].mxu0 %v1341
      %v3790 = vpop.f32.mrb[0].mxu0
      %v3791 = vadd.f32 %v3630, %v3790
      %v3792 = vpop.f32.mrb[0].mxu0
      %v3793 = vpop.f32.mrb[0].mxu0
      %v3794 = vadd.f32 %v3633, %v3793
      %v3795 = vpop.f32.mrb[0].mxu0
      %3796 = vmatprep.mubr.bf16.mxu0 %v1268
      %3797 = vmatmul.mubr.bf16.gmra.mrb[0].mxu0 %v1342
      %v3798 = vpop.f32.mrb[0].mxu0
      %v3799 = vadd.f32 %v3638, %v3798
      %v3800 = vpop.f32.mrb[0].mxu0
      %v3801 = vpop.f32.mrb[0].mxu0
      %v3802 = vadd.f32 %v3641, %v3801
      %v3803 = vpop.f32.mrb[0].mxu0
      %3804 = vmatprep.mubr.bf16.mxu0 %v1269
      %3805 = vmatmul.mubr.bf16.gmra.mrb[0].mxu0 %v1343
      %v3806 = vpop.f32.mrb[0].mxu0
      %v3807 = vadd.f32 %v3646, %v3806
      %v3808 = vpop.f32.mrb[0].mxu0
      %v3809 = vpop.f32.mrb[0].mxu0
      %v3810 = vadd.f32 %v3649, %v3809
      %v3811 = vpop.f32.mrb[0].mxu0
      %3812 = vmatprep.mubr.bf16.mxu0 %v1270
      %3813 = vmatmul.mubr.bf16.gmra.mrb[0].mxu0 %v1344
      %v3814 = vpop.f32.mrb[0].mxu0
      %v3815 = vadd.f32 %v3654, %v3814
      %v3816 = vpop.f32.mrb[0].mxu0
      %v3817 = vpop.f32.mrb[0].mxu0
      %v3818 = vadd.f32 %v3657, %v3817
      %v3819 = vpop.f32.mrb[0].mxu0
      %3820 = vmatprep.mubr.bf16.mxu0 %v1271
      %3821 = vmatmul.mubr.bf16.gmra.mrb[0].mxu0 %v1345
      %v3822 = vpop.f32.mrb[0].mxu0
      %v3823 = vadd.f32 %v3662, %v3822
      %v3824 = vpop.f32.mrb[0].mxu0
      %v3825 = vpop.f32.mrb[0].mxu0
      %v3826 = vadd.f32 %v3665, %v3825
      %v3827 = vpop.f32.mrb[0].mxu0
      %3828 = vmatprep.mubr.bf16.mxu0 %v1272
      %3829 = vmatmul.mubr.bf16.gmra.mrb[0].mxu0 %v1346
      %v3830 = vpop.f32.mrb[0].mxu0
      %v3831 = vadd.f32 %v3670, %v3830
      %v3832 = vpop.f32.mrb[0].mxu0
      %v3833 = vpop.f32.mrb[0].mxu0
      %v3834 = vadd.f32 %v3673, %v3833
      %v3835 = vpop.f32.mrb[0].mxu0
      %3836 = vmatprep.mubr.bf16.mxu0 %v1273
      %3837 = vmatmul.mubr.bf16.gmra.mrb[0].mxu0 %v1347
      %v3838 = vpop.f32.mrb[0].mxu0
      %v3839 = vadd.f32 %v3678, %v3838
      %v3840 = vpop.f32.mrb[0].mxu0
      %v3841 = vpop.f32.mrb[0].mxu0
      %v3842 = vadd.f32 %v3681, %v3841
      %v3843 = vpop.f32.mrb[0].mxu0
      %3844 = vmatprep.mubr.bf16.mxu0 %v1274
      %3845 = vmatmul.mubr.bf16.gmra.mrb[0].mxu0 %v1348
      %v3846 = vpop.f32.mrb[0].mxu0
      %v3847 = vadd.f32 %v3686, %v3846
      %v3848 = vpop.f32.mrb[0].mxu0
      %v3849 = vpop.f32.mrb[0].mxu0
      %v3850 = vadd.f32 %v3689, %v3849
      %v3851 = vpop.f32.mrb[0].mxu0
      %3852 = vmatprep.mubr.bf16.mxu0 %v1275
      %3853 = vmatmul.mubr.bf16.gmra.mrb[0].mxu0 %v1349
      %v3854 = vpop.f32.mrb[0].mxu0
      %v3855 = vadd.f32 %v3694, %v3854
      %v3856 = vpop.f32.mrb[0].mxu0
      %v3857 = vpop.f32.mrb[0].mxu0
      %v3858 = vadd.f32 %v3697, %v3857
      %v3859 = vpop.f32.mrb[0].mxu0
      %3860 = vmatprep.mubr.bf16.mxu0 %v1276
      %3861 = vmatmul.mubr.bf16.gmra.mrb[0].mxu0 %v1350
      %v3862 = vpop.f32.mrb[0].mxu0
      %v3863 = vadd.f32 %v3702, %v3862
      %v3864 = vpop.f32.mrb[0].mxu0
      %v3865 = vpop.f32.mrb[0].mxu0
      %v3866 = vadd.f32 %v3705, %v3865
      %v3867 = vpop.f32.mrb[0].mxu0
      %3868 = vmatprep.mubr.bf16.mxu0 %v1277
      %3869 = vmatmul.mubr.bf16.gmra.mrb[0].mxu0 %v1351
      %v3870 = vpop.f32.mrb[0].mxu0
      %v3871 = vadd.f32 %v3710, %v3870
      %v3872 = vpop.f32.mrb[0].mxu0
      %v3873 = vpop.f32.mrb[0].mxu0
      %v3874 = vadd.f32 %v3713, %v3873
      %v3875 = vpop.f32.mrb[0].mxu0
      %3876 = vmatprep.mubr.bf16.mxu0 %v1278
      %3877 = vmatmul.mubr.bf16.gmra.mrb[0].mxu0 %v1352
      %v3878 = vpop.f32.mrb[0].mxu0
      %v3879 = vadd.f32 %v3718, %v3878
      %v3880 = vpop.f32.mrb[0].mxu0
      %v3881 = vpop.f32.mrb[0].mxu0
      %v3882 = vadd.f32 %v3721, %v3881
      %v3883 = vpop.f32.mrb[0].mxu0
      %3884 = vmatprep.mubr.bf16.mxu0 %v1279
      %3885 = vmatmul.mubr.bf16.gmra.mrb[0].mxu0 %v1353
      %v3886 = vpop.f32.mrb[0].mxu0
      %v3887 = vadd.f32 %v3726, %v3886
      %v3888 = vpop.f32.mrb[0].mxu0
      %v3889 = vpop.f32.mrb[0].mxu0
      %v3890 = vadd.f32 %v3729, %v3889
      %v3891 = vpop.f32.mrb[0].mxu0
      %3892 = vmatprep.mubr.bf16.mxu0 %v1280
      %3893 = vmatmul.mubr.bf16.gmra.mrb[0].mxu0 %v1354
      %v3894 = vpop.f32.mrb[0].mxu0
      %v3895 = vadd.f32 %v3734, %v3894
      %v3896 = vpop.f32.mrb[0].mxu0
      %v3897 = vpop.f32.mrb[0].mxu0
      %v3898 = vadd.f32 %v3737, %v3897
      %v3899 = vpop.f32.mrb[0].mxu0
      %3900 = vmatprep.mubr.bf16.mxu0 %v1281
      %3901 = vmatmul.mubr.bf16.gmra.mrb[0].mxu0 %v1355
      %v3902 = vpop.f32.mrb[0].mxu0
      %v3903 = vadd.f32 %v3742, %v3902
      %v3904 = vpop.f32.mrb[0].mxu0
      %v3905 = vpop.f32.mrb[0].mxu0
      %v3906 = vadd.f32 %v3745, %v3905
      %v3907 = vpop.f32.mrb[0].mxu0
      %3908 = vdwg.mxu0
      %3909 = vmatprep.subr.bf16.mxu0 0
      %3910 = vmatpush1.bf16.msra.mxu0 %v3475
      %3911 = vmatprep.subr.bf16.mxu0 0
      %3912 = vmatpush1.bf16.msra.mxu0 %v3476
      %3913 = vmatprep.subr.bf16.mxu0 0
      %3914 = vmatpush1.bf16.msra.mxu0 %v3477
      %3915 = vmatprep.subr.bf16.mxu0 0
      %3916 = vmatpush1.bf16.msra.mxu0 %v3478
      %3917 = vmatprep.subr.bf16.mxu0 0
      %3918 = vmatpush1.bf16.msra.mxu0 %v3479
      %3919 = vmatprep.subr.bf16.mxu0 0
      %3920 = vmatpush1.bf16.msra.mxu0 %v3480
      %3921 = vmatprep.subr.bf16.mxu0 0
      %3922 = vmatpush1.bf16.msra.mxu0 %v3481
      %3923 = vmatprep.subr.bf16.mxu0 0
      %3924 = vmatpush1.bf16.msra.mxu0 %v3482
      %3925 = vmatprep.subr.bf16.mxu0 0
      %3926 = vmatpush1.bf16.msra.mxu0 %v3483
      %3927 = vmatprep.subr.bf16.mxu0 0
      %3928 = vmatpush1.bf16.msra.mxu0 %v3484
      %3929 = vmatprep.subr.bf16.mxu0 0
      %3930 = vmatpush1.bf16.msra.mxu0 %v3485
      %3931 = vmatprep.subr.bf16.mxu0 0
      %3932 = vmatpush1.bf16.msra.mxu0 %v3486
      %3933 = vmatprep.subr.bf16.mxu0 0
      %3934 = vmatpush1.bf16.msra.mxu0 %v3487
      %3935 = vmatprep.subr.bf16.mxu0 0
      %3936 = vmatpush1.bf16.msra.mxu0 %v3488
      %3937 = vmatprep.subr.bf16.mxu0 0
      %3938 = vmatpush1.bf16.msra.mxu0 %v3489
      %3939 = vmatprep.subr.bf16.mxu0 0
      %3940 = vmatpush1.bf16.msra.mxu0 %v3490
      %3941 = vmatprep.mubr.bf16.mxu0 %v1341
      %3942 = vmatmul.mubr.bf16.gmra.mrb[0].mxu0 %v1101
      %v3943 = vpop.f32.mrb[0].mxu0
      %v3944 = vadd.f32 %v3783, %v3943
      %v3945 = vpop.f32.mrb[0].mxu0
      %v3946 = vpop.f32.mrb[0].mxu0
      %v3947 = vadd.f32 %v3786, %v3946
      %v3948 = vpop.f32.mrb[0].mxu0
      %3949 = vmatprep.mubr.bf16.mxu0 %v1342
      %3950 = vmatmul.mubr.bf16.gmra.mrb[0].mxu0 %v1102
      %v3951 = vpop.f32.mrb[0].mxu0
      %v3952 = vadd.f32 %v3791, %v3951
      %v3953 = vpop.f32.mrb[0].mxu0
      %v3954 = vpop.f32.mrb[0].mxu0
      %v3955 = vadd.f32 %v3794, %v3954
      %v3956 = vpop.f32.mrb[0].mxu0
      %3957 = vmatprep.mubr.bf16.mxu0 %v1343
      %3958 = vmatmul.mubr.bf16.gmra.mrb[0].mxu0 %v1103
      %v3959 = vpop.f32.mrb[0].mxu0
      %v3960 = vadd.f32 %v3799, %v3959
      %v3961 = vpop.f32.mrb[0].mxu0
      %v3962 = vpop.f32.mrb[0].mxu0
      %v3963 = vadd.f32 %v3802, %v3962
      %v3964 = vpop.f32.mrb[0].mxu0
      %3965 = vmatprep.mubr.bf16.mxu0 %v1344
      %3966 = vmatmul.mubr.bf16.gmra.mrb[0].mxu0 %v1104
      %v3967 = vpop.f32.mrb[0].mxu0
      %v3968 = vadd.f32 %v3807, %v3967
      %v3969 = vpop.f32.mrb[0].mxu0
      %v3970 = vpop.f32.mrb[0].mxu0
      %v3971 = vadd.f32 %v3810, %v3970
      %v3972 = vpop.f32.mrb[0].mxu0
      %3973 = vmatprep.mubr.bf16.mxu0 %v1345
      %3974 = vmatmul.mubr.bf16.gmra.mrb[0].mxu0 %v1105
      %v3975 = vpop.f32.mrb[0].mxu0
      %v3976 = vadd.f32 %v3815, %v3975
      %v3977 = vpop.f32.mrb[0].mxu0
      %v3978 = vpop.f32.mrb[0].mxu0
      %v3979 = vadd.f32 %v3818, %v3978
      %v3980 = vpop.f32.mrb[0].mxu0
      %3981 = vmatprep.mubr.bf16.mxu0 %v1346
      %3982 = vmatmul.mubr.bf16.gmra.mrb[0].mxu0 %v1106
      %v3983 = vpop.f32.mrb[0].mxu0
      %v3984 = vadd.f32 %v3823, %v3983
      %v3985 = vpop.f32.mrb[0].mxu0
      %v3986 = vpop.f32.mrb[0].mxu0
      %v3987 = vadd.f32 %v3826, %v3986
      %v3988 = vpop.f32.mrb[0].mxu0
      %3989 = vmatprep.mubr.bf16.mxu0 %v1347
      %3990 = vmatmul.mubr.bf16.gmra.mrb[0].mxu0 %v1107
      %v3991 = vpop.f32.mrb[0].mxu0
      %v3992 = vadd.f32 %v3831, %v3991
      %v3993 = vpop.f32.mrb[0].mxu0
      %v3994 = vpop.f32.mrb[0].mxu0
      %v3995 = vadd.f32 %v3834, %v3994
      %v3996 = vpop.f32.mrb[0].mxu0
      %3997 = vmatprep.mubr.bf16.mxu0 %v1348
      %3998 = vmatmul.mubr.bf16.gmra.mrb[0].mxu0 %v1108
      %v3999 = vpop.f32.mrb[0].mxu0
      %v4000 = vadd.f32 %v3839, %v3999
      %v4001 = vpop.f32.mrb[0].mxu0
      %v4002 = vpop.f32.mrb[0].mxu0
      %v4003 = vadd.f32 %v3842, %v4002
      %v4004 = vpop.f32.mrb[0].mxu0
      %4005 = vmatprep.mubr.bf16.mxu0 %v1349
      %4006 = vmatmul.mubr.bf16.gmra.mrb[0].mxu0 %v1109
      %v4007 = vpop.f32.mrb[0].mxu0
      %v4008 = vadd.f32 %v3847, %v4007
      %v4009 = vpop.f32.mrb[0].mxu0
      %v4010 = vpop.f32.mrb[0].mxu0
      %v4011 = vadd.f32 %v3850, %v4010
      %v4012 = vpop.f32.mrb[0].mxu0
      %4013 = vmatprep.mubr.bf16.mxu0 %v1350
      %4014 = vmatmul.mubr.bf16.gmra.mrb[0].mxu0 %v1110
      %v4015 = vpop.f32.mrb[0].mxu0
      %v4016 = vadd.f32 %v3855, %v4015
      %v4017 = vpop.f32.mrb[0].mxu0
      %v4018 = vpop.f32.mrb[0].mxu0
      %v4019 = vadd.f32 %v3858, %v4018
      %v4020 = vpop.f32.mrb[0].mxu0
      %4021 = vmatprep.mubr.bf16.mxu0 %v1351
      %4022 = vmatmul.mubr.bf16.gmra.mrb[0].mxu0 %v1111
      %v4023 = vpop.f32.mrb[0].mxu0
      %v4024 = vadd.f32 %v3863, %v4023
      %v4025 = vpop.f32.mrb[0].mxu0
      %v4026 = vpop.f32.mrb[0].mxu0
      %v4027 = vadd.f32 %v3866, %v4026
      %v4028 = vpop.f32.mrb[0].mxu0
      %4029 = vmatprep.mubr.bf16.mxu0 %v1352
      %4030 = vmatmul.mubr.bf16.gmra.mrb[0].mxu0 %v1112
      %v4031 = vpop.f32.mrb[0].mxu0
      %v4032 = vadd.f32 %v3871, %v4031
      %v4033 = vpop.f32.mrb[0].mxu0
      %v4034 = vpop.f32.mrb[0].mxu0
      %v4035 = vadd.f32 %v3874, %v4034
      %v4036 = vpop.f32.mrb[0].mxu0
      %4037 = vmatprep.mubr.bf16.mxu0 %v1353
      %4038 = vmatmul.mubr.bf16.gmra.mrb[0].mxu0 %v1113
      %v4039 = vpop.f32.mrb[0].mxu0
      %v4040 = vadd.f32 %v3879, %v4039
      %v4041 = vpop.f32.mrb[0].mxu0
      %v4042 = vpop.f32.mrb[0].mxu0
      %v4043 = vadd.f32 %v3882, %v4042
      %v4044 = vpop.f32.mrb[0].mxu0
      %4045 = vmatprep.mubr.bf16.mxu0 %v1354
      %4046 = vmatmul.mubr.bf16.gmra.mrb[0].mxu0 %v1114
      %v4047 = vpop.f32.mrb[0].mxu0
      %v4048 = vadd.f32 %v3887, %v4047
      %v4049 = vpop.f32.mrb[0].mxu0
      %v4050 = vpop.f32.mrb[0].mxu0
      %v4051 = vadd.f32 %v3890, %v4050
      %v4052 = vpop.f32.mrb[0].mxu0
      %4053 = vmatprep.mubr.bf16.mxu0 %v1355
      %4054 = vmatmul.mubr.bf16.gmra.mrb[0].mxu0 %v1115
      %v4055 = vpop.f32.mrb[0].mxu0
      %v4056 = vadd.f32 %v3895, %v4055
      %v4057 = vpop.f32.mrb[0].mxu0
      %v4058 = vpop.f32.mrb[0].mxu0
      %v4059 = vadd.f32 %v3898, %v4058
      %v4060 = vpop.f32.mrb[0].mxu0
      %4061 = vmatprep.mubr.bf16.mxu0 %v1356
      %4062 = vmatmul.mubr.bf16.gmra.mrb[0].mxu0 %v1116
      %v4063 = vpop.f32.mrb[0].mxu0
      %v4064 = vadd.f32 %v3903, %v4063
      %v4065 = vpop.f32.mrb[0].mxu0
      %v4066 = vpop.f32.mrb[0].mxu0
      %v4067 = vadd.f32 %v3906, %v4066
      %v4068 = vpop.f32.mrb[0].mxu0
      %4069 = vdwg.mxu0
      %4070 = vmatprep.subr.bf16.mxu0 0
      %4071 = vmatpush1.bf16.msra.mxu0 %v3491
      %4072 = vmatprep.subr.bf16.mxu0 0
      %4073 = vmatpush1.bf16.msra.mxu0 %v3492
      %4074 = vmatprep.subr.bf16.mxu0 0
      %4075 = vmatpush1.bf16.msra.mxu0 %v3493
      %4076 = vmatprep.subr.bf16.mxu0 0
      %4077 = vmatpush1.bf16.msra.mxu0 %v3494
      %4078 = vmatprep.subr.bf16.mxu0 0
      %4079 = vmatpush1.bf16.msra.mxu0 %v3495
      %4080 = vmatprep.subr.bf16.mxu0 0
      %4081 = vmatpush1.bf16.msra.mxu0 %v3496
      %4082 = vmatprep.subr.bf16.mxu0 0
      %4083 = vmatpush1.bf16.msra.mxu0 %v3497
      %4084 = vmatprep.subr.bf16.mxu0 0
      %4085 = vmatpush1.bf16.msra.mxu0 %v3498
      %4086 = vmatprep.subr.bf16.mxu0 0
      %4087 = vmatpush1.bf16.msra.mxu0 %v3499
      %4088 = vmatprep.subr.bf16.mxu0 0
      %4089 = vmatpush1.bf16.msra.mxu0 %v3500
      %4090 = vmatprep.subr.bf16.mxu0 0
      %4091 = vmatpush1.bf16.msra.mxu0 %v3501
      %4092 = vmatprep.subr.bf16.mxu0 0
      %4093 = vmatpush1.bf16.msra.mxu0 %v3502
      %4094 = vmatprep.subr.bf16.mxu0 0
      %4095 = vmatpush1.bf16.msra.mxu0 %v3503
      %4096 = vmatprep.subr.bf16.mxu0 0
      %4097 = vmatpush1.bf16.msra.mxu0 %v3504
      %4098 = vmatprep.subr.bf16.mxu0 0
      %4099 = vmatpush1.bf16.msra.mxu0 %v3505
      %4100 = vmatprep.subr.bf16.mxu0 0
      %4101 = vmatpush1.bf16.msra.mxu0 %v3506
      %4102 = vmatprep.mubr.bf16.mxu0 %v1102
      %4103 = vmatmul.mubr.bf16.gmra.mrb[0].mxu0 %v1267
      %v4104 = vpop.f32.mrb[0].mxu0
      %v4105 = vadd.f32 %v3944, %v4104
      %v4106 = vpop.f32.mrb[0].mxu0
      %v4107 = vpop.f32.mrb[0].mxu0
      %v4108 = vadd.f32 %v3947, %v4107
      %v4109 = vpop.f32.mrb[0].mxu0
      %4110 = vmatprep.mubr.bf16.mxu0 %v1103
      %4111 = vmatmul.mubr.bf16.gmra.mrb[0].mxu0 %v1268
      %v4112 = vpop.f32.mrb[0].mxu0
      %v4113 = vadd.f32 %v3952, %v4112
      %v4114 = vpop.f32.mrb[0].mxu0
      %v4115 = vpop.f32.mrb[0].mxu0
      %v4116 = vadd.f32 %v3955, %v4115
      %v4117 = vpop.f32.mrb[0].mxu0
      %4118 = vmatprep.mubr.bf16.mxu0 %v1104
      %4119 = vmatmul.mubr.bf16.gmra.mrb[0].mxu0 %v1269
      %v4120 = vpop.f32.mrb[0].mxu0
      %v4121 = vadd.f32 %v3960, %v4120
      %v4122 = vpop.f32.mrb[0].mxu0
      %v4123 = vpop.f32.mrb[0].mxu0
      %v4124 = vadd.f32 %v3963, %v4123
      %v4125 = vpop.f32.mrb[0].mxu0
      %4126 = vmatprep.mubr.bf16.mxu0 %v1105
      %4127 = vmatmul.mubr.bf16.gmra.mrb[0].mxu0 %v1270
      %v4128 = vpop.f32.mrb[0].mxu0
      %v4129 = vadd.f32 %v3968, %v4128
      %v4130 = vpop.f32.mrb[0].mxu0
      %v4131 = vpop.f32.mrb[0].mxu0
      %v4132 = vadd.f32 %v3971, %v4131
      %v4133 = vpop.f32.mrb[0].mxu0
      %4134 = vmatprep.mubr.bf16.mxu0 %v1106
      %4135 = vmatmul.mubr.bf16.gmra.mrb[0].mxu0 %v1271
      %v4136 = vpop.f32.mrb[0].mxu0
      %v4137 = vadd.f32 %v3976, %v4136
      %v4138 = vpop.f32.mrb[0].mxu0
      %v4139 = vpop.f32.mrb[0].mxu0
      %v4140 = vadd.f32 %v3979, %v4139
      %v4141 = vpop.f32.mrb[0].mxu0
      %4142 = vmatprep.mubr.bf16.mxu0 %v1107
      %4143 = vmatmul.mubr.bf16.gmra.mrb[0].mxu0 %v1272
      %v4144 = vpop.f32.mrb[0].mxu0
      %v4145 = vadd.f32 %v3984, %v4144
      %v4146 = vpop.f32.mrb[0].mxu0
      %v4147 = vpop.f32.mrb[0].mxu0
      %v4148 = vadd.f32 %v3987, %v4147
      %v4149 = vpop.f32.mrb[0].mxu0
      %4150 = vmatprep.mubr.bf16.mxu0 %v1108
      %4151 = vmatmul.mubr.bf16.gmra.mrb[0].mxu0 %v1273
      %v4152 = vpop.f32.mrb[0].mxu0
      %v4153 = vadd.f32 %v3992, %v4152
      %v4154 = vpop.f32.mrb[0].mxu0
      %v4155 = vpop.f32.mrb[0].mxu0
      %v4156 = vadd.f32 %v3995, %v4155
      %v4157 = vpop.f32.mrb[0].mxu0
      %4158 = vmatprep.mubr.bf16.mxu0 %v1109
      %4159 = vmatmul.mubr.bf16.gmra.mrb[0].mxu0 %v1274
      %v4160 = vpop.f32.mrb[0].mxu0
      %v4161 = vadd.f32 %v4000, %v4160
      %v4162 = vpop.f32.mrb[0].mxu0
      %v4163 = vpop.f32.mrb[0].mxu0
      %v4164 = vadd.f32 %v4003, %v4163
      %v4165 = vpop.f32.mrb[0].mxu0
      %4166 = vmatprep.mubr.bf16.mxu0 %v1110
      %4167 = vmatmul.mubr.bf16.gmra.mrb[0].mxu0 %v1275
      %v4168 = vpop.f32.mrb[0].mxu0
      %v4169 = vadd.f32 %v4008, %v4168
      %v4170 = vpop.f32.mrb[0].mxu0
      %v4171 = vpop.f32.mrb[0].mxu0
      %v4172 = vadd.f32 %v4011, %v4171
      %v4173 = vpop.f32.mrb[0].mxu0
      %4174 = vmatprep.mubr.bf16.mxu0 %v1111
      %4175 = vmatmul.mubr.bf16.gmra.mrb[0].mxu0 %v1276
      %v4176 = vpop.f32.mrb[0].mxu0
      %v4177 = vadd.f32 %v4016, %v4176
      %v4178 = vpop.f32.mrb[0].mxu0
      %v4179 = vpop.f32.mrb[0].mxu0
      %v4180 = vadd.f32 %v4019, %v4179
      %v4181 = vpop.f32.mrb[0].mxu0
      %4182 = vmatprep.mubr.bf16.mxu0 %v1112
      %4183 = vmatmul.mubr.bf16.gmra.mrb[0].mxu0 %v1277
      %v4184 = vpop.f32.mrb[0].mxu0
      %v4185 = vadd.f32 %v4024, %v4184
      %v4186 = vpop.f32.mrb[0].mxu0
      %v4187 = vpop.f32.mrb[0].mxu0
      %v4188 = vadd.f32 %v4027, %v4187
      %v4189 = vpop.f32.mrb[0].mxu0
      %4190 = vmatprep.mubr.bf16.mxu0 %v1113
      %4191 = vmatmul.mubr.bf16.gmra.mrb[0].mxu0 %v1278
      %v4192 = vpop.f32.mrb[0].mxu0
      %v4193 = vadd.f32 %v4032, %v4192
      %v4194 = vpop.f32.mrb[0].mxu0
      %v4195 = vpop.f32.mrb[0].mxu0
      %v4196 = vadd.f32 %v4035, %v4195
      %v4197 = vpop.f32.mrb[0].mxu0
      %4198 = vmatprep.mubr.bf16.mxu0 %v1114
      %4199 = vmatmul.mubr.bf16.gmra.mrb[0].mxu0 %v1279
      %v4200 = vpop.f32.mrb[0].mxu0
      %v4201 = vadd.f32 %v4040, %v4200
      %v4202 = vpop.f32.mrb[0].mxu0
      %v4203 = vpop.f32.mrb[0].mxu0
      %v4204 = vadd.f32 %v4043, %v4203
      %v4205 = vpop.f32.mrb[0].mxu0
      %4206 = vmatprep.mubr.bf16.mxu0 %v1115
      %4207 = vmatmul.mubr.bf16.gmra.mrb[0].mxu0 %v1280
      %v4208 = vpop.f32.mrb[0].mxu0
      %v4209 = vadd.f32 %v4048, %v4208
      %v4210 = vpop.f32.mrb[0].mxu0
      %v4211 = vpop.f32.mrb[0].mxu0
      %v4212 = vadd.f32 %v4051, %v4211
      %v4213 = vpop.f32.mrb[0].mxu0
      %4214 = vmatprep.mubr.bf16.mxu0 %v1116
      %4215 = vmatmul.mubr.bf16.gmra.mrb[0].mxu0 %v1281
      %v4216 = vpop.f32.mrb[0].mxu0
      %v4217 = vadd.f32 %v4056, %v4216
      %v4218 = vpop.f32.mrb[0].mxu0
      %v4219 = vpop.f32.mrb[0].mxu0
      %v4220 = vadd.f32 %v4059, %v4219
      %v4221 = vpop.f32.mrb[0].mxu0
      %4222 = vmatprep.mubr.bf16.mxu0 %v1117
      %4223 = vmatmul.mubr.bf16.gmra.mrb[0].mxu0 %v1282
      %v4224 = vpop.f32.mrb[0].mxu0
      %v4225 = vadd.f32 %v4064, %v4224
      %v4226 = vpop.f32.mrb[0].mxu0
      %v4227 = vpop.f32.mrb[0].mxu0
      %v4228 = vadd.f32 %v4067, %v4227
      %v4229 = vpop.f32.mrb[0].mxu0
      %4230 = vdwg.mxu0
      %4231 = vmatprep.subr.bf16.mxu0 0
      %4232 = vmatpush1.bf16.msra.mxu0 %v3507
      %4233 = vmatprep.subr.bf16.mxu0 0
      %4234 = vmatpush1.bf16.msra.mxu0 %v3508
      %4235 = vmatprep.subr.bf16.mxu0 0
      %4236 = vmatpush1.bf16.msra.mxu0 %v3509
      %4237 = vmatprep.subr.bf16.mxu0 0
      %4238 = vmatpush1.bf16.msra.mxu0 %v3510
      %4239 = vmatprep.subr.bf16.mxu0 0
      %4240 = vmatpush1.bf16.msra.mxu0 %v3511
      %4241 = vmatprep.subr.bf16.mxu0 0
      %4242 = vmatpush1.bf16.msra.mxu0 %v3512
      %4243 = vmatprep.subr.bf16.mxu0 0
      %4244 = vmatpush1.bf16.msra.mxu0 %v3513
      %4245 = vmatprep.subr.bf16.mxu0 0
      %4246 = vmatpush1.bf16.msra.mxu0 %v3514
      %4247 = vmatprep.subr.bf16.mxu0 0
      %4248 = vmatpush1.bf16.msra.mxu0 0
      %4249 = vmatprep.subr.bf16.mxu0 0
      %4250 = vmatpush1.bf16.msra.mxu0 0
      %4251 = vmatprep.subr.bf16.mxu0 0
      %4252 = vmatpush1.bf16.msra.mxu0 0
      %4253 = vmatprep.subr.bf16.mxu0 0
      %4254 = vmatpush1.bf16.msra.mxu0 0
      %4255 = vmatprep.subr.bf16.mxu0 0
      %4256 = vmatpush1.bf16.msra.mxu0 0
      %4257 = vmatprep.subr.bf16.mxu0 0
      %4258 = vmatpush1.bf16.msra.mxu0 0
      %4259 = vmatprep.subr.bf16.mxu0 0
      %4260 = vmatpush1.bf16.msra.mxu0 0
      %4261 = vmatprep.subr.bf16.mxu0 0
      %4262 = vmatpush1.bf16.msra.mxu0 0
      %4263 = vmatprep.mubr.bf16.mxu0 0
      %4264 = vmatmul.mubr.bf16.gmra.mrb[0].mxu0 %v1342
      %v4265 = vpop.f32.mrb[0].mxu0
      %v4266 = vadd.f32 %v4105, %v4265
      %v4267 = vpop.f32.mrb[0].mxu0
      %v4268 = vpop.f32.mrb[0].mxu0
      %v4269 = vadd.f32 %v4108, %v4268
      %v4270 = vpop.f32.mrb[0].mxu0
      %4271 = vmatprep.mubr.bf16.mxu0 0
      %4272 = vmatmul.mubr.bf16.gmra.mrb[0].mxu0 %v1343
      %v4273 = vpop.f32.mrb[0].mxu0
      %v4274 = vadd.f32 %v4113, %v4273
      %v4275 = vpop.f32.mrb[0].mxu0
      %v4276 = vpop.f32.mrb[0].mxu0
      %v4277 = vadd.f32 %v4116, %v4276
      %v4278 = vpop.f32.mrb[0].mxu0
      %4279 = vmatprep.mubr.bf16.mxu0 0
      %4280 = vmatmul.mubr.bf16.gmra.mrb[0].mxu0 %v1344
      %v4281 = vpop.f32.mrb[0].mxu0
      %v4282 = vadd.f32 %v4121, %v4281
      %v4283 = vpop.f32.mrb[0].mxu0
      %v4284 = vpop.f32.mrb[0].mxu0
      %v4285 = vadd.f32 %v4124, %v4284
      %v4286 = vpop.f32.mrb[0].mxu0
      %4287 = vmatprep.mubr.bf16.mxu0 0
      %4288 = vmatmul.mubr.bf16.gmra.mrb[0].mxu0 %v1345
      %v4289 = vpop.f32.mrb[0].mxu0
      %v4290 = vadd.f32 %v4129, %v4289
      %v4291 = vpop.f32.mrb[0].mxu0
      %v4292 = vpop.f32.mrb[0].mxu0
      %v4293 = vadd.f32 %v4132, %v4292
      %v4294 = vpop.f32.mrb[0].mxu0
      %4295 = vmatprep.mubr.bf16.mxu0 0
      %4296 = vmatmul.mubr.bf16.gmra.mrb[0].mxu0 %v1346
      %v4297 = vpop.f32.mrb[0].mxu0
      %v4298 = vadd.f32 %v4137, %v4297
      %v4299 = vpop.f32.mrb[0].mxu0
      %v4300 = vpop.f32.mrb[0].mxu0
      %v4301 = vadd.f32 %v4140, %v4300
      %v4302 = vpop.f32.mrb[0].mxu0
      %4303 = vmatprep.mubr.bf16.mxu0 0
      %4304 = vmatmul.mubr.bf16.gmra.mrb[0].mxu0 %v1347
      %v4305 = vpop.f32.mrb[0].mxu0
      %v4306 = vadd.f32 %v4145, %v4305
      %v4307 = vpop.f32.mrb[0].mxu0
      %v4308 = vpop.f32.mrb[0].mxu0
      %v4309 = vadd.f32 %v4148, %v4308
      %v4310 = vpop.f32.mrb[0].mxu0
      %4311 = vmatprep.mubr.bf16.mxu0 0
      %4312 = vmatmul.mubr.bf16.gmra.mrb[0].mxu0 %v1348
      %v4313 = vpop.f32.mrb[0].mxu0
      %v4314 = vadd.f32 %v4153, %v4313
      %v4315 = vpop.f32.mrb[0].mxu0
      %v4316 = vpop.f32.mrb[0].mxu0
      %v4317 = vadd.f32 %v4156, %v4316
      %v4318 = vpop.f32.mrb[0].mxu0
      %4319 = vmatprep.mubr.bf16.mxu0 0
      %4320 = vmatmul.mubr.bf16.gmra.mrb[0].mxu0 %v1349
      %v4321 = vpop.f32.mrb[0].mxu0
      %v4322 = vadd.f32 %v4161, %v4321
      %v4323 = vpop.f32.mrb[0].mxu0
      %v4324 = vpop.f32.mrb[0].mxu0
      %v4325 = vadd.f32 %v4164, %v4324
      %v4326 = vpop.f32.mrb[0].mxu0
      %4327 = vmatprep.mubr.bf16.mxu0 0
      %4328 = vmatmul.mubr.bf16.gmra.mrb[0].mxu0 %v1350
      %v4329 = vpop.f32.mrb[0].mxu0
      %v4330 = vadd.f32 %v4169, %v4329
      %v4331 = vpop.f32.mrb[0].mxu0
      %v4332 = vpop.f32.mrb[0].mxu0
      %v4333 = vadd.f32 %v4172, %v4332
      %v4334 = vpop.f32.mrb[0].mxu0
      %4335 = vmatprep.mubr.bf16.mxu0 0
      %4336 = vmatmul.mubr.bf16.gmra.mrb[0].mxu0 %v1351
      %v4337 = vpop.f32.mrb[0].mxu0
      %v4338 = vadd.f32 %v4177, %v4337
      %v4339 = vpop.f32.mrb[0].mxu0
      %v4340 = vpop.f32.mrb[0].mxu0
      %v4341 = vadd.f32 %v4180, %v4340
      %v4342 = vpop.f32.mrb[0].mxu0
      %4343 = vmatprep.mubr.bf16.mxu0 0
      %4344 = vmatmul.mubr.bf16.gmra.mrb[0].mxu0 %v1352
      %v4345 = vpop.f32.mrb[0].mxu0
      %v4346 = vadd.f32 %v4185, %v4345
      %v4347 = vpop.f32.mrb[0].mxu0
      %v4348 = vpop.f32.mrb[0].mxu0
      %v4349 = vadd.f32 %v4188, %v4348
      %v4350 = vpop.f32.mrb[0].mxu0
      %4351 = vmatprep.mubr.bf16.mxu0 0
      %4352 = vmatmul.mubr.bf16.gmra.mrb[0].mxu0 %v1353
      %v4353 = vpop.f32.mrb[0].mxu0
      %v4354 = vadd.f32 %v4193, %v4353
      %v4355 = vpop.f32.mrb[0].mxu0
      %v4356 = vpop.f32.mrb[0].mxu0
      %v4357 = vadd.f32 %v4196, %v4356
      %v4358 = vpop.f32.mrb[0].mxu0
      %4359 = vmatprep.mubr.bf16.mxu0 0
      %4360 = vmatmul.mubr.bf16.gmra.mrb[0].mxu0 %v1354
      %v4361 = vpop.f32.mrb[0].mxu0
      %v4362 = vadd.f32 %v4201, %v4361
      %v4363 = vpop.f32.mrb[0].mxu0
      %v4364 = vpop.f32.mrb[0].mxu0
      %v4365 = vadd.f32 %v4204, %v4364
      %v4366 = vpop.f32.mrb[0].mxu0
      %4367 = vmatprep.mubr.bf16.mxu0 0
      %4368 = vmatmul.mubr.bf16.gmra.mrb[0].mxu0 %v1355
      %v4369 = vpop.f32.mrb[0].mxu0
      %v4370 = vadd.f32 %v4209, %v4369
      %v4371 = vpop.f32.mrb[0].mxu0
      %v4372 = vpop.f32.mrb[0].mxu0
      %v4373 = vadd.f32 %v4212, %v4372
      %v4374 = vpop.f32.mrb[0].mxu0
      %4375 = vmatprep.mubr.bf16.mxu0 0
      %4376 = vmatmul.mubr.bf16.gmra.mrb[0].mxu0 %v1356
      %v4377 = vpop.f32.mrb[0].mxu0
      %v4378 = vadd.f32 %v4217, %v4377
      %v4379 = vpop.f32.mrb[0].mxu0
      %v4380 = vpop.f32.mrb[0].mxu0
      %v4381 = vadd.f32 %v4220, %v4380
      %v4382 = vpop.f32.mrb[0].mxu0
      %4383 = vmatprep.mubr.bf16.mxu0 0
      %4384 = vmatmul.mubr.bf16.gmra.mrb[0].mxu0 %v1357
      %v4385 = vpop.f32.mrb[0].mxu0
      %v4386 = vadd.f32 %v4225, %v4385
      %v4387 = vpop.f32.mrb[0].mxu0
      %v4388 = vpop.f32.mrb[0].mxu0
      %v4389 = vadd.f32 %v4228, %v4388
      %v4390 = vpop.f32.mrb[0].mxu0
      %4391 = vdwg.mxu0
      %v4392 = vld [vmem:[%s4] sm:$0x1]
      %v4394 = vlaneseq
      %v4395 = vshrl.u32 %v4394, 7
      %v4396 = vsub.s32 0, %v4395
      %v4397 = vrot.slane %v4392, %v4396
      %v4399 = vadd.f32 %v4266, %v4397
      %v4400 = vadd.f32 %v4269, %v4397
      %v4401 = vadd.f32 %v4274, %v4397
      %v4402 = vadd.f32 %v4277, %v4397
      %v4403 = vadd.f32 %v4282, %v4397
      %v4404 = vadd.f32 %v4285, %v4397
      %v4405 = vadd.f32 %v4290, %v4397
      %v4406 = vadd.f32 %v4293, %v4397
      %v4407 = vadd.f32 %v4298, %v4397
      %v4408 = vadd.f32 %v4301, %v4397
      %v4409 = vadd.f32 %v4306, %v4397
      %v4410 = vadd.f32 %v4309, %v4397
      %v4411 = vadd.f32 %v4314, %v4397
      %v4412 = vadd.f32 %v4317, %v4397
      %v4413 = vadd.f32 %v4322, %v4397
      %v4414 = vadd.f32 %v4325, %v4397
      %v4415 = vadd.f32 %v4330, %v4397
      %v4416 = vadd.f32 %v4333, %v4397
      %v4417 = vadd.f32 %v4338, %v4397
      %v4418 = vadd.f32 %v4341, %v4397
      %v4419 = vadd.f32 %v4346, %v4397
      %v4420 = vadd.f32 %v4349, %v4397
      %v4421 = vadd.f32 %v4354, %v4397
      %v4422 = vadd.f32 %v4357, %v4397
      %v4423 = vadd.f32 %v4362, %v4397
      %v4424 = vadd.f32 %v4365, %v4397
      %v4425 = vadd.f32 %v4370, %v4397
      %v4426 = vadd.f32 %v4373, %v4397
      %v4427 = vadd.f32 %v4378, %v4397
      %v4428 = vadd.f32 %v4381, %v4397
      %v4429 = vadd.f32 %v4386, %v4397
      %v4430 = vadd.f32 %v4389, %v4397
      %v4431 = vpack.c.bf16 %v4400, %v4399
      %v4432 = vpack.c.bf16 %v4402, %v4401
      %v4433 = vpack.c.bf16 %v4404, %v4403
      %v4434 = vpack.c.bf16 %v4406, %v4405
      %v4435 = vpack.c.bf16 %v4408, %v4407
      %v4436 = vpack.c.bf16 %v4410, %v4409
      %v4437 = vpack.c.bf16 %v4412, %v4411
      %v4438 = vpack.c.bf16 %v4414, %v4413
      %v4439 = vpack.c.bf16 %v4416, %v4415
      %v4440 = vpack.c.bf16 %v4418, %v4417
      %v4441 = vpack.c.bf16 %v4420, %v4419
      %v4442 = vpack.c.bf16 %v4422, %v4421
      %v4443 = vpack.c.bf16 %v4424, %v4423
      %v4444 = vpack.c.bf16 %v4426, %v4425
      %v4445 = vpack.c.bf16 %v4428, %v4427
      %v4446 = vpack.c.bf16 %v4430, %v4429
      %v4463 = vunpack.c.l.b16 %v4431
      %v4464 = vunpack.c.h.b16 %v4431
      %v4465 = vunpack.c.l.b16 %v4432
      %v4466 = vunpack.c.h.b16 %v4432
      %v4467 = vunpack.c.l.b16 %v4433
      %v4468 = vunpack.c.h.b16 %v4433
      %v4469 = vunpack.c.l.b16 %v4434
      %v4470 = vunpack.c.h.b16 %v4434
      %v4471 = vunpack.c.l.b16 %v4435
      %v4472 = vunpack.c.h.b16 %v4435
      %v4473 = vunpack.c.l.b16 %v4436
      %v4474 = vunpack.c.h.b16 %v4436
      %v4475 = vunpack.c.l.b16 %v4437
      %v4476 = vunpack.c.h.b16 %v4437
      %v4477 = vunpack.c.l.b16 %v4438
      %v4478 = vunpack.c.h.b16 %v4438
      %v4479 = vunpack.c.l.b16 %v4439
      %v4480 = vunpack.c.h.b16 %v4439
      %v4481 = vunpack.c.l.b16 %v4440
      %v4482 = vunpack.c.h.b16 %v4440
      %v4483 = vunpack.c.l.b16 %v4441
      %v4484 = vunpack.c.h.b16 %v4441
      %v4485 = vunpack.c.l.b16 %v4442
      %v4486 = vunpack.c.h.b16 %v4442
      %v4487 = vunpack.c.l.b16 %v4443
      %v4488 = vunpack.c.h.b16 %v4443
      %v4489 = vunpack.c.l.b16 %v4444
      %v4490 = vunpack.c.h.b16 %v4444
      %v4491 = vunpack.c.l.b16 %v4445
      %v4492 = vunpack.c.h.b16 %v4445
      %v4493 = vunpack.c.l.b16 %v4446
      %v4494 = vunpack.c.h.b16 %v4446
      %v4495 = vpack.c.b16 %v4463, %v4463
      %v4496 = vpack.c.b16 %v4464, %v4464
      %v4497 = vpack.c.b16 %v4465, %v4465
      %v4498 = vpack.c.b16 %v4466, %v4466
      %v4499 = vpack.c.b16 %v4467, %v4467
      %v4500 = vpack.c.b16 %v4468, %v4468
      %v4501 = vpack.c.b16 %v4469, %v4469
      %v4502 = vpack.c.b16 %v4470, %v4470
      %v4503 = vpack.c.b16 %v4471, %v4471
      %v4504 = vpack.c.b16 %v4472, %v4472
      %v4505 = vpack.c.b16 %v4473, %v4473
      %v4506 = vpack.c.b16 %v4474, %v4474
      %v4507 = vpack.c.b16 %v4475, %v4475
      %v4508 = vpack.c.b16 %v4476, %v4476
      %v4509 = vpack.c.b16 %v4477, %v4477
      %v4510 = vpack.c.b16 %v4478, %v4478
      %v4511 = vpack.c.b16 %v4479, %v4479
      %v4512 = vpack.c.b16 %v4480, %v4480
      %v4513 = vpack.c.b16 %v4481, %v4481
      %v4514 = vpack.c.b16 %v4482, %v4482
      %v4515 = vpack.c.b16 %v4483, %v4483
      %v4516 = vpack.c.b16 %v4484, %v4484
      %v4517 = vpack.c.b16 %v4485, %v4485
      %v4518 = vpack.c.b16 %v4486, %v4486
      %v4519 = vpack.c.b16 %v4487, %v4487
      %v4520 = vpack.c.b16 %v4488, %v4488
      %v4521 = vpack.c.b16 %v4489, %v4489
      %v4522 = vpack.c.b16 %v4490, %v4490
      %v4523 = vpack.c.b16 %v4491, %v4491
      %v4524 = vpack.c.b16 %v4492, %v4492
      %v4525 = vpack.c.b16 %v4493, %v4493
      %v4526 = vpack.c.b16 %v4494, %v4494
      %4559 = vst [vmem:[%s215] sm:$0xf] %v4495
      %4560 = vst [vmem:[%s215 + $0x4] sm:$0xf] %v4496
      %4561 = vst [vmem:[%s215 + $0x8] sm:$0xf] %v4497
      %4562 = vst [vmem:[%s215 + $0xc] sm:$0xf] %v4498
      %4563 = vst [vmem:[%s215 + $0x10] sm:$0xf] %v4499
      %4564 = vst [vmem:[%s215 + $0x14] sm:$0xf] %v4500
      %4565 = vst [vmem:[%s215 + $0x18] sm:$0xf] %v4501
      %4566 = vst [vmem:[%s215 + $0x1c] sm:$0xf] %v4502
      %4567 = vst [vmem:[%s215 + $0x20] sm:$0xf] %v4503
      %4568 = vst [vmem:[%s215 + $0x24] sm:$0xf] %v4504
      %4569 = vst [vmem:[%s215 + $0x28] sm:$0xf] %v4505
      %4570 = vst [vmem:[%s215 + $0x2c] sm:$0xf] %v4506
      %4571 = vst [vmem:[%s215 + $0x30] sm:$0xf] %v4507
      %4572 = vst [vmem:[%s215 + $0x34] sm:$0xf] %v4508
      %4573 = vst [vmem:[%s215 + $0x38] sm:$0xf] %v4509
      %4574 = vst [vmem:[%s215 + $0x3c] sm:$0xf] %v4510
      %4575 = vst [vmem:[%s215 + $0x40] sm:$0xf] %v4511
      %4576 = vst [vmem:[%s215 + $0x44] sm:$0xf] %v4512
      %4577 = vst [vmem:[%s215 + $0x48] sm:$0xf] %v4513
      %4578 = vst [vmem:[%s215 + $0x4c] sm:$0xf] %v4514
      %4579 = vst [vmem:[%s215 + $0x50] sm:$0xf] %v4515
      %4580 = vst [vmem:[%s215 + $0x54] sm:$0xf] %v4516
      %4581 = vst [vmem:[%s215 + $0x58] sm:$0xf] %v4517
      %4582 = vst [vmem:[%s215 + $0x5c] sm:$0xf] %v4518
      %4583 = vst [vmem:[%s215 + $0x60] sm:$0xf] %v4519
      %4584 = vst [vmem:[%s215 + $0x64] sm:$0xf] %v4520
      %4585 = vst [vmem:[%s215 + $0x68] sm:$0xf] %v4521
      %4586 = vst [vmem:[%s215 + $0x6c] sm:$0xf] %v4522
      %4587 = vst [vmem:[%s215 + $0x70] sm:$0xf] %v4523
      %4588 = vst [vmem:[%s215 + $0x74] sm:$0xf] %v4524
      %4589 = vst [vmem:[%s215 + $0x78] sm:$0xf] %v4525
      %4590 = vst [vmem:[%s215 + $0x7c] sm:$0xf] %v4526
      %v4591 = vadd.f32 %v4399, %v4400
      %v4592 = vadd.f32 %v4591, %v4401
      %v4593 = vadd.f32 %v4592, %v4402
      %v4594 = vadd.f32 %v4593, %v4403
      %v4595 = vadd.f32 %v4594, %v4404
      %v4596 = vadd.f32 %v4595, %v4405
      %v4597 = vadd.f32 %v4596, %v4406
      %v4598 = vadd.f32 %v4597, %v4407
      %v4599 = vadd.f32 %v4598, %v4408
      %v4600 = vadd.f32 %v4599, %v4409
      %v4601 = vadd.f32 %v4600, %v4410
      %v4602 = vadd.f32 %v4601, %v4411
      %v4603 = vadd.f32 %v4602, %v4412
      %v4604 = vadd.f32 %v4603, %v4413
      %v4605 = vadd.f32 %v4604, %v4414
      %v4606 = vadd.f32 %v4605, %v4415
      %v4607 = vadd.f32 %v4606, %v4416
      %v4608 = vadd.f32 %v4607, %v4417
      %v4609 = vadd.f32 %v4608, %v4418
      %v4610 = vadd.f32 %v4609, %v4419
      %v4611 = vadd.f32 %v4610, %v4420
      %v4612 = vadd.f32 %v4611, %v4421
      %v4613 = vadd.f32 %v4612, %v4422
      %v4614 = vadd.f32 %v4613, %v4423
      %v4615 = vadd.f32 %v4614, %v4424
      %v4616 = vadd.f32 %v4615, %v4425
      %v4617 = vadd.f32 %v4616, %v4426
      %v4618 = vadd.f32 %v4617, %v4427
      %v4619 = vadd.f32 %v4618, %v4428
      %v4620 = vadd.f32 %v4619, %v4429
      %v4621 = vadd.f32 %v4620, %v4430
      %v4622 = vrot.slane %v4621, 4
      %v4623 = vadd.f32 %v4621, %v4622
      %v4624 = vrot.slane %v4623, 2
      %v4625 = vadd.f32 %v4623, %v4624
      %v4626 = vrot.slane %v4625, 1
      %v4627 = vadd.f32 %v4625, %v4626
      %v4628 = vmul.f32 %v4399, %v4399
      %v4629 = vmul.f32 %v4400, %v4400
      %v4630 = vmul.f32 %v4401, %v4401
      %v4631 = vmul.f32 %v4402, %v4402
      %v4632 = vmul.f32 %v4403, %v4403
      %v4633 = vmul.f32 %v4404, %v4404
      %v4634 = vmul.f32 %v4405, %v4405
      %v4635 = vmul.f32 %v4406, %v4406
      %v4636 = vmul.f32 %v4407, %v4407
      %v4637 = vmul.f32 %v4408, %v4408
      %v4638 = vmul.f32 %v4409, %v4409
      %v4639 = vmul.f32 %v4410, %v4410
      %v4640 = vmul.f32 %v4411, %v4411
      %v4641 = vmul.f32 %v4412, %v4412
      %v4642 = vmul.f32 %v4413, %v4413
      %v4643 = vmul.f32 %v4414, %v4414
      %v4644 = vmul.f32 %v4415, %v4415
      %v4645 = vmul.f32 %v4416, %v4416
      %v4646 = vmul.f32 %v4417, %v4417
      %v4647 = vmul.f32 %v4418, %v4418
      %v4648 = vmul.f32 %v4419, %v4419
      %v4649 = vmul.f32 %v4420, %v4420
      %v4650 = vmul.f32 %v4421, %v4421
      %v4651 = vmul.f32 %v4422, %v4422
      %v4652 = vmul.f32 %v4423, %v4423
      %v4653 = vmul.f32 %v4424, %v4424
      %v4654 = vmul.f32 %v4425, %v4425
      %v4655 = vmul.f32 %v4426, %v4426
      %v4656 = vmul.f32 %v4427, %v4427
      %v4657 = vmul.f32 %v4428, %v4428
      %v4658 = vmul.f32 %v4429, %v4429
      %v4659 = vmul.f32 %v4430, %v4430
      %v4660 = vadd.f32 %v4628, %v4629
      %v4661 = vadd.f32 %v4660, %v4630
      %v4662 = vadd.f32 %v4661, %v4631
      %v4663 = vadd.f32 %v4662, %v4632
      %v4664 = vadd.f32 %v4663, %v4633
      %v4665 = vadd.f32 %v4664, %v4634
      %v4666 = vadd.f32 %v4665, %v4635
      %v4667 = vadd.f32 %v4666, %v4636
      %v4668 = vadd.f32 %v4667, %v4637
      %v4669 = vadd.f32 %v4668, %v4638
      %v4670 = vadd.f32 %v4669, %v4639
      %v4671 = vadd.f32 %v4670, %v4640
      %v4672 = vadd.f32 %v4671, %v4641
      %v4673 = vadd.f32 %v4672, %v4642
      %v4674 = vadd.f32 %v4673, %v4643
      %v4675 = vadd.f32 %v4674, %v4644
      %v4676 = vadd.f32 %v4675, %v4645
      %v4677 = vadd.f32 %v4676, %v4646
      %v4678 = vadd.f32 %v4677, %v4647
      %v4679 = vadd.f32 %v4678, %v4648
      %v4680 = vadd.f32 %v4679, %v4649
      %v4681 = vadd.f32 %v4680, %v4650
      %v4682 = vadd.f32 %v4681, %v4651
      %v4683 = vadd.f32 %v4682, %v4652
      %v4684 = vadd.f32 %v4683, %v4653
      %v4685 = vadd.f32 %v4684, %v4654
      %v4686 = vadd.f32 %v4685, %v4655
      %v4687 = vadd.f32 %v4686, %v4656
      %v4688 = vadd.f32 %v4687, %v4657
      %v4689 = vadd.f32 %v4688, %v4658
      %v4690 = vadd.f32 %v4689, %v4659
      %v4691 = vrot.slane %v4690, 4
      %v4692 = vadd.f32 %v4690, %v4691
      %v4693 = vrot.slane %v4692, 2
      %v4694 = vadd.f32 %v4692, %v4693
      %v4695 = vrot.slane %v4694, 1
      %v4696 = vadd.f32 %v4694, %v4695
      %vm4697 = vcmask 1040384
      %v4698 = vsel %vm4697, %v4627, %v4696
      %4699 = vst [vmem:[%s223] sm:$0x3] %v4698
      %s4700 = smul.u32 16, %s23
      %p4701 = scmp.lt.s32.totalorder %s22, 1
      %s4702 = scalar_select %p4701, %s22, 1
      %p4703 = scmp.lt.s32.totalorder %s4700, 15
      %s4704 = scalar_select %p4703, %s4700, 15
      %s4705 = smul.addr %s4704, 2
      %s4706 = smul.addr %s4702, 32
      %s4707 = sadd.s32 %s4705, %s4706
      %s4708 = smul.addr %s4707, 4
      %s4709 = scalar_lea.vmem %s5, %s4708
      %p4710 = scmp.lt.s32.totalorder %s22, 1
      %s4711 = scalar_select %p4710, %s22, 1
      %p4712 = scmp.lt.s32.totalorder %s23, 0
      %s4713 = scalar_select %p4712, %s23, 0
      %s4714 = sadd.s32 %s4713, %s4711
      %s4715 = smul.addr %s4714, 2
      %s4716 = scalar_lea.vmem %s6, %s4715
      // Predicated region
      $region449: #{expansive_block.5} parent=31 // pred_check
        %p4717 = pneg %p113
      $region450: #{expansive_block.5} parent=31 // pred_check_branch
        %4719 = sbr.rel (%p4717) target = $region452
      $region451: #{expansive_block.5} parent=31 // pred_region
        %s4720 = smul.u32 16, %s23
      $region452: #{expansive_block.5} parent=31 // pred_fallthru
        _
      // Predicated region
      $region453: #{expansive_block.5} parent=31 // pred_check
        %p4721 = pneg %p141
      $region454: #{expansive_block.5} parent=31 // pred_check_branch
        %4723 = sbr.rel (%p4721) target = $region456
      $region455: #{expansive_block.5} parent=31 // pred_region
        _
      $region456: #{expansive_block.5} parent=31 // pred_fallthru
        _
    $region32: #{expansive_block.5} parent=5 // pred_fallthru
      _
    %p4724 = scmp.le.s32.totalorder 2, %s13
    // Predicated region
    $region457: #{expansive_block.5} parent=5 // pred_check
      %p4725 = pneg %p4724
    $region458: #{expansive_block.5} parent=5 // pred_check_branch
      %4727 = sbr.rel (%p4725) target = $region460
    $region459: #{expansive_block.5} parent=5 // pred_region
      %s4728 = ssub.s32 %s13, 2
      // Predicated region
      $region461: #{expansive_block.5} parent=459 // pred_check
        %p4729 = pneg %p119
      $region462: #{expansive_block.5} parent=459 // pred_check_branch
        %4731 = sbr.rel (%p4729) target = $region464
      $region463: #{expansive_block.5} parent=459 // pred_region
        %s4732 = smul.u32 16, %s25
        %p4733 = scmp.lt.s32.totalorder %s24, 1
        %s4734 = scalar_select %p4733, %s24, 1
        %p4735 = scmp.lt.s32.totalorder %s4732, 15
        %s4736 = scalar_select %p4735, %s4732, 15
        %s4737 = smul.addr %s4736, 2
        %s4738 = smul.addr %s4734, 32
        %s4739 = sadd.s32 %s4737, %s4738
        %s4740 = smul.addr %s4739, 4
        %s4741 = scalar_lea.vmem %s5, %s4740
      $region464: #{expansive_block.5} parent=459 // pred_fallthru
        _
      // Predicated region
      $region465: #{expansive_block.5} parent=459 // pred_check
        %p4742 = pneg %p147
      $region466: #{expansive_block.5} parent=459 // pred_check_branch
        %4744 = sbr.rel (%p4742) target = $region468
      $region467: #{expansive_block.5} parent=459 // pred_region
        %p4745 = scmp.lt.s32.totalorder %s24, 1
        %s4746 = scalar_select %p4745, %s24, 1
        %p4747 = scmp.lt.s32.totalorder %s25, 0
        %s4748 = scalar_select %p4747, %s25, 0
        %s4749 = sadd.s32 %s4748, %s4746
        %s4750 = smul.addr %s4749, 2
        %s4751 = scalar_lea.vmem %s6, %s4750
      $region468: #{expansive_block.5} parent=459 // pred_fallthru
        _
    $region460: #{expansive_block.5} parent=5 // pred_fallthru
      _
  $region6: #{expansive_block.5} parent=0 // loop_footer
    %s17 = sadd.s32 1, %s13
  $region7: #{expansive_block.5} parent=0 // loop_footer_branch
    %12 = sbr.rel target = $region3
  $region8: #{expansive_block.5} parent=0 // loop_exit
    _
  %4752 = vsyncmov [#allocation4]
  %s4753 = vpop.sfrf %4752
  %p4754 = scmp.eq.s32.totalorder %s4753, 0
  %p4755 = pneg %p4754
  %4757 = shalt.err (%p4755)
  %s4758 = scalar_lea.sflag [#allocation4], 1
  %4759 = vsyncmov %s4758
  %s4760 = vpop.sfrf %4759
  %p4761 = scmp.eq.s32.totalorder %s4760, 0
  %p4762 = pneg %p4761
  %4764 = shalt.err (%p4762)
  %s4765 = scalar_lea.sflag [#allocation4], 2
  %4766 = vsyncmov %s4765
  %s4767 = vpop.sfrf %4766
  %p4768 = scmp.eq.s32.totalorder %s4767, 0
  %p4769 = pneg %p4768
  %4771 = shalt.err (%p4769)
  %s4772 = scalar_lea.sflag [#allocation4], 3
  %4773 = vsyncmov %s4772
  %s4774 = vpop.sfrf %4773
  %p4775 = scmp.eq.s32.totalorder %s4774, 0
  %p4776 = pneg %p4775
  %4778 = shalt.err (%p4776)
  %s4779 = scalar_lea.sflag [#allocation4], 4
  %4780 = vsyncmov %s4779
  %s4781 = vpop.sfrf %4780
  %p4782 = scmp.eq.s32.totalorder %s4781, 0
  %p4783 = pneg %p4782
  %4785 = shalt.err (%p4783)
  %s4786 = scalar_lea.sflag [#allocation4], 5
  %4787 = vsyncmov %s4786
  %s4788 = vpop.sfrf %4787
  %p4789 = scmp.eq.s32.totalorder %s4788, 0
  %p4790 = pneg %p4789
  %4792 = shalt.err (%p4790)
  %4793 = vsyncmov [#allocation5]
  %s4794 = vpop.sfrf %4793
  %p4795 = scmp.eq.s32.totalorder %s4794, 0
  %p4796 = pneg %p4795
  %4798 = shalt.err (%p4796)
  %s4799 = scalar_lea.sflag [#allocation5], 1
  %4800 = vsyncmov %s4799
  %s4801 = vpop.sfrf %4800
  %p4802 = scmp.eq.s32.totalorder %s4801, 0
  %p4803 = pneg %p4802
  %4805 = shalt.err (%p4803)
  %s4806 = scalar_lea.sflag [#allocation5], 2
  %4807 = vsyncmov %s4806
  %s4808 = vpop.sfrf %4807
  %p4809 = scmp.eq.s32.totalorder %s4808, 0
  %p4810 = pneg %p4809
  %4812 = shalt.err (%p4810)
  %s4813 = scalar_lea.sflag [#allocation5], 3
  %4814 = vsyncmov %s4813
  %s4815 = vpop.sfrf %4814
  %p4816 = scmp.eq.s32.totalorder %s4815, 0
  %p4817 = pneg %p4816
  %4819 = shalt.err (%p4817)
  %s4820 = scalar_lea.sflag [#allocation5], 4
  %4821 = vsyncmov %s4820
  %s4822 = vpop.sfrf %4821
  %p4823 = scmp.eq.s32.totalorder %s4822, 0
  %p4824 = pneg %p4823
  %4826 = shalt.err (%p4824)
  %s4827 = scalar_lea.sflag [#allocation5], 5
  %4828 = vsyncmov %s4827
  %s4829 = vpop.sfrf %4828
  %p4830 = scmp.eq.s32.totalorder %s4829, 0
  %p4831 = pneg %p4830
  %4833 = shalt.err (%p4831)

</llo_original>
